<compile_context>
chip_gen: v5e
topology: v5e:2x2
jax: 0.10.0
libtpu: 0.0.40
codegen_flags: <defaults>
</compile_context>

<pallas_src>
import jax
import jax.numpy as jnp
from jax.experimental import pallas as pl
from jax.experimental.pallas import tpu as pltpu

# ----------------------------- synthetic BART config -------------------------
D_MODEL = 32
N_HEADS = 4
HEAD_DIM = D_MODEL // N_HEADS
ATT_SCALE = HEAD_DIM ** -0.5
D_FFN = 64
VOCAB = 128
ENC_LAYERS = 2
DEC_LAYERS = 2
MAX_POS = 32            # bart.config.max_position_embeddings
POS_OFFSET = 2          # BartLearnedPositionalEmbedding offset
PAD_ID = 1
BOS_ID = 0
EOS_ID = 2
DEC_START_ID = 2        # bart.config.decoder_start_token_id
NOFACT_ID = 5
ENC_PREFIX = 1
DEC_PREFIX = 1          # TODO(synk): dec_prefix is created in __init__ but never used in forward()
PREFIX_AGGR = "concat"
NEG_INF = -1e9
LN_EPS = 1e-5

# Ordered names of the packed weight arrays passed to the fused kernel.
_WEIGHT_NAMES = (
    "enc_ln_emb",
    "e_wqkv", "e_bqkv", "e_wo", "e_bo", "e_ln1",
    "e_w1", "e_b1", "e_w2", "e_b2", "e_ln2",
    "dec_ln_emb",
    "d_wqkv", "d_bqkv", "d_wo", "d_bo", "d_ln1",
    "d_wq_c", "d_bq_c", "d_wkv_c", "d_bkv_c", "d_wo_c", "d_bo_c", "d_ln2",
    "d_w1", "d_b1", "d_w2", "d_b2", "d_ln3",
    "clf_w", "clf_b", "lm_w", "lm_b",
)


# ------------------------------ in-kernel helpers ------------------------------
def _ln_f(x, gb):
    """LayerNorm. x: (N, D); gb: (2, D) with gamma row 0, beta row 1."""
    g = gb[0:1, :]
    b = gb[1:2, :]
    mu = jnp.mean(x, axis=-1, keepdims=True)
    var = jnp.mean((x - mu) ** 2, axis=-1, keepdims=True)
    return (x - mu) * jax.lax.rsqrt(var + LN_EPS) * g + b


def _softmax_rows(s):
    m = jnp.max(s, axis=-1, keepdims=True)
    e = jnp.exp(s - m)
    return e * pl.reciprocal(jnp.sum(e, axis=-1, keepdims=True), approx=True)


def _log_softmax_rows(x):
    m = jnp.max(x, axis=-1, keepdims=True)
    lse = jnp.log(jnp.sum(jnp.exp(x - m), axis=-1, keepdims=True)) + m
    return x - lse


def _gelu(x):
    # TODO(synk): HF BART uses exact (erf) GELU; tanh approximation keeps it on the EUP.
    return 0.5 * x * (1.0 + jnp.tanh(0.7978845608028654 * (x + 0.044715 * x * x * x)))


def _mha(q, k, v, wo, bo, mask_add):
    """Multi-head attention with the output projection folded into the head loop.

    q: (Sq, D), k/v: (Sk, D), wo: (D, D), bo: (1, D),
    mask_add: additive mask broadcastable to (Sq, Sk) or None.
    """
    out = bo
    for h in range(N_HEADS):
        sl = slice(h * HEAD_DIM, (h + 1) * HEAD_DIM)
        qh = q[:, sl]
        kh = k[:, sl]
        vh = v[:, sl]
        s = jax.lax.dot_general(qh, kh, (((1,), (1,)), ((), ())),
                                preferred_element_type=jnp.float32) * ATT_SCALE
        if mask_add is not None:
            s = s + mask_add
        p = _softmax_rows(s)
        oh = jnp.dot(p, vh, preferred_element_type=jnp.float32)
        out = out + jnp.dot(oh, wo[sl, :], preferred_element_type=jnp.float32)
    return out


# ------------------------------- fused forward kernel --------------------------
def _prefix_bart_kernel(x_enc_ref, x_dec_ref, kmask_ref, *refs):
    w = dict(zip(_WEIGHT_NAMES, refs[: len(_WEIGHT_NAMES)]))
    fact_ref, lm_ref = refs[len(_WEIGHT_NAMES):]

    # ------------------------------- encoder -------------------------------
    x = x_enc_ref[0]                                  # (S, D), prefix+emb+pos already added
    x = _ln_f(x, w["enc_ln_emb"][...])                # layernorm_embedding (post-LN BART)
    enc_mask = kmask_ref[0]                           # (1, S) additive key-padding mask

    for l in range(ENC_LAYERS):
        qkv = jnp.dot(x, w["e_wqkv"][l], preferred_element_type=jnp.float32) + w["e_bqkv"][l]
        q = qkv[:, :D_MODEL]
        k = qkv[:, D_MODEL:2 * D_MODEL]
        v = qkv[:, 2 * D_MODEL:]
        h = _mha(q, k, v, w["e_wo"][l], w["e_bo"][l], enc_mask)
        x = _ln_f(x + h, w["e_ln1"][l])
        hh = _gelu(jnp.dot(x, w["e_w1"][l], preferred_element_type=jnp.float32) + w["e_b1"][l])
        hh = jnp.dot(hh, w["e_w2"][l], preferred_element_type=jnp.float32) + w["e_b2"][l]
        x = _ln_f(x + hh, w["e_ln2"][l])
    enc_h = x                                         # (S, D)

    # -------------- classifier (prefix_aggr='concat') + log_softmax --------------
    # cls = concat(enc_h[0..ENC_PREFIX]) @ clf_w  ==  sum_i enc_h[i] @ clf_w[i*D:(i+1)*D]
    cw = w["clf_w"][...]                              # ((ENC_PREFIX+1)*D, 2)
    fact_logits = w["clf_b"][...]                     # (1, 2)
    for i in range(ENC_PREFIX + 1):
        fact_logits = fact_logits + jnp.dot(
            enc_h[i:i + 1, :], cw[i * D_MODEL:(i + 1) * D_MODEL, :],
            preferred_element_type=jnp.float32)
    fact_ref[0] = _log_softmax_rows(fact_logits)

    # ------------------------------- decoder -------------------------------
    y = x_dec_ref[0]                                  # (T, D), emb+pos already added
    T = y.shape[0]
    y = _ln_f(y, w["dec_ln_emb"][...])

    row = jax.lax.broadcasted_iota(jnp.int32, (T, T), 0)
    col = jax.lax.broadcasted_iota(jnp.int32, (T, T), 1)
    causal = jnp.where(col <= row, 0.0, NEG_INF).astype(jnp.float32)

    for l in range(DEC_LAYERS):
        # masked self-attention
        qkv = jnp.dot(y, w["d_wqkv"][l], preferred_element_type=jnp.float32) + w["d_bqkv"][l]
        q = qkv[:, :D_MODEL]
        k = qkv[:, D_MODEL:2 * D_MODEL]
        v = qkv[:, 2 * D_MODEL:]
        h = _mha(q, k, v, w["d_wo"][l], w["d_bo"][l], causal)
        y = _ln_f(y + h, w["d_ln1"][l])

        # cross-attention (unmasked: forward() passes no attention_mask to bart())
        qc = jnp.dot(y, w["d_wq_c"][l], preferred_element_type=jnp.float32) + w["d_bq_c"][l]
        kvc = jnp.dot(enc_h, w["d_wkv_c"][l], preferred_element_type=jnp.float32) + w["d_bkv_c"][l]
        kc = kvc[:, :D_MODEL]
        vc = kvc[:, D_MODEL:]
        h = _mha(qc, kc, vc, w["d_wo_c"][l], w["d_bo_c"][l], None)
        y = _ln_f(y + h, w["d_ln2"][l])

        # FFN
        hh = _gelu(jnp.dot(y, w["d_w1"][l], preferred_element_type=jnp.float32) + w["d_b1"][l])
        hh = jnp.dot(hh, w["d_w2"][l], preferred_element_type=jnp.float32) + w["d_b2"][l]
        y = _ln_f(y + hh, w["d_ln3"][l])

    # ------------- tied lm_head + final_logits_bias + log_softmax (fused) -------------
    lm_logits = jnp.dot(y, w["lm_w"][...], preferred_element_type=jnp.float32) + w["lm_b"][...]
    lm_ref[0] = _log_softmax_rows(lm_logits)


# ------------------------------- wrapper glue ---------------------------------
def _full_spec(a):
    nd = a.ndim
    return pl.BlockSpec(a.shape, lambda b, _nd=nd: (0,) * _nd)


def shift_tokens_right(labels):
    B = labels.shape[0]
    start = jnp.full((B, 1), DEC_START_ID, labels.dtype)
    shifted = jnp.concatenate([start, labels[:, :-1]], axis=1)
    return jnp.where(shifted == -100, PAD_ID, shifted)


def prefix_bart_forward(packed, input_ids, attention_mask, labels):
    """Returns (fact_logprobs (B,2), lm_logprobs (B,T,VOCAB)) exactly as PrefixBart.forward."""
    B, L = input_ids.shape
    trunc_L = MAX_POS - ENC_PREFIX

    # ---- plain-JAX glue: embedding gathers, prefix concat, positions, masks ----
    inp_emb = jnp.take(packed["shared"], input_ids[:, :trunc_L], axis=0)       # (B, L', D)
    prefix = jnp.broadcast_to(packed["enc_prefix"][None], (B, ENC_PREFIX, D_MODEL))
    x_enc = jnp.concatenate([prefix, inp_emb], axis=1)                          # (B, S, D)
    S = x_enc.shape[1]
    x_enc = x_enc + packed["enc_pos"][POS_OFFSET:POS_OFFSET + S][None]

    am = jnp.concatenate(
        [jnp.ones((B, ENC_PREFIX), attention_mask.dtype), attention_mask[:, :trunc_L]], axis=1)
    kmask = ((1.0 - am.astype(jnp.float32)) * NEG_INF)[:, None, :]              # (B, 1, S)

    dec_ids = shift_tokens_right(labels)
    T = labels.shape[1]
    x_dec = jnp.take(packed["shared"], dec_ids, axis=0)
    x_dec = x_dec + packed["dec_pos"][POS_OFFSET:POS_OFFSET + T][None]          # (B, T, D)

    weights = [packed[name] for name in _WEIGHT_NAMES]

    in_specs = [
        pl.BlockSpec((1, S, D_MODEL), lambda b: (b, 0, 0)),
        pl.BlockSpec((1, T, D_MODEL), lambda b: (b, 0, 0)),
        pl.BlockSpec((1, 1, S), lambda b: (b, 0, 0)),
    ] + [_full_spec(a) for a in weights]

    fact3, lm = pl.pallas_call(
        _prefix_bart_kernel,
        out_shape=(jax.ShapeDtypeStruct((B, 1, 2), jnp.float32),
                   jax.ShapeDtypeStruct((B, T, VOCAB), jnp.float32)),
        grid=(B,),
        in_specs=in_specs,
        out_specs=(pl.BlockSpec((1, 1, 2), lambda b: (b, 0, 0)),
                   pl.BlockSpec((1, T, VOCAB), lambda b: (b, 0, 0))),
        compiler_params=pltpu.CompilerParams(dimension_semantics=("parallel",)),
    )(x_enc, x_dec, kmask, *weights)

    return fact3[:, 0, :], lm


# ------------------------------ deterministic init ------------------------------
def init_params(seed=0):
    key_holder = [jax.random.PRNGKey(seed)]

    def nk():
        key_holder[0], sub = jax.random.split(key_holder[0])
        return sub

    def w(shape, scale=0.02):
        return jax.random.normal(nk(), shape, jnp.float32) * scale

    def ln():
        return {"g": jnp.ones((D_MODEL,), jnp.float32), "b": jnp.zeros((D_MODEL,), jnp.float32)}

    def attn_params():
        return {
            "wq": w((D_MODEL, D_MODEL)), "bq": jnp.zeros((D_MODEL,), jnp.float32),
            "wk": w((D_MODEL, D_MODEL)), "bk": jnp.zeros((D_MODEL,), jnp.float32),
            "wv": w((D_MODEL, D_MODEL)), "bv": jnp.zeros((D_MODEL,), jnp.float32),
            "wo": w((D_MODEL, D_MODEL)), "bo": jnp.zeros((D_MODEL,), jnp.float32),
        }

    def enc_layer():
        return {"self_attn": attn_params(), "ln1": ln(),
                "w1": w((D_MODEL, D_FFN)), "b1": jnp.zeros((D_FFN,), jnp.float32),
                "w2": w((D_FFN, D_MODEL)), "b2": jnp.zeros((D_MODEL,), jnp.float32),
                "ln2": ln()}

    def dec_layer():
        return {"self_attn": attn_params(), "ln1": ln(),
                "cross_attn": attn_params(), "ln2": ln(),
                "w1": w((D_MODEL, D_FFN)), "b1": jnp.zeros((D_FFN,), jnp.float32),
                "w2": w((D_FFN, D_MODEL)), "b2": jnp.zeros((D_MODEL,), jnp.float32),
                "ln3": ln()}

    return {
        "shared": w((VOCAB, D_MODEL)),
        "enc_pos": w((MAX_POS + POS_OFFSET, D_MODEL)),
        "dec_pos": w((MAX_POS + POS_OFFSET, D_MODEL)),
        "enc_ln_emb": ln(),
        "dec_ln_emb": ln(),
        "enc_layers": [enc_layer() for _ in range(ENC_LAYERS)],
        "dec_layers": [dec_layer() for _ in range(DEC_LAYERS)],
        "enc_prefix": w((ENC_PREFIX, D_MODEL)),
        "dec_prefix": w((DEC_PREFIX, D_MODEL)),
        "clf_w": w((D_MODEL * (ENC_PREFIX + 1), 2)),
        "clf_b": jnp.zeros((2,), jnp.float32),
        "final_logits_bias": jnp.zeros((VOCAB,), jnp.float32),
    }


def pack_params(p):
    """Repack per-layer dicts into layer-stacked arrays (pure re-layout, same math)."""
    def ln2(d):
        return jnp.stack([d["g"], d["b"]])                                   # (2, D)

    def qkv_w(a):
        return jnp.concatenate([a["wq"], a["wk"], a["wv"]], axis=1)          # (D, 3D)

    def qkv_b(a):
        return jnp.concatenate([a["bq"], a["bk"], a["bv"]])[None, :]         # (1, 3D)

    enc, dec = p["enc_layers"], p["dec_layers"]
    packed = {
        # arrays used only by the plain-JAX embedding glue
        "shared": p["shared"],
        "enc_pos": p["enc_pos"],
        "dec_pos": p["dec_pos"],
        "enc_prefix": p["enc_prefix"],
        # kernel weights (layer-stacked)
        "enc_ln_emb": ln2(p["enc_ln_emb"]),
        "dec_ln_emb": ln2(p["dec_ln_emb"]),
        "e_wqkv": jnp.stack([qkv_w(l["self_attn"]) for l in enc]),
        "e_bqkv": jnp.stack([qkv_b(l["self_attn"]) for l in enc]),
        "e_wo": jnp.stack([l["self_attn"]["wo"] for l in enc]),
        "e_bo": jnp.stack([l["self_attn"]["bo"][None, :] for l in enc]),
        "e_ln1": jnp.stack([ln2(l["ln1"]) for l in enc]),
        "e_w1": jnp.stack([l["w1"] for l in enc]),
        "e_b1": jnp.stack([l["b1"][None, :] for l in enc]),
        "e_w2": jnp.stack([l["w2"] for l in enc]),
        "e_b2": jnp.stack([l["b2"][None, :] for l in enc]),
        "e_ln2": jnp.stack([ln2(l["ln2"]) for l in enc]),
        "d_wqkv": jnp.stack([qkv_w(l["self_attn"]) for l in dec]),
        "d_bqkv": jnp.stack([qkv_b(l["self_attn"]) for l in dec]),
        "d_wo": jnp.stack([l["self_attn"]["wo"] for l in dec]),
        "d_bo": jnp.stack([l["self_attn"]["bo"][None, :] for l in dec]),
        "d_ln1": jnp.stack([ln2(l["ln1"]) for l in dec]),
        "d_wq_c": jnp.stack([l["cross_attn"]["wq"] for l in dec]),
        "d_bq_c": jnp.stack([l["cross_attn"]["bq"][None, :] for l in dec]),
        "d_wkv_c": jnp.stack(
            [jnp.concatenate([l["cross_attn"]["wk"], l["cross_attn"]["wv"]], axis=1) for l in dec]),
        "d_bkv_c": jnp.stack(
            [jnp.concatenate([l["cross_attn"]["bk"], l["cross_attn"]["bv"]])[None, :] for l in dec]),
        "d_wo_c": jnp.stack([l["cross_attn"]["wo"] for l in dec]),
        "d_bo_c": jnp.stack([l["cross_attn"]["bo"][None, :] for l in dec]),
        "d_ln2": jnp.stack([ln2(l["ln2"]) for l in dec]),
        "d_w1": jnp.stack([l["w1"] for l in dec]),
        "d_b1": jnp.stack([l["b1"][None, :] for l in dec]),
        "d_w2": jnp.stack([l["w2"] for l in dec]),
        "d_b2": jnp.stack([l["b2"][None, :] for l in dec]),
        "d_ln3": jnp.stack([ln2(l["ln3"]) for l in dec]),
        "clf_w": p["clf_w"],
        "clf_b": p["clf_b"][None, :],
        "lm_w": p["shared"].T,                       # tied lm_head, transposed once
        "lm_b": p["final_logits_bias"][None, :],
    }
    return packed


# ------------------------------------ main ------------------------------------
if __name__ == "__main__":
    params = init_params(0)
    packed = pack_params(params)

    key = jax.random.PRNGKey(0)
    k1, k2 = jax.random.split(key)

    B, L = 2, 8
    input_ids = jax.random.randint(k1, (B, L), 0, VOCAB, dtype=jnp.int32)
    attention_mask = jnp.ones((B, L), dtype=jnp.int32).at[1, -2:].set(0)
    labels = jax.random.randint(k2, (B, L), 0, VOCAB, dtype=jnp.int32)

    fwd = jax.jit(prefix_bart_forward)
    fact_logprobs, lm_logprobs = fwd(packed, input_ids, attention_mask, labels)
    jax.block_until_ready((fact_logprobs, lm_logprobs))

    assert fact_logprobs.shape == (B, 2)
    assert lm_logprobs.shape == (B, L, VOCAB)
    assert bool(jnp.all(jnp.isfinite(fact_logprobs))) and bool(jnp.all(jnp.isfinite(lm_logprobs)))
    print("KERNEL_OK")
</pallas_src>

<mosaic_0001>
module attributes {stable_mosaic.version = 11 : i64} {
  func.func @_prefix_bart_kernel(%arg0: i32, %arg1: memref<1x9x32xf32, #tpu.memory_space<vmem>>, %arg2: memref<1x8x32xf32, #tpu.memory_space<vmem>>, %arg3: memref<1x1x9xf32, #tpu.memory_space<vmem>>, %arg4: memref<2x32xf32, #tpu.memory_space<vmem>>, %arg5: memref<2x32x96xf32, #tpu.memory_space<vmem>>, %arg6: memref<2x1x96xf32, #tpu.memory_space<vmem>>, %arg7: memref<2x32x32xf32, #tpu.memory_space<vmem>>, %arg8: memref<2x1x32xf32, #tpu.memory_space<vmem>>, %arg9: memref<2x2x32xf32, #tpu.memory_space<vmem>>, %arg10: memref<2x32x64xf32, #tpu.memory_space<vmem>>, %arg11: memref<2x1x64xf32, #tpu.memory_space<vmem>>, %arg12: memref<2x64x32xf32, #tpu.memory_space<vmem>>, %arg13: memref<2x1x32xf32, #tpu.memory_space<vmem>>, %arg14: memref<2x2x32xf32, #tpu.memory_space<vmem>>, %arg15: memref<2x32xf32, #tpu.memory_space<vmem>>, %arg16: memref<2x32x96xf32, #tpu.memory_space<vmem>>, %arg17: memref<2x1x96xf32, #tpu.memory_space<vmem>>, %arg18: memref<2x32x32xf32, #tpu.memory_space<vmem>>, %arg19: memref<2x1x32xf32, #tpu.memory_space<vmem>>, %arg20: memref<2x2x32xf32, #tpu.memory_space<vmem>>, %arg21: memref<2x32x32xf32, #tpu.memory_space<vmem>>, %arg22: memref<2x1x32xf32, #tpu.memory_space<vmem>>, %arg23: memref<2x32x64xf32, #tpu.memory_space<vmem>>, %arg24: memref<2x1x64xf32, #tpu.memory_space<vmem>>, %arg25: memref<2x32x32xf32, #tpu.memory_space<vmem>>, %arg26: memref<2x1x32xf32, #tpu.memory_space<vmem>>, %arg27: memref<2x2x32xf32, #tpu.memory_space<vmem>>, %arg28: memref<2x32x64xf32, #tpu.memory_space<vmem>>, %arg29: memref<2x1x64xf32, #tpu.memory_space<vmem>>, %arg30: memref<2x64x32xf32, #tpu.memory_space<vmem>>, %arg31: memref<2x1x32xf32, #tpu.memory_space<vmem>>, %arg32: memref<2x2x32xf32, #tpu.memory_space<vmem>>, %arg33: memref<64x2xf32, #tpu.memory_space<vmem>>, %arg34: memref<1x2xf32, #tpu.memory_space<vmem>>, %arg35: memref<32x128xf32, #tpu.memory_space<vmem>>, %arg36: memref<1x128xf32, #tpu.memory_space<vmem>>, %arg37: memref<1x1x2xf32, #tpu.memory_space<vmem>>, %arg38: memref<1x8x128xf32, #tpu.memory_space<vmem>>) attributes {dimension_semantics = [#tpu.dimension_semantics<parallel>], iteration_bounds = array<i64: 2>, scalar_prefetch = 0 : i64, scratch_operands = 0 : i64, tpu.core_type = #tpu.core_type<tc>, window_params = [{transform_indices = @transform_0, window_bounds = array<i64: 1, 9, 32>}, {transform_indices = @transform_1, window_bounds = array<i64: 1, 8, 32>}, {transform_indices = @transform_2, window_bounds = array<i64: 1, 1, 9>}, {pipeline_mode = #tpu.pipeline_mode<synchronous>, transform_indices = @transform_3, window_bounds = array<i64: 2, 32>}, {pipeline_mode = #tpu.pipeline_mode<synchronous>, transform_indices = @transform_4, window_bounds = array<i64: 2, 32, 96>}, {pipeline_mode = #tpu.pipeline_mode<synchronous>, transform_indices = @transform_5, window_bounds = array<i64: 2, 1, 96>}, {pipeline_mode = #tpu.pipeline_mode<synchronous>, transform_indices = @transform_6, window_bounds = array<i64: 2, 32, 32>}, {pipeline_mode = #tpu.pipeline_mode<synchronous>, transform_indices = @transform_7, window_bounds = array<i64: 2, 1, 32>}, {pipeline_mode = #tpu.pipeline_mode<synchronous>, transform_indices = @transform_8, window_bounds = array<i64: 2, 2, 32>}, {pipeline_mode = #tpu.pipeline_mode<synchronous>, transform_indices = @transform_9, window_bounds = array<i64: 2, 32, 64>}, {pipeline_mode = #tpu.pipeline_mode<synchronous>, transform_indices = @transform_10, window_bounds = array<i64: 2, 1, 64>}, {pipeline_mode = #tpu.pipeline_mode<synchronous>, transform_indices = @transform_11, window_bounds = array<i64: 2, 64, 32>}, {pipeline_mode = #tpu.pipeline_mode<synchronous>, transform_indices = @transform_12, window_bounds = array<i64: 2, 1, 32>}, {pipeline_mode = #tpu.pipeline_mode<synchronous>, transform_indices = @transform_13, window_bounds = array<i64: 2, 2, 32>}, {pipeline_mode = #tpu.pipeline_mode<synchronous>, transform_indices = @transform_14, window_bounds = array<i64: 2, 32>}, {pipeline_mode = #tpu.pipeline_mode<synchronous>, transform_indices = @transform_15, window_bounds = array<i64: 2, 32, 96>}, {pipeline_mode = #tpu.pipeline_mode<synchronous>, transform_indices = @transform_16, window_bounds = array<i64: 2, 1, 96>}, {pipeline_mode = #tpu.pipeline_mode<synchronous>, transform_indices = @transform_17, window_bounds = array<i64: 2, 32, 32>}, {pipeline_mode = #tpu.pipeline_mode<synchronous>, transform_indices = @transform_18, window_bounds = array<i64: 2, 1, 32>}, {pipeline_mode = #tpu.pipeline_mode<synchronous>, transform_indices = @transform_19, window_bounds = array<i64: 2, 2, 32>}, {pipeline_mode = #tpu.pipeline_mode<synchronous>, transform_indices = @transform_20, window_bounds = array<i64: 2, 32, 32>}, {pipeline_mode = #tpu.pipeline_mode<synchronous>, transform_indices = @transform_21, window_bounds = array<i64: 2, 1, 32>}, {pipeline_mode = #tpu.pipeline_mode<synchronous>, transform_indices = @transform_22, window_bounds = array<i64: 2, 32, 64>}, {pipeline_mode = #tpu.pipeline_mode<synchronous>, transform_indices = @transform_23, window_bounds = array<i64: 2, 1, 64>}, {pipeline_mode = #tpu.pipeline_mode<synchronous>, transform_indices = @transform_24, window_bounds = array<i64: 2, 32, 32>}, {pipeline_mode = #tpu.pipeline_mode<synchronous>, transform_indices = @transform_25, window_bounds = array<i64: 2, 1, 32>}, {pipeline_mode = #tpu.pipeline_mode<synchronous>, transform_indices = @transform_26, window_bounds = array<i64: 2, 2, 32>}, {pipeline_mode = #tpu.pipeline_mode<synchronous>, transform_indices = @transform_27, window_bounds = array<i64: 2, 32, 64>}, {pipeline_mode = #tpu.pipeline_mode<synchronous>, transform_indices = @transform_28, window_bounds = array<i64: 2, 1, 64>}, {pipeline_mode = #tpu.pipeline_mode<synchronous>, transform_indices = @transform_29, window_bounds = array<i64: 2, 64, 32>}, {pipeline_mode = #tpu.pipeline_mode<synchronous>, transform_indices = @transform_30, window_bounds = array<i64: 2, 1, 32>}, {pipeline_mode = #tpu.pipeline_mode<synchronous>, transform_indices = @transform_31, window_bounds = array<i64: 2, 2, 32>}, {pipeline_mode = #tpu.pipeline_mode<synchronous>, transform_indices = @transform_32, window_bounds = array<i64: 64, 2>}, {pipeline_mode = #tpu.pipeline_mode<synchronous>, transform_indices = @transform_33, window_bounds = array<i64: 1, 2>}, {pipeline_mode = #tpu.pipeline_mode<synchronous>, transform_indices = @transform_34, window_bounds = array<i64: 32, 128>}, {pipeline_mode = #tpu.pipeline_mode<synchronous>, transform_indices = @transform_35, window_bounds = array<i64: 1, 128>}, {transform_indices = @transform_36, window_bounds = array<i64: 1, 1, 2>}, {transform_indices = @transform_37, window_bounds = array<i64: 1, 8, 128>}]} {
    %c0 = arith.constant 0 : index
    %c0_0 = arith.constant 0 : index
    %c0_1 = arith.constant 0 : index
    %0 = vector.load %arg1[%c0, %c0_0, %c0_1] : memref<1x9x32xf32, #tpu.memory_space<vmem>>, vector<1x9x32xf32>
    %1 = vector.shape_cast %0 : vector<1x9x32xf32> to vector<9x32xf32>
    %c0_2 = arith.constant 0 : index
    %c0_3 = arith.constant 0 : index
    %2 = vector.load %arg4[%c0_2, %c0_3] : memref<2x32xf32, #tpu.memory_space<vmem>>, vector<2x32xf32>
    %3 = vector.extract_strided_slice %2 {offsets = [0, 0], sizes = [1, 32], strides = [1, 1]} : vector<2x32xf32> to vector<1x32xf32>
    %4 = vector.extract_strided_slice %2 {offsets = [1, 0], sizes = [1, 32], strides = [1, 1]} : vector<2x32xf32> to vector<1x32xf32>
    %cst = arith.constant dense<0.000000e+00> : vector<9xf32>
    %5 = vector.multi_reduction <add>, %1, %cst [1] : vector<9x32xf32> to vector<9xf32>
    %6 = vector.shape_cast %5 : vector<9xf32> to vector<9x1xf32>
    %cst_4 = arith.constant 3.200000e+01 : f32
    %7 = vector.broadcast %cst_4 : f32 to vector<9x1xf32>
    %8 = arith.divf %6, %7 : vector<9x1xf32>
    %9 = vector.broadcast %8 : vector<9x1xf32> to vector<9x32xf32>
    %10 = arith.subf %1, %9 : vector<9x32xf32>
    %11 = arith.mulf %10, %10 : vector<9x32xf32>
    %cst_5 = arith.constant dense<0.000000e+00> : vector<9xf32>
    %12 = vector.multi_reduction <add>, %11, %cst_5 [1] : vector<9x32xf32> to vector<9xf32>
    %13 = vector.shape_cast %12 : vector<9xf32> to vector<9x1xf32>
    %cst_6 = arith.constant 3.200000e+01 : f32
    %14 = vector.broadcast %cst_6 : f32 to vector<9x1xf32>
    %15 = arith.divf %13, %14 : vector<9x1xf32>
    %16 = vector.broadcast %8 : vector<9x1xf32> to vector<9x32xf32>
    %17 = arith.subf %1, %16 : vector<9x32xf32>
    %cst_7 = arith.constant 9.99999974E-6 : f32
    %18 = vector.broadcast %cst_7 : f32 to vector<9x1xf32>
    %19 = arith.addf %15, %18 : vector<9x1xf32>
    %20 = math.rsqrt %19 : vector<9x1xf32>
    %21 = vector.broadcast %20 : vector<9x1xf32> to vector<9x32xf32>
    %22 = arith.mulf %17, %21 : vector<9x32xf32>
    %23 = vector.broadcast %3 : vector<1x32xf32> to vector<9x32xf32>
    %24 = arith.mulf %22, %23 : vector<9x32xf32>
    %25 = vector.broadcast %4 : vector<1x32xf32> to vector<9x32xf32>
    %26 = arith.addf %24, %25 : vector<9x32xf32>
    %c0_8 = arith.constant 0 : index
    %c0_9 = arith.constant 0 : index
    %c0_10 = arith.constant 0 : index
    %27 = vector.load %arg3[%c0_8, %c0_9, %c0_10] : memref<1x1x9xf32, #tpu.memory_space<vmem>>, vector<1x1x9xf32>
    %28 = vector.shape_cast %27 : vector<1x1x9xf32> to vector<1x9xf32>
    %c0_11 = arith.constant 0 : index
    %c0_12 = arith.constant 0 : index
    %c0_13 = arith.constant 0 : index
    %29 = vector.load %arg5[%c0_11, %c0_12, %c0_13] : memref<2x32x96xf32, #tpu.memory_space<vmem>>, vector<1x32x96xf32>
    %30 = vector.shape_cast %29 : vector<1x32x96xf32> to vector<32x96xf32>
    %cst_14 = arith.constant dense<0.000000e+00> : vector<9x96xf32>
    %31 = tpu.matmul %26, %30, %cst_14 {dimension_numbers = #tpu.dot_dimension_numbers<[1], [0], [0], [1], [0, 0, 1, 1], [], []>} : vector<9x32xf32>, vector<32x96xf32>, vector<9x96xf32> -> vector<9x96xf32>
    %c0_15 = arith.constant 0 : index
    %c0_16 = arith.constant 0 : index
    %c0_17 = arith.constant 0 : index
    %32 = vector.load %arg6[%c0_15, %c0_16, %c0_17] : memref<2x1x96xf32, #tpu.memory_space<vmem>>, vector<1x1x96xf32>
    %33 = vector.shape_cast %32 : vector<1x1x96xf32> to vector<1x96xf32>
    %34 = vector.broadcast %33 : vector<1x96xf32> to vector<9x96xf32>
    %35 = arith.addf %31, %34 : vector<9x96xf32>
    %36 = vector.extract_strided_slice %35 {offsets = [0, 0], sizes = [9, 32], strides = [1, 1]} : vector<9x96xf32> to vector<9x32xf32>
    %37 = vector.extract_strided_slice %35 {offsets = [0, 32], sizes = [9, 32], strides = [1, 1]} : vector<9x96xf32> to vector<9x32xf32>
    %38 = vector.extract_strided_slice %35 {offsets = [0, 64], sizes = [9, 32], strides = [1, 1]} : vector<9x96xf32> to vector<9x32xf32>
    %c0_18 = arith.constant 0 : index
    %c0_19 = arith.constant 0 : index
    %c0_20 = arith.constant 0 : index
    %39 = vector.load %arg7[%c0_18, %c0_19, %c0_20] : memref<2x32x32xf32, #tpu.memory_space<vmem>>, vector<1x32x32xf32>
    %40 = vector.shape_cast %39 : vector<1x32x32xf32> to vector<32x32xf32>
    %c0_21 = arith.constant 0 : index
    %c0_22 = arith.constant 0 : index
    %c0_23 = arith.constant 0 : index
    %41 = vector.load %arg8[%c0_21, %c0_22, %c0_23] : memref<2x1x32xf32, #tpu.memory_space<vmem>>, vector<1x1x32xf32>
    %42 = vector.shape_cast %41 : vector<1x1x32xf32> to vector<1x32xf32>
    %43 = vector.extract_strided_slice %36 {offsets = [0, 0], sizes = [9, 8], strides = [1, 1]} : vector<9x32xf32> to vector<9x8xf32>
    %44 = vector.extract_strided_slice %37 {offsets = [0, 0], sizes = [9, 8], strides = [1, 1]} : vector<9x32xf32> to vector<9x8xf32>
    %45 = vector.extract_strided_slice %38 {offsets = [0, 0], sizes = [9, 8], strides = [1, 1]} : vector<9x32xf32> to vector<9x8xf32>
    %cst_24 = arith.constant dense<0.000000e+00> : vector<9x9xf32>
    %46 = tpu.matmul %43, %44, %cst_24 {dimension_numbers = #tpu.dot_dimension_numbers<[1], [1], [0], [0], [0, 0, 1, 0], [], []>} : vector<9x8xf32>, vector<9x8xf32>, vector<9x9xf32> -> vector<9x9xf32>
    %cst_25 = arith.constant 0.353553385 : f32
    %47 = vector.broadcast %cst_25 : f32 to vector<9x9xf32>
    %48 = arith.mulf %46, %47 : vector<9x9xf32>
    %49 = vector.broadcast %28 : vector<1x9xf32> to vector<9x9xf32>
    %50 = arith.addf %48, %49 : vector<9x9xf32>
    %cst_26 = arith.constant dense<0xFF800000> : vector<9xf32>
    %51 = vector.multi_reduction <maximumf>, %50, %cst_26 [1] : vector<9x9xf32> to vector<9xf32>
    %52 = vector.shape_cast %51 : vector<9xf32> to vector<9x1xf32>
    %53 = vector.broadcast %52 : vector<9x1xf32> to vector<9x9xf32>
    %54 = arith.subf %50, %53 : vector<9x9xf32>
    %55 = math.exp %54 : vector<9x9xf32>
    %cst_27 = arith.constant dense<0.000000e+00> : vector<9xf32>
    %56 = vector.multi_reduction <add>, %55, %cst_27 [1] : vector<9x9xf32> to vector<9xf32>
    %57 = vector.shape_cast %56 : vector<9xf32> to vector<9x1xf32>
    %58 = tpu.reciprocal %57 {approx = true} : vector<9x1xf32> -> vector<9x1xf32>
    %59 = vector.broadcast %58 : vector<9x1xf32> to vector<9x9xf32>
    %60 = arith.mulf %55, %59 : vector<9x9xf32>
    %cst_28 = arith.constant dense<0.000000e+00> : vector<9x8xf32>
    %61 = tpu.matmul %60, %45, %cst_28 {dimension_numbers = #tpu.dot_dimension_numbers<[1], [0], [0], [1], [0, 0, 1, 1], [], []>} : vector<9x9xf32>, vector<9x8xf32>, vector<9x8xf32> -> vector<9x8xf32>
    %62 = vector.extract_strided_slice %40 {offsets = [0, 0], sizes = [8, 32], strides = [1, 1]} : vector<32x32xf32> to vector<8x32xf32>
    %cst_29 = arith.constant dense<0.000000e+00> : vector<9x32xf32>
    %63 = tpu.matmul %61, %62, %cst_29 {dimension_numbers = #tpu.dot_dimension_numbers<[1], [0], [0], [1], [0, 0, 1, 1], [], []>} : vector<9x8xf32>, vector<8x32xf32>, vector<9x32xf32> -> vector<9x32xf32>
    %64 = vector.broadcast %42 : vector<1x32xf32> to vector<9x32xf32>
    %65 = arith.addf %64, %63 : vector<9x32xf32>
    %66 = vector.extract_strided_slice %36 {offsets = [0, 8], sizes = [9, 8], strides = [1, 1]} : vector<9x32xf32> to vector<9x8xf32>
    %67 = vector.extract_strided_slice %37 {offsets = [0, 8], sizes = [9, 8], strides = [1, 1]} : vector<9x32xf32> to vector<9x8xf32>
    %68 = vector.extract_strided_slice %38 {offsets = [0, 8], sizes = [9, 8], strides = [1, 1]} : vector<9x32xf32> to vector<9x8xf32>
    %cst_30 = arith.constant dense<0.000000e+00> : vector<9x9xf32>
    %69 = tpu.matmul %66, %67, %cst_30 {dimension_numbers = #tpu.dot_dimension_numbers<[1], [1], [0], [0], [0, 0, 1, 0], [], []>} : vector<9x8xf32>, vector<9x8xf32>, vector<9x9xf32> -> vector<9x9xf32>
    %cst_31 = arith.constant 0.353553385 : f32
    %70 = vector.broadcast %cst_31 : f32 to vector<9x9xf32>
    %71 = arith.mulf %69, %70 : vector<9x9xf32>
    %72 = vector.broadcast %28 : vector<1x9xf32> to vector<9x9xf32>
    %73 = arith.addf %71, %72 : vector<9x9xf32>
    %cst_32 = arith.constant dense<0xFF800000> : vector<9xf32>
    %74 = vector.multi_reduction <maximumf>, %73, %cst_32 [1] : vector<9x9xf32> to vector<9xf32>
    %75 = vector.shape_cast %74 : vector<9xf32> to vector<9x1xf32>
    %76 = vector.broadcast %75 : vector<9x1xf32> to vector<9x9xf32>
    %77 = arith.subf %73, %76 : vector<9x9xf32>
    %78 = math.exp %77 : vector<9x9xf32>
    %cst_33 = arith.constant dense<0.000000e+00> : vector<9xf32>
    %79 = vector.multi_reduction <add>, %78, %cst_33 [1] : vector<9x9xf32> to vector<9xf32>
    %80 = vector.shape_cast %79 : vector<9xf32> to vector<9x1xf32>
    %81 = tpu.reciprocal %80 {approx = true} : vector<9x1xf32> -> vector<9x1xf32>
    %82 = vector.broadcast %81 : vector<9x1xf32> to vector<9x9xf32>
    %83 = arith.mulf %78, %82 : vector<9x9xf32>
    %cst_34 = arith.constant dense<0.000000e+00> : vector<9x8xf32>
    %84 = tpu.matmul %83, %68, %cst_34 {dimension_numbers = #tpu.dot_dimension_numbers<[1], [0], [0], [1], [0, 0, 1, 1], [], []>} : vector<9x9xf32>, vector<9x8xf32>, vector<9x8xf32> -> vector<9x8xf32>
    %85 = vector.extract_strided_slice %40 {offsets = [8, 0], sizes = [8, 32], strides = [1, 1]} : vector<32x32xf32> to vector<8x32xf32>
    %cst_35 = arith.constant dense<0.000000e+00> : vector<9x32xf32>
    %86 = tpu.matmul %84, %85, %cst_35 {dimension_numbers = #tpu.dot_dimension_numbers<[1], [0], [0], [1], [0, 0, 1, 1], [], []>} : vector<9x8xf32>, vector<8x32xf32>, vector<9x32xf32> -> vector<9x32xf32>
    %87 = arith.addf %65, %86 : vector<9x32xf32>
    %88 = vector.extract_strided_slice %36 {offsets = [0, 16], sizes = [9, 8], strides = [1, 1]} : vector<9x32xf32> to vector<9x8xf32>
    %89 = vector.extract_strided_slice %37 {offsets = [0, 16], sizes = [9, 8], strides = [1, 1]} : vector<9x32xf32> to vector<9x8xf32>
    %90 = vector.extract_strided_slice %38 {offsets = [0, 16], sizes = [9, 8], strides = [1, 1]} : vector<9x32xf32> to vector<9x8xf32>
    %cst_36 = arith.constant dense<0.000000e+00> : vector<9x9xf32>
    %91 = tpu.matmul %88, %89, %cst_36 {dimension_numbers = #tpu.dot_dimension_numbers<[1], [1], [0], [0], [0, 0, 1, 0], [], []>} : vector<9x8xf32>, vector<9x8xf32>, vector<9x9xf32> -> vector<9x9xf32>
    %cst_37 = arith.constant 0.353553385 : f32
    %92 = vector.broadcast %cst_37 : f32 to vector<9x9xf32>
    %93 = arith.mulf %91, %92 : vector<9x9xf32>
    %94 = vector.broadcast %28 : vector<1x9xf32> to vector<9x9xf32>
    %95 = arith.addf %93, %94 : vector<9x9xf32>
    %cst_38 = arith.constant dense<0xFF800000> : vector<9xf32>
    %96 = vector.multi_reduction <maximumf>, %95, %cst_38 [1] : vector<9x9xf32> to vector<9xf32>
    %97 = vector.shape_cast %96 : vector<9xf32> to vector<9x1xf32>
    %98 = vector.broadcast %97 : vector<9x1xf32> to vector<9x9xf32>
    %99 = arith.subf %95, %98 : vector<9x9xf32>
    %100 = math.exp %99 : vector<9x9xf32>
    %cst_39 = arith.constant dense<0.000000e+00> : vector<9xf32>
    %101 = vector.multi_reduction <add>, %100, %cst_39 [1] : vector<9x9xf32> to vector<9xf32>
    %102 = vector.shape_cast %101 : vector<9xf32> to vector<9x1xf32>
    %103 = tpu.reciprocal %102 {approx = true} : vector<9x1xf32> -> vector<9x1xf32>
    %104 = vector.broadcast %103 : vector<9x1xf32> to vector<9x9xf32>
    %105 = arith.mulf %100, %104 : vector<9x9xf32>
    %cst_40 = arith.constant dense<0.000000e+00> : vector<9x8xf32>
    %106 = tpu.matmul %105, %90, %cst_40 {dimension_numbers = #tpu.dot_dimension_numbers<[1], [0], [0], [1], [0, 0, 1, 1], [], []>} : vector<9x9xf32>, vector<9x8xf32>, vector<9x8xf32> -> vector<9x8xf32>
    %107 = vector.extract_strided_slice %40 {offsets = [16, 0], sizes = [8, 32], strides = [1, 1]} : vector<32x32xf32> to vector<8x32xf32>
    %cst_41 = arith.constant dense<0.000000e+00> : vector<9x32xf32>
    %108 = tpu.matmul %106, %107, %cst_41 {dimension_numbers = #tpu.dot_dimension_numbers<[1], [0], [0], [1], [0, 0, 1, 1], [], []>} : vector<9x8xf32>, vector<8x32xf32>, vector<9x32xf32> -> vector<9x32xf32>
    %109 = arith.addf %87, %108 : vector<9x32xf32>
    %110 = vector.extract_strided_slice %36 {offsets = [0, 24], sizes = [9, 8], strides = [1, 1]} : vector<9x32xf32> to vector<9x8xf32>
    %111 = vector.extract_strided_slice %37 {offsets = [0, 24], sizes = [9, 8], strides = [1, 1]} : vector<9x32xf32> to vector<9x8xf32>
    %112 = vector.extract_strided_slice %38 {offsets = [0, 24], sizes = [9, 8], strides = [1, 1]} : vector<9x32xf32> to vector<9x8xf32>
    %cst_42 = arith.constant dense<0.000000e+00> : vector<9x9xf32>
    %113 = tpu.matmul %110, %111, %cst_42 {dimension_numbers = #tpu.dot_dimension_numbers<[1], [1], [0], [0], [0, 0, 1, 0], [], []>} : vector<9x8xf32>, vector<9x8xf32>, vector<9x9xf32> -> vector<9x9xf32>
    %cst_43 = arith.constant 0.353553385 : f32
    %114 = vector.broadcast %cst_43 : f32 to vector<9x9xf32>
    %115 = arith.mulf %113, %114 : vector<9x9xf32>
    %116 = vector.broadcast %28 : vector<1x9xf32> to vector<9x9xf32>
    %117 = arith.addf %115, %116 : vector<9x9xf32>
    %cst_44 = arith.constant dense<0xFF800000> : vector<9xf32>
    %118 = vector.multi_reduction <maximumf>, %117, %cst_44 [1] : vector<9x9xf32> to vector<9xf32>
    %119 = vector.shape_cast %118 : vector<9xf32> to vector<9x1xf32>
    %120 = vector.broadcast %119 : vector<9x1xf32> to vector<9x9xf32>
    %121 = arith.subf %117, %120 : vector<9x9xf32>
    %122 = math.exp %121 : vector<9x9xf32>
    %cst_45 = arith.constant dense<0.000000e+00> : vector<9xf32>
    %123 = vector.multi_reduction <add>, %122, %cst_45 [1] : vector<9x9xf32> to vector<9xf32>
    %124 = vector.shape_cast %123 : vector<9xf32> to vector<9x1xf32>
    %125 = tpu.reciprocal %124 {approx = true} : vector<9x1xf32> -> vector<9x1xf32>
    %126 = vector.broadcast %125 : vector<9x1xf32> to vector<9x9xf32>
    %127 = arith.mulf %122, %126 : vector<9x9xf32>
    %cst_46 = arith.constant dense<0.000000e+00> : vector<9x8xf32>
    %128 = tpu.matmul %127, %112, %cst_46 {dimension_numbers = #tpu.dot_dimension_numbers<[1], [0], [0], [1], [0, 0, 1, 1], [], []>} : vector<9x9xf32>, vector<9x8xf32>, vector<9x8xf32> -> vector<9x8xf32>
    %129 = vector.extract_strided_slice %40 {offsets = [24, 0], sizes = [8, 32], strides = [1, 1]} : vector<32x32xf32> to vector<8x32xf32>
    %cst_47 = arith.constant dense<0.000000e+00> : vector<9x32xf32>
    %130 = tpu.matmul %128, %129, %cst_47 {dimension_numbers = #tpu.dot_dimension_numbers<[1], [0], [0], [1], [0, 0, 1, 1], [], []>} : vector<9x8xf32>, vector<8x32xf32>, vector<9x32xf32> -> vector<9x32xf32>
    %131 = arith.addf %109, %130 : vector<9x32xf32>
    %132 = arith.addf %26, %131 : vector<9x32xf32>
    %c0_48 = arith.constant 0 : index
    %c0_49 = arith.constant 0 : index
    %c0_50 = arith.constant 0 : index
    %133 = vector.load %arg9[%c0_48, %c0_49, %c0_50] : memref<2x2x32xf32, #tpu.memory_space<vmem>>, vector<1x2x32xf32>
    %134 = vector.shape_cast %133 : vector<1x2x32xf32> to vector<2x32xf32>
    %135 = vector.extract_strided_slice %134 {offsets = [0, 0], sizes = [1, 32], strides = [1, 1]} : vector<2x32xf32> to vector<1x32xf32>
    %136 = vector.extract_strided_slice %134 {offsets = [1, 0], sizes = [1, 32], strides = [1, 1]} : vector<2x32xf32> to vector<1x32xf32>
    %cst_51 = arith.constant dense<0.000000e+00> : vector<9xf32>
    %137 = vector.multi_reduction <add>, %132, %cst_51 [1] : vector<9x32xf32> to vector<9xf32>
    %138 = vector.shape_cast %137 : vector<9xf32> to vector<9x1xf32>
    %cst_52 = arith.constant 3.200000e+01 : f32
    %139 = vector.broadcast %cst_52 : f32 to vector<9x1xf32>
    %140 = arith.divf %138, %139 : vector<9x1xf32>
    %141 = vector.broadcast %140 : vector<9x1xf32> to vector<9x32xf32>
    %142 = arith.subf %132, %141 : vector<9x32xf32>
    %143 = arith.mulf %142, %142 : vector<9x32xf32>
    %cst_53 = arith.constant dense<0.000000e+00> : vector<9xf32>
    %144 = vector.multi_reduction <add>, %143, %cst_53 [1] : vector<9x32xf32> to vector<9xf32>
    %145 = vector.shape_cast %144 : vector<9xf32> to vector<9x1xf32>
    %cst_54 = arith.constant 3.200000e+01 : f32
    %146 = vector.broadcast %cst_54 : f32 to vector<9x1xf32>
    %147 = arith.divf %145, %146 : vector<9x1xf32>
    %148 = vector.broadcast %140 : vector<9x1xf32> to vector<9x32xf32>
    %149 = arith.subf %132, %148 : vector<9x32xf32>
    %cst_55 = arith.constant 9.99999974E-6 : f32
    %150 = vector.broadcast %cst_55 : f32 to vector<9x1xf32>
    %151 = arith.addf %147, %150 : vector<9x1xf32>
    %152 = math.rsqrt %151 : vector<9x1xf32>
    %153 = vector.broadcast %152 : vector<9x1xf32> to vector<9x32xf32>
    %154 = arith.mulf %149, %153 : vector<9x32xf32>
    %155 = vector.broadcast %135 : vector<1x32xf32> to vector<9x32xf32>
    %156 = arith.mulf %154, %155 : vector<9x32xf32>
    %157 = vector.broadcast %136 : vector<1x32xf32> to vector<9x32xf32>
    %158 = arith.addf %156, %157 : vector<9x32xf32>
    %c0_56 = arith.constant 0 : index
    %c0_57 = arith.constant 0 : index
    %c0_58 = arith.constant 0 : index
    %159 = vector.load %arg10[%c0_56, %c0_57, %c0_58] : memref<2x32x64xf32, #tpu.memory_space<vmem>>, vector<1x32x64xf32>
    %160 = vector.shape_cast %159 : vector<1x32x64xf32> to vector<32x64xf32>
    %cst_59 = arith.constant dense<0.000000e+00> : vector<9x64xf32>
    %161 = tpu.matmul %158, %160, %cst_59 {dimension_numbers = #tpu.dot_dimension_numbers<[1], [0], [0], [1], [0, 0, 1, 1], [], []>} : vector<9x32xf32>, vector<32x64xf32>, vector<9x64xf32> -> vector<9x64xf32>
    %c0_60 = arith.constant 0 : index
    %c0_61 = arith.constant 0 : index
    %c0_62 = arith.constant 0 : index
    %162 = vector.load %arg11[%c0_60, %c0_61, %c0_62] : memref<2x1x64xf32, #tpu.memory_space<vmem>>, vector<1x1x64xf32>
    %163 = vector.shape_cast %162 : vector<1x1x64xf32> to vector<1x64xf32>
    %164 = vector.broadcast %163 : vector<1x64xf32> to vector<9x64xf32>
    %165 = arith.addf %161, %164 : vector<9x64xf32>
    %cst_63 = arith.constant 5.000000e-01 : f32
    %166 = vector.broadcast %cst_63 : f32 to vector<9x64xf32>
    %167 = arith.mulf %166, %165 : vector<9x64xf32>
    %cst_64 = arith.constant 4.471500e-02 : f32
    %168 = vector.broadcast %cst_64 : f32 to vector<9x64xf32>
    %169 = arith.mulf %168, %165 : vector<9x64xf32>
    %170 = arith.mulf %169, %165 : vector<9x64xf32>
    %171 = arith.mulf %170, %165 : vector<9x64xf32>
    %172 = arith.addf %165, %171 : vector<9x64xf32>
    %cst_65 = arith.constant 0.797884583 : f32
    %173 = vector.broadcast %cst_65 : f32 to vector<9x64xf32>
    %174 = arith.mulf %173, %172 : vector<9x64xf32>
    %175 = math.tanh %174 : vector<9x64xf32>
    %cst_66 = arith.constant 1.000000e+00 : f32
    %176 = vector.broadcast %cst_66 : f32 to vector<9x64xf32>
    %177 = arith.addf %176, %175 : vector<9x64xf32>
    %178 = arith.mulf %167, %177 : vector<9x64xf32>
    %c0_67 = arith.constant 0 : index
    %c0_68 = arith.constant 0 : index
    %c0_69 = arith.constant 0 : index
    %179 = vector.load %arg12[%c0_67, %c0_68, %c0_69] : memref<2x64x32xf32, #tpu.memory_space<vmem>>, vector<1x64x32xf32>
    %180 = vector.shape_cast %179 : vector<1x64x32xf32> to vector<64x32xf32>
    %cst_70 = arith.constant dense<0.000000e+00> : vector<9x32xf32>
    %181 = tpu.matmul %178, %180, %cst_70 {dimension_numbers = #tpu.dot_dimension_numbers<[1], [0], [0], [1], [0, 0, 1, 1], [], []>} : vector<9x64xf32>, vector<64x32xf32>, vector<9x32xf32> -> vector<9x32xf32>
    %c0_71 = arith.constant 0 : index
    %c0_72 = arith.constant 0 : index
    %c0_73 = arith.constant 0 : index
    %182 = vector.load %arg13[%c0_71, %c0_72, %c0_73] : memref<2x1x32xf32, #tpu.memory_space<vmem>>, vector<1x1x32xf32>
    %183 = vector.shape_cast %182 : vector<1x1x32xf32> to vector<1x32xf32>
    %184 = vector.broadcast %183 : vector<1x32xf32> to vector<9x32xf32>
    %185 = arith.addf %181, %184 : vector<9x32xf32>
    %186 = arith.addf %158, %185 : vector<9x32xf32>
    %c0_74 = arith.constant 0 : index
    %c0_75 = arith.constant 0 : index
    %c0_76 = arith.constant 0 : index
    %187 = vector.load %arg14[%c0_74, %c0_75, %c0_76] : memref<2x2x32xf32, #tpu.memory_space<vmem>>, vector<1x2x32xf32>
    %188 = vector.shape_cast %187 : vector<1x2x32xf32> to vector<2x32xf32>
    %189 = vector.extract_strided_slice %188 {offsets = [0, 0], sizes = [1, 32], strides = [1, 1]} : vector<2x32xf32> to vector<1x32xf32>
    %190 = vector.extract_strided_slice %188 {offsets = [1, 0], sizes = [1, 32], strides = [1, 1]} : vector<2x32xf32> to vector<1x32xf32>
    %cst_77 = arith.constant dense<0.000000e+00> : vector<9xf32>
    %191 = vector.multi_reduction <add>, %186, %cst_77 [1] : vector<9x32xf32> to vector<9xf32>
    %192 = vector.shape_cast %191 : vector<9xf32> to vector<9x1xf32>
    %cst_78 = arith.constant 3.200000e+01 : f32
    %193 = vector.broadcast %cst_78 : f32 to vector<9x1xf32>
    %194 = arith.divf %192, %193 : vector<9x1xf32>
    %195 = vector.broadcast %194 : vector<9x1xf32> to vector<9x32xf32>
    %196 = arith.subf %186, %195 : vector<9x32xf32>
    %197 = arith.mulf %196, %196 : vector<9x32xf32>
    %cst_79 = arith.constant dense<0.000000e+00> : vector<9xf32>
    %198 = vector.multi_reduction <add>, %197, %cst_79 [1] : vector<9x32xf32> to vector<9xf32>
    %199 = vector.shape_cast %198 : vector<9xf32> to vector<9x1xf32>
    %cst_80 = arith.constant 3.200000e+01 : f32
    %200 = vector.broadcast %cst_80 : f32 to vector<9x1xf32>
    %201 = arith.divf %199, %200 : vector<9x1xf32>
    %202 = vector.broadcast %194 : vector<9x1xf32> to vector<9x32xf32>
    %203 = arith.subf %186, %202 : vector<9x32xf32>
    %cst_81 = arith.constant 9.99999974E-6 : f32
    %204 = vector.broadcast %cst_81 : f32 to vector<9x1xf32>
    %205 = arith.addf %201, %204 : vector<9x1xf32>
    %206 = math.rsqrt %205 : vector<9x1xf32>
    %207 = vector.broadcast %206 : vector<9x1xf32> to vector<9x32xf32>
    %208 = arith.mulf %203, %207 : vector<9x32xf32>
    %209 = vector.broadcast %189 : vector<1x32xf32> to vector<9x32xf32>
    %210 = arith.mulf %208, %209 : vector<9x32xf32>
    %211 = vector.broadcast %190 : vector<1x32xf32> to vector<9x32xf32>
    %212 = arith.addf %210, %211 : vector<9x32xf32>
    %c1 = arith.constant 1 : index
    %c0_82 = arith.constant 0 : index
    %c0_83 = arith.constant 0 : index
    %213 = vector.load %arg5[%c1, %c0_82, %c0_83] : memref<2x32x96xf32, #tpu.memory_space<vmem>>, vector<1x32x96xf32>
    %214 = vector.shape_cast %213 : vector<1x32x96xf32> to vector<32x96xf32>
    %cst_84 = arith.constant dense<0.000000e+00> : vector<9x96xf32>
    %215 = tpu.matmul %212, %214, %cst_84 {dimension_numbers = #tpu.dot_dimension_numbers<[1], [0], [0], [1], [0, 0, 1, 1], [], []>} : vector<9x32xf32>, vector<32x96xf32>, vector<9x96xf32> -> vector<9x96xf32>
    %c1_85 = arith.constant 1 : index
    %c0_86 = arith.constant 0 : index
    %c0_87 = arith.constant 0 : index
    %216 = vector.load %arg6[%c1_85, %c0_86, %c0_87] : memref<2x1x96xf32, #tpu.memory_space<vmem>>, vector<1x1x96xf32>
    %217 = vector.shape_cast %216 : vector<1x1x96xf32> to vector<1x96xf32>
    %218 = vector.broadcast %217 : vector<1x96xf32> to vector<9x96xf32>
    %219 = arith.addf %215, %218 : vector<9x96xf32>
    %220 = vector.extract_strided_slice %219 {offsets = [0, 0], sizes = [9, 32], strides = [1, 1]} : vector<9x96xf32> to vector<9x32xf32>
    %221 = vector.extract_strided_slice %219 {offsets = [0, 32], sizes = [9, 32], strides = [1, 1]} : vector<9x96xf32> to vector<9x32xf32>
    %222 = vector.extract_strided_slice %219 {offsets = [0, 64], sizes = [9, 32], strides = [1, 1]} : vector<9x96xf32> to vector<9x32xf32>
    %c1_88 = arith.constant 1 : index
    %c0_89 = arith.constant 0 : index
    %c0_90 = arith.constant 0 : index
    %223 = vector.load %arg7[%c1_88, %c0_89, %c0_90] : memref<2x32x32xf32, #tpu.memory_space<vmem>>, vector<1x32x32xf32>
    %224 = vector.shape_cast %223 : vector<1x32x32xf32> to vector<32x32xf32>
    %c1_91 = arith.constant 1 : index
    %c0_92 = arith.constant 0 : index
    %c0_93 = arith.constant 0 : index
    %225 = vector.load %arg8[%c1_91, %c0_92, %c0_93] : memref<2x1x32xf32, #tpu.memory_space<vmem>>, vector<1x1x32xf32>
    %226 = vector.shape_cast %225 : vector<1x1x32xf32> to vector<1x32xf32>
    %227 = vector.extract_strided_slice %220 {offsets = [0, 0], sizes = [9, 8], strides = [1, 1]} : vector<9x32xf32> to vector<9x8xf32>
    %228 = vector.extract_strided_slice %221 {offsets = [0, 0], sizes = [9, 8], strides = [1, 1]} : vector<9x32xf32> to vector<9x8xf32>
    %229 = vector.extract_strided_slice %222 {offsets = [0, 0], sizes = [9, 8], strides = [1, 1]} : vector<9x32xf32> to vector<9x8xf32>
    %cst_94 = arith.constant dense<0.000000e+00> : vector<9x9xf32>
    %230 = tpu.matmul %227, %228, %cst_94 {dimension_numbers = #tpu.dot_dimension_numbers<[1], [1], [0], [0], [0, 0, 1, 0], [], []>} : vector<9x8xf32>, vector<9x8xf32>, vector<9x9xf32> -> vector<9x9xf32>
    %cst_95 = arith.constant 0.353553385 : f32
    %231 = vector.broadcast %cst_95 : f32 to vector<9x9xf32>
    %232 = arith.mulf %230, %231 : vector<9x9xf32>
    %233 = vector.broadcast %28 : vector<1x9xf32> to vector<9x9xf32>
    %234 = arith.addf %232, %233 : vector<9x9xf32>
    %cst_96 = arith.constant dense<0xFF800000> : vector<9xf32>
    %235 = vector.multi_reduction <maximumf>, %234, %cst_96 [1] : vector<9x9xf32> to vector<9xf32>
    %236 = vector.shape_cast %235 : vector<9xf32> to vector<9x1xf32>
    %237 = vector.broadcast %236 : vector<9x1xf32> to vector<9x9xf32>
    %238 = arith.subf %234, %237 : vector<9x9xf32>
    %239 = math.exp %238 : vector<9x9xf32>
    %cst_97 = arith.constant dense<0.000000e+00> : vector<9xf32>
    %240 = vector.multi_reduction <add>, %239, %cst_97 [1] : vector<9x9xf32> to vector<9xf32>
    %241 = vector.shape_cast %240 : vector<9xf32> to vector<9x1xf32>
    %242 = tpu.reciprocal %241 {approx = true} : vector<9x1xf32> -> vector<9x1xf32>
    %243 = vector.broadcast %242 : vector<9x1xf32> to vector<9x9xf32>
    %244 = arith.mulf %239, %243 : vector<9x9xf32>
    %cst_98 = arith.constant dense<0.000000e+00> : vector<9x8xf32>
    %245 = tpu.matmul %244, %229, %cst_98 {dimension_numbers = #tpu.dot_dimension_numbers<[1], [0], [0], [1], [0, 0, 1, 1], [], []>} : vector<9x9xf32>, vector<9x8xf32>, vector<9x8xf32> -> vector<9x8xf32>
    %246 = vector.extract_strided_slice %224 {offsets = [0, 0], sizes = [8, 32], strides = [1, 1]} : vector<32x32xf32> to vector<8x32xf32>
    %cst_99 = arith.constant dense<0.000000e+00> : vector<9x32xf32>
    %247 = tpu.matmul %245, %246, %cst_99 {dimension_numbers = #tpu.dot_dimension_numbers<[1], [0], [0], [1], [0, 0, 1, 1], [], []>} : vector<9x8xf32>, vector<8x32xf32>, vector<9x32xf32> -> vector<9x32xf32>
    %248 = vector.broadcast %226 : vector<1x32xf32> to vector<9x32xf32>
    %249 = arith.addf %248, %247 : vector<9x32xf32>
    %250 = vector.extract_strided_slice %220 {offsets = [0, 8], sizes = [9, 8], strides = [1, 1]} : vector<9x32xf32> to vector<9x8xf32>
    %251 = vector.extract_strided_slice %221 {offsets = [0, 8], sizes = [9, 8], strides = [1, 1]} : vector<9x32xf32> to vector<9x8xf32>
    %252 = vector.extract_strided_slice %222 {offsets = [0, 8], sizes = [9, 8], strides = [1, 1]} : vector<9x32xf32> to vector<9x8xf32>
    %cst_100 = arith.constant dense<0.000000e+00> : vector<9x9xf32>
    %253 = tpu.matmul %250, %251, %cst_100 {dimension_numbers = #tpu.dot_dimension_numbers<[1], [1], [0], [0], [0, 0, 1, 0], [], []>} : vector<9x8xf32>, vector<9x8xf32>, vector<9x9xf32> -> vector<9x9xf32>
    %cst_101 = arith.constant 0.353553385 : f32
    %254 = vector.broadcast %cst_101 : f32 to vector<9x9xf32>
    %255 = arith.mulf %253, %254 : vector<9x9xf32>
    %256 = vector.broadcast %28 : vector<1x9xf32> to vector<9x9xf32>
    %257 = arith.addf %255, %256 : vector<9x9xf32>
    %cst_102 = arith.constant dense<0xFF800000> : vector<9xf32>
    %258 = vector.multi_reduction <maximumf>, %257, %cst_102 [1] : vector<9x9xf32> to vector<9xf32>
    %259 = vector.shape_cast %258 : vector<9xf32> to vector<9x1xf32>
    %260 = vector.broadcast %259 : vector<9x1xf32> to vector<9x9xf32>
    %261 = arith.subf %257, %260 : vector<9x9xf32>
    %262 = math.exp %261 : vector<9x9xf32>
    %cst_103 = arith.constant dense<0.000000e+00> : vector<9xf32>
    %263 = vector.multi_reduction <add>, %262, %cst_103 [1] : vector<9x9xf32> to vector<9xf32>
    %264 = vector.shape_cast %263 : vector<9xf32> to vector<9x1xf32>
    %265 = tpu.reciprocal %264 {approx = true} : vector<9x1xf32> -> vector<9x1xf32>
    %266 = vector.broadcast %265 : vector<9x1xf32> to vector<9x9xf32>
    %267 = arith.mulf %262, %266 : vector<9x9xf32>
    %cst_104 = arith.constant dense<0.000000e+00> : vector<9x8xf32>
    %268 = tpu.matmul %267, %252, %cst_104 {dimension_numbers = #tpu.dot_dimension_numbers<[1], [0], [0], [1], [0, 0, 1, 1], [], []>} : vector<9x9xf32>, vector<9x8xf32>, vector<9x8xf32> -> vector<9x8xf32>
    %269 = vector.extract_strided_slice %224 {offsets = [8, 0], sizes = [8, 32], strides = [1, 1]} : vector<32x32xf32> to vector<8x32xf32>
    %cst_105 = arith.constant dense<0.000000e+00> : vector<9x32xf32>
    %270 = tpu.matmul %268, %269, %cst_105 {dimension_numbers = #tpu.dot_dimension_numbers<[1], [0], [0], [1], [0, 0, 1, 1], [], []>} : vector<9x8xf32>, vector<8x32xf32>, vector<9x32xf32> -> vector<9x32xf32>
    %271 = arith.addf %249, %270 : vector<9x32xf32>
    %272 = vector.extract_strided_slice %220 {offsets = [0, 16], sizes = [9, 8], strides = [1, 1]} : vector<9x32xf32> to vector<9x8xf32>
    %273 = vector.extract_strided_slice %221 {offsets = [0, 16], sizes = [9, 8], strides = [1, 1]} : vector<9x32xf32> to vector<9x8xf32>
    %274 = vector.extract_strided_slice %222 {offsets = [0, 16], sizes = [9, 8], strides = [1, 1]} : vector<9x32xf32> to vector<9x8xf32>
    %cst_106 = arith.constant dense<0.000000e+00> : vector<9x9xf32>
    %275 = tpu.matmul %272, %273, %cst_106 {dimension_numbers = #tpu.dot_dimension_numbers<[1], [1], [0], [0], [0, 0, 1, 0], [], []>} : vector<9x8xf32>, vector<9x8xf32>, vector<9x9xf32> -> vector<9x9xf32>
    %cst_107 = arith.constant 0.353553385 : f32
    %276 = vector.broadcast %cst_107 : f32 to vector<9x9xf32>
    %277 = arith.mulf %275, %276 : vector<9x9xf32>
    %278 = vector.broadcast %28 : vector<1x9xf32> to vector<9x9xf32>
    %279 = arith.addf %277, %278 : vector<9x9xf32>
    %cst_108 = arith.constant dense<0xFF800000> : vector<9xf32>
    %280 = vector.multi_reduction <maximumf>, %279, %cst_108 [1] : vector<9x9xf32> to vector<9xf32>
    %281 = vector.shape_cast %280 : vector<9xf32> to vector<9x1xf32>
    %282 = vector.broadcast %281 : vector<9x1xf32> to vector<9x9xf32>
    %283 = arith.subf %279, %282 : vector<9x9xf32>
    %284 = math.exp %283 : vector<9x9xf32>
    %cst_109 = arith.constant dense<0.000000e+00> : vector<9xf32>
    %285 = vector.multi_reduction <add>, %284, %cst_109 [1] : vector<9x9xf32> to vector<9xf32>
    %286 = vector.shape_cast %285 : vector<9xf32> to vector<9x1xf32>
    %287 = tpu.reciprocal %286 {approx = true} : vector<9x1xf32> -> vector<9x1xf32>
    %288 = vector.broadcast %287 : vector<9x1xf32> to vector<9x9xf32>
    %289 = arith.mulf %284, %288 : vector<9x9xf32>
    %cst_110 = arith.constant dense<0.000000e+00> : vector<9x8xf32>
    %290 = tpu.matmul %289, %274, %cst_110 {dimension_numbers = #tpu.dot_dimension_numbers<[1], [0], [0], [1], [0, 0, 1, 1], [], []>} : vector<9x9xf32>, vector<9x8xf32>, vector<9x8xf32> -> vector<9x8xf32>
    %291 = vector.extract_strided_slice %224 {offsets = [16, 0], sizes = [8, 32], strides = [1, 1]} : vector<32x32xf32> to vector<8x32xf32>
    %cst_111 = arith.constant dense<0.000000e+00> : vector<9x32xf32>
    %292 = tpu.matmul %290, %291, %cst_111 {dimension_numbers = #tpu.dot_dimension_numbers<[1], [0], [0], [1], [0, 0, 1, 1], [], []>} : vector<9x8xf32>, vector<8x32xf32>, vector<9x32xf32> -> vector<9x32xf32>
    %293 = arith.addf %271, %292 : vector<9x32xf32>
    %294 = vector.extract_strided_slice %220 {offsets = [0, 24], sizes = [9, 8], strides = [1, 1]} : vector<9x32xf32> to vector<9x8xf32>
    %295 = vector.extract_strided_slice %221 {offsets = [0, 24], sizes = [9, 8], strides = [1, 1]} : vector<9x32xf32> to vector<9x8xf32>
    %296 = vector.extract_strided_slice %222 {offsets = [0, 24], sizes = [9, 8], strides = [1, 1]} : vector<9x32xf32> to vector<9x8xf32>
    %cst_112 = arith.constant dense<0.000000e+00> : vector<9x9xf32>
    %297 = tpu.matmul %294, %295, %cst_112 {dimension_numbers = #tpu.dot_dimension_numbers<[1], [1], [0], [0], [0, 0, 1, 0], [], []>} : vector<9x8xf32>, vector<9x8xf32>, vector<9x9xf32> -> vector<9x9xf32>
    %cst_113 = arith.constant 0.353553385 : f32
    %298 = vector.broadcast %cst_113 : f32 to vector<9x9xf32>
    %299 = arith.mulf %297, %298 : vector<9x9xf32>
    %300 = vector.broadcast %28 : vector<1x9xf32> to vector<9x9xf32>
    %301 = arith.addf %299, %300 : vector<9x9xf32>
    %cst_114 = arith.constant dense<0xFF800000> : vector<9xf32>
    %302 = vector.multi_reduction <maximumf>, %301, %cst_114 [1] : vector<9x9xf32> to vector<9xf32>
    %303 = vector.shape_cast %302 : vector<9xf32> to vector<9x1xf32>
    %304 = vector.broadcast %303 : vector<9x1xf32> to vector<9x9xf32>
    %305 = arith.subf %301, %304 : vector<9x9xf32>
    %306 = math.exp %305 : vector<9x9xf32>
    %cst_115 = arith.constant dense<0.000000e+00> : vector<9xf32>
    %307 = vector.multi_reduction <add>, %306, %cst_115 [1] : vector<9x9xf32> to vector<9xf32>
    %308 = vector.shape_cast %307 : vector<9xf32> to vector<9x1xf32>
    %309 = tpu.reciprocal %308 {approx = true} : vector<9x1xf32> -> vector<9x1xf32>
    %310 = vector.broadcast %309 : vector<9x1xf32> to vector<9x9xf32>
    %311 = arith.mulf %306, %310 : vector<9x9xf32>
    %cst_116 = arith.constant dense<0.000000e+00> : vector<9x8xf32>
    %312 = tpu.matmul %311, %296, %cst_116 {dimension_numbers = #tpu.dot_dimension_numbers<[1], [0], [0], [1], [0, 0, 1, 1], [], []>} : vector<9x9xf32>, vector<9x8xf32>, vector<9x8xf32> -> vector<9x8xf32>
    %313 = vector.extract_strided_slice %224 {offsets = [24, 0], sizes = [8, 32], strides = [1, 1]} : vector<32x32xf32> to vector<8x32xf32>
    %cst_117 = arith.constant dense<0.000000e+00> : vector<9x32xf32>
    %314 = tpu.matmul %312, %313, %cst_117 {dimension_numbers = #tpu.dot_dimension_numbers<[1], [0], [0], [1], [0, 0, 1, 1], [], []>} : vector<9x8xf32>, vector<8x32xf32>, vector<9x32xf32> -> vector<9x32xf32>
    %315 = arith.addf %293, %314 : vector<9x32xf32>
    %316 = arith.addf %212, %315 : vector<9x32xf32>
    %c1_118 = arith.constant 1 : index
    %c0_119 = arith.constant 0 : index
    %c0_120 = arith.constant 0 : index
    %317 = vector.load %arg9[%c1_118, %c0_119, %c0_120] : memref<2x2x32xf32, #tpu.memory_space<vmem>>, vector<1x2x32xf32>
    %318 = vector.shape_cast %317 : vector<1x2x32xf32> to vector<2x32xf32>
    %319 = vector.extract_strided_slice %318 {offsets = [0, 0], sizes = [1, 32], strides = [1, 1]} : vector<2x32xf32> to vector<1x32xf32>
    %320 = vector.extract_strided_slice %318 {offsets = [1, 0], sizes = [1, 32], strides = [1, 1]} : vector<2x32xf32> to vector<1x32xf32>
    %cst_121 = arith.constant dense<0.000000e+00> : vector<9xf32>
    %321 = vector.multi_reduction <add>, %316, %cst_121 [1] : vector<9x32xf32> to vector<9xf32>
    %322 = vector.shape_cast %321 : vector<9xf32> to vector<9x1xf32>
    %cst_122 = arith.constant 3.200000e+01 : f32
    %323 = vector.broadcast %cst_122 : f32 to vector<9x1xf32>
    %324 = arith.divf %322, %323 : vector<9x1xf32>
    %325 = vector.broadcast %324 : vector<9x1xf32> to vector<9x32xf32>
    %326 = arith.subf %316, %325 : vector<9x32xf32>
    %327 = arith.mulf %326, %326 : vector<9x32xf32>
    %cst_123 = arith.constant dense<0.000000e+00> : vector<9xf32>
    %328 = vector.multi_reduction <add>, %327, %cst_123 [1] : vector<9x32xf32> to vector<9xf32>
    %329 = vector.shape_cast %328 : vector<9xf32> to vector<9x1xf32>
    %cst_124 = arith.constant 3.200000e+01 : f32
    %330 = vector.broadcast %cst_124 : f32 to vector<9x1xf32>
    %331 = arith.divf %329, %330 : vector<9x1xf32>
    %332 = vector.broadcast %324 : vector<9x1xf32> to vector<9x32xf32>
    %333 = arith.subf %316, %332 : vector<9x32xf32>
    %cst_125 = arith.constant 9.99999974E-6 : f32
    %334 = vector.broadcast %cst_125 : f32 to vector<9x1xf32>
    %335 = arith.addf %331, %334 : vector<9x1xf32>
    %336 = math.rsqrt %335 : vector<9x1xf32>
    %337 = vector.broadcast %336 : vector<9x1xf32> to vector<9x32xf32>
    %338 = arith.mulf %333, %337 : vector<9x32xf32>
    %339 = vector.broadcast %319 : vector<1x32xf32> to vector<9x32xf32>
    %340 = arith.mulf %338, %339 : vector<9x32xf32>
    %341 = vector.broadcast %320 : vector<1x32xf32> to vector<9x32xf32>
    %342 = arith.addf %340, %341 : vector<9x32xf32>
    %c1_126 = arith.constant 1 : index
    %c0_127 = arith.constant 0 : index
    %c0_128 = arith.constant 0 : index
    %343 = vector.load %arg10[%c1_126, %c0_127, %c0_128] : memref<2x32x64xf32, #tpu.memory_space<vmem>>, vector<1x32x64xf32>
    %344 = vector.shape_cast %343 : vector<1x32x64xf32> to vector<32x64xf32>
    %cst_129 = arith.constant dense<0.000000e+00> : vector<9x64xf32>
    %345 = tpu.matmul %342, %344, %cst_129 {dimension_numbers = #tpu.dot_dimension_numbers<[1], [0], [0], [1], [0, 0, 1, 1], [], []>} : vector<9x32xf32>, vector<32x64xf32>, vector<9x64xf32> -> vector<9x64xf32>
    %c1_130 = arith.constant 1 : index
    %c0_131 = arith.constant 0 : index
    %c0_132 = arith.constant 0 : index
    %346 = vector.load %arg11[%c1_130, %c0_131, %c0_132] : memref<2x1x64xf32, #tpu.memory_space<vmem>>, vector<1x1x64xf32>
    %347 = vector.shape_cast %346 : vector<1x1x64xf32> to vector<1x64xf32>
    %348 = vector.broadcast %347 : vector<1x64xf32> to vector<9x64xf32>
    %349 = arith.addf %345, %348 : vector<9x64xf32>
    %cst_133 = arith.constant 5.000000e-01 : f32
    %350 = vector.broadcast %cst_133 : f32 to vector<9x64xf32>
    %351 = arith.mulf %350, %349 : vector<9x64xf32>
    %cst_134 = arith.constant 4.471500e-02 : f32
    %352 = vector.broadcast %cst_134 : f32 to vector<9x64xf32>
    %353 = arith.mulf %352, %349 : vector<9x64xf32>
    %354 = arith.mulf %353, %349 : vector<9x64xf32>
    %355 = arith.mulf %354, %349 : vector<9x64xf32>
    %356 = arith.addf %349, %355 : vector<9x64xf32>
    %cst_135 = arith.constant 0.797884583 : f32
    %357 = vector.broadcast %cst_135 : f32 to vector<9x64xf32>
    %358 = arith.mulf %357, %356 : vector<9x64xf32>
    %359 = math.tanh %358 : vector<9x64xf32>
    %cst_136 = arith.constant 1.000000e+00 : f32
    %360 = vector.broadcast %cst_136 : f32 to vector<9x64xf32>
    %361 = arith.addf %360, %359 : vector<9x64xf32>
    %362 = arith.mulf %351, %361 : vector<9x64xf32>
    %c1_137 = arith.constant 1 : index
    %c0_138 = arith.constant 0 : index
    %c0_139 = arith.constant 0 : index
    %363 = vector.load %arg12[%c1_137, %c0_138, %c0_139] : memref<2x64x32xf32, #tpu.memory_space<vmem>>, vector<1x64x32xf32>
    %364 = vector.shape_cast %363 : vector<1x64x32xf32> to vector<64x32xf32>
    %cst_140 = arith.constant dense<0.000000e+00> : vector<9x32xf32>
    %365 = tpu.matmul %362, %364, %cst_140 {dimension_numbers = #tpu.dot_dimension_numbers<[1], [0], [0], [1], [0, 0, 1, 1], [], []>} : vector<9x64xf32>, vector<64x32xf32>, vector<9x32xf32> -> vector<9x32xf32>
    %c1_141 = arith.constant 1 : index
    %c0_142 = arith.constant 0 : index
    %c0_143 = arith.constant 0 : index
    %366 = vector.load %arg13[%c1_141, %c0_142, %c0_143] : memref<2x1x32xf32, #tpu.memory_space<vmem>>, vector<1x1x32xf32>
    %367 = vector.shape_cast %366 : vector<1x1x32xf32> to vector<1x32xf32>
    %368 = vector.broadcast %367 : vector<1x32xf32> to vector<9x32xf32>
    %369 = arith.addf %365, %368 : vector<9x32xf32>
    %370 = arith.addf %342, %369 : vector<9x32xf32>
    %c1_144 = arith.constant 1 : index
    %c0_145 = arith.constant 0 : index
    %c0_146 = arith.constant 0 : index
    %371 = vector.load %arg14[%c1_144, %c0_145, %c0_146] : memref<2x2x32xf32, #tpu.memory_space<vmem>>, vector<1x2x32xf32>
    %372 = vector.shape_cast %371 : vector<1x2x32xf32> to vector<2x32xf32>
    %373 = vector.extract_strided_slice %372 {offsets = [0, 0], sizes = [1, 32], strides = [1, 1]} : vector<2x32xf32> to vector<1x32xf32>
    %374 = vector.extract_strided_slice %372 {offsets = [1, 0], sizes = [1, 32], strides = [1, 1]} : vector<2x32xf32> to vector<1x32xf32>
    %cst_147 = arith.constant dense<0.000000e+00> : vector<9xf32>
    %375 = vector.multi_reduction <add>, %370, %cst_147 [1] : vector<9x32xf32> to vector<9xf32>
    %376 = vector.shape_cast %375 : vector<9xf32> to vector<9x1xf32>
    %cst_148 = arith.constant 3.200000e+01 : f32
    %377 = vector.broadcast %cst_148 : f32 to vector<9x1xf32>
    %378 = arith.divf %376, %377 : vector<9x1xf32>
    %379 = vector.broadcast %378 : vector<9x1xf32> to vector<9x32xf32>
    %380 = arith.subf %370, %379 : vector<9x32xf32>
    %381 = arith.mulf %380, %380 : vector<9x32xf32>
    %cst_149 = arith.constant dense<0.000000e+00> : vector<9xf32>
    %382 = vector.multi_reduction <add>, %381, %cst_149 [1] : vector<9x32xf32> to vector<9xf32>
    %383 = vector.shape_cast %382 : vector<9xf32> to vector<9x1xf32>
    %cst_150 = arith.constant 3.200000e+01 : f32
    %384 = vector.broadcast %cst_150 : f32 to vector<9x1xf32>
    %385 = arith.divf %383, %384 : vector<9x1xf32>
    %386 = vector.broadcast %378 : vector<9x1xf32> to vector<9x32xf32>
    %387 = arith.subf %370, %386 : vector<9x32xf32>
    %cst_151 = arith.constant 9.99999974E-6 : f32
    %388 = vector.broadcast %cst_151 : f32 to vector<9x1xf32>
    %389 = arith.addf %385, %388 : vector<9x1xf32>
    %390 = math.rsqrt %389 : vector<9x1xf32>
    %391 = vector.broadcast %390 : vector<9x1xf32> to vector<9x32xf32>
    %392 = arith.mulf %387, %391 : vector<9x32xf32>
    %393 = vector.broadcast %373 : vector<1x32xf32> to vector<9x32xf32>
    %394 = arith.mulf %392, %393 : vector<9x32xf32>
    %395 = vector.broadcast %374 : vector<1x32xf32> to vector<9x32xf32>
    %396 = arith.addf %394, %395 : vector<9x32xf32>
    %c0_152 = arith.constant 0 : index
    %c0_153 = arith.constant 0 : index
    %397 = vector.load %arg33[%c0_152, %c0_153] : memref<64x2xf32, #tpu.memory_space<vmem>>, vector<64x2xf32>
    %c0_154 = arith.constant 0 : index
    %c0_155 = arith.constant 0 : index
    %398 = vector.load %arg34[%c0_154, %c0_155] : memref<1x2xf32, #tpu.memory_space<vmem>>, vector<1x2xf32>
    %399 = vector.extract_strided_slice %396 {offsets = [0, 0], sizes = [1, 32], strides = [1, 1]} : vector<9x32xf32> to vector<1x32xf32>
    %400 = vector.extract_strided_slice %397 {offsets = [0, 0], sizes = [32, 2], strides = [1, 1]} : vector<64x2xf32> to vector<32x2xf32>
    %cst_156 = arith.constant dense<0.000000e+00> : vector<1x2xf32>
    %401 = tpu.matmul %399, %400, %cst_156 {dimension_numbers = #tpu.dot_dimension_numbers<[1], [0], [0], [1], [0, 0, 1, 1], [], []>} : vector<1x32xf32>, vector<32x2xf32>, vector<1x2xf32> -> vector<1x2xf32>
    %402 = arith.addf %398, %401 : vector<1x2xf32>
    %403 = vector.extract_strided_slice %396 {offsets = [1, 0], sizes = [1, 32], strides = [1, 1]} : vector<9x32xf32> to vector<1x32xf32>
    %404 = vector.extract_strided_slice %397 {offsets = [32, 0], sizes = [32, 2], strides = [1, 1]} : vector<64x2xf32> to vector<32x2xf32>
    %cst_157 = arith.constant dense<0.000000e+00> : vector<1x2xf32>
    %405 = tpu.matmul %403, %404, %cst_157 {dimension_numbers = #tpu.dot_dimension_numbers<[1], [0], [0], [1], [0, 0, 1, 1], [], []>} : vector<1x32xf32>, vector<32x2xf32>, vector<1x2xf32> -> vector<1x2xf32>
    %406 = arith.addf %402, %405 : vector<1x2xf32>
    %cst_158 = arith.constant dense<0xFF800000> : vector<1xf32>
    %407 = vector.multi_reduction <maximumf>, %406, %cst_158 [1] : vector<1x2xf32> to vector<1xf32>
    %408 = vector.shape_cast %407 : vector<1xf32> to vector<1x1xf32>
    %409 = vector.broadcast %408 : vector<1x1xf32> to vector<1x2xf32>
    %410 = arith.subf %406, %409 : vector<1x2xf32>
    %411 = math.exp %410 : vector<1x2xf32>
    %cst_159 = arith.constant dense<0.000000e+00> : vector<1xf32>
    %412 = vector.multi_reduction <add>, %411, %cst_159 [1] : vector<1x2xf32> to vector<1xf32>
    %413 = vector.shape_cast %412 : vector<1xf32> to vector<1x1xf32>
    %414 = math.log %413 : vector<1x1xf32>
    %415 = arith.addf %414, %408 : vector<1x1xf32>
    %416 = vector.broadcast %415 : vector<1x1xf32> to vector<1x2xf32>
    %417 = arith.subf %406, %416 : vector<1x2xf32>
    %c0_160 = arith.constant 0 : index
    %c0_161 = arith.constant 0 : index
    %c0_162 = arith.constant 0 : index
    %418 = vector.load %arg37[%c0_160, %c0_161, %c0_162] : memref<1x1x2xf32, #tpu.memory_space<vmem>>, vector<1x1x2xf32>
    %419 = vector.shape_cast %418 : vector<1x1x2xf32> to vector<1x2xf32>
    %420 = vector.shape_cast %417 : vector<1x2xf32> to vector<1x1x2xf32>
    tpu.vector_store %arg37[%c0_160, %c0_161, %c0_162], %420 {strides = array<i32>} : memref<1x1x2xf32, #tpu.memory_space<vmem>>, vector<1x1x2xf32>,
    %c0_163 = arith.constant 0 : index
    %c0_164 = arith.constant 0 : index
    %c0_165 = arith.constant 0 : index
    %421 = vector.load %arg2[%c0_163, %c0_164, %c0_165] : memref<1x8x32xf32, #tpu.memory_space<vmem>>, vector<1x8x32xf32>
    %422 = vector.shape_cast %421 : vector<1x8x32xf32> to vector<8x32xf32>
    %c0_166 = arith.constant 0 : index
    %c0_167 = arith.constant 0 : index
    %423 = vector.load %arg15[%c0_166, %c0_167] : memref<2x32xf32, #tpu.memory_space<vmem>>, vector<2x32xf32>
    %424 = vector.extract_strided_slice %423 {offsets = [0, 0], sizes = [1, 32], strides = [1, 1]} : vector<2x32xf32> to vector<1x32xf32>
    %425 = vector.extract_strided_slice %423 {offsets = [1, 0], sizes = [1, 32], strides = [1, 1]} : vector<2x32xf32> to vector<1x32xf32>
    %cst_168 = arith.constant dense<0.000000e+00> : vector<8xf32>
    %426 = vector.multi_reduction <add>, %422, %cst_168 [1] : vector<8x32xf32> to vector<8xf32>
    %427 = vector.shape_cast %426 : vector<8xf32> to vector<8x1xf32>
    %cst_169 = arith.constant 3.200000e+01 : f32
    %428 = vector.broadcast %cst_169 : f32 to vector<8x1xf32>
    %429 = arith.divf %427, %428 : vector<8x1xf32>
    %430 = vector.broadcast %429 : vector<8x1xf32> to vector<8x32xf32>
    %431 = arith.subf %422, %430 : vector<8x32xf32>
    %432 = arith.mulf %431, %431 : vector<8x32xf32>
    %cst_170 = arith.constant dense<0.000000e+00> : vector<8xf32>
    %433 = vector.multi_reduction <add>, %432, %cst_170 [1] : vector<8x32xf32> to vector<8xf32>
    %434 = vector.shape_cast %433 : vector<8xf32> to vector<8x1xf32>
    %cst_171 = arith.constant 3.200000e+01 : f32
    %435 = vector.broadcast %cst_171 : f32 to vector<8x1xf32>
    %436 = arith.divf %434, %435 : vector<8x1xf32>
    %437 = vector.broadcast %429 : vector<8x1xf32> to vector<8x32xf32>
    %438 = arith.subf %422, %437 : vector<8x32xf32>
    %cst_172 = arith.constant 9.99999974E-6 : f32
    %439 = vector.broadcast %cst_172 : f32 to vector<8x1xf32>
    %440 = arith.addf %436, %439 : vector<8x1xf32>
    %441 = math.rsqrt %440 : vector<8x1xf32>
    %442 = vector.broadcast %441 : vector<8x1xf32> to vector<8x32xf32>
    %443 = arith.mulf %438, %442 : vector<8x32xf32>
    %444 = vector.broadcast %424 : vector<1x32xf32> to vector<8x32xf32>
    %445 = arith.mulf %443, %444 : vector<8x32xf32>
    %446 = vector.broadcast %425 : vector<1x32xf32> to vector<8x32xf32>
    %447 = arith.addf %445, %446 : vector<8x32xf32>
    %448 = tpu.iota {dimensions = array<i32: 0>} : vector<8x8xi32>
    %449 = tpu.iota {dimensions = array<i32: 1>} : vector<8x8xi32>
    %450 = arith.cmpi sle, %449, %448 : vector<8x8xi32>
    %cst_173 = arith.constant 0.000000e+00 : f32
    %cst_174 = arith.constant -1.000000e+09 : f32
    %451 = vector.broadcast %cst_173 : f32 to vector<8x8xf32>
    %452 = vector.broadcast %cst_174 : f32 to vector<8x8xf32>
    %453 = arith.select %450, %451, %452 : vector<8x8xi1>, vector<8x8xf32>
    %c0_175 = arith.constant 0 : index
    %c0_176 = arith.constant 0 : index
    %c0_177 = arith.constant 0 : index
    %454 = vector.load %arg16[%c0_175, %c0_176, %c0_177] : memref<2x32x96xf32, #tpu.memory_space<vmem>>, vector<1x32x96xf32>
    %455 = vector.shape_cast %454 : vector<1x32x96xf32> to vector<32x96xf32>
    %cst_178 = arith.constant dense<0.000000e+00> : vector<8x96xf32>
    %456 = tpu.matmul %447, %455, %cst_178 {dimension_numbers = #tpu.dot_dimension_numbers<[1], [0], [0], [1], [0, 0, 1, 1], [], []>} : vector<8x32xf32>, vector<32x96xf32>, vector<8x96xf32> -> vector<8x96xf32>
    %c0_179 = arith.constant 0 : index
    %c0_180 = arith.constant 0 : index
    %c0_181 = arith.constant 0 : index
    %457 = vector.load %arg17[%c0_179, %c0_180, %c0_181] : memref<2x1x96xf32, #tpu.memory_space<vmem>>, vector<1x1x96xf32>
    %458 = vector.shape_cast %457 : vector<1x1x96xf32> to vector<1x96xf32>
    %459 = vector.broadcast %458 : vector<1x96xf32> to vector<8x96xf32>
    %460 = arith.addf %456, %459 : vector<8x96xf32>
    %461 = vector.extract_strided_slice %460 {offsets = [0, 0], sizes = [8, 32], strides = [1, 1]} : vector<8x96xf32> to vector<8x32xf32>
    %462 = vector.extract_strided_slice %460 {offsets = [0, 32], sizes = [8, 32], strides = [1, 1]} : vector<8x96xf32> to vector<8x32xf32>
    %463 = vector.extract_strided_slice %460 {offsets = [0, 64], sizes = [8, 32], strides = [1, 1]} : vector<8x96xf32> to vector<8x32xf32>
    %c0_182 = arith.constant 0 : index
    %c0_183 = arith.constant 0 : index
    %c0_184 = arith.constant 0 : index
    %464 = vector.load %arg18[%c0_182, %c0_183, %c0_184] : memref<2x32x32xf32, #tpu.memory_space<vmem>>, vector<1x32x32xf32>
    %465 = vector.shape_cast %464 : vector<1x32x32xf32> to vector<32x32xf32>
    %c0_185 = arith.constant 0 : index
    %c0_186 = arith.constant 0 : index
    %c0_187 = arith.constant 0 : index
    %466 = vector.load %arg19[%c0_185, %c0_186, %c0_187] : memref<2x1x32xf32, #tpu.memory_space<vmem>>, vector<1x1x32xf32>
    %467 = vector.shape_cast %466 : vector<1x1x32xf32> to vector<1x32xf32>
    %468 = vector.extract_strided_slice %461 {offsets = [0, 0], sizes = [8, 8], strides = [1, 1]} : vector<8x32xf32> to vector<8x8xf32>
    %469 = vector.extract_strided_slice %462 {offsets = [0, 0], sizes = [8, 8], strides = [1, 1]} : vector<8x32xf32> to vector<8x8xf32>
    %470 = vector.extract_strided_slice %463 {offsets = [0, 0], sizes = [8, 8], strides = [1, 1]} : vector<8x32xf32> to vector<8x8xf32>
    %cst_188 = arith.constant dense<0.000000e+00> : vector<8x8xf32>
    %471 = tpu.matmul %468, %469, %cst_188 {dimension_numbers = #tpu.dot_dimension_numbers<[1], [1], [0], [0], [0, 0, 1, 0], [], []>} : vector<8x8xf32>, vector<8x8xf32>, vector<8x8xf32> -> vector<8x8xf32>
    %cst_189 = arith.constant 0.353553385 : f32
    %472 = vector.broadcast %cst_189 : f32 to vector<8x8xf32>
    %473 = arith.mulf %471, %472 : vector<8x8xf32>
    %474 = arith.addf %473, %453 : vector<8x8xf32>
    %cst_190 = arith.constant dense<0xFF800000> : vector<8xf32>
    %475 = vector.multi_reduction <maximumf>, %474, %cst_190 [1] : vector<8x8xf32> to vector<8xf32>
    %476 = vector.shape_cast %475 : vector<8xf32> to vector<8x1xf32>
    %477 = vector.broadcast %476 : vector<8x1xf32> to vector<8x8xf32>
    %478 = arith.subf %474, %477 : vector<8x8xf32>
    %479 = math.exp %478 : vector<8x8xf32>
    %cst_191 = arith.constant dense<0.000000e+00> : vector<8xf32>
    %480 = vector.multi_reduction <add>, %479, %cst_191 [1] : vector<8x8xf32> to vector<8xf32>
    %481 = vector.shape_cast %480 : vector<8xf32> to vector<8x1xf32>
    %482 = tpu.reciprocal %481 {approx = true} : vector<8x1xf32> -> vector<8x1xf32>
    %483 = vector.broadcast %482 : vector<8x1xf32> to vector<8x8xf32>
    %484 = arith.mulf %479, %483 : vector<8x8xf32>
    %cst_192 = arith.constant dense<0.000000e+00> : vector<8x8xf32>
    %485 = tpu.matmul %484, %470, %cst_192 {dimension_numbers = #tpu.dot_dimension_numbers<[1], [0], [0], [1], [0, 0, 1, 1], [], []>} : vector<8x8xf32>, vector<8x8xf32>, vector<8x8xf32> -> vector<8x8xf32>
    %486 = vector.extract_strided_slice %465 {offsets = [0, 0], sizes = [8, 32], strides = [1, 1]} : vector<32x32xf32> to vector<8x32xf32>
    %cst_193 = arith.constant dense<0.000000e+00> : vector<8x32xf32>
    %487 = tpu.matmul %485, %486, %cst_193 {dimension_numbers = #tpu.dot_dimension_numbers<[1], [0], [0], [1], [0, 0, 1, 1], [], []>} : vector<8x8xf32>, vector<8x32xf32>, vector<8x32xf32> -> vector<8x32xf32>
    %488 = vector.broadcast %467 : vector<1x32xf32> to vector<8x32xf32>
    %489 = arith.addf %488, %487 : vector<8x32xf32>
    %490 = vector.extract_strided_slice %461 {offsets = [0, 8], sizes = [8, 8], strides = [1, 1]} : vector<8x32xf32> to vector<8x8xf32>
    %491 = vector.extract_strided_slice %462 {offsets = [0, 8], sizes = [8, 8], strides = [1, 1]} : vector<8x32xf32> to vector<8x8xf32>
    %492 = vector.extract_strided_slice %463 {offsets = [0, 8], sizes = [8, 8], strides = [1, 1]} : vector<8x32xf32> to vector<8x8xf32>
    %cst_194 = arith.constant dense<0.000000e+00> : vector<8x8xf32>
    %493 = tpu.matmul %490, %491, %cst_194 {dimension_numbers = #tpu.dot_dimension_numbers<[1], [1], [0], [0], [0, 0, 1, 0], [], []>} : vector<8x8xf32>, vector<8x8xf32>, vector<8x8xf32> -> vector<8x8xf32>
    %cst_195 = arith.constant 0.353553385 : f32
    %494 = vector.broadcast %cst_195 : f32 to vector<8x8xf32>
    %495 = arith.mulf %493, %494 : vector<8x8xf32>
    %496 = arith.addf %495, %453 : vector<8x8xf32>
    %cst_196 = arith.constant dense<0xFF800000> : vector<8xf32>
    %497 = vector.multi_reduction <maximumf>, %496, %cst_196 [1] : vector<8x8xf32> to vector<8xf32>
    %498 = vector.shape_cast %497 : vector<8xf32> to vector<8x1xf32>
    %499 = vector.broadcast %498 : vector<8x1xf32> to vector<8x8xf32>
    %500 = arith.subf %496, %499 : vector<8x8xf32>
    %501 = math.exp %500 : vector<8x8xf32>
    %cst_197 = arith.constant dense<0.000000e+00> : vector<8xf32>
    %502 = vector.multi_reduction <add>, %501, %cst_197 [1] : vector<8x8xf32> to vector<8xf32>
    %503 = vector.shape_cast %502 : vector<8xf32> to vector<8x1xf32>
    %504 = tpu.reciprocal %503 {approx = true} : vector<8x1xf32> -> vector<8x1xf32>
    %505 = vector.broadcast %504 : vector<8x1xf32> to vector<8x8xf32>
    %506 = arith.mulf %501, %505 : vector<8x8xf32>
    %cst_198 = arith.constant dense<0.000000e+00> : vector<8x8xf32>
    %507 = tpu.matmul %506, %492, %cst_198 {dimension_numbers = #tpu.dot_dimension_numbers<[1], [0], [0], [1], [0, 0, 1, 1], [], []>} : vector<8x8xf32>, vector<8x8xf32>, vector<8x8xf32> -> vector<8x8xf32>
    %508 = vector.extract_strided_slice %465 {offsets = [8, 0], sizes = [8, 32], strides = [1, 1]} : vector<32x32xf32> to vector<8x32xf32>
    %cst_199 = arith.constant dense<0.000000e+00> : vector<8x32xf32>
    %509 = tpu.matmul %507, %508, %cst_199 {dimension_numbers = #tpu.dot_dimension_numbers<[1], [0], [0], [1], [0, 0, 1, 1], [], []>} : vector<8x8xf32>, vector<8x32xf32>, vector<8x32xf32> -> vector<8x32xf32>
    %510 = arith.addf %489, %509 : vector<8x32xf32>
    %511 = vector.extract_strided_slice %461 {offsets = [0, 16], sizes = [8, 8], strides = [1, 1]} : vector<8x32xf32> to vector<8x8xf32>
    %512 = vector.extract_strided_slice %462 {offsets = [0, 16], sizes = [8, 8], strides = [1, 1]} : vector<8x32xf32> to vector<8x8xf32>
    %513 = vector.extract_strided_slice %463 {offsets = [0, 16], sizes = [8, 8], strides = [1, 1]} : vector<8x32xf32> to vector<8x8xf32>
    %cst_200 = arith.constant dense<0.000000e+00> : vector<8x8xf32>
    %514 = tpu.matmul %511, %512, %cst_200 {dimension_numbers = #tpu.dot_dimension_numbers<[1], [1], [0], [0], [0, 0, 1, 0], [], []>} : vector<8x8xf32>, vector<8x8xf32>, vector<8x8xf32> -> vector<8x8xf32>
    %cst_201 = arith.constant 0.353553385 : f32
    %515 = vector.broadcast %cst_201 : f32 to vector<8x8xf32>
    %516 = arith.mulf %514, %515 : vector<8x8xf32>
    %517 = arith.addf %516, %453 : vector<8x8xf32>
    %cst_202 = arith.constant dense<0xFF800000> : vector<8xf32>
    %518 = vector.multi_reduction <maximumf>, %517, %cst_202 [1] : vector<8x8xf32> to vector<8xf32>
    %519 = vector.shape_cast %518 : vector<8xf32> to vector<8x1xf32>
    %520 = vector.broadcast %519 : vector<8x1xf32> to vector<8x8xf32>
    %521 = arith.subf %517, %520 : vector<8x8xf32>
    %522 = math.exp %521 : vector<8x8xf32>
    %cst_203 = arith.constant dense<0.000000e+00> : vector<8xf32>
    %523 = vector.multi_reduction <add>, %522, %cst_203 [1] : vector<8x8xf32> to vector<8xf32>
    %524 = vector.shape_cast %523 : vector<8xf32> to vector<8x1xf32>
    %525 = tpu.reciprocal %524 {approx = true} : vector<8x1xf32> -> vector<8x1xf32>
    %526 = vector.broadcast %525 : vector<8x1xf32> to vector<8x8xf32>
    %527 = arith.mulf %522, %526 : vector<8x8xf32>
    %cst_204 = arith.constant dense<0.000000e+00> : vector<8x8xf32>
    %528 = tpu.matmul %527, %513, %cst_204 {dimension_numbers = #tpu.dot_dimension_numbers<[1], [0], [0], [1], [0, 0, 1, 1], [], []>} : vector<8x8xf32>, vector<8x8xf32>, vector<8x8xf32> -> vector<8x8xf32>
    %529 = vector.extract_strided_slice %465 {offsets = [16, 0], sizes = [8, 32], strides = [1, 1]} : vector<32x32xf32> to vector<8x32xf32>
    %cst_205 = arith.constant dense<0.000000e+00> : vector<8x32xf32>
    %530 = tpu.matmul %528, %529, %cst_205 {dimension_numbers = #tpu.dot_dimension_numbers<[1], [0], [0], [1], [0, 0, 1, 1], [], []>} : vector<8x8xf32>, vector<8x32xf32>, vector<8x32xf32> -> vector<8x32xf32>
    %531 = arith.addf %510, %530 : vector<8x32xf32>
    %532 = vector.extract_strided_slice %461 {offsets = [0, 24], sizes = [8, 8], strides = [1, 1]} : vector<8x32xf32> to vector<8x8xf32>
    %533 = vector.extract_strided_slice %462 {offsets = [0, 24], sizes = [8, 8], strides = [1, 1]} : vector<8x32xf32> to vector<8x8xf32>
    %534 = vector.extract_strided_slice %463 {offsets = [0, 24], sizes = [8, 8], strides = [1, 1]} : vector<8x32xf32> to vector<8x8xf32>
    %cst_206 = arith.constant dense<0.000000e+00> : vector<8x8xf32>
    %535 = tpu.matmul %532, %533, %cst_206 {dimension_numbers = #tpu.dot_dimension_numbers<[1], [1], [0], [0], [0, 0, 1, 0], [], []>} : vector<8x8xf32>, vector<8x8xf32>, vector<8x8xf32> -> vector<8x8xf32>
    %cst_207 = arith.constant 0.353553385 : f32
    %536 = vector.broadcast %cst_207 : f32 to vector<8x8xf32>
    %537 = arith.mulf %535, %536 : vector<8x8xf32>
    %538 = arith.addf %537, %453 : vector<8x8xf32>
    %cst_208 = arith.constant dense<0xFF800000> : vector<8xf32>
    %539 = vector.multi_reduction <maximumf>, %538, %cst_208 [1] : vector<8x8xf32> to vector<8xf32>
    %540 = vector.shape_cast %539 : vector<8xf32> to vector<8x1xf32>
    %541 = vector.broadcast %540 : vector<8x1xf32> to vector<8x8xf32>
    %542 = arith.subf %538, %541 : vector<8x8xf32>
    %543 = math.exp %542 : vector<8x8xf32>
    %cst_209 = arith.constant dense<0.000000e+00> : vector<8xf32>
    %544 = vector.multi_reduction <add>, %543, %cst_209 [1] : vector<8x8xf32> to vector<8xf32>
    %545 = vector.shape_cast %544 : vector<8xf32> to vector<8x1xf32>
    %546 = tpu.reciprocal %545 {approx = true} : vector<8x1xf32> -> vector<8x1xf32>
    %547 = vector.broadcast %546 : vector<8x1xf32> to vector<8x8xf32>
    %548 = arith.mulf %543, %547 : vector<8x8xf32>
    %cst_210 = arith.constant dense<0.000000e+00> : vector<8x8xf32>
    %549 = tpu.matmul %548, %534, %cst_210 {dimension_numbers = #tpu.dot_dimension_numbers<[1], [0], [0], [1], [0, 0, 1, 1], [], []>} : vector<8x8xf32>, vector<8x8xf32>, vector<8x8xf32> -> vector<8x8xf32>
    %550 = vector.extract_strided_slice %465 {offsets = [24, 0], sizes = [8, 32], strides = [1, 1]} : vector<32x32xf32> to vector<8x32xf32>
    %cst_211 = arith.constant dense<0.000000e+00> : vector<8x32xf32>
    %551 = tpu.matmul %549, %550, %cst_211 {dimension_numbers = #tpu.dot_dimension_numbers<[1], [0], [0], [1], [0, 0, 1, 1], [], []>} : vector<8x8xf32>, vector<8x32xf32>, vector<8x32xf32> -> vector<8x32xf32>
    %552 = arith.addf %531, %551 : vector<8x32xf32>
    %553 = arith.addf %447, %552 : vector<8x32xf32>
    %c0_212 = arith.constant 0 : index
    %c0_213 = arith.constant 0 : index
    %c0_214 = arith.constant 0 : index
    %554 = vector.load %arg20[%c0_212, %c0_213, %c0_214] : memref<2x2x32xf32, #tpu.memory_space<vmem>>, vector<1x2x32xf32>
    %555 = vector.shape_cast %554 : vector<1x2x32xf32> to vector<2x32xf32>
    %556 = vector.extract_strided_slice %555 {offsets = [0, 0], sizes = [1, 32], strides = [1, 1]} : vector<2x32xf32> to vector<1x32xf32>
    %557 = vector.extract_strided_slice %555 {offsets = [1, 0], sizes = [1, 32], strides = [1, 1]} : vector<2x32xf32> to vector<1x32xf32>
    %cst_215 = arith.constant dense<0.000000e+00> : vector<8xf32>
    %558 = vector.multi_reduction <add>, %553, %cst_215 [1] : vector<8x32xf32> to vector<8xf32>
    %559 = vector.shape_cast %558 : vector<8xf32> to vector<8x1xf32>
    %cst_216 = arith.constant 3.200000e+01 : f32
    %560 = vector.broadcast %cst_216 : f32 to vector<8x1xf32>
    %561 = arith.divf %559, %560 : vector<8x1xf32>
    %562 = vector.broadcast %561 : vector<8x1xf32> to vector<8x32xf32>
    %563 = arith.subf %553, %562 : vector<8x32xf32>
    %564 = arith.mulf %563, %563 : vector<8x32xf32>
    %cst_217 = arith.constant dense<0.000000e+00> : vector<8xf32>
    %565 = vector.multi_reduction <add>, %564, %cst_217 [1] : vector<8x32xf32> to vector<8xf32>
    %566 = vector.shape_cast %565 : vector<8xf32> to vector<8x1xf32>
    %cst_218 = arith.constant 3.200000e+01 : f32
    %567 = vector.broadcast %cst_218 : f32 to vector<8x1xf32>
    %568 = arith.divf %566, %567 : vector<8x1xf32>
    %569 = vector.broadcast %561 : vector<8x1xf32> to vector<8x32xf32>
    %570 = arith.subf %553, %569 : vector<8x32xf32>
    %cst_219 = arith.constant 9.99999974E-6 : f32
    %571 = vector.broadcast %cst_219 : f32 to vector<8x1xf32>
    %572 = arith.addf %568, %571 : vector<8x1xf32>
    %573 = math.rsqrt %572 : vector<8x1xf32>
    %574 = vector.broadcast %573 : vector<8x1xf32> to vector<8x32xf32>
    %575 = arith.mulf %570, %574 : vector<8x32xf32>
    %576 = vector.broadcast %556 : vector<1x32xf32> to vector<8x32xf32>
    %577 = arith.mulf %575, %576 : vector<8x32xf32>
    %578 = vector.broadcast %557 : vector<1x32xf32> to vector<8x32xf32>
    %579 = arith.addf %577, %578 : vector<8x32xf32>
    %c0_220 = arith.constant 0 : index
    %c0_221 = arith.constant 0 : index
    %c0_222 = arith.constant 0 : index
    %580 = vector.load %arg21[%c0_220, %c0_221, %c0_222] : memref<2x32x32xf32, #tpu.memory_space<vmem>>, vector<1x32x32xf32>
    %581 = vector.shape_cast %580 : vector<1x32x32xf32> to vector<32x32xf32>
    %cst_223 = arith.constant dense<0.000000e+00> : vector<8x32xf32>
    %582 = tpu.matmul %579, %581, %cst_223 {dimension_numbers = #tpu.dot_dimension_numbers<[1], [0], [0], [1], [0, 0, 1, 1], [], []>} : vector<8x32xf32>, vector<32x32xf32>, vector<8x32xf32> -> vector<8x32xf32>
    %c0_224 = arith.constant 0 : index
    %c0_225 = arith.constant 0 : index
    %c0_226 = arith.constant 0 : index
    %583 = vector.load %arg22[%c0_224, %c0_225, %c0_226] : memref<2x1x32xf32, #tpu.memory_space<vmem>>, vector<1x1x32xf32>
    %584 = vector.shape_cast %583 : vector<1x1x32xf32> to vector<1x32xf32>
    %585 = vector.broadcast %584 : vector<1x32xf32> to vector<8x32xf32>
    %586 = arith.addf %582, %585 : vector<8x32xf32>
    %c0_227 = arith.constant 0 : index
    %c0_228 = arith.constant 0 : index
    %c0_229 = arith.constant 0 : index
    %587 = vector.load %arg23[%c0_227, %c0_228, %c0_229] : memref<2x32x64xf32, #tpu.memory_space<vmem>>, vector<1x32x64xf32>
    %588 = vector.shape_cast %587 : vector<1x32x64xf32> to vector<32x64xf32>
    %cst_230 = arith.constant dense<0.000000e+00> : vector<9x64xf32>
    %589 = tpu.matmul %396, %588, %cst_230 {dimension_numbers = #tpu.dot_dimension_numbers<[1], [0], [0], [1], [0, 0, 1, 1], [], []>} : vector<9x32xf32>, vector<32x64xf32>, vector<9x64xf32> -> vector<9x64xf32>
    %c0_231 = arith.constant 0 : index
    %c0_232 = arith.constant 0 : index
    %c0_233 = arith.constant 0 : index
    %590 = vector.load %arg24[%c0_231, %c0_232, %c0_233] : memref<2x1x64xf32, #tpu.memory_space<vmem>>, vector<1x1x64xf32>
    %591 = vector.shape_cast %590 : vector<1x1x64xf32> to vector<1x64xf32>
    %592 = vector.broadcast %591 : vector<1x64xf32> to vector<9x64xf32>
    %593 = arith.addf %589, %592 : vector<9x64xf32>
    %594 = vector.extract_strided_slice %593 {offsets = [0, 0], sizes = [9, 32], strides = [1, 1]} : vector<9x64xf32> to vector<9x32xf32>
    %595 = vector.extract_strided_slice %593 {offsets = [0, 32], sizes = [9, 32], strides = [1, 1]} : vector<9x64xf32> to vector<9x32xf32>
    %c0_234 = arith.constant 0 : index
    %c0_235 = arith.constant 0 : index
    %c0_236 = arith.constant 0 : index
    %596 = vector.load %arg25[%c0_234, %c0_235, %c0_236] : memref<2x32x32xf32, #tpu.memory_space<vmem>>, vector<1x32x32xf32>
    %597 = vector.shape_cast %596 : vector<1x32x32xf32> to vector<32x32xf32>
    %c0_237 = arith.constant 0 : index
    %c0_238 = arith.constant 0 : index
    %c0_239 = arith.constant 0 : index
    %598 = vector.load %arg26[%c0_237, %c0_238, %c0_239] : memref<2x1x32xf32, #tpu.memory_space<vmem>>, vector<1x1x32xf32>
    %599 = vector.shape_cast %598 : vector<1x1x32xf32> to vector<1x32xf32>
    %600 = vector.extract_strided_slice %586 {offsets = [0, 0], sizes = [8, 8], strides = [1, 1]} : vector<8x32xf32> to vector<8x8xf32>
    %601 = vector.extract_strided_slice %594 {offsets = [0, 0], sizes = [9, 8], strides = [1, 1]} : vector<9x32xf32> to vector<9x8xf32>
    %602 = vector.extract_strided_slice %595 {offsets = [0, 0], sizes = [9, 8], strides = [1, 1]} : vector<9x32xf32> to vector<9x8xf32>
    %cst_240 = arith.constant dense<0.000000e+00> : vector<8x9xf32>
    %603 = tpu.matmul %600, %601, %cst_240 {dimension_numbers = #tpu.dot_dimension_numbers<[1], [1], [0], [0], [0, 0, 1, 0], [], []>} : vector<8x8xf32>, vector<9x8xf32>, vector<8x9xf32> -> vector<8x9xf32>
    %cst_241 = arith.constant 0.353553385 : f32
    %604 = vector.broadcast %cst_241 : f32 to vector<8x9xf32>
    %605 = arith.mulf %603, %604 : vector<8x9xf32>
    %cst_242 = arith.constant dense<0xFF800000> : vector<8xf32>
    %606 = vector.multi_reduction <maximumf>, %605, %cst_242 [1] : vector<8x9xf32> to vector<8xf32>
    %607 = vector.shape_cast %606 : vector<8xf32> to vector<8x1xf32>
    %608 = vector.broadcast %607 : vector<8x1xf32> to vector<8x9xf32>
    %609 = arith.subf %605, %608 : vector<8x9xf32>
    %610 = math.exp %609 : vector<8x9xf32>
    %cst_243 = arith.constant dense<0.000000e+00> : vector<8xf32>
    %611 = vector.multi_reduction <add>, %610, %cst_243 [1] : vector<8x9xf32> to vector<8xf32>
    %612 = vector.shape_cast %611 : vector<8xf32> to vector<8x1xf32>
    %613 = tpu.reciprocal %612 {approx = true} : vector<8x1xf32> -> vector<8x1xf32>
    %614 = vector.broadcast %613 : vector<8x1xf32> to vector<8x9xf32>
    %615 = arith.mulf %610, %614 : vector<8x9xf32>
    %cst_244 = arith.constant dense<0.000000e+00> : vector<8x8xf32>
    %616 = tpu.matmul %615, %602, %cst_244 {dimension_numbers = #tpu.dot_dimension_numbers<[1], [0], [0], [1], [0, 0, 1, 1], [], []>} : vector<8x9xf32>, vector<9x8xf32>, vector<8x8xf32> -> vector<8x8xf32>
    %617 = vector.extract_strided_slice %597 {offsets = [0, 0], sizes = [8, 32], strides = [1, 1]} : vector<32x32xf32> to vector<8x32xf32>
    %cst_245 = arith.constant dense<0.000000e+00> : vector<8x32xf32>
    %618 = tpu.matmul %616, %617, %cst_245 {dimension_numbers = #tpu.dot_dimension_numbers<[1], [0], [0], [1], [0, 0, 1, 1], [], []>} : vector<8x8xf32>, vector<8x32xf32>, vector<8x32xf32> -> vector<8x32xf32>
    %619 = vector.broadcast %599 : vector<1x32xf32> to vector<8x32xf32>
    %620 = arith.addf %619, %618 : vector<8x32xf32>
    %621 = vector.extract_strided_slice %586 {offsets = [0, 8], sizes = [8, 8], strides = [1, 1]} : vector<8x32xf32> to vector<8x8xf32>
    %622 = vector.extract_strided_slice %594 {offsets = [0, 8], sizes = [9, 8], strides = [1, 1]} : vector<9x32xf32> to vector<9x8xf32>
    %623 = vector.extract_strided_slice %595 {offsets = [0, 8], sizes = [9, 8], strides = [1, 1]} : vector<9x32xf32> to vector<9x8xf32>
    %cst_246 = arith.constant dense<0.000000e+00> : vector<8x9xf32>
    %624 = tpu.matmul %621, %622, %cst_246 {dimension_numbers = #tpu.dot_dimension_numbers<[1], [1], [0], [0], [0, 0, 1, 0], [], []>} : vector<8x8xf32>, vector<9x8xf32>, vector<8x9xf32> -> vector<8x9xf32>
    %cst_247 = arith.constant 0.353553385 : f32
    %625 = vector.broadcast %cst_247 : f32 to vector<8x9xf32>
    %626 = arith.mulf %624, %625 : vector<8x9xf32>
    %cst_248 = arith.constant dense<0xFF800000> : vector<8xf32>
    %627 = vector.multi_reduction <maximumf>, %626, %cst_248 [1] : vector<8x9xf32> to vector<8xf32>
    %628 = vector.shape_cast %627 : vector<8xf32> to vector<8x1xf32>
    %629 = vector.broadcast %628 : vector<8x1xf32> to vector<8x9xf32>
    %630 = arith.subf %626, %629 : vector<8x9xf32>
    %631 = math.exp %630 : vector<8x9xf32>
    %cst_249 = arith.constant dense<0.000000e+00> : vector<8xf32>
    %632 = vector.multi_reduction <add>, %631, %cst_249 [1] : vector<8x9xf32> to vector<8xf32>
    %633 = vector.shape_cast %632 : vector<8xf32> to vector<8x1xf32>
    %634 = tpu.reciprocal %633 {approx = true} : vector<8x1xf32> -> vector<8x1xf32>
    %635 = vector.broadcast %634 : vector<8x1xf32> to vector<8x9xf32>
    %636 = arith.mulf %631, %635 : vector<8x9xf32>
    %cst_250 = arith.constant dense<0.000000e+00> : vector<8x8xf32>
    %637 = tpu.matmul %636, %623, %cst_250 {dimension_numbers = #tpu.dot_dimension_numbers<[1], [0], [0], [1], [0, 0, 1, 1], [], []>} : vector<8x9xf32>, vector<9x8xf32>, vector<8x8xf32> -> vector<8x8xf32>
    %638 = vector.extract_strided_slice %597 {offsets = [8, 0], sizes = [8, 32], strides = [1, 1]} : vector<32x32xf32> to vector<8x32xf32>
    %cst_251 = arith.constant dense<0.000000e+00> : vector<8x32xf32>
    %639 = tpu.matmul %637, %638, %cst_251 {dimension_numbers = #tpu.dot_dimension_numbers<[1], [0], [0], [1], [0, 0, 1, 1], [], []>} : vector<8x8xf32>, vector<8x32xf32>, vector<8x32xf32> -> vector<8x32xf32>
    %640 = arith.addf %620, %639 : vector<8x32xf32>
    %641 = vector.extract_strided_slice %586 {offsets = [0, 16], sizes = [8, 8], strides = [1, 1]} : vector<8x32xf32> to vector<8x8xf32>
    %642 = vector.extract_strided_slice %594 {offsets = [0, 16], sizes = [9, 8], strides = [1, 1]} : vector<9x32xf32> to vector<9x8xf32>
    %643 = vector.extract_strided_slice %595 {offsets = [0, 16], sizes = [9, 8], strides = [1, 1]} : vector<9x32xf32> to vector<9x8xf32>
    %cst_252 = arith.constant dense<0.000000e+00> : vector<8x9xf32>
    %644 = tpu.matmul %641, %642, %cst_252 {dimension_numbers = #tpu.dot_dimension_numbers<[1], [1], [0], [0], [0, 0, 1, 0], [], []>} : vector<8x8xf32>, vector<9x8xf32>, vector<8x9xf32> -> vector<8x9xf32>
    %cst_253 = arith.constant 0.353553385 : f32
    %645 = vector.broadcast %cst_253 : f32 to vector<8x9xf32>
    %646 = arith.mulf %644, %645 : vector<8x9xf32>
    %cst_254 = arith.constant dense<0xFF800000> : vector<8xf32>
    %647 = vector.multi_reduction <maximumf>, %646, %cst_254 [1] : vector<8x9xf32> to vector<8xf32>
    %648 = vector.shape_cast %647 : vector<8xf32> to vector<8x1xf32>
    %649 = vector.broadcast %648 : vector<8x1xf32> to vector<8x9xf32>
    %650 = arith.subf %646, %649 : vector<8x9xf32>
    %651 = math.exp %650 : vector<8x9xf32>
    %cst_255 = arith.constant dense<0.000000e+00> : vector<8xf32>
    %652 = vector.multi_reduction <add>, %651, %cst_255 [1] : vector<8x9xf32> to vector<8xf32>
    %653 = vector.shape_cast %652 : vector<8xf32> to vector<8x1xf32>
    %654 = tpu.reciprocal %653 {approx = true} : vector<8x1xf32> -> vector<8x1xf32>
    %655 = vector.broadcast %654 : vector<8x1xf32> to vector<8x9xf32>
    %656 = arith.mulf %651, %655 : vector<8x9xf32>
    %cst_256 = arith.constant dense<0.000000e+00> : vector<8x8xf32>
    %657 = tpu.matmul %656, %643, %cst_256 {dimension_numbers = #tpu.dot_dimension_numbers<[1], [0], [0], [1], [0, 0, 1, 1], [], []>} : vector<8x9xf32>, vector<9x8xf32>, vector<8x8xf32> -> vector<8x8xf32>
    %658 = vector.extract_strided_slice %597 {offsets = [16, 0], sizes = [8, 32], strides = [1, 1]} : vector<32x32xf32> to vector<8x32xf32>
    %cst_257 = arith.constant dense<0.000000e+00> : vector<8x32xf32>
    %659 = tpu.matmul %657, %658, %cst_257 {dimension_numbers = #tpu.dot_dimension_numbers<[1], [0], [0], [1], [0, 0, 1, 1], [], []>} : vector<8x8xf32>, vector<8x32xf32>, vector<8x32xf32> -> vector<8x32xf32>
    %660 = arith.addf %640, %659 : vector<8x32xf32>
    %661 = vector.extract_strided_slice %586 {offsets = [0, 24], sizes = [8, 8], strides = [1, 1]} : vector<8x32xf32> to vector<8x8xf32>
    %662 = vector.extract_strided_slice %594 {offsets = [0, 24], sizes = [9, 8], strides = [1, 1]} : vector<9x32xf32> to vector<9x8xf32>
    %663 = vector.extract_strided_slice %595 {offsets = [0, 24], sizes = [9, 8], strides = [1, 1]} : vector<9x32xf32> to vector<9x8xf32>
    %cst_258 = arith.constant dense<0.000000e+00> : vector<8x9xf32>
    %664 = tpu.matmul %661, %662, %cst_258 {dimension_numbers = #tpu.dot_dimension_numbers<[1], [1], [0], [0], [0, 0, 1, 0], [], []>} : vector<8x8xf32>, vector<9x8xf32>, vector<8x9xf32> -> vector<8x9xf32>
    %cst_259 = arith.constant 0.353553385 : f32
    %665 = vector.broadcast %cst_259 : f32 to vector<8x9xf32>
    %666 = arith.mulf %664, %665 : vector<8x9xf32>
    %cst_260 = arith.constant dense<0xFF800000> : vector<8xf32>
    %667 = vector.multi_reduction <maximumf>, %666, %cst_260 [1] : vector<8x9xf32> to vector<8xf32>
    %668 = vector.shape_cast %667 : vector<8xf32> to vector<8x1xf32>
    %669 = vector.broadcast %668 : vector<8x1xf32> to vector<8x9xf32>
    %670 = arith.subf %666, %669 : vector<8x9xf32>
    %671 = math.exp %670 : vector<8x9xf32>
    %cst_261 = arith.constant dense<0.000000e+00> : vector<8xf32>
    %672 = vector.multi_reduction <add>, %671, %cst_261 [1] : vector<8x9xf32> to vector<8xf32>
    %673 = vector.shape_cast %672 : vector<8xf32> to vector<8x1xf32>
    %674 = tpu.reciprocal %673 {approx = true} : vector<8x1xf32> -> vector<8x1xf32>
    %675 = vector.broadcast %674 : vector<8x1xf32> to vector<8x9xf32>
    %676 = arith.mulf %671, %675 : vector<8x9xf32>
    %cst_262 = arith.constant dense<0.000000e+00> : vector<8x8xf32>
    %677 = tpu.matmul %676, %663, %cst_262 {dimension_numbers = #tpu.dot_dimension_numbers<[1], [0], [0], [1], [0, 0, 1, 1], [], []>} : vector<8x9xf32>, vector<9x8xf32>, vector<8x8xf32> -> vector<8x8xf32>
    %678 = vector.extract_strided_slice %597 {offsets = [24, 0], sizes = [8, 32], strides = [1, 1]} : vector<32x32xf32> to vector<8x32xf32>
    %cst_263 = arith.constant dense<0.000000e+00> : vector<8x32xf32>
    %679 = tpu.matmul %677, %678, %cst_263 {dimension_numbers = #tpu.dot_dimension_numbers<[1], [0], [0], [1], [0, 0, 1, 1], [], []>} : vector<8x8xf32>, vector<8x32xf32>, vector<8x32xf32> -> vector<8x32xf32>
    %680 = arith.addf %660, %679 : vector<8x32xf32>
    %681 = arith.addf %579, %680 : vector<8x32xf32>
    %c0_264 = arith.constant 0 : index
    %c0_265 = arith.constant 0 : index
    %c0_266 = arith.constant 0 : index
    %682 = vector.load %arg27[%c0_264, %c0_265, %c0_266] : memref<2x2x32xf32, #tpu.memory_space<vmem>>, vector<1x2x32xf32>
    %683 = vector.shape_cast %682 : vector<1x2x32xf32> to vector<2x32xf32>
    %684 = vector.extract_strided_slice %683 {offsets = [0, 0], sizes = [1, 32], strides = [1, 1]} : vector<2x32xf32> to vector<1x32xf32>
    %685 = vector.extract_strided_slice %683 {offsets = [1, 0], sizes = [1, 32], strides = [1, 1]} : vector<2x32xf32> to vector<1x32xf32>
    %cst_267 = arith.constant dense<0.000000e+00> : vector<8xf32>
    %686 = vector.multi_reduction <add>, %681, %cst_267 [1] : vector<8x32xf32> to vector<8xf32>
    %687 = vector.shape_cast %686 : vector<8xf32> to vector<8x1xf32>
    %cst_268 = arith.constant 3.200000e+01 : f32
    %688 = vector.broadcast %cst_268 : f32 to vector<8x1xf32>
    %689 = arith.divf %687, %688 : vector<8x1xf32>
    %690 = vector.broadcast %689 : vector<8x1xf32> to vector<8x32xf32>
    %691 = arith.subf %681, %690 : vector<8x32xf32>
    %692 = arith.mulf %691, %691 : vector<8x32xf32>
    %cst_269 = arith.constant dense<0.000000e+00> : vector<8xf32>
    %693 = vector.multi_reduction <add>, %692, %cst_269 [1] : vector<8x32xf32> to vector<8xf32>
    %694 = vector.shape_cast %693 : vector<8xf32> to vector<8x1xf32>
    %cst_270 = arith.constant 3.200000e+01 : f32
    %695 = vector.broadcast %cst_270 : f32 to vector<8x1xf32>
    %696 = arith.divf %694, %695 : vector<8x1xf32>
    %697 = vector.broadcast %689 : vector<8x1xf32> to vector<8x32xf32>
    %698 = arith.subf %681, %697 : vector<8x32xf32>
    %cst_271 = arith.constant 9.99999974E-6 : f32
    %699 = vector.broadcast %cst_271 : f32 to vector<8x1xf32>
    %700 = arith.addf %696, %699 : vector<8x1xf32>
    %701 = math.rsqrt %700 : vector<8x1xf32>
    %702 = vector.broadcast %701 : vector<8x1xf32> to vector<8x32xf32>
    %703 = arith.mulf %698, %702 : vector<8x32xf32>
    %704 = vector.broadcast %684 : vector<1x32xf32> to vector<8x32xf32>
    %705 = arith.mulf %703, %704 : vector<8x32xf32>
    %706 = vector.broadcast %685 : vector<1x32xf32> to vector<8x32xf32>
    %707 = arith.addf %705, %706 : vector<8x32xf32>
    %c0_272 = arith.constant 0 : index
    %c0_273 = arith.constant 0 : index
    %c0_274 = arith.constant 0 : index
    %708 = vector.load %arg28[%c0_272, %c0_273, %c0_274] : memref<2x32x64xf32, #tpu.memory_space<vmem>>, vector<1x32x64xf32>
    %709 = vector.shape_cast %708 : vector<1x32x64xf32> to vector<32x64xf32>
    %cst_275 = arith.constant dense<0.000000e+00> : vector<8x64xf32>
    %710 = tpu.matmul %707, %709, %cst_275 {dimension_numbers = #tpu.dot_dimension_numbers<[1], [0], [0], [1], [0, 0, 1, 1], [], []>} : vector<8x32xf32>, vector<32x64xf32>, vector<8x64xf32> -> vector<8x64xf32>
    %c0_276 = arith.constant 0 : index
    %c0_277 = arith.constant 0 : index
    %c0_278 = arith.constant 0 : index
    %711 = vector.load %arg29[%c0_276, %c0_277, %c0_278] : memref<2x1x64xf32, #tpu.memory_space<vmem>>, vector<1x1x64xf32>
    %712 = vector.shape_cast %711 : vector<1x1x64xf32> to vector<1x64xf32>
    %713 = vector.broadcast %712 : vector<1x64xf32> to vector<8x64xf32>
    %714 = arith.addf %710, %713 : vector<8x64xf32>
    %cst_279 = arith.constant 5.000000e-01 : f32
    %715 = vector.broadcast %cst_279 : f32 to vector<8x64xf32>
    %716 = arith.mulf %715, %714 : vector<8x64xf32>
    %cst_280 = arith.constant 4.471500e-02 : f32
    %717 = vector.broadcast %cst_280 : f32 to vector<8x64xf32>
    %718 = arith.mulf %717, %714 : vector<8x64xf32>
    %719 = arith.mulf %718, %714 : vector<8x64xf32>
    %720 = arith.mulf %719, %714 : vector<8x64xf32>
    %721 = arith.addf %714, %720 : vector<8x64xf32>
    %cst_281 = arith.constant 0.797884583 : f32
    %722 = vector.broadcast %cst_281 : f32 to vector<8x64xf32>
    %723 = arith.mulf %722, %721 : vector<8x64xf32>
    %724 = math.tanh %723 : vector<8x64xf32>
    %cst_282 = arith.constant 1.000000e+00 : f32
    %725 = vector.broadcast %cst_282 : f32 to vector<8x64xf32>
    %726 = arith.addf %725, %724 : vector<8x64xf32>
    %727 = arith.mulf %716, %726 : vector<8x64xf32>
    %c0_283 = arith.constant 0 : index
    %c0_284 = arith.constant 0 : index
    %c0_285 = arith.constant 0 : index
    %728 = vector.load %arg30[%c0_283, %c0_284, %c0_285] : memref<2x64x32xf32, #tpu.memory_space<vmem>>, vector<1x64x32xf32>
    %729 = vector.shape_cast %728 : vector<1x64x32xf32> to vector<64x32xf32>
    %cst_286 = arith.constant dense<0.000000e+00> : vector<8x32xf32>
    %730 = tpu.matmul %727, %729, %cst_286 {dimension_numbers = #tpu.dot_dimension_numbers<[1], [0], [0], [1], [0, 0, 1, 1], [], []>} : vector<8x64xf32>, vector<64x32xf32>, vector<8x32xf32> -> vector<8x32xf32>
    %c0_287 = arith.constant 0 : index
    %c0_288 = arith.constant 0 : index
    %c0_289 = arith.constant 0 : index
    %731 = vector.load %arg31[%c0_287, %c0_288, %c0_289] : memref<2x1x32xf32, #tpu.memory_space<vmem>>, vector<1x1x32xf32>
    %732 = vector.shape_cast %731 : vector<1x1x32xf32> to vector<1x32xf32>
    %733 = vector.broadcast %732 : vector<1x32xf32> to vector<8x32xf32>
    %734 = arith.addf %730, %733 : vector<8x32xf32>
    %735 = arith.addf %707, %734 : vector<8x32xf32>
    %c0_290 = arith.constant 0 : index
    %c0_291 = arith.constant 0 : index
    %c0_292 = arith.constant 0 : index
    %736 = vector.load %arg32[%c0_290, %c0_291, %c0_292] : memref<2x2x32xf32, #tpu.memory_space<vmem>>, vector<1x2x32xf32>
    %737 = vector.shape_cast %736 : vector<1x2x32xf32> to vector<2x32xf32>
    %738 = vector.extract_strided_slice %737 {offsets = [0, 0], sizes = [1, 32], strides = [1, 1]} : vector<2x32xf32> to vector<1x32xf32>
    %739 = vector.extract_strided_slice %737 {offsets = [1, 0], sizes = [1, 32], strides = [1, 1]} : vector<2x32xf32> to vector<1x32xf32>
    %cst_293 = arith.constant dense<0.000000e+00> : vector<8xf32>
    %740 = vector.multi_reduction <add>, %735, %cst_293 [1] : vector<8x32xf32> to vector<8xf32>
    %741 = vector.shape_cast %740 : vector<8xf32> to vector<8x1xf32>
    %cst_294 = arith.constant 3.200000e+01 : f32
    %742 = vector.broadcast %cst_294 : f32 to vector<8x1xf32>
    %743 = arith.divf %741, %742 : vector<8x1xf32>
    %744 = vector.broadcast %743 : vector<8x1xf32> to vector<8x32xf32>
    %745 = arith.subf %735, %744 : vector<8x32xf32>
    %746 = arith.mulf %745, %745 : vector<8x32xf32>
    %cst_295 = arith.constant dense<0.000000e+00> : vector<8xf32>
    %747 = vector.multi_reduction <add>, %746, %cst_295 [1] : vector<8x32xf32> to vector<8xf32>
    %748 = vector.shape_cast %747 : vector<8xf32> to vector<8x1xf32>
    %cst_296 = arith.constant 3.200000e+01 : f32
    %749 = vector.broadcast %cst_296 : f32 to vector<8x1xf32>
    %750 = arith.divf %748, %749 : vector<8x1xf32>
    %751 = vector.broadcast %743 : vector<8x1xf32> to vector<8x32xf32>
    %752 = arith.subf %735, %751 : vector<8x32xf32>
    %cst_297 = arith.constant 9.99999974E-6 : f32
    %753 = vector.broadcast %cst_297 : f32 to vector<8x1xf32>
    %754 = arith.addf %750, %753 : vector<8x1xf32>
    %755 = math.rsqrt %754 : vector<8x1xf32>
    %756 = vector.broadcast %755 : vector<8x1xf32> to vector<8x32xf32>
    %757 = arith.mulf %752, %756 : vector<8x32xf32>
    %758 = vector.broadcast %738 : vector<1x32xf32> to vector<8x32xf32>
    %759 = arith.mulf %757, %758 : vector<8x32xf32>
    %760 = vector.broadcast %739 : vector<1x32xf32> to vector<8x32xf32>
    %761 = arith.addf %759, %760 : vector<8x32xf32>
    %c1_298 = arith.constant 1 : index
    %c0_299 = arith.constant 0 : index
    %c0_300 = arith.constant 0 : index
    %762 = vector.load %arg16[%c1_298, %c0_299, %c0_300] : memref<2x32x96xf32, #tpu.memory_space<vmem>>, vector<1x32x96xf32>
    %763 = vector.shape_cast %762 : vector<1x32x96xf32> to vector<32x96xf32>
    %cst_301 = arith.constant dense<0.000000e+00> : vector<8x96xf32>
    %764 = tpu.matmul %761, %763, %cst_301 {dimension_numbers = #tpu.dot_dimension_numbers<[1], [0], [0], [1], [0, 0, 1, 1], [], []>} : vector<8x32xf32>, vector<32x96xf32>, vector<8x96xf32> -> vector<8x96xf32>
    %c1_302 = arith.constant 1 : index
    %c0_303 = arith.constant 0 : index
    %c0_304 = arith.constant 0 : index
    %765 = vector.load %arg17[%c1_302, %c0_303, %c0_304] : memref<2x1x96xf32, #tpu.memory_space<vmem>>, vector<1x1x96xf32>
    %766 = vector.shape_cast %765 : vector<1x1x96xf32> to vector<1x96xf32>
    %767 = vector.broadcast %766 : vector<1x96xf32> to vector<8x96xf32>
    %768 = arith.addf %764, %767 : vector<8x96xf32>
    %769 = vector.extract_strided_slice %768 {offsets = [0, 0], sizes = [8, 32], strides = [1, 1]} : vector<8x96xf32> to vector<8x32xf32>
    %770 = vector.extract_strided_slice %768 {offsets = [0, 32], sizes = [8, 32], strides = [1, 1]} : vector<8x96xf32> to vector<8x32xf32>
    %771 = vector.extract_strided_slice %768 {offsets = [0, 64], sizes = [8, 32], strides = [1, 1]} : vector<8x96xf32> to vector<8x32xf32>
    %c1_305 = arith.constant 1 : index
    %c0_306 = arith.constant 0 : index
    %c0_307 = arith.constant 0 : index
    %772 = vector.load %arg18[%c1_305, %c0_306, %c0_307] : memref<2x32x32xf32, #tpu.memory_space<vmem>>, vector<1x32x32xf32>
    %773 = vector.shape_cast %772 : vector<1x32x32xf32> to vector<32x32xf32>
    %c1_308 = arith.constant 1 : index
    %c0_309 = arith.constant 0 : index
    %c0_310 = arith.constant 0 : index
    %774 = vector.load %arg19[%c1_308, %c0_309, %c0_310] : memref<2x1x32xf32, #tpu.memory_space<vmem>>, vector<1x1x32xf32>
    %775 = vector.shape_cast %774 : vector<1x1x32xf32> to vector<1x32xf32>
    %776 = vector.extract_strided_slice %769 {offsets = [0, 0], sizes = [8, 8], strides = [1, 1]} : vector<8x32xf32> to vector<8x8xf32>
    %777 = vector.extract_strided_slice %770 {offsets = [0, 0], sizes = [8, 8], strides = [1, 1]} : vector<8x32xf32> to vector<8x8xf32>
    %778 = vector.extract_strided_slice %771 {offsets = [0, 0], sizes = [8, 8], strides = [1, 1]} : vector<8x32xf32> to vector<8x8xf32>
    %cst_311 = arith.constant dense<0.000000e+00> : vector<8x8xf32>
    %779 = tpu.matmul %776, %777, %cst_311 {dimension_numbers = #tpu.dot_dimension_numbers<[1], [1], [0], [0], [0, 0, 1, 0], [], []>} : vector<8x8xf32>, vector<8x8xf32>, vector<8x8xf32> -> vector<8x8xf32>
    %cst_312 = arith.constant 0.353553385 : f32
    %780 = vector.broadcast %cst_312 : f32 to vector<8x8xf32>
    %781 = arith.mulf %779, %780 : vector<8x8xf32>
    %782 = arith.addf %781, %453 : vector<8x8xf32>
    %cst_313 = arith.constant dense<0xFF800000> : vector<8xf32>
    %783 = vector.multi_reduction <maximumf>, %782, %cst_313 [1] : vector<8x8xf32> to vector<8xf32>
    %784 = vector.shape_cast %783 : vector<8xf32> to vector<8x1xf32>
    %785 = vector.broadcast %784 : vector<8x1xf32> to vector<8x8xf32>
    %786 = arith.subf %782, %785 : vector<8x8xf32>
    %787 = math.exp %786 : vector<8x8xf32>
    %cst_314 = arith.constant dense<0.000000e+00> : vector<8xf32>
    %788 = vector.multi_reduction <add>, %787, %cst_314 [1] : vector<8x8xf32> to vector<8xf32>
    %789 = vector.shape_cast %788 : vector<8xf32> to vector<8x1xf32>
    %790 = tpu.reciprocal %789 {approx = true} : vector<8x1xf32> -> vector<8x1xf32>
    %791 = vector.broadcast %790 : vector<8x1xf32> to vector<8x8xf32>
    %792 = arith.mulf %787, %791 : vector<8x8xf32>
    %cst_315 = arith.constant dense<0.000000e+00> : vector<8x8xf32>
    %793 = tpu.matmul %792, %778, %cst_315 {dimension_numbers = #tpu.dot_dimension_numbers<[1], [0], [0], [1], [0, 0, 1, 1], [], []>} : vector<8x8xf32>, vector<8x8xf32>, vector<8x8xf32> -> vector<8x8xf32>
    %794 = vector.extract_strided_slice %773 {offsets = [0, 0], sizes = [8, 32], strides = [1, 1]} : vector<32x32xf32> to vector<8x32xf32>
    %cst_316 = arith.constant dense<0.000000e+00> : vector<8x32xf32>
    %795 = tpu.matmul %793, %794, %cst_316 {dimension_numbers = #tpu.dot_dimension_numbers<[1], [0], [0], [1], [0, 0, 1, 1], [], []>} : vector<8x8xf32>, vector<8x32xf32>, vector<8x32xf32> -> vector<8x32xf32>
    %796 = vector.broadcast %775 : vector<1x32xf32> to vector<8x32xf32>
    %797 = arith.addf %796, %795 : vector<8x32xf32>
    %798 = vector.extract_strided_slice %769 {offsets = [0, 8], sizes = [8, 8], strides = [1, 1]} : vector<8x32xf32> to vector<8x8xf32>
    %799 = vector.extract_strided_slice %770 {offsets = [0, 8], sizes = [8, 8], strides = [1, 1]} : vector<8x32xf32> to vector<8x8xf32>
    %800 = vector.extract_strided_slice %771 {offsets = [0, 8], sizes = [8, 8], strides = [1, 1]} : vector<8x32xf32> to vector<8x8xf32>
    %cst_317 = arith.constant dense<0.000000e+00> : vector<8x8xf32>
    %801 = tpu.matmul %798, %799, %cst_317 {dimension_numbers = #tpu.dot_dimension_numbers<[1], [1], [0], [0], [0, 0, 1, 0], [], []>} : vector<8x8xf32>, vector<8x8xf32>, vector<8x8xf32> -> vector<8x8xf32>
    %cst_318 = arith.constant 0.353553385 : f32
    %802 = vector.broadcast %cst_318 : f32 to vector<8x8xf32>
    %803 = arith.mulf %801, %802 : vector<8x8xf32>
    %804 = arith.addf %803, %453 : vector<8x8xf32>
    %cst_319 = arith.constant dense<0xFF800000> : vector<8xf32>
    %805 = vector.multi_reduction <maximumf>, %804, %cst_319 [1] : vector<8x8xf32> to vector<8xf32>
    %806 = vector.shape_cast %805 : vector<8xf32> to vector<8x1xf32>
    %807 = vector.broadcast %806 : vector<8x1xf32> to vector<8x8xf32>
    %808 = arith.subf %804, %807 : vector<8x8xf32>
    %809 = math.exp %808 : vector<8x8xf32>
    %cst_320 = arith.constant dense<0.000000e+00> : vector<8xf32>
    %810 = vector.multi_reduction <add>, %809, %cst_320 [1] : vector<8x8xf32> to vector<8xf32>
    %811 = vector.shape_cast %810 : vector<8xf32> to vector<8x1xf32>
    %812 = tpu.reciprocal %811 {approx = true} : vector<8x1xf32> -> vector<8x1xf32>
    %813 = vector.broadcast %812 : vector<8x1xf32> to vector<8x8xf32>
    %814 = arith.mulf %809, %813 : vector<8x8xf32>
    %cst_321 = arith.constant dense<0.000000e+00> : vector<8x8xf32>
    %815 = tpu.matmul %814, %800, %cst_321 {dimension_numbers = #tpu.dot_dimension_numbers<[1], [0], [0], [1], [0, 0, 1, 1], [], []>} : vector<8x8xf32>, vector<8x8xf32>, vector<8x8xf32> -> vector<8x8xf32>
    %816 = vector.extract_strided_slice %773 {offsets = [8, 0], sizes = [8, 32], strides = [1, 1]} : vector<32x32xf32> to vector<8x32xf32>
    %cst_322 = arith.constant dense<0.000000e+00> : vector<8x32xf32>
    %817 = tpu.matmul %815, %816, %cst_322 {dimension_numbers = #tpu.dot_dimension_numbers<[1], [0], [0], [1], [0, 0, 1, 1], [], []>} : vector<8x8xf32>, vector<8x32xf32>, vector<8x32xf32> -> vector<8x32xf32>
    %818 = arith.addf %797, %817 : vector<8x32xf32>
    %819 = vector.extract_strided_slice %769 {offsets = [0, 16], sizes = [8, 8], strides = [1, 1]} : vector<8x32xf32> to vector<8x8xf32>
    %820 = vector.extract_strided_slice %770 {offsets = [0, 16], sizes = [8, 8], strides = [1, 1]} : vector<8x32xf32> to vector<8x8xf32>
    %821 = vector.extract_strided_slice %771 {offsets = [0, 16], sizes = [8, 8], strides = [1, 1]} : vector<8x32xf32> to vector<8x8xf32>
    %cst_323 = arith.constant dense<0.000000e+00> : vector<8x8xf32>
    %822 = tpu.matmul %819, %820, %cst_323 {dimension_numbers = #tpu.dot_dimension_numbers<[1], [1], [0], [0], [0, 0, 1, 0], [], []>} : vector<8x8xf32>, vector<8x8xf32>, vector<8x8xf32> -> vector<8x8xf32>
    %cst_324 = arith.constant 0.353553385 : f32
    %823 = vector.broadcast %cst_324 : f32 to vector<8x8xf32>
    %824 = arith.mulf %822, %823 : vector<8x8xf32>
    %825 = arith.addf %824, %453 : vector<8x8xf32>
    %cst_325 = arith.constant dense<0xFF800000> : vector<8xf32>
    %826 = vector.multi_reduction <maximumf>, %825, %cst_325 [1] : vector<8x8xf32> to vector<8xf32>
    %827 = vector.shape_cast %826 : vector<8xf32> to vector<8x1xf32>
    %828 = vector.broadcast %827 : vector<8x1xf32> to vector<8x8xf32>
    %829 = arith.subf %825, %828 : vector<8x8xf32>
    %830 = math.exp %829 : vector<8x8xf32>
    %cst_326 = arith.constant dense<0.000000e+00> : vector<8xf32>
    %831 = vector.multi_reduction <add>, %830, %cst_326 [1] : vector<8x8xf32> to vector<8xf32>
    %832 = vector.shape_cast %831 : vector<8xf32> to vector<8x1xf32>
    %833 = tpu.reciprocal %832 {approx = true} : vector<8x1xf32> -> vector<8x1xf32>
    %834 = vector.broadcast %833 : vector<8x1xf32> to vector<8x8xf32>
    %835 = arith.mulf %830, %834 : vector<8x8xf32>
    %cst_327 = arith.constant dense<0.000000e+00> : vector<8x8xf32>
    %836 = tpu.matmul %835, %821, %cst_327 {dimension_numbers = #tpu.dot_dimension_numbers<[1], [0], [0], [1], [0, 0, 1, 1], [], []>} : vector<8x8xf32>, vector<8x8xf32>, vector<8x8xf32> -> vector<8x8xf32>
    %837 = vector.extract_strided_slice %773 {offsets = [16, 0], sizes = [8, 32], strides = [1, 1]} : vector<32x32xf32> to vector<8x32xf32>
    %cst_328 = arith.constant dense<0.000000e+00> : vector<8x32xf32>
    %838 = tpu.matmul %836, %837, %cst_328 {dimension_numbers = #tpu.dot_dimension_numbers<[1], [0], [0], [1], [0, 0, 1, 1], [], []>} : vector<8x8xf32>, vector<8x32xf32>, vector<8x32xf32> -> vector<8x32xf32>
    %839 = arith.addf %818, %838 : vector<8x32xf32>
    %840 = vector.extract_strided_slice %769 {offsets = [0, 24], sizes = [8, 8], strides = [1, 1]} : vector<8x32xf32> to vector<8x8xf32>
    %841 = vector.extract_strided_slice %770 {offsets = [0, 24], sizes = [8, 8], strides = [1, 1]} : vector<8x32xf32> to vector<8x8xf32>
    %842 = vector.extract_strided_slice %771 {offsets = [0, 24], sizes = [8, 8], strides = [1, 1]} : vector<8x32xf32> to vector<8x8xf32>
    %cst_329 = arith.constant dense<0.000000e+00> : vector<8x8xf32>
    %843 = tpu.matmul %840, %841, %cst_329 {dimension_numbers = #tpu.dot_dimension_numbers<[1], [1], [0], [0], [0, 0, 1, 0], [], []>} : vector<8x8xf32>, vector<8x8xf32>, vector<8x8xf32> -> vector<8x8xf32>
    %cst_330 = arith.constant 0.353553385 : f32
    %844 = vector.broadcast %cst_330 : f32 to vector<8x8xf32>
    %845 = arith.mulf %843, %844 : vector<8x8xf32>
    %846 = arith.addf %845, %453 : vector<8x8xf32>
    %cst_331 = arith.constant dense<0xFF800000> : vector<8xf32>
    %847 = vector.multi_reduction <maximumf>, %846, %cst_331 [1] : vector<8x8xf32> to vector<8xf32>
    %848 = vector.shape_cast %847 : vector<8xf32> to vector<8x1xf32>
    %849 = vector.broadcast %848 : vector<8x1xf32> to vector<8x8xf32>
    %850 = arith.subf %846, %849 : vector<8x8xf32>
    %851 = math.exp %850 : vector<8x8xf32>
    %cst_332 = arith.constant dense<0.000000e+00> : vector<8xf32>
    %852 = vector.multi_reduction <add>, %851, %cst_332 [1] : vector<8x8xf32> to vector<8xf32>
    %853 = vector.shape_cast %852 : vector<8xf32> to vector<8x1xf32>
    %854 = tpu.reciprocal %853 {approx = true} : vector<8x1xf32> -> vector<8x1xf32>
    %855 = vector.broadcast %854 : vector<8x1xf32> to vector<8x8xf32>
    %856 = arith.mulf %851, %855 : vector<8x8xf32>
    %cst_333 = arith.constant dense<0.000000e+00> : vector<8x8xf32>
    %857 = tpu.matmul %856, %842, %cst_333 {dimension_numbers = #tpu.dot_dimension_numbers<[1], [0], [0], [1], [0, 0, 1, 1], [], []>} : vector<8x8xf32>, vector<8x8xf32>, vector<8x8xf32> -> vector<8x8xf32>
    %858 = vector.extract_strided_slice %773 {offsets = [24, 0], sizes = [8, 32], strides = [1, 1]} : vector<32x32xf32> to vector<8x32xf32>
    %cst_334 = arith.constant dense<0.000000e+00> : vector<8x32xf32>
    %859 = tpu.matmul %857, %858, %cst_334 {dimension_numbers = #tpu.dot_dimension_numbers<[1], [0], [0], [1], [0, 0, 1, 1], [], []>} : vector<8x8xf32>, vector<8x32xf32>, vector<8x32xf32> -> vector<8x32xf32>
    %860 = arith.addf %839, %859 : vector<8x32xf32>
    %861 = arith.addf %761, %860 : vector<8x32xf32>
    %c1_335 = arith.constant 1 : index
    %c0_336 = arith.constant 0 : index
    %c0_337 = arith.constant 0 : index
    %862 = vector.load %arg20[%c1_335, %c0_336, %c0_337] : memref<2x2x32xf32, #tpu.memory_space<vmem>>, vector<1x2x32xf32>
    %863 = vector.shape_cast %862 : vector<1x2x32xf32> to vector<2x32xf32>
    %864 = vector.extract_strided_slice %863 {offsets = [0, 0], sizes = [1, 32], strides = [1, 1]} : vector<2x32xf32> to vector<1x32xf32>
    %865 = vector.extract_strided_slice %863 {offsets = [1, 0], sizes = [1, 32], strides = [1, 1]} : vector<2x32xf32> to vector<1x32xf32>
    %cst_338 = arith.constant dense<0.000000e+00> : vector<8xf32>
    %866 = vector.multi_reduction <add>, %861, %cst_338 [1] : vector<8x32xf32> to vector<8xf32>
    %867 = vector.shape_cast %866 : vector<8xf32> to vector<8x1xf32>
    %cst_339 = arith.constant 3.200000e+01 : f32
    %868 = vector.broadcast %cst_339 : f32 to vector<8x1xf32>
    %869 = arith.divf %867, %868 : vector<8x1xf32>
    %870 = vector.broadcast %869 : vector<8x1xf32> to vector<8x32xf32>
    %871 = arith.subf %861, %870 : vector<8x32xf32>
    %872 = arith.mulf %871, %871 : vector<8x32xf32>
    %cst_340 = arith.constant dense<0.000000e+00> : vector<8xf32>
    %873 = vector.multi_reduction <add>, %872, %cst_340 [1] : vector<8x32xf32> to vector<8xf32>
    %874 = vector.shape_cast %873 : vector<8xf32> to vector<8x1xf32>
    %cst_341 = arith.constant 3.200000e+01 : f32
    %875 = vector.broadcast %cst_341 : f32 to vector<8x1xf32>
    %876 = arith.divf %874, %875 : vector<8x1xf32>
    %877 = vector.broadcast %869 : vector<8x1xf32> to vector<8x32xf32>
    %878 = arith.subf %861, %877 : vector<8x32xf32>
    %cst_342 = arith.constant 9.99999974E-6 : f32
    %879 = vector.broadcast %cst_342 : f32 to vector<8x1xf32>
    %880 = arith.addf %876, %879 : vector<8x1xf32>
    %881 = math.rsqrt %880 : vector<8x1xf32>
    %882 = vector.broadcast %881 : vector<8x1xf32> to vector<8x32xf32>
    %883 = arith.mulf %878, %882 : vector<8x32xf32>
    %884 = vector.broadcast %864 : vector<1x32xf32> to vector<8x32xf32>
    %885 = arith.mulf %883, %884 : vector<8x32xf32>
    %886 = vector.broadcast %865 : vector<1x32xf32> to vector<8x32xf32>
    %887 = arith.addf %885, %886 : vector<8x32xf32>
    %c1_343 = arith.constant 1 : index
    %c0_344 = arith.constant 0 : index
    %c0_345 = arith.constant 0 : index
    %888 = vector.load %arg21[%c1_343, %c0_344, %c0_345] : memref<2x32x32xf32, #tpu.memory_space<vmem>>, vector<1x32x32xf32>
    %889 = vector.shape_cast %888 : vector<1x32x32xf32> to vector<32x32xf32>
    %cst_346 = arith.constant dense<0.000000e+00> : vector<8x32xf32>
    %890 = tpu.matmul %887, %889, %cst_346 {dimension_numbers = #tpu.dot_dimension_numbers<[1], [0], [0], [1], [0, 0, 1, 1], [], []>} : vector<8x32xf32>, vector<32x32xf32>, vector<8x32xf32> -> vector<8x32xf32>
    %c1_347 = arith.constant 1 : index
    %c0_348 = arith.constant 0 : index
    %c0_349 = arith.constant 0 : index
    %891 = vector.load %arg22[%c1_347, %c0_348, %c0_349] : memref<2x1x32xf32, #tpu.memory_space<vmem>>, vector<1x1x32xf32>
    %892 = vector.shape_cast %891 : vector<1x1x32xf32> to vector<1x32xf32>
    %893 = vector.broadcast %892 : vector<1x32xf32> to vector<8x32xf32>
    %894 = arith.addf %890, %893 : vector<8x32xf32>
    %c1_350 = arith.constant 1 : index
    %c0_351 = arith.constant 0 : index
    %c0_352 = arith.constant 0 : index
    %895 = vector.load %arg23[%c1_350, %c0_351, %c0_352] : memref<2x32x64xf32, #tpu.memory_space<vmem>>, vector<1x32x64xf32>
    %896 = vector.shape_cast %895 : vector<1x32x64xf32> to vector<32x64xf32>
    %cst_353 = arith.constant dense<0.000000e+00> : vector<9x64xf32>
    %897 = tpu.matmul %396, %896, %cst_353 {dimension_numbers = #tpu.dot_dimension_numbers<[1], [0], [0], [1], [0, 0, 1, 1], [], []>} : vector<9x32xf32>, vector<32x64xf32>, vector<9x64xf32> -> vector<9x64xf32>
    %c1_354 = arith.constant 1 : index
    %c0_355 = arith.constant 0 : index
    %c0_356 = arith.constant 0 : index
    %898 = vector.load %arg24[%c1_354, %c0_355, %c0_356] : memref<2x1x64xf32, #tpu.memory_space<vmem>>, vector<1x1x64xf32>
    %899 = vector.shape_cast %898 : vector<1x1x64xf32> to vector<1x64xf32>
    %900 = vector.broadcast %899 : vector<1x64xf32> to vector<9x64xf32>
    %901 = arith.addf %897, %900 : vector<9x64xf32>
    %902 = vector.extract_strided_slice %901 {offsets = [0, 0], sizes = [9, 32], strides = [1, 1]} : vector<9x64xf32> to vector<9x32xf32>
    %903 = vector.extract_strided_slice %901 {offsets = [0, 32], sizes = [9, 32], strides = [1, 1]} : vector<9x64xf32> to vector<9x32xf32>
    %c1_357 = arith.constant 1 : index
    %c0_358 = arith.constant 0 : index
    %c0_359 = arith.constant 0 : index
    %904 = vector.load %arg25[%c1_357, %c0_358, %c0_359] : memref<2x32x32xf32, #tpu.memory_space<vmem>>, vector<1x32x32xf32>
    %905 = vector.shape_cast %904 : vector<1x32x32xf32> to vector<32x32xf32>
    %c1_360 = arith.constant 1 : index
    %c0_361 = arith.constant 0 : index
    %c0_362 = arith.constant 0 : index
    %906 = vector.load %arg26[%c1_360, %c0_361, %c0_362] : memref<2x1x32xf32, #tpu.memory_space<vmem>>, vector<1x1x32xf32>
    %907 = vector.shape_cast %906 : vector<1x1x32xf32> to vector<1x32xf32>
    %908 = vector.extract_strided_slice %894 {offsets = [0, 0], sizes = [8, 8], strides = [1, 1]} : vector<8x32xf32> to vector<8x8xf32>
    %909 = vector.extract_strided_slice %902 {offsets = [0, 0], sizes = [9, 8], strides = [1, 1]} : vector<9x32xf32> to vector<9x8xf32>
    %910 = vector.extract_strided_slice %903 {offsets = [0, 0], sizes = [9, 8], strides = [1, 1]} : vector<9x32xf32> to vector<9x8xf32>
    %cst_363 = arith.constant dense<0.000000e+00> : vector<8x9xf32>
    %911 = tpu.matmul %908, %909, %cst_363 {dimension_numbers = #tpu.dot_dimension_numbers<[1], [1], [0], [0], [0, 0, 1, 0], [], []>} : vector<8x8xf32>, vector<9x8xf32>, vector<8x9xf32> -> vector<8x9xf32>
    %cst_364 = arith.constant 0.353553385 : f32
    %912 = vector.broadcast %cst_364 : f32 to vector<8x9xf32>
    %913 = arith.mulf %911, %912 : vector<8x9xf32>
    %cst_365 = arith.constant dense<0xFF800000> : vector<8xf32>
    %914 = vector.multi_reduction <maximumf>, %913, %cst_365 [1] : vector<8x9xf32> to vector<8xf32>
    %915 = vector.shape_cast %914 : vector<8xf32> to vector<8x1xf32>
    %916 = vector.broadcast %915 : vector<8x1xf32> to vector<8x9xf32>
    %917 = arith.subf %913, %916 : vector<8x9xf32>
    %918 = math.exp %917 : vector<8x9xf32>
    %cst_366 = arith.constant dense<0.000000e+00> : vector<8xf32>
    %919 = vector.multi_reduction <add>, %918, %cst_366 [1] : vector<8x9xf32> to vector<8xf32>
    %920 = vector.shape_cast %919 : vector<8xf32> to vector<8x1xf32>
    %921 = tpu.reciprocal %920 {approx = true} : vector<8x1xf32> -> vector<8x1xf32>
    %922 = vector.broadcast %921 : vector<8x1xf32> to vector<8x9xf32>
    %923 = arith.mulf %918, %922 : vector<8x9xf32>
    %cst_367 = arith.constant dense<0.000000e+00> : vector<8x8xf32>
    %924 = tpu.matmul %923, %910, %cst_367 {dimension_numbers = #tpu.dot_dimension_numbers<[1], [0], [0], [1], [0, 0, 1, 1], [], []>} : vector<8x9xf32>, vector<9x8xf32>, vector<8x8xf32> -> vector<8x8xf32>
    %925 = vector.extract_strided_slice %905 {offsets = [0, 0], sizes = [8, 32], strides = [1, 1]} : vector<32x32xf32> to vector<8x32xf32>
    %cst_368 = arith.constant dense<0.000000e+00> : vector<8x32xf32>
    %926 = tpu.matmul %924, %925, %cst_368 {dimension_numbers = #tpu.dot_dimension_numbers<[1], [0], [0], [1], [0, 0, 1, 1], [], []>} : vector<8x8xf32>, vector<8x32xf32>, vector<8x32xf32> -> vector<8x32xf32>
    %927 = vector.broadcast %907 : vector<1x32xf32> to vector<8x32xf32>
    %928 = arith.addf %927, %926 : vector<8x32xf32>
    %929 = vector.extract_strided_slice %894 {offsets = [0, 8], sizes = [8, 8], strides = [1, 1]} : vector<8x32xf32> to vector<8x8xf32>
    %930 = vector.extract_strided_slice %902 {offsets = [0, 8], sizes = [9, 8], strides = [1, 1]} : vector<9x32xf32> to vector<9x8xf32>
    %931 = vector.extract_strided_slice %903 {offsets = [0, 8], sizes = [9, 8], strides = [1, 1]} : vector<9x32xf32> to vector<9x8xf32>
    %cst_369 = arith.constant dense<0.000000e+00> : vector<8x9xf32>
    %932 = tpu.matmul %929, %930, %cst_369 {dimension_numbers = #tpu.dot_dimension_numbers<[1], [1], [0], [0], [0, 0, 1, 0], [], []>} : vector<8x8xf32>, vector<9x8xf32>, vector<8x9xf32> -> vector<8x9xf32>
    %cst_370 = arith.constant 0.353553385 : f32
    %933 = vector.broadcast %cst_370 : f32 to vector<8x9xf32>
    %934 = arith.mulf %932, %933 : vector<8x9xf32>
    %cst_371 = arith.constant dense<0xFF800000> : vector<8xf32>
    %935 = vector.multi_reduction <maximumf>, %934, %cst_371 [1] : vector<8x9xf32> to vector<8xf32>
    %936 = vector.shape_cast %935 : vector<8xf32> to vector<8x1xf32>
    %937 = vector.broadcast %936 : vector<8x1xf32> to vector<8x9xf32>
    %938 = arith.subf %934, %937 : vector<8x9xf32>
    %939 = math.exp %938 : vector<8x9xf32>
    %cst_372 = arith.constant dense<0.000000e+00> : vector<8xf32>
    %940 = vector.multi_reduction <add>, %939, %cst_372 [1] : vector<8x9xf32> to vector<8xf32>
    %941 = vector.shape_cast %940 : vector<8xf32> to vector<8x1xf32>
    %942 = tpu.reciprocal %941 {approx = true} : vector<8x1xf32> -> vector<8x1xf32>
    %943 = vector.broadcast %942 : vector<8x1xf32> to vector<8x9xf32>
    %944 = arith.mulf %939, %943 : vector<8x9xf32>
    %cst_373 = arith.constant dense<0.000000e+00> : vector<8x8xf32>
    %945 = tpu.matmul %944, %931, %cst_373 {dimension_numbers = #tpu.dot_dimension_numbers<[1], [0], [0], [1], [0, 0, 1, 1], [], []>} : vector<8x9xf32>, vector<9x8xf32>, vector<8x8xf32> -> vector<8x8xf32>
    %946 = vector.extract_strided_slice %905 {offsets = [8, 0], sizes = [8, 32], strides = [1, 1]} : vector<32x32xf32> to vector<8x32xf32>
    %cst_374 = arith.constant dense<0.000000e+00> : vector<8x32xf32>
    %947 = tpu.matmul %945, %946, %cst_374 {dimension_numbers = #tpu.dot_dimension_numbers<[1], [0], [0], [1], [0, 0, 1, 1], [], []>} : vector<8x8xf32>, vector<8x32xf32>, vector<8x32xf32> -> vector<8x32xf32>
    %948 = arith.addf %928, %947 : vector<8x32xf32>
    %949 = vector.extract_strided_slice %894 {offsets = [0, 16], sizes = [8, 8], strides = [1, 1]} : vector<8x32xf32> to vector<8x8xf32>
    %950 = vector.extract_strided_slice %902 {offsets = [0, 16], sizes = [9, 8], strides = [1, 1]} : vector<9x32xf32> to vector<9x8xf32>
    %951 = vector.extract_strided_slice %903 {offsets = [0, 16], sizes = [9, 8], strides = [1, 1]} : vector<9x32xf32> to vector<9x8xf32>
    %cst_375 = arith.constant dense<0.000000e+00> : vector<8x9xf32>
    %952 = tpu.matmul %949, %950, %cst_375 {dimension_numbers = #tpu.dot_dimension_numbers<[1], [1], [0], [0], [0, 0, 1, 0], [], []>} : vector<8x8xf32>, vector<9x8xf32>, vector<8x9xf32> -> vector<8x9xf32>
    %cst_376 = arith.constant 0.353553385 : f32
    %953 = vector.broadcast %cst_376 : f32 to vector<8x9xf32>
    %954 = arith.mulf %952, %953 : vector<8x9xf32>
    %cst_377 = arith.constant dense<0xFF800000> : vector<8xf32>
    %955 = vector.multi_reduction <maximumf>, %954, %cst_377 [1] : vector<8x9xf32> to vector<8xf32>
    %956 = vector.shape_cast %955 : vector<8xf32> to vector<8x1xf32>
    %957 = vector.broadcast %956 : vector<8x1xf32> to vector<8x9xf32>
    %958 = arith.subf %954, %957 : vector<8x9xf32>
    %959 = math.exp %958 : vector<8x9xf32>
    %cst_378 = arith.constant dense<0.000000e+00> : vector<8xf32>
    %960 = vector.multi_reduction <add>, %959, %cst_378 [1] : vector<8x9xf32> to vector<8xf32>
    %961 = vector.shape_cast %960 : vector<8xf32> to vector<8x1xf32>
    %962 = tpu.reciprocal %961 {approx = true} : vector<8x1xf32> -> vector<8x1xf32>
    %963 = vector.broadcast %962 : vector<8x1xf32> to vector<8x9xf32>
    %964 = arith.mulf %959, %963 : vector<8x9xf32>
    %cst_379 = arith.constant dense<0.000000e+00> : vector<8x8xf32>
    %965 = tpu.matmul %964, %951, %cst_379 {dimension_numbers = #tpu.dot_dimension_numbers<[1], [0], [0], [1], [0, 0, 1, 1], [], []>} : vector<8x9xf32>, vector<9x8xf32>, vector<8x8xf32> -> vector<8x8xf32>
    %966 = vector.extract_strided_slice %905 {offsets = [16, 0], sizes = [8, 32], strides = [1, 1]} : vector<32x32xf32> to vector<8x32xf32>
    %cst_380 = arith.constant dense<0.000000e+00> : vector<8x32xf32>
    %967 = tpu.matmul %965, %966, %cst_380 {dimension_numbers = #tpu.dot_dimension_numbers<[1], [0], [0], [1], [0, 0, 1, 1], [], []>} : vector<8x8xf32>, vector<8x32xf32>, vector<8x32xf32> -> vector<8x32xf32>
    %968 = arith.addf %948, %967 : vector<8x32xf32>
    %969 = vector.extract_strided_slice %894 {offsets = [0, 24], sizes = [8, 8], strides = [1, 1]} : vector<8x32xf32> to vector<8x8xf32>
    %970 = vector.extract_strided_slice %902 {offsets = [0, 24], sizes = [9, 8], strides = [1, 1]} : vector<9x32xf32> to vector<9x8xf32>
    %971 = vector.extract_strided_slice %903 {offsets = [0, 24], sizes = [9, 8], strides = [1, 1]} : vector<9x32xf32> to vector<9x8xf32>
    %cst_381 = arith.constant dense<0.000000e+00> : vector<8x9xf32>
    %972 = tpu.matmul %969, %970, %cst_381 {dimension_numbers = #tpu.dot_dimension_numbers<[1], [1], [0], [0], [0, 0, 1, 0], [], []>} : vector<8x8xf32>, vector<9x8xf32>, vector<8x9xf32> -> vector<8x9xf32>
    %cst_382 = arith.constant 0.353553385 : f32
    %973 = vector.broadcast %cst_382 : f32 to vector<8x9xf32>
    %974 = arith.mulf %972, %973 : vector<8x9xf32>
    %cst_383 = arith.constant dense<0xFF800000> : vector<8xf32>
    %975 = vector.multi_reduction <maximumf>, %974, %cst_383 [1] : vector<8x9xf32> to vector<8xf32>
    %976 = vector.shape_cast %975 : vector<8xf32> to vector<8x1xf32>
    %977 = vector.broadcast %976 : vector<8x1xf32> to vector<8x9xf32>
    %978 = arith.subf %974, %977 : vector<8x9xf32>
    %979 = math.exp %978 : vector<8x9xf32>
    %cst_384 = arith.constant dense<0.000000e+00> : vector<8xf32>
    %980 = vector.multi_reduction <add>, %979, %cst_384 [1] : vector<8x9xf32> to vector<8xf32>
    %981 = vector.shape_cast %980 : vector<8xf32> to vector<8x1xf32>
    %982 = tpu.reciprocal %981 {approx = true} : vector<8x1xf32> -> vector<8x1xf32>
    %983 = vector.broadcast %982 : vector<8x1xf32> to vector<8x9xf32>
    %984 = arith.mulf %979, %983 : vector<8x9xf32>
    %cst_385 = arith.constant dense<0.000000e+00> : vector<8x8xf32>
    %985 = tpu.matmul %984, %971, %cst_385 {dimension_numbers = #tpu.dot_dimension_numbers<[1], [0], [0], [1], [0, 0, 1, 1], [], []>} : vector<8x9xf32>, vector<9x8xf32>, vector<8x8xf32> -> vector<8x8xf32>
    %986 = vector.extract_strided_slice %905 {offsets = [24, 0], sizes = [8, 32], strides = [1, 1]} : vector<32x32xf32> to vector<8x32xf32>
    %cst_386 = arith.constant dense<0.000000e+00> : vector<8x32xf32>
    %987 = tpu.matmul %985, %986, %cst_386 {dimension_numbers = #tpu.dot_dimension_numbers<[1], [0], [0], [1], [0, 0, 1, 1], [], []>} : vector<8x8xf32>, vector<8x32xf32>, vector<8x32xf32> -> vector<8x32xf32>
    %988 = arith.addf %968, %987 : vector<8x32xf32>
    %989 = arith.addf %887, %988 : vector<8x32xf32>
    %c1_387 = arith.constant 1 : index
    %c0_388 = arith.constant 0 : index
    %c0_389 = arith.constant 0 : index
    %990 = vector.load %arg27[%c1_387, %c0_388, %c0_389] : memref<2x2x32xf32, #tpu.memory_space<vmem>>, vector<1x2x32xf32>
    %991 = vector.shape_cast %990 : vector<1x2x32xf32> to vector<2x32xf32>
    %992 = vector.extract_strided_slice %991 {offsets = [0, 0], sizes = [1, 32], strides = [1, 1]} : vector<2x32xf32> to vector<1x32xf32>
    %993 = vector.extract_strided_slice %991 {offsets = [1, 0], sizes = [1, 32], strides = [1, 1]} : vector<2x32xf32> to vector<1x32xf32>
    %cst_390 = arith.constant dense<0.000000e+00> : vector<8xf32>
    %994 = vector.multi_reduction <add>, %989, %cst_390 [1] : vector<8x32xf32> to vector<8xf32>
    %995 = vector.shape_cast %994 : vector<8xf32> to vector<8x1xf32>
    %cst_391 = arith.constant 3.200000e+01 : f32
    %996 = vector.broadcast %cst_391 : f32 to vector<8x1xf32>
    %997 = arith.divf %995, %996 : vector<8x1xf32>
    %998 = vector.broadcast %997 : vector<8x1xf32> to vector<8x32xf32>
    %999 = arith.subf %989, %998 : vector<8x32xf32>
    %1000 = arith.mulf %999, %999 : vector<8x32xf32>
    %cst_392 = arith.constant dense<0.000000e+00> : vector<8xf32>
    %1001 = vector.multi_reduction <add>, %1000, %cst_392 [1] : vector<8x32xf32> to vector<8xf32>
    %1002 = vector.shape_cast %1001 : vector<8xf32> to vector<8x1xf32>
    %cst_393 = arith.constant 3.200000e+01 : f32
    %1003 = vector.broadcast %cst_393 : f32 to vector<8x1xf32>
    %1004 = arith.divf %1002, %1003 : vector<8x1xf32>
    %1005 = vector.broadcast %997 : vector<8x1xf32> to vector<8x32xf32>
    %1006 = arith.subf %989, %1005 : vector<8x32xf32>
    %cst_394 = arith.constant 9.99999974E-6 : f32
    %1007 = vector.broadcast %cst_394 : f32 to vector<8x1xf32>
    %1008 = arith.addf %1004, %1007 : vector<8x1xf32>
    %1009 = math.rsqrt %1008 : vector<8x1xf32>
    %1010 = vector.broadcast %1009 : vector<8x1xf32> to vector<8x32xf32>
    %1011 = arith.mulf %1006, %1010 : vector<8x32xf32>
    %1012 = vector.broadcast %992 : vector<1x32xf32> to vector<8x32xf32>
    %1013 = arith.mulf %1011, %1012 : vector<8x32xf32>
    %1014 = vector.broadcast %993 : vector<1x32xf32> to vector<8x32xf32>
    %1015 = arith.addf %1013, %1014 : vector<8x32xf32>
    %c1_395 = arith.constant 1 : index
    %c0_396 = arith.constant 0 : index
    %c0_397 = arith.constant 0 : index
    %1016 = vector.load %arg28[%c1_395, %c0_396, %c0_397] : memref<2x32x64xf32, #tpu.memory_space<vmem>>, vector<1x32x64xf32>
    %1017 = vector.shape_cast %1016 : vector<1x32x64xf32> to vector<32x64xf32>
    %cst_398 = arith.constant dense<0.000000e+00> : vector<8x64xf32>
    %1018 = tpu.matmul %1015, %1017, %cst_398 {dimension_numbers = #tpu.dot_dimension_numbers<[1], [0], [0], [1], [0, 0, 1, 1], [], []>} : vector<8x32xf32>, vector<32x64xf32>, vector<8x64xf32> -> vector<8x64xf32>
    %c1_399 = arith.constant 1 : index
    %c0_400 = arith.constant 0 : index
    %c0_401 = arith.constant 0 : index
    %1019 = vector.load %arg29[%c1_399, %c0_400, %c0_401] : memref<2x1x64xf32, #tpu.memory_space<vmem>>, vector<1x1x64xf32>
    %1020 = vector.shape_cast %1019 : vector<1x1x64xf32> to vector<1x64xf32>
    %1021 = vector.broadcast %1020 : vector<1x64xf32> to vector<8x64xf32>
    %1022 = arith.addf %1018, %1021 : vector<8x64xf32>
    %cst_402 = arith.constant 5.000000e-01 : f32
    %1023 = vector.broadcast %cst_402 : f32 to vector<8x64xf32>
    %1024 = arith.mulf %1023, %1022 : vector<8x64xf32>
    %cst_403 = arith.constant 4.471500e-02 : f32
    %1025 = vector.broadcast %cst_403 : f32 to vector<8x64xf32>
    %1026 = arith.mulf %1025, %1022 : vector<8x64xf32>
    %1027 = arith.mulf %1026, %1022 : vector<8x64xf32>
    %1028 = arith.mulf %1027, %1022 : vector<8x64xf32>
    %1029 = arith.addf %1022, %1028 : vector<8x64xf32>
    %cst_404 = arith.constant 0.797884583 : f32
    %1030 = vector.broadcast %cst_404 : f32 to vector<8x64xf32>
    %1031 = arith.mulf %1030, %1029 : vector<8x64xf32>
    %1032 = math.tanh %1031 : vector<8x64xf32>
    %cst_405 = arith.constant 1.000000e+00 : f32
    %1033 = vector.broadcast %cst_405 : f32 to vector<8x64xf32>
    %1034 = arith.addf %1033, %1032 : vector<8x64xf32>
    %1035 = arith.mulf %1024, %1034 : vector<8x64xf32>
    %c1_406 = arith.constant 1 : index
    %c0_407 = arith.constant 0 : index
    %c0_408 = arith.constant 0 : index
    %1036 = vector.load %arg30[%c1_406, %c0_407, %c0_408] : memref<2x64x32xf32, #tpu.memory_space<vmem>>, vector<1x64x32xf32>
    %1037 = vector.shape_cast %1036 : vector<1x64x32xf32> to vector<64x32xf32>
    %cst_409 = arith.constant dense<0.000000e+00> : vector<8x32xf32>
    %1038 = tpu.matmul %1035, %1037, %cst_409 {dimension_numbers = #tpu.dot_dimension_numbers<[1], [0], [0], [1], [0, 0, 1, 1], [], []>} : vector<8x64xf32>, vector<64x32xf32>, vector<8x32xf32> -> vector<8x32xf32>
    %c1_410 = arith.constant 1 : index
    %c0_411 = arith.constant 0 : index
    %c0_412 = arith.constant 0 : index
    %1039 = vector.load %arg31[%c1_410, %c0_411, %c0_412] : memref<2x1x32xf32, #tpu.memory_space<vmem>>, vector<1x1x32xf32>
    %1040 = vector.shape_cast %1039 : vector<1x1x32xf32> to vector<1x32xf32>
    %1041 = vector.broadcast %1040 : vector<1x32xf32> to vector<8x32xf32>
    %1042 = arith.addf %1038, %1041 : vector<8x32xf32>
    %1043 = arith.addf %1015, %1042 : vector<8x32xf32>
    %c1_413 = arith.constant 1 : index
    %c0_414 = arith.constant 0 : index
    %c0_415 = arith.constant 0 : index
    %1044 = vector.load %arg32[%c1_413, %c0_414, %c0_415] : memref<2x2x32xf32, #tpu.memory_space<vmem>>, vector<1x2x32xf32>
    %1045 = vector.shape_cast %1044 : vector<1x2x32xf32> to vector<2x32xf32>
    %1046 = vector.extract_strided_slice %1045 {offsets = [0, 0], sizes = [1, 32], strides = [1, 1]} : vector<2x32xf32> to vector<1x32xf32>
    %1047 = vector.extract_strided_slice %1045 {offsets = [1, 0], sizes = [1, 32], strides = [1, 1]} : vector<2x32xf32> to vector<1x32xf32>
    %cst_416 = arith.constant dense<0.000000e+00> : vector<8xf32>
    %1048 = vector.multi_reduction <add>, %1043, %cst_416 [1] : vector<8x32xf32> to vector<8xf32>
    %1049 = vector.shape_cast %1048 : vector<8xf32> to vector<8x1xf32>
    %cst_417 = arith.constant 3.200000e+01 : f32
    %1050 = vector.broadcast %cst_417 : f32 to vector<8x1xf32>
    %1051 = arith.divf %1049, %1050 : vector<8x1xf32>
    %1052 = vector.broadcast %1051 : vector<8x1xf32> to vector<8x32xf32>
    %1053 = arith.subf %1043, %1052 : vector<8x32xf32>
    %1054 = arith.mulf %1053, %1053 : vector<8x32xf32>
    %cst_418 = arith.constant dense<0.000000e+00> : vector<8xf32>
    %1055 = vector.multi_reduction <add>, %1054, %cst_418 [1] : vector<8x32xf32> to vector<8xf32>
    %1056 = vector.shape_cast %1055 : vector<8xf32> to vector<8x1xf32>
    %cst_419 = arith.constant 3.200000e+01 : f32
    %1057 = vector.broadcast %cst_419 : f32 to vector<8x1xf32>
    %1058 = arith.divf %1056, %1057 : vector<8x1xf32>
    %1059 = vector.broadcast %1051 : vector<8x1xf32> to vector<8x32xf32>
    %1060 = arith.subf %1043, %1059 : vector<8x32xf32>
    %cst_420 = arith.constant 9.99999974E-6 : f32
    %1061 = vector.broadcast %cst_420 : f32 to vector<8x1xf32>
    %1062 = arith.addf %1058, %1061 : vector<8x1xf32>
    %1063 = math.rsqrt %1062 : vector<8x1xf32>
    %1064 = vector.broadcast %1063 : vector<8x1xf32> to vector<8x32xf32>
    %1065 = arith.mulf %1060, %1064 : vector<8x32xf32>
    %1066 = vector.broadcast %1046 : vector<1x32xf32> to vector<8x32xf32>
    %1067 = arith.mulf %1065, %1066 : vector<8x32xf32>
    %1068 = vector.broadcast %1047 : vector<1x32xf32> to vector<8x32xf32>
    %1069 = arith.addf %1067, %1068 : vector<8x32xf32>
    %c0_421 = arith.constant 0 : index
    %c0_422 = arith.constant 0 : index
    %1070 = vector.load %arg35[%c0_421, %c0_422] : memref<32x128xf32, #tpu.memory_space<vmem>>, vector<32x128xf32>
    %cst_423 = arith.constant dense<0.000000e+00> : vector<8x128xf32>
    %1071 = tpu.matmul %1069, %1070, %cst_423 {dimension_numbers = #tpu.dot_dimension_numbers<[1], [0], [0], [1], [0, 0, 1, 1], [], []>} : vector<8x32xf32>, vector<32x128xf32>, vector<8x128xf32> -> vector<8x128xf32>
    %c0_424 = arith.constant 0 : index
    %c0_425 = arith.constant 0 : index
    %1072 = vector.load %arg36[%c0_424, %c0_425] : memref<1x128xf32, #tpu.memory_space<vmem>>, vector<1x128xf32>
    %1073 = vector.broadcast %1072 : vector<1x128xf32> to vector<8x128xf32>
    %1074 = arith.addf %1071, %1073 : vector<8x128xf32>
    %cst_426 = arith.constant dense<0xFF800000> : vector<8xf32>
    %1075 = vector.multi_reduction <maximumf>, %1074, %cst_426 [1] : vector<8x128xf32> to vector<8xf32>
    %1076 = vector.shape_cast %1075 : vector<8xf32> to vector<8x1xf32>
    %1077 = vector.broadcast %1076 : vector<8x1xf32> to vector<8x128xf32>
    %1078 = arith.subf %1074, %1077 : vector<8x128xf32>
    %1079 = math.exp %1078 : vector<8x128xf32>
    %cst_427 = arith.constant dense<0.000000e+00> : vector<8xf32>
    %1080 = vector.multi_reduction <add>, %1079, %cst_427 [1] : vector<8x128xf32> to vector<8xf32>
    %1081 = vector.shape_cast %1080 : vector<8xf32> to vector<8x1xf32>
    %1082 = math.log %1081 : vector<8x1xf32>
    %1083 = arith.addf %1082, %1076 : vector<8x1xf32>
    %1084 = vector.broadcast %1083 : vector<8x1xf32> to vector<8x128xf32>
    %1085 = arith.subf %1074, %1084 : vector<8x128xf32>
    %c0_428 = arith.constant 0 : index
    %c0_429 = arith.constant 0 : index
    %c0_430 = arith.constant 0 : index
    %1086 = vector.load %arg38[%c0_428, %c0_429, %c0_430] : memref<1x8x128xf32, #tpu.memory_space<vmem>>, vector<1x8x128xf32>
    %1087 = vector.shape_cast %1086 : vector<1x8x128xf32> to vector<8x128xf32>
    %1088 = vector.shape_cast %1085 : vector<8x128xf32> to vector<1x8x128xf32>
    tpu.vector_store %arg38[%c0_428, %c0_429, %c0_430], %1088 {strides = array<i32>} : memref<1x8x128xf32, #tpu.memory_space<vmem>>, vector<1x8x128xf32>,
    return
  }
  func.func @transform_0(%arg0: i32) -> (i32, i32, i32) {
    %c0_i32 = arith.constant 0 : i32
    %c0_i32_0 = arith.constant 0 : i32
    %c0_i32_1 = arith.constant 0 : i32
    return %arg0, %c0_i32, %c0_i32_0 : i32, i32, i32
  }
  func.func @transform_1(%arg0: i32) -> (i32, i32, i32) {
    %c0_i32 = arith.constant 0 : i32
    %c0_i32_0 = arith.constant 0 : i32
    %c0_i32_1 = arith.constant 0 : i32
    return %arg0, %c0_i32, %c0_i32_0 : i32, i32, i32
  }
  func.func @transform_2(%arg0: i32) -> (i32, i32, i32) {
    %c0_i32 = arith.constant 0 : i32
    %c0_i32_0 = arith.constant 0 : i32
    %c0_i32_1 = arith.constant 0 : i32
    return %arg0, %c0_i32, %c0_i32_0 : i32, i32, i32
  }
  func.func @transform_3(%arg0: i32) -> (i32, i32) {
    %c0_i32 = arith.constant 0 : i32
    %c0_i32_0 = arith.constant 0 : i32
    %c0_i32_1 = arith.constant 0 : i32
    return %c0_i32, %c0_i32_0 : i32, i32
  }
  func.func @transform_4(%arg0: i32) -> (i32, i32, i32) {
    %c0_i32 = arith.constant 0 : i32
    %c0_i32_0 = arith.constant 0 : i32
    %c0_i32_1 = arith.constant 0 : i32
    %c0_i32_2 = arith.constant 0 : i32
    return %c0_i32, %c0_i32_0, %c0_i32_1 : i32, i32, i32
  }
  func.func @transform_5(%arg0: i32) -> (i32, i32, i32) {
    %c0_i32 = arith.constant 0 : i32
    %c0_i32_0 = arith.constant 0 : i32
    %c0_i32_1 = arith.constant 0 : i32
    %c0_i32_2 = arith.constant 0 : i32
    return %c0_i32, %c0_i32_0, %c0_i32_1 : i32, i32, i32
  }
  func.func @transform_6(%arg0: i32) -> (i32, i32, i32) {
    %c0_i32 = arith.constant 0 : i32
    %c0_i32_0 = arith.constant 0 : i32
    %c0_i32_1 = arith.constant 0 : i32
    %c0_i32_2 = arith.constant 0 : i32
    return %c0_i32, %c0_i32_0, %c0_i32_1 : i32, i32, i32
  }
  func.func @transform_7(%arg0: i32) -> (i32, i32, i32) {
    %c0_i32 = arith.constant 0 : i32
    %c0_i32_0 = arith.constant 0 : i32
    %c0_i32_1 = arith.constant 0 : i32
    %c0_i32_2 = arith.constant 0 : i32
    return %c0_i32, %c0_i32_0, %c0_i32_1 : i32, i32, i32
  }
  func.func @transform_8(%arg0: i32) -> (i32, i32, i32) {
    %c0_i32 = arith.constant 0 : i32
    %c0_i32_0 = arith.constant 0 : i32
    %c0_i32_1 = arith.constant 0 : i32
    %c0_i32_2 = arith.constant 0 : i32
    return %c0_i32, %c0_i32_0, %c0_i32_1 : i32, i32, i32
  }
  func.func @transform_9(%arg0: i32) -> (i32, i32, i32) {
    %c0_i32 = arith.constant 0 : i32
    %c0_i32_0 = arith.constant 0 : i32
    %c0_i32_1 = arith.constant 0 : i32
    %c0_i32_2 = arith.constant 0 : i32
    return %c0_i32, %c0_i32_0, %c0_i32_1 : i32, i32, i32
  }
  func.func @transform_10(%arg0: i32) -> (i32, i32, i32) {
    %c0_i32 = arith.constant 0 : i32
    %c0_i32_0 = arith.constant 0 : i32
    %c0_i32_1 = arith.constant 0 : i32
    %c0_i32_2 = arith.constant 0 : i32
    return %c0_i32, %c0_i32_0, %c0_i32_1 : i32, i32, i32
  }
  func.func @transform_11(%arg0: i32) -> (i32, i32, i32) {
    %c0_i32 = arith.constant 0 : i32
    %c0_i32_0 = arith.constant 0 : i32
    %c0_i32_1 = arith.constant 0 : i32
    %c0_i32_2 = arith.constant 0 : i32
    return %c0_i32, %c0_i32_0, %c0_i32_1 : i32, i32, i32
  }
  func.func @transform_12(%arg0: i32) -> (i32, i32, i32) {
    %c0_i32 = arith.constant 0 : i32
    %c0_i32_0 = arith.constant 0 : i32
    %c0_i32_1 = arith.constant 0 : i32
    %c0_i32_2 = arith.constant 0 : i32
    return %c0_i32, %c0_i32_0, %c0_i32_1 : i32, i32, i32
  }
  func.func @transform_13(%arg0: i32) -> (i32, i32, i32) {
    %c0_i32 = arith.constant 0 : i32
    %c0_i32_0 = arith.constant 0 : i32
    %c0_i32_1 = arith.constant 0 : i32
    %c0_i32_2 = arith.constant 0 : i32
    return %c0_i32, %c0_i32_0, %c0_i32_1 : i32, i32, i32
  }
  func.func @transform_14(%arg0: i32) -> (i32, i32) {
    %c0_i32 = arith.constant 0 : i32
    %c0_i32_0 = arith.constant 0 : i32
    %c0_i32_1 = arith.constant 0 : i32
    return %c0_i32, %c0_i32_0 : i32, i32
  }
  func.func @transform_15(%arg0: i32) -> (i32, i32, i32) {
    %c0_i32 = arith.constant 0 : i32
    %c0_i32_0 = arith.constant 0 : i32
    %c0_i32_1 = arith.constant 0 : i32
    %c0_i32_2 = arith.constant 0 : i32
    return %c0_i32, %c0_i32_0, %c0_i32_1 : i32, i32, i32
  }
  func.func @transform_16(%arg0: i32) -> (i32, i32, i32) {
    %c0_i32 = arith.constant 0 : i32
    %c0_i32_0 = arith.constant 0 : i32
    %c0_i32_1 = arith.constant 0 : i32
    %c0_i32_2 = arith.constant 0 : i32
    return %c0_i32, %c0_i32_0, %c0_i32_1 : i32, i32, i32
  }
  func.func @transform_17(%arg0: i32) -> (i32, i32, i32) {
    %c0_i32 = arith.constant 0 : i32
    %c0_i32_0 = arith.constant 0 : i32
    %c0_i32_1 = arith.constant 0 : i32
    %c0_i32_2 = arith.constant 0 : i32
    return %c0_i32, %c0_i32_0, %c0_i32_1 : i32, i32, i32
  }
  func.func @transform_18(%arg0: i32) -> (i32, i32, i32) {
    %c0_i32 = arith.constant 0 : i32
    %c0_i32_0 = arith.constant 0 : i32
    %c0_i32_1 = arith.constant 0 : i32
    %c0_i32_2 = arith.constant 0 : i32
    return %c0_i32, %c0_i32_0, %c0_i32_1 : i32, i32, i32
  }
  func.func @transform_19(%arg0: i32) -> (i32, i32, i32) {
    %c0_i32 = arith.constant 0 : i32
    %c0_i32_0 = arith.constant 0 : i32
    %c0_i32_1 = arith.constant 0 : i32
    %c0_i32_2 = arith.constant 0 : i32
    return %c0_i32, %c0_i32_0, %c0_i32_1 : i32, i32, i32
  }
  func.func @transform_20(%arg0: i32) -> (i32, i32, i32) {
    %c0_i32 = arith.constant 0 : i32
    %c0_i32_0 = arith.constant 0 : i32
    %c0_i32_1 = arith.constant 0 : i32
    %c0_i32_2 = arith.constant 0 : i32
    return %c0_i32, %c0_i32_0, %c0_i32_1 : i32, i32, i32
  }
  func.func @transform_21(%arg0: i32) -> (i32, i32, i32) {
    %c0_i32 = arith.constant 0 : i32
    %c0_i32_0 = arith.constant 0 : i32
    %c0_i32_1 = arith.constant 0 : i32
    %c0_i32_2 = arith.constant 0 : i32
    return %c0_i32, %c0_i32_0, %c0_i32_1 : i32, i32, i32
  }
  func.func @transform_22(%arg0: i32) -> (i32, i32, i32) {
    %c0_i32 = arith.constant 0 : i32
    %c0_i32_0 = arith.constant 0 : i32
    %c0_i32_1 = arith.constant 0 : i32
    %c0_i32_2 = arith.constant 0 : i32
    return %c0_i32, %c0_i32_0, %c0_i32_1 : i32, i32, i32
  }
  func.func @transform_23(%arg0: i32) -> (i32, i32, i32) {
    %c0_i32 = arith.constant 0 : i32
    %c0_i32_0 = arith.constant 0 : i32
    %c0_i32_1 = arith.constant 0 : i32
    %c0_i32_2 = arith.constant 0 : i32
    return %c0_i32, %c0_i32_0, %c0_i32_1 : i32, i32, i32
  }
  func.func @transform_24(%arg0: i32) -> (i32, i32, i32) {
    %c0_i32 = arith.constant 0 : i32
    %c0_i32_0 = arith.constant 0 : i32
    %c0_i32_1 = arith.constant 0 : i32
    %c0_i32_2 = arith.constant 0 : i32
    return %c0_i32, %c0_i32_0, %c0_i32_1 : i32, i32, i32
  }
  func.func @transform_25(%arg0: i32) -> (i32, i32, i32) {
    %c0_i32 = arith.constant 0 : i32
    %c0_i32_0 = arith.constant 0 : i32
    %c0_i32_1 = arith.constant 0 : i32
    %c0_i32_2 = arith.constant 0 : i32
    return %c0_i32, %c0_i32_0, %c0_i32_1 : i32, i32, i32
  }
  func.func @transform_26(%arg0: i32) -> (i32, i32, i32) {
    %c0_i32 = arith.constant 0 : i32
    %c0_i32_0 = arith.constant 0 : i32
    %c0_i32_1 = arith.constant 0 : i32
    %c0_i32_2 = arith.constant 0 : i32
    return %c0_i32, %c0_i32_0, %c0_i32_1 : i32, i32, i32
  }
  func.func @transform_27(%arg0: i32) -> (i32, i32, i32) {
    %c0_i32 = arith.constant 0 : i32
    %c0_i32_0 = arith.constant 0 : i32
    %c0_i32_1 = arith.constant 0 : i32
    %c0_i32_2 = arith.constant 0 : i32
    return %c0_i32, %c0_i32_0, %c0_i32_1 : i32, i32, i32
  }
  func.func @transform_28(%arg0: i32) -> (i32, i32, i32) {
    %c0_i32 = arith.constant 0 : i32
    %c0_i32_0 = arith.constant 0 : i32
    %c0_i32_1 = arith.constant 0 : i32
    %c0_i32_2 = arith.constant 0 : i32
    return %c0_i32, %c0_i32_0, %c0_i32_1 : i32, i32, i32
  }
  func.func @transform_29(%arg0: i32) -> (i32, i32, i32) {
    %c0_i32 = arith.constant 0 : i32
    %c0_i32_0 = arith.constant 0 : i32
    %c0_i32_1 = arith.constant 0 : i32
    %c0_i32_2 = arith.constant 0 : i32
    return %c0_i32, %c0_i32_0, %c0_i32_1 : i32, i32, i32
  }
  func.func @transform_30(%arg0: i32) -> (i32, i32, i32) {
    %c0_i32 = arith.constant 0 : i32
    %c0_i32_0 = arith.constant 0 : i32
    %c0_i32_1 = arith.constant 0 : i32
    %c0_i32_2 = arith.constant 0 : i32
    return %c0_i32, %c0_i32_0, %c0_i32_1 : i32, i32, i32
  }
  func.func @transform_31(%arg0: i32) -> (i32, i32, i32) {
    %c0_i32 = arith.constant 0 : i32
    %c0_i32_0 = arith.constant 0 : i32
    %c0_i32_1 = arith.constant 0 : i32
    %c0_i32_2 = arith.constant 0 : i32
    return %c0_i32, %c0_i32_0, %c0_i32_1 : i32, i32, i32
  }
  func.func @transform_32(%arg0: i32) -> (i32, i32) {
    %c0_i32 = arith.constant 0 : i32
    %c0_i32_0 = arith.constant 0 : i32
    %c0_i32_1 = arith.constant 0 : i32
    return %c0_i32, %c0_i32_0 : i32, i32
  }
  func.func @transform_33(%arg0: i32) -> (i32, i32) {
    %c0_i32 = arith.constant 0 : i32
    %c0_i32_0 = arith.constant 0 : i32
    %c0_i32_1 = arith.constant 0 : i32
    return %c0_i32, %c0_i32_0 : i32, i32
  }
  func.func @transform_34(%arg0: i32) -> (i32, i32) {
    %c0_i32 = arith.constant 0 : i32
    %c0_i32_0 = arith.constant 0 : i32
    %c0_i32_1 = arith.constant 0 : i32
    return %c0_i32, %c0_i32_0 : i32, i32
  }
  func.func @transform_35(%arg0: i32) -> (i32, i32) {
    %c0_i32 = arith.constant 0 : i32
    %c0_i32_0 = arith.constant 0 : i32
    %c0_i32_1 = arith.constant 0 : i32
    return %c0_i32, %c0_i32_0 : i32, i32
  }
  func.func @transform_36(%arg0: i32) -> (i32, i32, i32) {
    %c0_i32 = arith.constant 0 : i32
    %c0_i32_0 = arith.constant 0 : i32
    %c0_i32_1 = arith.constant 0 : i32
    return %arg0, %c0_i32, %c0_i32_0 : i32, i32, i32
  }
  func.func @transform_37(%arg0: i32) -> (i32, i32, i32) {
    %c0_i32 = arith.constant 0 : i32
    %c0_i32_0 = arith.constant 0 : i32
    %c0_i32_1 = arith.constant 0 : i32
    return %arg0, %c0_i32, %c0_i32_0 : i32, i32, i32
  }
}

</mosaic_0001>

<llo_original>
// kernel: prefix_bart_forward.1
$region0: #{prefix_bart_forward.1}
  #allocation0 [shape = 'u32[]', space=smem, size = 0x4, offset = 0x4, fixed_abs, tag = 'smem constant byte address 0x4 - core index']
  #allocation1 [shape = 'u32[72,128]{1,0:T(1,128)}', space=vmem, size = 0x9000, scoped, tag = 'internal scratch']
  %s0 = inlined_call_operand.smem [shape: u32[38], index: -1, kind: input, shape index: {}]
  %s1 = sld [smem:[%s0]]
  %s2 = scalar_lea.smem %s0, 1
  %s3 = sld [smem:[%s2]]
  %s4 = scalar_lea.smem %s0, 2
  %s5 = sld [smem:[%s4]]
  %s6 = scalar_lea.smem %s0, 3
  %s7 = sld [smem:[%s6]]
  %s8 = scalar_lea.smem %s0, 4
  %s9 = sld [smem:[%s8]]
  %s10 = scalar_lea.smem %s0, 5
  %s11 = sld [smem:[%s10]]
  %s12 = scalar_lea.smem %s0, 6
  %s13 = sld [smem:[%s12]]
  %s14 = scalar_lea.smem %s0, 7
  %s15 = sld [smem:[%s14]]
  %s16 = scalar_lea.smem %s0, 8
  %s17 = sld [smem:[%s16]]
  %s18 = scalar_lea.smem %s0, 9
  %s19 = sld [smem:[%s18]]
  %s20 = scalar_lea.smem %s0, 10
  %s21 = sld [smem:[%s20]]
  %s22 = scalar_lea.smem %s0, 11
  %s23 = sld [smem:[%s22]]
  %s24 = scalar_lea.smem %s0, 12
  %s25 = sld [smem:[%s24]]
  %s26 = scalar_lea.smem %s0, 13
  %s27 = sld [smem:[%s26]]
  %s28 = scalar_lea.smem %s0, 14
  %s29 = sld [smem:[%s28]]
  %s30 = scalar_lea.smem %s0, 15
  %s31 = sld [smem:[%s30]]
  %s32 = scalar_lea.smem %s0, 16
  %s33 = sld [smem:[%s32]]
  %s34 = scalar_lea.smem %s0, 17
  %s35 = sld [smem:[%s34]]
  %s36 = scalar_lea.smem %s0, 18
  %s37 = sld [smem:[%s36]]
  %s38 = scalar_lea.smem %s0, 19
  %s39 = sld [smem:[%s38]]
  %s40 = scalar_lea.smem %s0, 20
  %s41 = sld [smem:[%s40]]
  %s42 = scalar_lea.smem %s0, 21
  %s43 = sld [smem:[%s42]]
  %s44 = scalar_lea.smem %s0, 22
  %s45 = sld [smem:[%s44]]
  %s46 = scalar_lea.smem %s0, 23
  %s47 = sld [smem:[%s46]]
  %s48 = scalar_lea.smem %s0, 24
  %s49 = sld [smem:[%s48]]
  %s50 = scalar_lea.smem %s0, 25
  %s51 = sld [smem:[%s50]]
  %s52 = scalar_lea.smem %s0, 26
  %s53 = sld [smem:[%s52]]
  %s54 = scalar_lea.smem %s0, 27
  %s55 = sld [smem:[%s54]]
  %s56 = scalar_lea.smem %s0, 28
  %s57 = sld [smem:[%s56]]
  %s58 = scalar_lea.smem %s0, 29
  %s59 = sld [smem:[%s58]]
  %s60 = scalar_lea.smem %s0, 30
  %s61 = sld [smem:[%s60]]
  %s62 = scalar_lea.smem %s0, 31
  %s63 = sld [smem:[%s62]]
  %s64 = scalar_lea.smem %s0, 32
  %s65 = sld [smem:[%s64]]
  %s66 = scalar_lea.smem %s0, 33
  %s67 = sld [smem:[%s66]]
  %s68 = scalar_lea.smem %s0, 34
  %s69 = sld [smem:[%s68]]
  %s70 = scalar_lea.smem %s0, 35
  %s71 = sld [smem:[%s70]]
  %s72 = scalar_lea.smem %s0, 36
  %s73 = sld [smem:[%s72]]
  %s74 = scalar_lea.smem %s0, 37
  %s75 = sld [smem:[%s74]]
  %76 = xla_tuple %s73, %s75
  %s77 = sld [smem:[#allocation0]]
  $region185: #{prefix_bart_forward.1} parent=0
    _
  %s79 = ssub.s32 1, %s77
  %s80 = scalar_select 0, %s79, %s77
  $region1: #{prefix_bart_forward.1} parent=0
    #allocation2 [shape = 'u8[1024]{0}', space=vmem, size = 0x400, scoped, tag = 'output window, operand 0']
    #allocation3 [shape = 's32[2]{0}', space=sflag, size = 0x8, scoped, tag = 'scoped memory for prefix_bart_forward.1']
    #allocation4 [shape = 'u8[8192]{0}', space=vmem, size = 0x2000, scoped, tag = 'output window, operand 1']
    #allocation5 [shape = 's32[2]{0}', space=sflag, size = 0x8, scoped, tag = 'scoped memory for prefix_bart_forward.1']
    %81 = vsyncpa [#allocation3], 0
    %s82 = scalar_lea.sflag [#allocation3], 1
    %83 = vsyncpa %s82, 0
    %84 = vsyncpa [#allocation5], 0
    %s85 = scalar_lea.sflag [#allocation5], 1
    %86 = vsyncpa %s85, 0
    loop: start=0, step=1, limit=4
    $region2: #{prefix_bart_forward.1} parent=1 // loop_pre_header
      _
    $region3: #{prefix_bart_forward.1} parent=1 // loop_header
      %s88 = sphi 0, %s92
      %p89 = scmp.ge.s32.totalorder %s88, 4
      %s98 = sphi 0, %s100
      %s101 = sphi 0, %s98
      %s102 = sphi 0, %s101
      %s118 = sphi 0, %s102
      %s124 = sphi 0, %s126
      %s127 = sphi 0, %s124
      %s128 = sphi 0, %s127
      %s144 = sphi 0, %s128
      %s150 = sphi 0, %s152
      %s153 = sphi 0, %s150
      %s154 = sphi 0, %s153
      %s170 = sphi 0, %s154
      %s174 = sphi 0, %s174
      %s176 = sphi 0, %s174
      %s177 = sphi 0, %s176
      %s191 = sphi 0, %s177
      %s195 = sphi 0, %s195
      %s197 = sphi 0, %s195
      %s198 = sphi 0, %s197
      %s212 = sphi 0, %s198
      %s216 = sphi 0, %s216
      %s218 = sphi 0, %s216
      %s219 = sphi 0, %s218
      %s233 = sphi 0, %s219
      %s237 = sphi 0, %s237
      %s239 = sphi 0, %s237
      %s240 = sphi 0, %s239
      %s254 = sphi 0, %s240
      %s258 = sphi 0, %s258
      %s260 = sphi 0, %s258
      %s261 = sphi 0, %s260
      %s275 = sphi 0, %s261
      %s279 = sphi 0, %s279
      %s281 = sphi 0, %s279
      %s282 = sphi 0, %s281
      %s296 = sphi 0, %s282
      %s300 = sphi 0, %s300
      %s302 = sphi 0, %s300
      %s303 = sphi 0, %s302
      %s317 = sphi 0, %s303
      %s321 = sphi 0, %s321
      %s323 = sphi 0, %s321
      %s324 = sphi 0, %s323
      %s338 = sphi 0, %s324
      %s342 = sphi 0, %s342
      %s344 = sphi 0, %s342
      %s345 = sphi 0, %s344
      %s359 = sphi 0, %s345
      %s363 = sphi 0, %s363
      %s365 = sphi 0, %s363
      %s366 = sphi 0, %s365
      %s380 = sphi 0, %s366
      %s384 = sphi 0, %s384
      %s386 = sphi 0, %s384
      %s387 = sphi 0, %s386
      %s401 = sphi 0, %s387
      %s405 = sphi 0, %s405
      %s407 = sphi 0, %s405
      %s408 = sphi 0, %s407
      %s422 = sphi 0, %s408
      %s426 = sphi 0, %s426
      %s428 = sphi 0, %s426
      %s429 = sphi 0, %s428
      %s443 = sphi 0, %s429
      %s447 = sphi 0, %s447
      %s449 = sphi 0, %s447
      %s450 = sphi 0, %s449
      %s464 = sphi 0, %s450
      %s468 = sphi 0, %s468
      %s470 = sphi 0, %s468
      %s471 = sphi 0, %s470
      %s485 = sphi 0, %s471
      %s489 = sphi 0, %s489
      %s491 = sphi 0, %s489
      %s492 = sphi 0, %s491
      %s506 = sphi 0, %s492
      %s510 = sphi 0, %s510
      %s512 = sphi 0, %s510
      %s513 = sphi 0, %s512
      %s527 = sphi 0, %s513
      %s531 = sphi 0, %s531
      %s533 = sphi 0, %s531
      %s534 = sphi 0, %s533
      %s548 = sphi 0, %s534
      %s552 = sphi 0, %s552
      %s554 = sphi 0, %s552
      %s555 = sphi 0, %s554
      %s569 = sphi 0, %s555
      %s573 = sphi 0, %s573
      %s575 = sphi 0, %s573
      %s576 = sphi 0, %s575
      %s590 = sphi 0, %s576
      %s594 = sphi 0, %s594
      %s596 = sphi 0, %s594
      %s597 = sphi 0, %s596
      %s611 = sphi 0, %s597
      %s615 = sphi 0, %s615
      %s617 = sphi 0, %s615
      %s618 = sphi 0, %s617
      %s632 = sphi 0, %s618
      %s636 = sphi 0, %s636
      %s638 = sphi 0, %s636
      %s639 = sphi 0, %s638
      %s653 = sphi 0, %s639
      %s657 = sphi 0, %s657
      %s659 = sphi 0, %s657
      %s660 = sphi 0, %s659
      %s674 = sphi 0, %s660
      %s678 = sphi 0, %s678
      %s680 = sphi 0, %s678
      %s681 = sphi 0, %s680
      %s695 = sphi 0, %s681
      %s699 = sphi 0, %s699
      %s701 = sphi 0, %s699
      %s702 = sphi 0, %s701
      %s716 = sphi 0, %s702
      %s720 = sphi 0, %s720
      %s722 = sphi 0, %s720
      %s723 = sphi 0, %s722
      %s737 = sphi 0, %s723
      %s741 = sphi 0, %s741
      %s743 = sphi 0, %s741
      %s744 = sphi 0, %s743
      %s758 = sphi 0, %s744
      %s762 = sphi 0, %s762
      %s764 = sphi 0, %s762
      %s765 = sphi 0, %s764
      %s779 = sphi 0, %s765
      %s783 = sphi 0, %s783
      %s785 = sphi 0, %s783
      %s786 = sphi 0, %s785
      %s800 = sphi 0, %s786
      %s804 = sphi 0, %s804
      %s806 = sphi 0, %s804
      %s807 = sphi 0, %s806
      %s821 = sphi 0, %s807
      %s825 = sphi 0, %s825
      %s827 = sphi 0, %s825
      %s828 = sphi 0, %s827
      %s842 = sphi 0, %s828
      %s846 = sphi 0, %s846
      %s848 = sphi 0, %s846
      %s849 = sphi 0, %s848
      %s863 = sphi 0, %s849
      %s869 = sphi 0, %s871
      %s872 = sphi 0, %s869
      %s873 = sphi 0, %s872
      %s889 = sphi 0, %s873
      %s895 = sphi 0, %s897
      %s898 = sphi 0, %s895
      %s899 = sphi 0, %s898
      %s915 = sphi 0, %s899
    $region4: #{prefix_bart_forward.1} parent=1 // loop_header_branch
      %91 = sbr.rel (%p89) target = $region8
    $region5: #{prefix_bart_forward.1} parent=1 // loop_body
      %s93 = ssub.s32 %s88, 1
      %s94 = ssub.s32 %s88, 2
      %s95 = sadd.s32 %s88, 1
      %s96 = ssub.s32 %s88, %s95
      %p97 = scmp.eq.s32.totalorder %s96, 0
      %s99 = sadd.s32 %s98, 1
      %s100 = scalar_select %p97, %s98, %s99
      %p103 = pneg %p97
      %p104 = scmp.eq.s32.totalorder %s88, 1
      %p105 = por %p103, %p104
      %p106 = scmp.ne.s32.totalorder %s98, %s101
      %p107 = scmp.eq.s32.totalorder %s88, 0
      %p108 = por %p106, %p107
      %p109 = scmp.ne.s32.totalorder %s98, %s101
      %p110 = scmp.eq.s32.totalorder %s93, 1
      %p111 = por %p109, %p110
      %p112 = scmp.ne.s32.totalorder %s101, %s102
      %p113 = scmp.eq.s32.totalorder %s93, 0
      %p114 = por %p112, %p113
      %p115 = scmp.ne.s32.totalorder %s101, %s102
      %p116 = scmp.eq.s32.totalorder %s94, 1
      %p117 = por %p115, %p116
      %p119 = scmp.ne.s32.totalorder %s102, %s118
      %p120 = scmp.eq.s32.totalorder %s94, 0
      %p121 = por %p119, %p120
      %s122 = ssub.s32 %s88, %s95
      %p123 = scmp.eq.s32.totalorder %s122, 0
      %s125 = sadd.s32 %s124, 1
      %s126 = scalar_select %p123, %s124, %s125
      %p129 = pneg %p123
      %p130 = scmp.eq.s32.totalorder %s88, 1
      %p131 = por %p129, %p130
      %p132 = scmp.ne.s32.totalorder %s124, %s127
      %p133 = scmp.eq.s32.totalorder %s88, 0
      %p134 = por %p132, %p133
      %p135 = scmp.ne.s32.totalorder %s124, %s127
      %p136 = scmp.eq.s32.totalorder %s93, 1
      %p137 = por %p135, %p136
      %p138 = scmp.ne.s32.totalorder %s127, %s128
      %p139 = scmp.eq.s32.totalorder %s93, 0
      %p140 = por %p138, %p139
      %p141 = scmp.ne.s32.totalorder %s127, %s128
      %p142 = scmp.eq.s32.totalorder %s94, 1
      %p143 = por %p141, %p142
      %p145 = scmp.ne.s32.totalorder %s128, %s144
      %p146 = scmp.eq.s32.totalorder %s94, 0
      %p147 = por %p145, %p146
      %s148 = ssub.s32 %s88, %s95
      %p149 = scmp.eq.s32.totalorder %s148, 0
      %s151 = sadd.s32 %s150, 1
      %s152 = scalar_select %p149, %s150, %s151
      %p155 = pneg %p149
      %p156 = scmp.eq.s32.totalorder %s88, 1
      %p157 = por %p155, %p156
      %p158 = scmp.ne.s32.totalorder %s150, %s153
      %p159 = scmp.eq.s32.totalorder %s88, 0
      %p160 = por %p158, %p159
      %p161 = scmp.ne.s32.totalorder %s150, %s153
      %p162 = scmp.eq.s32.totalorder %s93, 1
      %p163 = por %p161, %p162
      %p164 = scmp.ne.s32.totalorder %s153, %s154
      %p165 = scmp.eq.s32.totalorder %s93, 0
      %p166 = por %p164, %p165
      %p167 = scmp.ne.s32.totalorder %s153, %s154
      %p168 = scmp.eq.s32.totalorder %s94, 1
      %p169 = por %p167, %p168
      %p171 = scmp.ne.s32.totalorder %s154, %s170
      %p172 = scmp.eq.s32.totalorder %s94, 0
      %p173 = por %p171, %p172
      %s175 = sadd.s32 %s174, 1
      %p178 = scmp.eq.s32.totalorder %s88, 1
      %p179 = scmp.ne.s32.totalorder %s174, %s176
      %p180 = scmp.eq.s32.totalorder %s88, 0
      %p181 = por %p179, %p180
      %p182 = scmp.ne.s32.totalorder %s174, %s176
      %p183 = scmp.eq.s32.totalorder %s93, 1
      %p184 = por %p182, %p183
      %p185 = scmp.ne.s32.totalorder %s176, %s177
      %p186 = scmp.eq.s32.totalorder %s93, 0
      %p187 = por %p185, %p186
      %p188 = scmp.ne.s32.totalorder %s176, %s177
      %p189 = scmp.eq.s32.totalorder %s94, 1
      %p190 = por %p188, %p189
      %p192 = scmp.ne.s32.totalorder %s177, %s191
      %p193 = scmp.eq.s32.totalorder %s94, 0
      %p194 = por %p192, %p193
      %s196 = sadd.s32 %s195, 1
      %p199 = scmp.eq.s32.totalorder %s88, 1
      %p200 = scmp.ne.s32.totalorder %s195, %s197
      %p201 = scmp.eq.s32.totalorder %s88, 0
      %p202 = por %p200, %p201
      %p203 = scmp.ne.s32.totalorder %s195, %s197
      %p204 = scmp.eq.s32.totalorder %s93, 1
      %p205 = por %p203, %p204
      %p206 = scmp.ne.s32.totalorder %s197, %s198
      %p207 = scmp.eq.s32.totalorder %s93, 0
      %p208 = por %p206, %p207
      %p209 = scmp.ne.s32.totalorder %s197, %s198
      %p210 = scmp.eq.s32.totalorder %s94, 1
      %p211 = por %p209, %p210
      %p213 = scmp.ne.s32.totalorder %s198, %s212
      %p214 = scmp.eq.s32.totalorder %s94, 0
      %p215 = por %p213, %p214
      %s217 = sadd.s32 %s216, 1
      %p220 = scmp.eq.s32.totalorder %s88, 1
      %p221 = scmp.ne.s32.totalorder %s216, %s218
      %p222 = scmp.eq.s32.totalorder %s88, 0
      %p223 = por %p221, %p222
      %p224 = scmp.ne.s32.totalorder %s216, %s218
      %p225 = scmp.eq.s32.totalorder %s93, 1
      %p226 = por %p224, %p225
      %p227 = scmp.ne.s32.totalorder %s218, %s219
      %p228 = scmp.eq.s32.totalorder %s93, 0
      %p229 = por %p227, %p228
      %p230 = scmp.ne.s32.totalorder %s218, %s219
      %p231 = scmp.eq.s32.totalorder %s94, 1
      %p232 = por %p230, %p231
      %p234 = scmp.ne.s32.totalorder %s219, %s233
      %p235 = scmp.eq.s32.totalorder %s94, 0
      %p236 = por %p234, %p235
      %s238 = sadd.s32 %s237, 1
      %p241 = scmp.eq.s32.totalorder %s88, 1
      %p242 = scmp.ne.s32.totalorder %s237, %s239
      %p243 = scmp.eq.s32.totalorder %s88, 0
      %p244 = por %p242, %p243
      %p245 = scmp.ne.s32.totalorder %s237, %s239
      %p246 = scmp.eq.s32.totalorder %s93, 1
      %p247 = por %p245, %p246
      %p248 = scmp.ne.s32.totalorder %s239, %s240
      %p249 = scmp.eq.s32.totalorder %s93, 0
      %p250 = por %p248, %p249
      %p251 = scmp.ne.s32.totalorder %s239, %s240
      %p252 = scmp.eq.s32.totalorder %s94, 1
      %p253 = por %p251, %p252
      %p255 = scmp.ne.s32.totalorder %s240, %s254
      %p256 = scmp.eq.s32.totalorder %s94, 0
      %p257 = por %p255, %p256
      %s259 = sadd.s32 %s258, 1
      %p262 = scmp.eq.s32.totalorder %s88, 1
      %p263 = scmp.ne.s32.totalorder %s258, %s260
      %p264 = scmp.eq.s32.totalorder %s88, 0
      %p265 = por %p263, %p264
      %p266 = scmp.ne.s32.totalorder %s258, %s260
      %p267 = scmp.eq.s32.totalorder %s93, 1
      %p268 = por %p266, %p267
      %p269 = scmp.ne.s32.totalorder %s260, %s261
      %p270 = scmp.eq.s32.totalorder %s93, 0
      %p271 = por %p269, %p270
      %p272 = scmp.ne.s32.totalorder %s260, %s261
      %p273 = scmp.eq.s32.totalorder %s94, 1
      %p274 = por %p272, %p273
      %p276 = scmp.ne.s32.totalorder %s261, %s275
      %p277 = scmp.eq.s32.totalorder %s94, 0
      %p278 = por %p276, %p277
      %s280 = sadd.s32 %s279, 1
      %p283 = scmp.eq.s32.totalorder %s88, 1
      %p284 = scmp.ne.s32.totalorder %s279, %s281
      %p285 = scmp.eq.s32.totalorder %s88, 0
      %p286 = por %p284, %p285
      %p287 = scmp.ne.s32.totalorder %s279, %s281
      %p288 = scmp.eq.s32.totalorder %s93, 1
      %p289 = por %p287, %p288
      %p290 = scmp.ne.s32.totalorder %s281, %s282
      %p291 = scmp.eq.s32.totalorder %s93, 0
      %p292 = por %p290, %p291
      %p293 = scmp.ne.s32.totalorder %s281, %s282
      %p294 = scmp.eq.s32.totalorder %s94, 1
      %p295 = por %p293, %p294
      %p297 = scmp.ne.s32.totalorder %s282, %s296
      %p298 = scmp.eq.s32.totalorder %s94, 0
      %p299 = por %p297, %p298
      %s301 = sadd.s32 %s300, 1
      %p304 = scmp.eq.s32.totalorder %s88, 1
      %p305 = scmp.ne.s32.totalorder %s300, %s302
      %p306 = scmp.eq.s32.totalorder %s88, 0
      %p307 = por %p305, %p306
      %p308 = scmp.ne.s32.totalorder %s300, %s302
      %p309 = scmp.eq.s32.totalorder %s93, 1
      %p310 = por %p308, %p309
      %p311 = scmp.ne.s32.totalorder %s302, %s303
      %p312 = scmp.eq.s32.totalorder %s93, 0
      %p313 = por %p311, %p312
      %p314 = scmp.ne.s32.totalorder %s302, %s303
      %p315 = scmp.eq.s32.totalorder %s94, 1
      %p316 = por %p314, %p315
      %p318 = scmp.ne.s32.totalorder %s303, %s317
      %p319 = scmp.eq.s32.totalorder %s94, 0
      %p320 = por %p318, %p319
      %s322 = sadd.s32 %s321, 1
      %p325 = scmp.eq.s32.totalorder %s88, 1
      %p326 = scmp.ne.s32.totalorder %s321, %s323
      %p327 = scmp.eq.s32.totalorder %s88, 0
      %p328 = por %p326, %p327
      %p329 = scmp.ne.s32.totalorder %s321, %s323
      %p330 = scmp.eq.s32.totalorder %s93, 1
      %p331 = por %p329, %p330
      %p332 = scmp.ne.s32.totalorder %s323, %s324
      %p333 = scmp.eq.s32.totalorder %s93, 0
      %p334 = por %p332, %p333
      %p335 = scmp.ne.s32.totalorder %s323, %s324
      %p336 = scmp.eq.s32.totalorder %s94, 1
      %p337 = por %p335, %p336
      %p339 = scmp.ne.s32.totalorder %s324, %s338
      %p340 = scmp.eq.s32.totalorder %s94, 0
      %p341 = por %p339, %p340
      %s343 = sadd.s32 %s342, 1
      %p346 = scmp.eq.s32.totalorder %s88, 1
      %p347 = scmp.ne.s32.totalorder %s342, %s344
      %p348 = scmp.eq.s32.totalorder %s88, 0
      %p349 = por %p347, %p348
      %p350 = scmp.ne.s32.totalorder %s342, %s344
      %p351 = scmp.eq.s32.totalorder %s93, 1
      %p352 = por %p350, %p351
      %p353 = scmp.ne.s32.totalorder %s344, %s345
      %p354 = scmp.eq.s32.totalorder %s93, 0
      %p355 = por %p353, %p354
      %p356 = scmp.ne.s32.totalorder %s344, %s345
      %p357 = scmp.eq.s32.totalorder %s94, 1
      %p358 = por %p356, %p357
      %p360 = scmp.ne.s32.totalorder %s345, %s359
      %p361 = scmp.eq.s32.totalorder %s94, 0
      %p362 = por %p360, %p361
      %s364 = sadd.s32 %s363, 1
      %p367 = scmp.eq.s32.totalorder %s88, 1
      %p368 = scmp.ne.s32.totalorder %s363, %s365
      %p369 = scmp.eq.s32.totalorder %s88, 0
      %p370 = por %p368, %p369
      %p371 = scmp.ne.s32.totalorder %s363, %s365
      %p372 = scmp.eq.s32.totalorder %s93, 1
      %p373 = por %p371, %p372
      %p374 = scmp.ne.s32.totalorder %s365, %s366
      %p375 = scmp.eq.s32.totalorder %s93, 0
      %p376 = por %p374, %p375
      %p377 = scmp.ne.s32.totalorder %s365, %s366
      %p378 = scmp.eq.s32.totalorder %s94, 1
      %p379 = por %p377, %p378
      %p381 = scmp.ne.s32.totalorder %s366, %s380
      %p382 = scmp.eq.s32.totalorder %s94, 0
      %p383 = por %p381, %p382
      %s385 = sadd.s32 %s384, 1
      %p388 = scmp.eq.s32.totalorder %s88, 1
      %p389 = scmp.ne.s32.totalorder %s384, %s386
      %p390 = scmp.eq.s32.totalorder %s88, 0
      %p391 = por %p389, %p390
      %p392 = scmp.ne.s32.totalorder %s384, %s386
      %p393 = scmp.eq.s32.totalorder %s93, 1
      %p394 = por %p392, %p393
      %p395 = scmp.ne.s32.totalorder %s386, %s387
      %p396 = scmp.eq.s32.totalorder %s93, 0
      %p397 = por %p395, %p396
      %p398 = scmp.ne.s32.totalorder %s386, %s387
      %p399 = scmp.eq.s32.totalorder %s94, 1
      %p400 = por %p398, %p399
      %p402 = scmp.ne.s32.totalorder %s387, %s401
      %p403 = scmp.eq.s32.totalorder %s94, 0
      %p404 = por %p402, %p403
      %s406 = sadd.s32 %s405, 1
      %p409 = scmp.eq.s32.totalorder %s88, 1
      %p410 = scmp.ne.s32.totalorder %s405, %s407
      %p411 = scmp.eq.s32.totalorder %s88, 0
      %p412 = por %p410, %p411
      %p413 = scmp.ne.s32.totalorder %s405, %s407
      %p414 = scmp.eq.s32.totalorder %s93, 1
      %p415 = por %p413, %p414
      %p416 = scmp.ne.s32.totalorder %s407, %s408
      %p417 = scmp.eq.s32.totalorder %s93, 0
      %p418 = por %p416, %p417
      %p419 = scmp.ne.s32.totalorder %s407, %s408
      %p420 = scmp.eq.s32.totalorder %s94, 1
      %p421 = por %p419, %p420
      %p423 = scmp.ne.s32.totalorder %s408, %s422
      %p424 = scmp.eq.s32.totalorder %s94, 0
      %p425 = por %p423, %p424
      %s427 = sadd.s32 %s426, 1
      %p430 = scmp.eq.s32.totalorder %s88, 1
      %p431 = scmp.ne.s32.totalorder %s426, %s428
      %p432 = scmp.eq.s32.totalorder %s88, 0
      %p433 = por %p431, %p432
      %p434 = scmp.ne.s32.totalorder %s426, %s428
      %p435 = scmp.eq.s32.totalorder %s93, 1
      %p436 = por %p434, %p435
      %p437 = scmp.ne.s32.totalorder %s428, %s429
      %p438 = scmp.eq.s32.totalorder %s93, 0
      %p439 = por %p437, %p438
      %p440 = scmp.ne.s32.totalorder %s428, %s429
      %p441 = scmp.eq.s32.totalorder %s94, 1
      %p442 = por %p440, %p441
      %p444 = scmp.ne.s32.totalorder %s429, %s443
      %p445 = scmp.eq.s32.totalorder %s94, 0
      %p446 = por %p444, %p445
      %s448 = sadd.s32 %s447, 1
      %p451 = scmp.eq.s32.totalorder %s88, 1
      %p452 = scmp.ne.s32.totalorder %s447, %s449
      %p453 = scmp.eq.s32.totalorder %s88, 0
      %p454 = por %p452, %p453
      %p455 = scmp.ne.s32.totalorder %s447, %s449
      %p456 = scmp.eq.s32.totalorder %s93, 1
      %p457 = por %p455, %p456
      %p458 = scmp.ne.s32.totalorder %s449, %s450
      %p459 = scmp.eq.s32.totalorder %s93, 0
      %p460 = por %p458, %p459
      %p461 = scmp.ne.s32.totalorder %s449, %s450
      %p462 = scmp.eq.s32.totalorder %s94, 1
      %p463 = por %p461, %p462
      %p465 = scmp.ne.s32.totalorder %s450, %s464
      %p466 = scmp.eq.s32.totalorder %s94, 0
      %p467 = por %p465, %p466
      %s469 = sadd.s32 %s468, 1
      %p472 = scmp.eq.s32.totalorder %s88, 1
      %p473 = scmp.ne.s32.totalorder %s468, %s470
      %p474 = scmp.eq.s32.totalorder %s88, 0
      %p475 = por %p473, %p474
      %p476 = scmp.ne.s32.totalorder %s468, %s470
      %p477 = scmp.eq.s32.totalorder %s93, 1
      %p478 = por %p476, %p477
      %p479 = scmp.ne.s32.totalorder %s470, %s471
      %p480 = scmp.eq.s32.totalorder %s93, 0
      %p481 = por %p479, %p480
      %p482 = scmp.ne.s32.totalorder %s470, %s471
      %p483 = scmp.eq.s32.totalorder %s94, 1
      %p484 = por %p482, %p483
      %p486 = scmp.ne.s32.totalorder %s471, %s485
      %p487 = scmp.eq.s32.totalorder %s94, 0
      %p488 = por %p486, %p487
      %s490 = sadd.s32 %s489, 1
      %p493 = scmp.eq.s32.totalorder %s88, 1
      %p494 = scmp.ne.s32.totalorder %s489, %s491
      %p495 = scmp.eq.s32.totalorder %s88, 0
      %p496 = por %p494, %p495
      %p497 = scmp.ne.s32.totalorder %s489, %s491
      %p498 = scmp.eq.s32.totalorder %s93, 1
      %p499 = por %p497, %p498
      %p500 = scmp.ne.s32.totalorder %s491, %s492
      %p501 = scmp.eq.s32.totalorder %s93, 0
      %p502 = por %p500, %p501
      %p503 = scmp.ne.s32.totalorder %s491, %s492
      %p504 = scmp.eq.s32.totalorder %s94, 1
      %p505 = por %p503, %p504
      %p507 = scmp.ne.s32.totalorder %s492, %s506
      %p508 = scmp.eq.s32.totalorder %s94, 0
      %p509 = por %p507, %p508
      %s511 = sadd.s32 %s510, 1
      %p514 = scmp.eq.s32.totalorder %s88, 1
      %p515 = scmp.ne.s32.totalorder %s510, %s512
      %p516 = scmp.eq.s32.totalorder %s88, 0
      %p517 = por %p515, %p516
      %p518 = scmp.ne.s32.totalorder %s510, %s512
      %p519 = scmp.eq.s32.totalorder %s93, 1
      %p520 = por %p518, %p519
      %p521 = scmp.ne.s32.totalorder %s512, %s513
      %p522 = scmp.eq.s32.totalorder %s93, 0
      %p523 = por %p521, %p522
      %p524 = scmp.ne.s32.totalorder %s512, %s513
      %p525 = scmp.eq.s32.totalorder %s94, 1
      %p526 = por %p524, %p525
      %p528 = scmp.ne.s32.totalorder %s513, %s527
      %p529 = scmp.eq.s32.totalorder %s94, 0
      %p530 = por %p528, %p529
      %s532 = sadd.s32 %s531, 1
      %p535 = scmp.eq.s32.totalorder %s88, 1
      %p536 = scmp.ne.s32.totalorder %s531, %s533
      %p537 = scmp.eq.s32.totalorder %s88, 0
      %p538 = por %p536, %p537
      %p539 = scmp.ne.s32.totalorder %s531, %s533
      %p540 = scmp.eq.s32.totalorder %s93, 1
      %p541 = por %p539, %p540
      %p542 = scmp.ne.s32.totalorder %s533, %s534
      %p543 = scmp.eq.s32.totalorder %s93, 0
      %p544 = por %p542, %p543
      %p545 = scmp.ne.s32.totalorder %s533, %s534
      %p546 = scmp.eq.s32.totalorder %s94, 1
      %p547 = por %p545, %p546
      %p549 = scmp.ne.s32.totalorder %s534, %s548
      %p550 = scmp.eq.s32.totalorder %s94, 0
      %p551 = por %p549, %p550
      %s553 = sadd.s32 %s552, 1
      %p556 = scmp.eq.s32.totalorder %s88, 1
      %p557 = scmp.ne.s32.totalorder %s552, %s554
      %p558 = scmp.eq.s32.totalorder %s88, 0
      %p559 = por %p557, %p558
      %p560 = scmp.ne.s32.totalorder %s552, %s554
      %p561 = scmp.eq.s32.totalorder %s93, 1
      %p562 = por %p560, %p561
      %p563 = scmp.ne.s32.totalorder %s554, %s555
      %p564 = scmp.eq.s32.totalorder %s93, 0
      %p565 = por %p563, %p564
      %p566 = scmp.ne.s32.totalorder %s554, %s555
      %p567 = scmp.eq.s32.totalorder %s94, 1
      %p568 = por %p566, %p567
      %p570 = scmp.ne.s32.totalorder %s555, %s569
      %p571 = scmp.eq.s32.totalorder %s94, 0
      %p572 = por %p570, %p571
      %s574 = sadd.s32 %s573, 1
      %p577 = scmp.eq.s32.totalorder %s88, 1
      %p578 = scmp.ne.s32.totalorder %s573, %s575
      %p579 = scmp.eq.s32.totalorder %s88, 0
      %p580 = por %p578, %p579
      %p581 = scmp.ne.s32.totalorder %s573, %s575
      %p582 = scmp.eq.s32.totalorder %s93, 1
      %p583 = por %p581, %p582
      %p584 = scmp.ne.s32.totalorder %s575, %s576
      %p585 = scmp.eq.s32.totalorder %s93, 0
      %p586 = por %p584, %p585
      %p587 = scmp.ne.s32.totalorder %s575, %s576
      %p588 = scmp.eq.s32.totalorder %s94, 1
      %p589 = por %p587, %p588
      %p591 = scmp.ne.s32.totalorder %s576, %s590
      %p592 = scmp.eq.s32.totalorder %s94, 0
      %p593 = por %p591, %p592
      %s595 = sadd.s32 %s594, 1
      %p598 = scmp.eq.s32.totalorder %s88, 1
      %p599 = scmp.ne.s32.totalorder %s594, %s596
      %p600 = scmp.eq.s32.totalorder %s88, 0
      %p601 = por %p599, %p600
      %p602 = scmp.ne.s32.totalorder %s594, %s596
      %p603 = scmp.eq.s32.totalorder %s93, 1
      %p604 = por %p602, %p603
      %p605 = scmp.ne.s32.totalorder %s596, %s597
      %p606 = scmp.eq.s32.totalorder %s93, 0
      %p607 = por %p605, %p606
      %p608 = scmp.ne.s32.totalorder %s596, %s597
      %p609 = scmp.eq.s32.totalorder %s94, 1
      %p610 = por %p608, %p609
      %p612 = scmp.ne.s32.totalorder %s597, %s611
      %p613 = scmp.eq.s32.totalorder %s94, 0
      %p614 = por %p612, %p613
      %s616 = sadd.s32 %s615, 1
      %p619 = scmp.eq.s32.totalorder %s88, 1
      %p620 = scmp.ne.s32.totalorder %s615, %s617
      %p621 = scmp.eq.s32.totalorder %s88, 0
      %p622 = por %p620, %p621
      %p623 = scmp.ne.s32.totalorder %s615, %s617
      %p624 = scmp.eq.s32.totalorder %s93, 1
      %p625 = por %p623, %p624
      %p626 = scmp.ne.s32.totalorder %s617, %s618
      %p627 = scmp.eq.s32.totalorder %s93, 0
      %p628 = por %p626, %p627
      %p629 = scmp.ne.s32.totalorder %s617, %s618
      %p630 = scmp.eq.s32.totalorder %s94, 1
      %p631 = por %p629, %p630
      %p633 = scmp.ne.s32.totalorder %s618, %s632
      %p634 = scmp.eq.s32.totalorder %s94, 0
      %p635 = por %p633, %p634
      %s637 = sadd.s32 %s636, 1
      %p640 = scmp.eq.s32.totalorder %s88, 1
      %p641 = scmp.ne.s32.totalorder %s636, %s638
      %p642 = scmp.eq.s32.totalorder %s88, 0
      %p643 = por %p641, %p642
      %p644 = scmp.ne.s32.totalorder %s636, %s638
      %p645 = scmp.eq.s32.totalorder %s93, 1
      %p646 = por %p644, %p645
      %p647 = scmp.ne.s32.totalorder %s638, %s639
      %p648 = scmp.eq.s32.totalorder %s93, 0
      %p649 = por %p647, %p648
      %p650 = scmp.ne.s32.totalorder %s638, %s639
      %p651 = scmp.eq.s32.totalorder %s94, 1
      %p652 = por %p650, %p651
      %p654 = scmp.ne.s32.totalorder %s639, %s653
      %p655 = scmp.eq.s32.totalorder %s94, 0
      %p656 = por %p654, %p655
      %s658 = sadd.s32 %s657, 1
      %p661 = scmp.eq.s32.totalorder %s88, 1
      %p662 = scmp.ne.s32.totalorder %s657, %s659
      %p663 = scmp.eq.s32.totalorder %s88, 0
      %p664 = por %p662, %p663
      %p665 = scmp.ne.s32.totalorder %s657, %s659
      %p666 = scmp.eq.s32.totalorder %s93, 1
      %p667 = por %p665, %p666
      %p668 = scmp.ne.s32.totalorder %s659, %s660
      %p669 = scmp.eq.s32.totalorder %s93, 0
      %p670 = por %p668, %p669
      %p671 = scmp.ne.s32.totalorder %s659, %s660
      %p672 = scmp.eq.s32.totalorder %s94, 1
      %p673 = por %p671, %p672
      %p675 = scmp.ne.s32.totalorder %s660, %s674
      %p676 = scmp.eq.s32.totalorder %s94, 0
      %p677 = por %p675, %p676
      %s679 = sadd.s32 %s678, 1
      %p682 = scmp.eq.s32.totalorder %s88, 1
      %p683 = scmp.ne.s32.totalorder %s678, %s680
      %p684 = scmp.eq.s32.totalorder %s88, 0
      %p685 = por %p683, %p684
      %p686 = scmp.ne.s32.totalorder %s678, %s680
      %p687 = scmp.eq.s32.totalorder %s93, 1
      %p688 = por %p686, %p687
      %p689 = scmp.ne.s32.totalorder %s680, %s681
      %p690 = scmp.eq.s32.totalorder %s93, 0
      %p691 = por %p689, %p690
      %p692 = scmp.ne.s32.totalorder %s680, %s681
      %p693 = scmp.eq.s32.totalorder %s94, 1
      %p694 = por %p692, %p693
      %p696 = scmp.ne.s32.totalorder %s681, %s695
      %p697 = scmp.eq.s32.totalorder %s94, 0
      %p698 = por %p696, %p697
      %s700 = sadd.s32 %s699, 1
      %p703 = scmp.eq.s32.totalorder %s88, 1
      %p704 = scmp.ne.s32.totalorder %s699, %s701
      %p705 = scmp.eq.s32.totalorder %s88, 0
      %p706 = por %p704, %p705
      %p707 = scmp.ne.s32.totalorder %s699, %s701
      %p708 = scmp.eq.s32.totalorder %s93, 1
      %p709 = por %p707, %p708
      %p710 = scmp.ne.s32.totalorder %s701, %s702
      %p711 = scmp.eq.s32.totalorder %s93, 0
      %p712 = por %p710, %p711
      %p713 = scmp.ne.s32.totalorder %s701, %s702
      %p714 = scmp.eq.s32.totalorder %s94, 1
      %p715 = por %p713, %p714
      %p717 = scmp.ne.s32.totalorder %s702, %s716
      %p718 = scmp.eq.s32.totalorder %s94, 0
      %p719 = por %p717, %p718
      %s721 = sadd.s32 %s720, 1
      %p724 = scmp.eq.s32.totalorder %s88, 1
      %p725 = scmp.ne.s32.totalorder %s720, %s722
      %p726 = scmp.eq.s32.totalorder %s88, 0
      %p727 = por %p725, %p726
      %p728 = scmp.ne.s32.totalorder %s720, %s722
      %p729 = scmp.eq.s32.totalorder %s93, 1
      %p730 = por %p728, %p729
      %p731 = scmp.ne.s32.totalorder %s722, %s723
      %p732 = scmp.eq.s32.totalorder %s93, 0
      %p733 = por %p731, %p732
      %p734 = scmp.ne.s32.totalorder %s722, %s723
      %p735 = scmp.eq.s32.totalorder %s94, 1
      %p736 = por %p734, %p735
      %p738 = scmp.ne.s32.totalorder %s723, %s737
      %p739 = scmp.eq.s32.totalorder %s94, 0
      %p740 = por %p738, %p739
      %s742 = sadd.s32 %s741, 1
      %p745 = scmp.eq.s32.totalorder %s88, 1
      %p746 = scmp.ne.s32.totalorder %s741, %s743
      %p747 = scmp.eq.s32.totalorder %s88, 0
      %p748 = por %p746, %p747
      %p749 = scmp.ne.s32.totalorder %s741, %s743
      %p750 = scmp.eq.s32.totalorder %s93, 1
      %p751 = por %p749, %p750
      %p752 = scmp.ne.s32.totalorder %s743, %s744
      %p753 = scmp.eq.s32.totalorder %s93, 0
      %p754 = por %p752, %p753
      %p755 = scmp.ne.s32.totalorder %s743, %s744
      %p756 = scmp.eq.s32.totalorder %s94, 1
      %p757 = por %p755, %p756
      %p759 = scmp.ne.s32.totalorder %s744, %s758
      %p760 = scmp.eq.s32.totalorder %s94, 0
      %p761 = por %p759, %p760
      %s763 = sadd.s32 %s762, 1
      %p766 = scmp.eq.s32.totalorder %s88, 1
      %p767 = scmp.ne.s32.totalorder %s762, %s764
      %p768 = scmp.eq.s32.totalorder %s88, 0
      %p769 = por %p767, %p768
      %p770 = scmp.ne.s32.totalorder %s762, %s764
      %p771 = scmp.eq.s32.totalorder %s93, 1
      %p772 = por %p770, %p771
      %p773 = scmp.ne.s32.totalorder %s764, %s765
      %p774 = scmp.eq.s32.totalorder %s93, 0
      %p775 = por %p773, %p774
      %p776 = scmp.ne.s32.totalorder %s764, %s765
      %p777 = scmp.eq.s32.totalorder %s94, 1
      %p778 = por %p776, %p777
      %p780 = scmp.ne.s32.totalorder %s765, %s779
      %p781 = scmp.eq.s32.totalorder %s94, 0
      %p782 = por %p780, %p781
      %s784 = sadd.s32 %s783, 1
      %p787 = scmp.eq.s32.totalorder %s88, 1
      %p788 = scmp.ne.s32.totalorder %s783, %s785
      %p789 = scmp.eq.s32.totalorder %s88, 0
      %p790 = por %p788, %p789
      %p791 = scmp.ne.s32.totalorder %s783, %s785
      %p792 = scmp.eq.s32.totalorder %s93, 1
      %p793 = por %p791, %p792
      %p794 = scmp.ne.s32.totalorder %s785, %s786
      %p795 = scmp.eq.s32.totalorder %s93, 0
      %p796 = por %p794, %p795
      %p797 = scmp.ne.s32.totalorder %s785, %s786
      %p798 = scmp.eq.s32.totalorder %s94, 1
      %p799 = por %p797, %p798
      %p801 = scmp.ne.s32.totalorder %s786, %s800
      %p802 = scmp.eq.s32.totalorder %s94, 0
      %p803 = por %p801, %p802
      %s805 = sadd.s32 %s804, 1
      %p808 = scmp.eq.s32.totalorder %s88, 1
      %p809 = scmp.ne.s32.totalorder %s804, %s806
      %p810 = scmp.eq.s32.totalorder %s88, 0
      %p811 = por %p809, %p810
      %p812 = scmp.ne.s32.totalorder %s804, %s806
      %p813 = scmp.eq.s32.totalorder %s93, 1
      %p814 = por %p812, %p813
      %p815 = scmp.ne.s32.totalorder %s806, %s807
      %p816 = scmp.eq.s32.totalorder %s93, 0
      %p817 = por %p815, %p816
      %p818 = scmp.ne.s32.totalorder %s806, %s807
      %p819 = scmp.eq.s32.totalorder %s94, 1
      %p820 = por %p818, %p819
      %p822 = scmp.ne.s32.totalorder %s807, %s821
      %p823 = scmp.eq.s32.totalorder %s94, 0
      %p824 = por %p822, %p823
      %s826 = sadd.s32 %s825, 1
      %p829 = scmp.eq.s32.totalorder %s88, 1
      %p830 = scmp.ne.s32.totalorder %s825, %s827
      %p831 = scmp.eq.s32.totalorder %s88, 0
      %p832 = por %p830, %p831
      %p833 = scmp.ne.s32.totalorder %s825, %s827
      %p834 = scmp.eq.s32.totalorder %s93, 1
      %p835 = por %p833, %p834
      %p836 = scmp.ne.s32.totalorder %s827, %s828
      %p837 = scmp.eq.s32.totalorder %s93, 0
      %p838 = por %p836, %p837
      %p839 = scmp.ne.s32.totalorder %s827, %s828
      %p840 = scmp.eq.s32.totalorder %s94, 1
      %p841 = por %p839, %p840
      %p843 = scmp.ne.s32.totalorder %s828, %s842
      %p844 = scmp.eq.s32.totalorder %s94, 0
      %p845 = por %p843, %p844
      %s847 = sadd.s32 %s846, 1
      %p850 = scmp.eq.s32.totalorder %s88, 1
      %p851 = scmp.ne.s32.totalorder %s846, %s848
      %p852 = scmp.eq.s32.totalorder %s88, 0
      %p853 = por %p851, %p852
      %p854 = scmp.ne.s32.totalorder %s846, %s848
      %p855 = scmp.eq.s32.totalorder %s93, 1
      %p856 = por %p854, %p855
      %p857 = scmp.ne.s32.totalorder %s848, %s849
      %p858 = scmp.eq.s32.totalorder %s93, 0
      %p859 = por %p857, %p858
      %p860 = scmp.ne.s32.totalorder %s848, %s849
      %p861 = scmp.eq.s32.totalorder %s94, 1
      %p862 = por %p860, %p861
      %p864 = scmp.ne.s32.totalorder %s849, %s863
      %p865 = scmp.eq.s32.totalorder %s94, 0
      %p866 = por %p864, %p865
      %s867 = ssub.s32 %s88, %s95
      %p868 = scmp.eq.s32.totalorder %s867, 0
      %s870 = sadd.s32 %s869, 1
      %s871 = scalar_select %p868, %s869, %s870
      %p874 = pneg %p868
      %p875 = scmp.eq.s32.totalorder %s88, 1
      %p876 = por %p874, %p875
      %p877 = scmp.ne.s32.totalorder %s869, %s872
      %p878 = scmp.eq.s32.totalorder %s88, 0
      %p879 = por %p877, %p878
      %p880 = scmp.ne.s32.totalorder %s869, %s872
      %p881 = scmp.eq.s32.totalorder %s93, 1
      %p882 = por %p880, %p881
      %p883 = scmp.ne.s32.totalorder %s872, %s873
      %p884 = scmp.eq.s32.totalorder %s93, 0
      %p885 = por %p883, %p884
      %p886 = scmp.ne.s32.totalorder %s872, %s873
      %p887 = scmp.eq.s32.totalorder %s94, 1
      %p888 = por %p886, %p887
      %p890 = scmp.ne.s32.totalorder %s873, %s889
      %p891 = scmp.eq.s32.totalorder %s94, 0
      %p892 = por %p890, %p891
      %s893 = ssub.s32 %s88, %s95
      %p894 = scmp.eq.s32.totalorder %s893, 0
      %s896 = sadd.s32 %s895, 1
      %s897 = scalar_select %p894, %s895, %s896
      %p900 = pneg %p894
      %p901 = scmp.eq.s32.totalorder %s88, 1
      %p902 = por %p900, %p901
      %p903 = scmp.ne.s32.totalorder %s895, %s898
      %p904 = scmp.eq.s32.totalorder %s88, 0
      %p905 = por %p903, %p904
      %p906 = scmp.ne.s32.totalorder %s895, %s898
      %p907 = scmp.eq.s32.totalorder %s93, 1
      %p908 = por %p906, %p907
      %p909 = scmp.ne.s32.totalorder %s898, %s899
      %p910 = scmp.eq.s32.totalorder %s93, 0
      %p911 = por %p909, %p910
      %p912 = scmp.ne.s32.totalorder %s898, %s899
      %p913 = scmp.eq.s32.totalorder %s94, 1
      %p914 = por %p912, %p913
      %p916 = scmp.ne.s32.totalorder %s899, %s915
      %p917 = scmp.eq.s32.totalorder %s94, 0
      %p918 = por %p916, %p917
      %p919 = scmp.le.s32.totalorder 1, %s88
      %p920 = scmp.lt.s32.totalorder %s88, 3
      %p921 = pnand %p919, %p920
      %p922 = pneg %p921
      // Predicated region
      $region9: #{prefix_bart_forward.1} parent=5 // pred_check
        _
      $region10: #{prefix_bart_forward.1} parent=5 // pred_check_branch
        %924 = sbr.rel (%p921) target = $region12
      $region11: #{prefix_bart_forward.1} parent=5 // pred_region
        %s925 = ssub.s32 %s88, 1
        // Predicated region
        $region13: #{prefix_bart_forward.1} parent=11 // pred_check
          %p926 = pneg %p187
        $region14: #{prefix_bart_forward.1} parent=11 // pred_check_branch
          %928 = sbr.rel (%p926) target = $region16
        $region15: #{prefix_bart_forward.1} parent=11 // pred_region
          _
        $region16: #{prefix_bart_forward.1} parent=11 // pred_fallthru
          _
        // Predicated region
        $region17: #{prefix_bart_forward.1} parent=11 // pred_check
          %p929 = pneg %p208
        $region18: #{prefix_bart_forward.1} parent=11 // pred_check_branch
          %931 = sbr.rel (%p929) target = $region20
        $region19: #{prefix_bart_forward.1} parent=11 // pred_region
          _
        $region20: #{prefix_bart_forward.1} parent=11 // pred_fallthru
          _
        // Predicated region
        $region21: #{prefix_bart_forward.1} parent=11 // pred_check
          %p932 = pneg %p229
        $region22: #{prefix_bart_forward.1} parent=11 // pred_check_branch
          %934 = sbr.rel (%p932) target = $region24
        $region23: #{prefix_bart_forward.1} parent=11 // pred_region
          _
        $region24: #{prefix_bart_forward.1} parent=11 // pred_fallthru
          _
        // Predicated region
        $region25: #{prefix_bart_forward.1} parent=11 // pred_check
          %p935 = pneg %p250
        $region26: #{prefix_bart_forward.1} parent=11 // pred_check_branch
          %937 = sbr.rel (%p935) target = $region28
        $region27: #{prefix_bart_forward.1} parent=11 // pred_region
          _
        $region28: #{prefix_bart_forward.1} parent=11 // pred_fallthru
          _
        // Predicated region
        $region29: #{prefix_bart_forward.1} parent=11 // pred_check
          %p938 = pneg %p271
        $region30: #{prefix_bart_forward.1} parent=11 // pred_check_branch
          %940 = sbr.rel (%p938) target = $region32
        $region31: #{prefix_bart_forward.1} parent=11 // pred_region
          _
        $region32: #{prefix_bart_forward.1} parent=11 // pred_fallthru
          _
        // Predicated region
        $region33: #{prefix_bart_forward.1} parent=11 // pred_check
          %p941 = pneg %p292
        $region34: #{prefix_bart_forward.1} parent=11 // pred_check_branch
          %943 = sbr.rel (%p941) target = $region36
        $region35: #{prefix_bart_forward.1} parent=11 // pred_region
          _
        $region36: #{prefix_bart_forward.1} parent=11 // pred_fallthru
          _
        // Predicated region
        $region37: #{prefix_bart_forward.1} parent=11 // pred_check
          %p944 = pneg %p313
        $region38: #{prefix_bart_forward.1} parent=11 // pred_check_branch
          %946 = sbr.rel (%p944) target = $region40
        $region39: #{prefix_bart_forward.1} parent=11 // pred_region
          _
        $region40: #{prefix_bart_forward.1} parent=11 // pred_fallthru
          _
        // Predicated region
        $region41: #{prefix_bart_forward.1} parent=11 // pred_check
          %p947 = pneg %p334
        $region42: #{prefix_bart_forward.1} parent=11 // pred_check_branch
          %949 = sbr.rel (%p947) target = $region44
        $region43: #{prefix_bart_forward.1} parent=11 // pred_region
          _
        $region44: #{prefix_bart_forward.1} parent=11 // pred_fallthru
          _
        // Predicated region
        $region45: #{prefix_bart_forward.1} parent=11 // pred_check
          %p950 = pneg %p355
        $region46: #{prefix_bart_forward.1} parent=11 // pred_check_branch
          %952 = sbr.rel (%p950) target = $region48
        $region47: #{prefix_bart_forward.1} parent=11 // pred_region
          _
        $region48: #{prefix_bart_forward.1} parent=11 // pred_fallthru
          _
        // Predicated region
        $region49: #{prefix_bart_forward.1} parent=11 // pred_check
          %p953 = pneg %p376
        $region50: #{prefix_bart_forward.1} parent=11 // pred_check_branch
          %955 = sbr.rel (%p953) target = $region52
        $region51: #{prefix_bart_forward.1} parent=11 // pred_region
          _
        $region52: #{prefix_bart_forward.1} parent=11 // pred_fallthru
          _
        // Predicated region
        $region53: #{prefix_bart_forward.1} parent=11 // pred_check
          %p956 = pneg %p397
        $region54: #{prefix_bart_forward.1} parent=11 // pred_check_branch
          %958 = sbr.rel (%p956) target = $region56
        $region55: #{prefix_bart_forward.1} parent=11 // pred_region
          _
        $region56: #{prefix_bart_forward.1} parent=11 // pred_fallthru
          _
        // Predicated region
        $region57: #{prefix_bart_forward.1} parent=11 // pred_check
          %p959 = pneg %p418
        $region58: #{prefix_bart_forward.1} parent=11 // pred_check_branch
          %961 = sbr.rel (%p959) target = $region60
        $region59: #{prefix_bart_forward.1} parent=11 // pred_region
          _
        $region60: #{prefix_bart_forward.1} parent=11 // pred_fallthru
          _
        // Predicated region
        $region61: #{prefix_bart_forward.1} parent=11 // pred_check
          %p962 = pneg %p439
        $region62: #{prefix_bart_forward.1} parent=11 // pred_check_branch
          %964 = sbr.rel (%p962) target = $region64
        $region63: #{prefix_bart_forward.1} parent=11 // pred_region
          _
        $region64: #{prefix_bart_forward.1} parent=11 // pred_fallthru
          _
        // Predicated region
        $region65: #{prefix_bart_forward.1} parent=11 // pred_check
          %p965 = pneg %p460
        $region66: #{prefix_bart_forward.1} parent=11 // pred_check_branch
          %967 = sbr.rel (%p965) target = $region68
        $region67: #{prefix_bart_forward.1} parent=11 // pred_region
          _
        $region68: #{prefix_bart_forward.1} parent=11 // pred_fallthru
          _
        // Predicated region
        $region69: #{prefix_bart_forward.1} parent=11 // pred_check
          %p968 = pneg %p481
        $region70: #{prefix_bart_forward.1} parent=11 // pred_check_branch
          %970 = sbr.rel (%p968) target = $region72
        $region71: #{prefix_bart_forward.1} parent=11 // pred_region
          _
        $region72: #{prefix_bart_forward.1} parent=11 // pred_fallthru
          _
        // Predicated region
        $region73: #{prefix_bart_forward.1} parent=11 // pred_check
          %p971 = pneg %p502
        $region74: #{prefix_bart_forward.1} parent=11 // pred_check_branch
          %973 = sbr.rel (%p971) target = $region76
        $region75: #{prefix_bart_forward.1} parent=11 // pred_region
          _
        $region76: #{prefix_bart_forward.1} parent=11 // pred_fallthru
          _
        // Predicated region
        $region77: #{prefix_bart_forward.1} parent=11 // pred_check
          %p974 = pneg %p523
        $region78: #{prefix_bart_forward.1} parent=11 // pred_check_branch
          %976 = sbr.rel (%p974) target = $region80
        $region79: #{prefix_bart_forward.1} parent=11 // pred_region
          _
        $region80: #{prefix_bart_forward.1} parent=11 // pred_fallthru
          _
        // Predicated region
        $region81: #{prefix_bart_forward.1} parent=11 // pred_check
          %p977 = pneg %p544
        $region82: #{prefix_bart_forward.1} parent=11 // pred_check_branch
          %979 = sbr.rel (%p977) target = $region84
        $region83: #{prefix_bart_forward.1} parent=11 // pred_region
          _
        $region84: #{prefix_bart_forward.1} parent=11 // pred_fallthru
          _
        // Predicated region
        $region85: #{prefix_bart_forward.1} parent=11 // pred_check
          %p980 = pneg %p565
        $region86: #{prefix_bart_forward.1} parent=11 // pred_check_branch
          %982 = sbr.rel (%p980) target = $region88
        $region87: #{prefix_bart_forward.1} parent=11 // pred_region
          _
        $region88: #{prefix_bart_forward.1} parent=11 // pred_fallthru
          _
        // Predicated region
        $region89: #{prefix_bart_forward.1} parent=11 // pred_check
          %p983 = pneg %p586
        $region90: #{prefix_bart_forward.1} parent=11 // pred_check_branch
          %985 = sbr.rel (%p983) target = $region92
        $region91: #{prefix_bart_forward.1} parent=11 // pred_region
          _
        $region92: #{prefix_bart_forward.1} parent=11 // pred_fallthru
          _
        // Predicated region
        $region93: #{prefix_bart_forward.1} parent=11 // pred_check
          %p986 = pneg %p607
        $region94: #{prefix_bart_forward.1} parent=11 // pred_check_branch
          %988 = sbr.rel (%p986) target = $region96
        $region95: #{prefix_bart_forward.1} parent=11 // pred_region
          _
        $region96: #{prefix_bart_forward.1} parent=11 // pred_fallthru
          _
        // Predicated region
        $region97: #{prefix_bart_forward.1} parent=11 // pred_check
          %p989 = pneg %p628
        $region98: #{prefix_bart_forward.1} parent=11 // pred_check_branch
          %991 = sbr.rel (%p989) target = $region100
        $region99: #{prefix_bart_forward.1} parent=11 // pred_region
          _
        $region100: #{prefix_bart_forward.1} parent=11 // pred_fallthru
          _
        // Predicated region
        $region101: #{prefix_bart_forward.1} parent=11 // pred_check
          %p992 = pneg %p649
        $region102: #{prefix_bart_forward.1} parent=11 // pred_check_branch
          %994 = sbr.rel (%p992) target = $region104
        $region103: #{prefix_bart_forward.1} parent=11 // pred_region
          _
        $region104: #{prefix_bart_forward.1} parent=11 // pred_fallthru
          _
        // Predicated region
        $region105: #{prefix_bart_forward.1} parent=11 // pred_check
          %p995 = pneg %p670
        $region106: #{prefix_bart_forward.1} parent=11 // pred_check_branch
          %997 = sbr.rel (%p995) target = $region108
        $region107: #{prefix_bart_forward.1} parent=11 // pred_region
          _
        $region108: #{prefix_bart_forward.1} parent=11 // pred_fallthru
          _
        // Predicated region
        $region109: #{prefix_bart_forward.1} parent=11 // pred_check
          %p998 = pneg %p691
        $region110: #{prefix_bart_forward.1} parent=11 // pred_check_branch
          %1000 = sbr.rel (%p998) target = $region112
        $region111: #{prefix_bart_forward.1} parent=11 // pred_region
          _
        $region112: #{prefix_bart_forward.1} parent=11 // pred_fallthru
          _
        // Predicated region
        $region113: #{prefix_bart_forward.1} parent=11 // pred_check
          %p1001 = pneg %p712
        $region114: #{prefix_bart_forward.1} parent=11 // pred_check_branch
          %1003 = sbr.rel (%p1001) target = $region116
        $region115: #{prefix_bart_forward.1} parent=11 // pred_region
          _
        $region116: #{prefix_bart_forward.1} parent=11 // pred_fallthru
          _
        // Predicated region
        $region117: #{prefix_bart_forward.1} parent=11 // pred_check
          %p1004 = pneg %p733
        $region118: #{prefix_bart_forward.1} parent=11 // pred_check_branch
          %1006 = sbr.rel (%p1004) target = $region120
        $region119: #{prefix_bart_forward.1} parent=11 // pred_region
          _
        $region120: #{prefix_bart_forward.1} parent=11 // pred_fallthru
          _
        // Predicated region
        $region121: #{prefix_bart_forward.1} parent=11 // pred_check
          %p1007 = pneg %p754
        $region122: #{prefix_bart_forward.1} parent=11 // pred_check_branch
          %1009 = sbr.rel (%p1007) target = $region124
        $region123: #{prefix_bart_forward.1} parent=11 // pred_region
          _
        $region124: #{prefix_bart_forward.1} parent=11 // pred_fallthru
          _
        // Predicated region
        $region125: #{prefix_bart_forward.1} parent=11 // pred_check
          %p1010 = pneg %p775
        $region126: #{prefix_bart_forward.1} parent=11 // pred_check_branch
          %1012 = sbr.rel (%p1010) target = $region128
        $region127: #{prefix_bart_forward.1} parent=11 // pred_region
          _
        $region128: #{prefix_bart_forward.1} parent=11 // pred_fallthru
          _
        // Predicated region
        $region129: #{prefix_bart_forward.1} parent=11 // pred_check
          %p1013 = pneg %p796
        $region130: #{prefix_bart_forward.1} parent=11 // pred_check_branch
          %1015 = sbr.rel (%p1013) target = $region132
        $region131: #{prefix_bart_forward.1} parent=11 // pred_region
          _
        $region132: #{prefix_bart_forward.1} parent=11 // pred_fallthru
          _
        // Predicated region
        $region133: #{prefix_bart_forward.1} parent=11 // pred_check
          %p1016 = pneg %p817
        $region134: #{prefix_bart_forward.1} parent=11 // pred_check_branch
          %1018 = sbr.rel (%p1016) target = $region136
        $region135: #{prefix_bart_forward.1} parent=11 // pred_region
          _
        $region136: #{prefix_bart_forward.1} parent=11 // pred_fallthru
          _
        // Predicated region
        $region137: #{prefix_bart_forward.1} parent=11 // pred_check
          %p1019 = pneg %p838
        $region138: #{prefix_bart_forward.1} parent=11 // pred_check_branch
          %1021 = sbr.rel (%p1019) target = $region140
        $region139: #{prefix_bart_forward.1} parent=11 // pred_region
          _
        $region140: #{prefix_bart_forward.1} parent=11 // pred_fallthru
          _
        // Predicated region
        $region141: #{prefix_bart_forward.1} parent=11 // pred_check
          %p1022 = pneg %p859
        $region142: #{prefix_bart_forward.1} parent=11 // pred_check_branch
          %1024 = sbr.rel (%p1022) target = $region144
        $region143: #{prefix_bart_forward.1} parent=11 // pred_region
          _
        $region144: #{prefix_bart_forward.1} parent=11 // pred_fallthru
          _
      $region12: #{prefix_bart_forward.1} parent=5 // pred_fallthru
        _
      %p1025 = scmp.lt.s32.totalorder %s88, 2
      // Predicated region
      $region145: #{prefix_bart_forward.1} parent=5 // pred_check
        %p1026 = pneg %p1025
      $region146: #{prefix_bart_forward.1} parent=5 // pred_check_branch
        %1028 = sbr.rel (%p1026) target = $region148
      $region147: #{prefix_bart_forward.1} parent=5 // pred_region
        // Predicated region
        $region149: #{prefix_bart_forward.1} parent=147 // pred_check
          %p1029 = pneg %p108
        $region150: #{prefix_bart_forward.1} parent=147 // pred_check_branch
          %1031 = sbr.rel (%p1029) target = $region152
        $region151: #{prefix_bart_forward.1} parent=147 // pred_region
          %p1032 = scmp.lt.s32.totalorder %s88, 1
          %s1033 = scalar_select %p1032, %s88, 1
          %s1034 = smul.addr %s1033, 2
          %s1035 = smul.addr %s1034, 8
          %s1036 = scalar_lea.vmem %s1, %s1035
        $region152: #{prefix_bart_forward.1} parent=147 // pred_fallthru
          _
        // Predicated region
        $region153: #{prefix_bart_forward.1} parent=147 // pred_check
          %p1037 = pneg %p134
        $region154: #{prefix_bart_forward.1} parent=147 // pred_check_branch
          %1039 = sbr.rel (%p1037) target = $region156
        $region155: #{prefix_bart_forward.1} parent=147 // pred_region
          %p1040 = scmp.lt.s32.totalorder %s88, 1
          %s1041 = scalar_select %p1040, %s88, 1
          %s1042 = smul.addr %s1041, 8
          %s1043 = scalar_lea.vmem %s3, %s1042
        $region156: #{prefix_bart_forward.1} parent=147 // pred_fallthru
          _
        // Predicated region
        $region157: #{prefix_bart_forward.1} parent=147 // pred_check
          %p1044 = pneg %p160
        $region158: #{prefix_bart_forward.1} parent=147 // pred_check_branch
          %1046 = sbr.rel (%p1044) target = $region160
        $region159: #{prefix_bart_forward.1} parent=147 // pred_region
          %p1047 = scmp.lt.s32.totalorder %s88, 1
          %s1048 = scalar_select %p1047, %s88, 1
          %s1049 = scalar_lea.vmem %s5, %s1048
        $region160: #{prefix_bart_forward.1} parent=147 // pred_fallthru
          _
      $region148: #{prefix_bart_forward.1} parent=5 // pred_fallthru
        _
      %p1050 = scmp.le.s32.totalorder 1, %s88
      %p1051 = scmp.lt.s32.totalorder %s88, 3
      %p1052 = pnand %p1050, %p1051
      %p1053 = pneg %p1052
      // Predicated region
      $region161: #{prefix_bart_forward.1} parent=5 // pred_check
        _
      $region162: #{prefix_bart_forward.1} parent=5 // pred_check_branch
        %1055 = sbr.rel (%p1052) target = $region164
      $region163: #{prefix_bart_forward.1} parent=5 // pred_region
        %s1056 = ssub.s32 %s88, 1
        %p1057 = scmp.lt.s32.totalorder %s93, 1
        %s1058 = scalar_select %p1057, %s93, 1
        %s1059 = smul.addr %s1058, 2
        %s1060 = smul.addr %s1059, 8
        %s1061 = scalar_lea.vmem %s1, %s1060
        %p1062 = pneg %p114
        %p1063 = pneg %p111
        %p1064 = scmp.lt.s32.totalorder %s93, 1
        %s1065 = scalar_select %p1064, %s93, 1
        %s1066 = smul.addr %s1065, 8
        %s1067 = scalar_lea.vmem %s3, %s1066
        %p1068 = pneg %p140
        %p1069 = pneg %p137
        %p1070 = scmp.lt.s32.totalorder %s93, 1
        %s1071 = scalar_select %p1070, %s93, 1
        %s1072 = scalar_lea.vmem %s5, %s1071
        %p1073 = pneg %p166
        %p1074 = pneg %p163
        %p1075 = pneg %p187
        %p1076 = pneg %p184
        %p1077 = pneg %p208
        %p1078 = pneg %p205
        %p1079 = pneg %p229
        %p1080 = pneg %p226
        %p1081 = pneg %p250
        %p1082 = pneg %p247
        %p1083 = pneg %p271
        %p1084 = pneg %p268
        %p1085 = pneg %p292
        %p1086 = pneg %p289
        %p1087 = pneg %p313
        %p1088 = pneg %p310
        %p1089 = pneg %p334
        %p1090 = pneg %p331
        %p1091 = pneg %p355
        %p1092 = pneg %p352
        %p1093 = pneg %p376
        %p1094 = pneg %p373
        %p1095 = pneg %p397
        %p1096 = pneg %p394
        %p1097 = pneg %p418
        %p1098 = pneg %p415
        %p1099 = pneg %p439
        %p1100 = pneg %p436
        %p1101 = pneg %p460
        %p1102 = pneg %p457
        %p1103 = pneg %p481
        %p1104 = pneg %p478
        %p1105 = pneg %p502
        %p1106 = pneg %p499
        %p1107 = pneg %p523
        %p1108 = pneg %p520
        %p1109 = pneg %p544
        %p1110 = pneg %p541
        %p1111 = pneg %p565
        %p1112 = pneg %p562
        %p1113 = pneg %p586
        %p1114 = pneg %p583
        %p1115 = pneg %p607
        %p1116 = pneg %p604
        %p1117 = pneg %p628
        %p1118 = pneg %p625
        %p1119 = pneg %p649
        %p1120 = pneg %p646
        %p1121 = pneg %p670
        %p1122 = pneg %p667
        %p1123 = pneg %p691
        %p1124 = pneg %p688
        %p1125 = pneg %p712
        %p1126 = pneg %p709
        %p1127 = pneg %p733
        %p1128 = pneg %p730
        %p1129 = pneg %p754
        %p1130 = pneg %p751
        %p1131 = pneg %p775
        %p1132 = pneg %p772
        %p1133 = pneg %p796
        %p1134 = pneg %p793
        %p1135 = pneg %p817
        %p1136 = pneg %p814
        %p1137 = pneg %p838
        %p1138 = pneg %p835
        %p1139 = pneg %p859
        %p1140 = pneg %p856
        %p1141 = pneg %p885
        %p1142 = pneg %p882
        %s1143 = sand.u32 %s872, 1
        %s1144 = scalar_lea.sflag [#allocation3], %s1143
        %s1145 = sand.u32 %s872, 1
        %s1146 = scalar_lea.vmem [#allocation2], %s1145
        %p1147 = pneg %p911
        %p1148 = pneg %p908
        %s1149 = sand.u32 %s898, 1
        %s1150 = scalar_lea.sflag [#allocation5], %s1149
        %s1151 = sand.u32 %s898, 1
        %s1152 = smul.addr %s1151, 8
        %s1153 = scalar_lea.vmem [#allocation4], %s1152
        %p1154 = scmp.lt.s32.totalorder %s93, 1
        %s1155 = scalar_select %p1154, %s93, 1
        %s1156 = smul.addr %s1155, 2
        %s1157 = smul.addr %s1156, 8
        %s1158 = scalar_lea.vmem %s1, %s1157
        %p1159 = scmp.lt.s32.totalorder %s93, 1
        %s1160 = scalar_select %p1159, %s93, 1
        %s1161 = smul.addr %s1160, 8
        %s1162 = scalar_lea.vmem %s3, %s1161
        %p1163 = scmp.lt.s32.totalorder %s93, 1
        %s1164 = scalar_select %p1163, %s93, 1
        %s1165 = scalar_lea.vmem %s5, %s1164
        %v1166 = vld [vmem:[%s1158] sm:$0xff]
        %v1167 = vld [vmem:[%s1158 + $0x8] sm:$0x1]
        %v1168 = vld [vmem:[%s7] sm:$0x3]
        %vm1169 = vcmask 261120
        %v1170 = vsel %vm1169, %v1166, 0.0
        %1171 = vadd.xlane.f32.xlu0 %v1170
        %v1172 = vpop.xlane.xlu0 %1171
        %vm1173 = vcmask 253952
        %v1174 = vsel %vm1173, %v1167, 0.0
        %1175 = vadd.xlane.f32.xlu0 %v1174
        %v1176 = vpop.xlane.xlu0 %1175
        %v1177 = vrcp.pop 32.0
        %v1178 = vmul.f32 32.0, %v1177
        %v1179 = vsub.f32 1.0, %v1178
        %v1180 = vmul.f32 %v1177, %v1179
        %v1181 = vadd.f32 %v1177, %v1180
        %vm1182 = vweird.f32 %v1177
        %v1183 = vsel %vm1182, %v1177, %v1181
        %v1184 = vmul.f32 %v1172, %v1183
        %v1185 = vmul.f32 %v1176, %v1183
        %v1186 = vsub.f32 %v1166, %v1184
        %v1187 = vsub.f32 %v1167, %v1185
        %v1188 = vmul.f32 %v1186, %v1186
        %v1189 = vmul.f32 %v1187, %v1187
        %v1190 = vsel %vm1169, %v1188, 0.0
        %1191 = vadd.xlane.f32.xlu0 %v1190
        %v1192 = vpop.xlane.xlu0 %1191
        %v1193 = vsel %vm1173, %v1189, 0.0
        %1194 = vadd.xlane.f32.xlu0 %v1193
        %v1195 = vpop.xlane.xlu0 %1194
        %v1196 = vmul.f32 %v1192, %v1183
        %v1197 = vmul.f32 %v1195, %v1183
        %v1198 = vadd.f32 %v1196, 1e-05
        %v1199 = vadd.f32 %v1197, 1e-05
        %v1200 = vrsqrt.pop %v1198
        %v1201 = vmul.f32 %v1200, %v1198
        %v1202 = vmul.f32 %v1201, %v1200
        %v1203 = vmul.f32 0.5, %v1202
        %v1204 = vsub.f32 1.5, %v1203
        %v1205 = vmul.f32 %v1200, %v1204
        %vm1206 = vweird.f32 %v1198
        %vm1207 = vweird.f32 %v1200
        %vm1208 = vmor %vm1206, %vm1207
        %v1209 = vsel %vm1208, %v1200, %v1205
        %v1210 = vrsqrt.pop %v1199
        %v1211 = vmul.f32 %v1210, %v1199
        %v1212 = vmul.f32 %v1211, %v1210
        %v1213 = vmul.f32 0.5, %v1212
        %v1214 = vsub.f32 1.5, %v1213
        %v1215 = vmul.f32 %v1210, %v1214
        %vm1216 = vweird.f32 %v1199
        %vm1217 = vweird.f32 %v1210
        %vm1218 = vmor %vm1216, %vm1217
        %v1219 = vsel %vm1218, %v1210, %v1215
        %v1220 = vmul.f32 %v1186, %v1209
        %v1221 = vmul.f32 %v1187, %v1219
        %v1222 = vperm.slane %v1168, 0
        %v1223 = vmul.f32 %v1220, %v1222
        %v1224 = vmul.f32 %v1221, %v1222
        %v1225 = vperm.slane %v1168, 1
        %v1226 = vadd.f32 %v1223, %v1225
        %v1227 = vadd.f32 %v1224, %v1225
        %v1228 = vld [vmem:[%s1165] sm:$0x1]
        %v1229 = vld [vmem:[%s9] sm:$0xff]
        %v1230 = vld [vmem:[%s9 + $0x8] sm:$0xff]
        %v1231 = vld [vmem:[%s9 + $0x10] sm:$0xff]
        %v1232 = vld [vmem:[%s9 + $0x18] sm:$0xff]
        %v1233 = vld [vmem:[%s11] sm:$0x1]
        %v1235 = vperm.slane %v1233, 0
        %v1238 = vsel %vm1169, %v1226, 0
        %v1241 = vsel %vm1169, %v1227, 0
        %1243 = vmatpush.msra.mxu0 0.0
        %1244 = vmatpush.msra.mxu0 0.0
        %1245 = vmatpush.msra.mxu0 0.0
        %1246 = vmatpush.msra.mxu0 0.0
        %1247 = vmatpush.msra.mxu0 0.0
        %1248 = vmatpush.msra.mxu0 0.0
        %1249 = vmatpush.msra.mxu0 0.0
        %1250 = vmatpush.msra.mxu0 0.0
        %1251 = vmatpush.msra.mxu0 0.0
        %1252 = vmatpush.msra.mxu0 0.0
        %1253 = vmatpush.msra.mxu0 0.0
        %1254 = vmatpush.msra.mxu0 0.0
        %1255 = vmatpush.msra.mxu0 %v1232
        %1256 = vmatpush.msra.mxu0 %v1231
        %1257 = vmatpush.msra.mxu0 %v1230
        %1258 = vmatpush.msra.mxu0 %v1229
        %1259 = vmatmul.f32.gmra.mxu0 %v1238
        %v1260 = vpop.f32.mrf.mxu0
        %v1261 = vadd.f32 %v1235, %v1260
        %1262 = vmatmul.f32.gmra.mxu0 %v1241
        %v1263 = vpop.f32.mrf.mxu0
        %v1264 = vadd.f32 %v1235, %v1263
        %1265 = vdwg.mxu0
        %v1266 = vld [vmem:[%s13] sm:$0xff]
        %v1267 = vld [vmem:[%s13 + $0x8] sm:$0xff]
        %v1268 = vld [vmem:[%s13 + $0x10] sm:$0xff]
        %v1269 = vld [vmem:[%s13 + $0x18] sm:$0xff]
        %v1270 = vld [vmem:[%s15] sm:$0x1]
        %1273 = vrot.lane.b32.xlu0 %v1261, 96
        %v1274 = vpop.permute.xlu0 %1273
        %1275 = vrot.lane.b32.xlu0 %v1264, 96
        %v1276 = vpop.permute.xlu0 %1275
        %vm1277 = vcmask 64512
        %v1278 = vsel %vm1277, %v1261, 0
        %v1280 = vsel %vm1277, %v1264, 0
        %v1282 = vsel %vm1277, %v1274, 0
        %v1284 = vsel %vm1277, %v1276, 0
        %1286 = vmatpush.xpose.msra.mxu0 0.0
        %1287 = vmatpush.xpose.msra.mxu0 0.0
        %1288 = vmatpush.xpose.msra.mxu0 0.0
        %1289 = vmatpush.xpose.msra.mxu0 0.0
        %1290 = vmatpush.xpose.msra.mxu0 0.0
        %1291 = vmatpush.xpose.msra.mxu0 0.0
        %1292 = vmatpush.xpose.msra.mxu0 0.0
        %1293 = vmatpush.xpose.msra.mxu0 0.0
        %1294 = vmatpush.xpose.msra.mxu0 0.0
        %1295 = vmatpush.xpose.msra.mxu0 0.0
        %1296 = vmatpush.xpose.msra.mxu0 0.0
        %1297 = vmatpush.xpose.msra.mxu0 0.0
        %1298 = vmatpush.xpose.msra.mxu0 0.0
        %1299 = vmatpush.xpose.msra.mxu0 0.0
        %1300 = vmatpush.xpose.msra.mxu0 %v1284
        %1301 = vmatpush.xpose.msra.mxu0 %v1282
        %1302 = vmatmul.f32.gmra.mxu0 %v1278
        %v1303 = vpop.f32.mrf.mxu0
        %v1304 = vadd.f32 0.0, %v1303
        %1305 = vmatmul.f32.gmra.mxu0 %v1280
        %v1306 = vpop.f32.mrf.mxu0
        %v1307 = vadd.f32 0.0, %v1306
        %1308 = vdwg.mxu0
        %v1309 = vmul.f32 %v1304, 0.35355338
        %v1310 = vmul.f32 %v1307, 0.35355338
        %v1312 = vperm.slane %v1228, 0
        %v1314 = vadd.f32 %v1309, %v1312
        %v1315 = vadd.f32 %v1310, %v1312
        %vm1316 = vcmask 72704
        %v1317 = vsel %vm1316, %v1314, -inf
        %1318 = vmax.xlane.f32.xlu0 %v1317
        %v1319 = vpop.xlane.xlu0 %1318
        %vm1320 = vcmask 65536
        %v1321 = vsel %vm1320, %v1315, -inf
        %1322 = vmax.xlane.f32.xlu0 %v1321
        %v1323 = vpop.xlane.xlu0 %1322
        %v1324 = vsub.f32 %v1314, %v1319
        %v1325 = vsub.f32 %v1315, %v1323
        %v1326 = vmul.f32 %v1324, 1.442695
        %v1327 = vpow.pop %v1326
        %v1328 = vmul.f32 %v1325, 1.442695
        %v1329 = vpow.pop %v1328
        %v1330 = vsel %vm1316, %v1327, 0.0
        %1331 = vadd.xlane.f32.xlu0 %v1330
        %v1332 = vpop.xlane.xlu0 %1331
        %v1333 = vsel %vm1320, %v1329, 0.0
        %1334 = vadd.xlane.f32.xlu0 %v1333
        %v1335 = vpop.xlane.xlu0 %1334
        %v1336 = vrcp.pop %v1332
        %v1337 = vrcp.pop %v1335
        %v1338 = vmul.f32 %v1327, %v1336
        %v1339 = vmul.f32 %v1329, %v1337
        %1340 = vrot.lane.b32.xlu0 %v1261, 64
        %v1341 = vpop.permute.xlu0 %1340
        %1342 = vrot.lane.b32.xlu0 %v1264, 64
        %v1343 = vpop.permute.xlu0 %1342
        %v1346 = vsel %vm1316, %v1338, 0
        %v1349 = vsel %vm1316, %v1339, 0
        %vm1351 = vcmask 1040384
        %v1352 = vsel %vm1351, %v1343, 0
        %1354 = vmatpush.msra.mxu0 0.0
        %1355 = vmatpush.msra.mxu0 0.0
        %1356 = vmatpush.msra.mxu0 0.0
        %1357 = vmatpush.msra.mxu0 0.0
        %1358 = vmatpush.msra.mxu0 0.0
        %1359 = vmatpush.msra.mxu0 0.0
        %1360 = vmatpush.msra.mxu0 0.0
        %1361 = vmatpush.msra.mxu0 0.0
        %1362 = vmatpush.msra.mxu0 0.0
        %1363 = vmatpush.msra.mxu0 0.0
        %1364 = vmatpush.msra.mxu0 0.0
        %1365 = vmatpush.msra.mxu0 0.0
        %1366 = vmatpush.msra.mxu0 0.0
        %1367 = vmatpush.msra.mxu0 0.0
        %1368 = vmatpush.msra.mxu0 %v1352
        %1369 = vmatpush.msra.mxu0 %v1341
        %1370 = vmatmul.f32.gmra.mxu0 %v1346
        %v1371 = vpop.f32.mrf.mxu0
        %v1372 = vadd.f32 0.0, %v1371
        %1373 = vmatmul.f32.gmra.mxu0 %v1349
        %v1374 = vpop.f32.mrf.mxu0
        %v1375 = vadd.f32 0.0, %v1374
        %1376 = vdwg.mxu0
        %v1378 = vsel %vm1277, %v1372, 0
        %v1381 = vsel %vm1277, %v1375, 0
        %1383 = vmatpush.msra.mxu0 0.0
        %1384 = vmatpush.msra.mxu0 0.0
        %1385 = vmatpush.msra.mxu0 0.0
        %1386 = vmatpush.msra.mxu0 0.0
        %1387 = vmatpush.msra.mxu0 0.0
        %1388 = vmatpush.msra.mxu0 0.0
        %1389 = vmatpush.msra.mxu0 0.0
        %1390 = vmatpush.msra.mxu0 0.0
        %1391 = vmatpush.msra.mxu0 0.0
        %1392 = vmatpush.msra.mxu0 0.0
        %1393 = vmatpush.msra.mxu0 0.0
        %1394 = vmatpush.msra.mxu0 0.0
        %1395 = vmatpush.msra.mxu0 0.0
        %1396 = vmatpush.msra.mxu0 0.0
        %1397 = vmatpush.msra.mxu0 0.0
        %1398 = vmatpush.msra.mxu0 %v1266
        %1399 = vmatmul.f32.gmra.mxu0 %v1378
        %v1400 = vpop.f32.mrf.mxu0
        %v1401 = vadd.f32 0.0, %v1400
        %1402 = vmatmul.f32.gmra.mxu0 %v1381
        %v1403 = vpop.f32.mrf.mxu0
        %v1404 = vadd.f32 0.0, %v1403
        %1405 = vdwg.mxu0
        %v1407 = vperm.slane %v1270, 0
        %v1409 = vadd.f32 %v1407, %v1401
        %v1410 = vadd.f32 %v1407, %v1404
        %1411 = vrot.lane.b32.xlu0 %v1261, 120
        %v1412 = vpop.permute.xlu0 %1411
        %1413 = vrot.lane.b32.xlu0 %v1264, 120
        %v1414 = vpop.permute.xlu0 %1413
        %1415 = vrot.lane.b32.xlu0 %v1261, 88
        %v1416 = vpop.permute.xlu0 %1415
        %1417 = vrot.lane.b32.xlu0 %v1264, 88
        %v1418 = vpop.permute.xlu0 %1417
        %v1419 = vsel %vm1277, %v1412, 0
        %v1421 = vsel %vm1277, %v1414, 0
        %v1423 = vsel %vm1277, %v1416, 0
        %v1425 = vsel %vm1277, %v1418, 0
        %1427 = vmatpush.xpose.msra.mxu0 0.0
        %1428 = vmatpush.xpose.msra.mxu0 0.0
        %1429 = vmatpush.xpose.msra.mxu0 0.0
        %1430 = vmatpush.xpose.msra.mxu0 0.0
        %1431 = vmatpush.xpose.msra.mxu0 0.0
        %1432 = vmatpush.xpose.msra.mxu0 0.0
        %1433 = vmatpush.xpose.msra.mxu0 0.0
        %1434 = vmatpush.xpose.msra.mxu0 0.0
        %1435 = vmatpush.xpose.msra.mxu0 0.0
        %1436 = vmatpush.xpose.msra.mxu0 0.0
        %1437 = vmatpush.xpose.msra.mxu0 0.0
        %1438 = vmatpush.xpose.msra.mxu0 0.0
        %1439 = vmatpush.xpose.msra.mxu0 0.0
        %1440 = vmatpush.xpose.msra.mxu0 0.0
        %1441 = vmatpush.xpose.msra.mxu0 %v1425
        %1442 = vmatpush.xpose.msra.mxu0 %v1423
        %1443 = vmatmul.f32.gmra.mxu0 %v1419
        %v1444 = vpop.f32.mrf.mxu0
        %v1445 = vadd.f32 0.0, %v1444
        %1446 = vmatmul.f32.gmra.mxu0 %v1421
        %v1447 = vpop.f32.mrf.mxu0
        %v1448 = vadd.f32 0.0, %v1447
        %1449 = vdwg.mxu0
        %v1450 = vmul.f32 %v1445, 0.35355338
        %v1451 = vmul.f32 %v1448, 0.35355338
        %v1452 = vadd.f32 %v1450, %v1312
        %v1453 = vadd.f32 %v1451, %v1312
        %v1454 = vsel %vm1316, %v1452, -inf
        %1455 = vmax.xlane.f32.xlu0 %v1454
        %v1456 = vpop.xlane.xlu0 %1455
        %v1457 = vsel %vm1320, %v1453, -inf
        %1458 = vmax.xlane.f32.xlu0 %v1457
        %v1459 = vpop.xlane.xlu0 %1458
        %v1460 = vsub.f32 %v1452, %v1456
        %v1461 = vsub.f32 %v1453, %v1459
        %v1462 = vmul.f32 %v1460, 1.442695
        %v1463 = vpow.pop %v1462
        %v1464 = vmul.f32 %v1461, 1.442695
        %v1465 = vpow.pop %v1464
        %v1466 = vsel %vm1316, %v1463, 0.0
        %1467 = vadd.xlane.f32.xlu0 %v1466
        %v1468 = vpop.xlane.xlu0 %1467
        %v1469 = vsel %vm1320, %v1465, 0.0
        %1470 = vadd.xlane.f32.xlu0 %v1469
        %v1471 = vpop.xlane.xlu0 %1470
        %v1472 = vrcp.pop %v1468
        %v1473 = vrcp.pop %v1471
        %v1474 = vmul.f32 %v1463, %v1472
        %v1475 = vmul.f32 %v1465, %v1473
        %1476 = vrot.lane.b32.xlu0 %v1261, 56
        %v1477 = vpop.permute.xlu0 %1476
        %1478 = vrot.lane.b32.xlu0 %v1264, 56
        %v1479 = vpop.permute.xlu0 %1478
        %v1482 = vsel %vm1316, %v1474, 0
        %v1485 = vsel %vm1316, %v1475, 0
        %v1487 = vsel %vm1351, %v1479, 0
        %1489 = vmatpush.msra.mxu0 0.0
        %1490 = vmatpush.msra.mxu0 0.0
        %1491 = vmatpush.msra.mxu0 0.0
        %1492 = vmatpush.msra.mxu0 0.0
        %1493 = vmatpush.msra.mxu0 0.0
        %1494 = vmatpush.msra.mxu0 0.0
        %1495 = vmatpush.msra.mxu0 0.0
        %1496 = vmatpush.msra.mxu0 0.0
        %1497 = vmatpush.msra.mxu0 0.0
        %1498 = vmatpush.msra.mxu0 0.0
        %1499 = vmatpush.msra.mxu0 0.0
        %1500 = vmatpush.msra.mxu0 0.0
        %1501 = vmatpush.msra.mxu0 0.0
        %1502 = vmatpush.msra.mxu0 0.0
        %1503 = vmatpush.msra.mxu0 %v1487
        %1504 = vmatpush.msra.mxu0 %v1477
        %1505 = vmatmul.f32.gmra.mxu0 %v1482
        %v1506 = vpop.f32.mrf.mxu0
        %v1507 = vadd.f32 0.0, %v1506
        %1508 = vmatmul.f32.gmra.mxu0 %v1485
        %v1509 = vpop.f32.mrf.mxu0
        %v1510 = vadd.f32 0.0, %v1509
        %1511 = vdwg.mxu0
        %v1513 = vsel %vm1277, %v1507, 0
        %v1516 = vsel %vm1277, %v1510, 0
        %1518 = vmatpush.msra.mxu0 0.0
        %1519 = vmatpush.msra.mxu0 0.0
        %1520 = vmatpush.msra.mxu0 0.0
        %1521 = vmatpush.msra.mxu0 0.0
        %1522 = vmatpush.msra.mxu0 0.0
        %1523 = vmatpush.msra.mxu0 0.0
        %1524 = vmatpush.msra.mxu0 0.0
        %1525 = vmatpush.msra.mxu0 0.0
        %1526 = vmatpush.msra.mxu0 0.0
        %1527 = vmatpush.msra.mxu0 0.0
        %1528 = vmatpush.msra.mxu0 0.0
        %1529 = vmatpush.msra.mxu0 0.0
        %1530 = vmatpush.msra.mxu0 0.0
        %1531 = vmatpush.msra.mxu0 0.0
        %1532 = vmatpush.msra.mxu0 0.0
        %1533 = vmatpush.msra.mxu0 %v1267
        %1534 = vmatmul.f32.gmra.mxu0 %v1513
        %v1535 = vpop.f32.mrf.mxu0
        %v1536 = vadd.f32 0.0, %v1535
        %1537 = vmatmul.f32.gmra.mxu0 %v1516
        %v1538 = vpop.f32.mrf.mxu0
        %v1539 = vadd.f32 0.0, %v1538
        %1540 = vdwg.mxu0
        %v1541 = vadd.f32 %v1409, %v1536
        %v1542 = vadd.f32 %v1410, %v1539
        %1543 = vrot.lane.b32.xlu0 %v1261, 112
        %v1544 = vpop.permute.xlu0 %1543
        %1545 = vrot.lane.b32.xlu0 %v1264, 112
        %v1546 = vpop.permute.xlu0 %1545
        %1547 = vrot.lane.b32.xlu0 %v1261, 80
        %v1548 = vpop.permute.xlu0 %1547
        %1549 = vrot.lane.b32.xlu0 %v1264, 80
        %v1550 = vpop.permute.xlu0 %1549
        %v1551 = vsel %vm1277, %v1544, 0
        %v1553 = vsel %vm1277, %v1546, 0
        %v1555 = vsel %vm1277, %v1548, 0
        %v1557 = vsel %vm1277, %v1550, 0
        %1559 = vmatpush.xpose.msra.mxu0 0.0
        %1560 = vmatpush.xpose.msra.mxu0 0.0
        %1561 = vmatpush.xpose.msra.mxu0 0.0
        %1562 = vmatpush.xpose.msra.mxu0 0.0
        %1563 = vmatpush.xpose.msra.mxu0 0.0
        %1564 = vmatpush.xpose.msra.mxu0 0.0
        %1565 = vmatpush.xpose.msra.mxu0 0.0
        %1566 = vmatpush.xpose.msra.mxu0 0.0
        %1567 = vmatpush.xpose.msra.mxu0 0.0
        %1568 = vmatpush.xpose.msra.mxu0 0.0
        %1569 = vmatpush.xpose.msra.mxu0 0.0
        %1570 = vmatpush.xpose.msra.mxu0 0.0
        %1571 = vmatpush.xpose.msra.mxu0 0.0
        %1572 = vmatpush.xpose.msra.mxu0 0.0
        %1573 = vmatpush.xpose.msra.mxu0 %v1557
        %1574 = vmatpush.xpose.msra.mxu0 %v1555
        %1575 = vmatmul.f32.gmra.mxu0 %v1551
        %v1576 = vpop.f32.mrf.mxu0
        %v1577 = vadd.f32 0.0, %v1576
        %1578 = vmatmul.f32.gmra.mxu0 %v1553
        %v1579 = vpop.f32.mrf.mxu0
        %v1580 = vadd.f32 0.0, %v1579
        %1581 = vdwg.mxu0
        %v1582 = vmul.f32 %v1577, 0.35355338
        %v1583 = vmul.f32 %v1580, 0.35355338
        %v1584 = vadd.f32 %v1582, %v1312
        %v1585 = vadd.f32 %v1583, %v1312
        %v1586 = vsel %vm1316, %v1584, -inf
        %1587 = vmax.xlane.f32.xlu0 %v1586
        %v1588 = vpop.xlane.xlu0 %1587
        %v1589 = vsel %vm1320, %v1585, -inf
        %1590 = vmax.xlane.f32.xlu0 %v1589
        %v1591 = vpop.xlane.xlu0 %1590
        %v1592 = vsub.f32 %v1584, %v1588
        %v1593 = vsub.f32 %v1585, %v1591
        %v1594 = vmul.f32 %v1592, 1.442695
        %v1595 = vpow.pop %v1594
        %v1596 = vmul.f32 %v1593, 1.442695
        %v1597 = vpow.pop %v1596
        %v1598 = vsel %vm1316, %v1595, 0.0
        %1599 = vadd.xlane.f32.xlu0 %v1598
        %v1600 = vpop.xlane.xlu0 %1599
        %v1601 = vsel %vm1320, %v1597, 0.0
        %1602 = vadd.xlane.f32.xlu0 %v1601
        %v1603 = vpop.xlane.xlu0 %1602
        %v1604 = vrcp.pop %v1600
        %v1605 = vrcp.pop %v1603
        %v1606 = vmul.f32 %v1595, %v1604
        %v1607 = vmul.f32 %v1597, %v1605
        %1608 = vrot.lane.b32.xlu0 %v1261, 48
        %v1609 = vpop.permute.xlu0 %1608
        %1610 = vrot.lane.b32.xlu0 %v1264, 48
        %v1611 = vpop.permute.xlu0 %1610
        %v1614 = vsel %vm1316, %v1606, 0
        %v1617 = vsel %vm1316, %v1607, 0
        %v1619 = vsel %vm1351, %v1611, 0
        %1621 = vmatpush.msra.mxu0 0.0
        %1622 = vmatpush.msra.mxu0 0.0
        %1623 = vmatpush.msra.mxu0 0.0
        %1624 = vmatpush.msra.mxu0 0.0
        %1625 = vmatpush.msra.mxu0 0.0
        %1626 = vmatpush.msra.mxu0 0.0
        %1627 = vmatpush.msra.mxu0 0.0
        %1628 = vmatpush.msra.mxu0 0.0
        %1629 = vmatpush.msra.mxu0 0.0
        %1630 = vmatpush.msra.mxu0 0.0
        %1631 = vmatpush.msra.mxu0 0.0
        %1632 = vmatpush.msra.mxu0 0.0
        %1633 = vmatpush.msra.mxu0 0.0
        %1634 = vmatpush.msra.mxu0 0.0
        %1635 = vmatpush.msra.mxu0 %v1619
        %1636 = vmatpush.msra.mxu0 %v1609
        %1637 = vmatmul.f32.gmra.mxu0 %v1614
        %v1638 = vpop.f32.mrf.mxu0
        %v1639 = vadd.f32 0.0, %v1638
        %1640 = vmatmul.f32.gmra.mxu0 %v1617
        %v1641 = vpop.f32.mrf.mxu0
        %v1642 = vadd.f32 0.0, %v1641
        %1643 = vdwg.mxu0
        %v1645 = vsel %vm1277, %v1639, 0
        %v1648 = vsel %vm1277, %v1642, 0
        %1650 = vmatpush.msra.mxu0 0.0
        %1651 = vmatpush.msra.mxu0 0.0
        %1652 = vmatpush.msra.mxu0 0.0
        %1653 = vmatpush.msra.mxu0 0.0
        %1654 = vmatpush.msra.mxu0 0.0
        %1655 = vmatpush.msra.mxu0 0.0
        %1656 = vmatpush.msra.mxu0 0.0
        %1657 = vmatpush.msra.mxu0 0.0
        %1658 = vmatpush.msra.mxu0 0.0
        %1659 = vmatpush.msra.mxu0 0.0
        %1660 = vmatpush.msra.mxu0 0.0
        %1661 = vmatpush.msra.mxu0 0.0
        %1662 = vmatpush.msra.mxu0 0.0
        %1663 = vmatpush.msra.mxu0 0.0
        %1664 = vmatpush.msra.mxu0 0.0
        %1665 = vmatpush.msra.mxu0 %v1268
        %1666 = vmatmul.f32.gmra.mxu0 %v1645
        %v1667 = vpop.f32.mrf.mxu0
        %v1668 = vadd.f32 0.0, %v1667
        %1669 = vmatmul.f32.gmra.mxu0 %v1648
        %v1670 = vpop.f32.mrf.mxu0
        %v1671 = vadd.f32 0.0, %v1670
        %1672 = vdwg.mxu0
        %v1673 = vadd.f32 %v1541, %v1668
        %v1674 = vadd.f32 %v1542, %v1671
        %1675 = vrot.lane.b32.xlu0 %v1261, 104
        %v1676 = vpop.permute.xlu0 %1675
        %1677 = vrot.lane.b32.xlu0 %v1264, 104
        %v1678 = vpop.permute.xlu0 %1677
        %1679 = vrot.lane.b32.xlu0 %v1261, 72
        %v1680 = vpop.permute.xlu0 %1679
        %1681 = vrot.lane.b32.xlu0 %v1264, 72
        %v1682 = vpop.permute.xlu0 %1681
        %v1683 = vsel %vm1277, %v1676, 0
        %v1685 = vsel %vm1277, %v1678, 0
        %v1687 = vsel %vm1277, %v1680, 0
        %v1689 = vsel %vm1277, %v1682, 0
        %1691 = vmatpush.xpose.msra.mxu0 0.0
        %1692 = vmatpush.xpose.msra.mxu0 0.0
        %1693 = vmatpush.xpose.msra.mxu0 0.0
        %1694 = vmatpush.xpose.msra.mxu0 0.0
        %1695 = vmatpush.xpose.msra.mxu0 0.0
        %1696 = vmatpush.xpose.msra.mxu0 0.0
        %1697 = vmatpush.xpose.msra.mxu0 0.0
        %1698 = vmatpush.xpose.msra.mxu0 0.0
        %1699 = vmatpush.xpose.msra.mxu0 0.0
        %1700 = vmatpush.xpose.msra.mxu0 0.0
        %1701 = vmatpush.xpose.msra.mxu0 0.0
        %1702 = vmatpush.xpose.msra.mxu0 0.0
        %1703 = vmatpush.xpose.msra.mxu0 0.0
        %1704 = vmatpush.xpose.msra.mxu0 0.0
        %1705 = vmatpush.xpose.msra.mxu0 %v1689
        %1706 = vmatpush.xpose.msra.mxu0 %v1687
        %1707 = vmatmul.f32.gmra.mxu0 %v1683
        %v1708 = vpop.f32.mrf.mxu0
        %v1709 = vadd.f32 0.0, %v1708
        %1710 = vmatmul.f32.gmra.mxu0 %v1685
        %v1711 = vpop.f32.mrf.mxu0
        %v1712 = vadd.f32 0.0, %v1711
        %1713 = vdwg.mxu0
        %v1714 = vmul.f32 %v1709, 0.35355338
        %v1715 = vmul.f32 %v1712, 0.35355338
        %v1716 = vadd.f32 %v1714, %v1312
        %v1717 = vadd.f32 %v1715, %v1312
        %v1718 = vsel %vm1316, %v1716, -inf
        %1719 = vmax.xlane.f32.xlu0 %v1718
        %v1720 = vpop.xlane.xlu0 %1719
        %v1721 = vsel %vm1320, %v1717, -inf
        %1722 = vmax.xlane.f32.xlu0 %v1721
        %v1723 = vpop.xlane.xlu0 %1722
        %v1724 = vsub.f32 %v1716, %v1720
        %v1725 = vsub.f32 %v1717, %v1723
        %v1726 = vmul.f32 %v1724, 1.442695
        %v1727 = vpow.pop %v1726
        %v1728 = vmul.f32 %v1725, 1.442695
        %v1729 = vpow.pop %v1728
        %v1730 = vsel %vm1316, %v1727, 0.0
        %1731 = vadd.xlane.f32.xlu0 %v1730
        %v1732 = vpop.xlane.xlu0 %1731
        %v1733 = vsel %vm1320, %v1729, 0.0
        %1734 = vadd.xlane.f32.xlu0 %v1733
        %v1735 = vpop.xlane.xlu0 %1734
        %v1736 = vrcp.pop %v1732
        %v1737 = vrcp.pop %v1735
        %v1738 = vmul.f32 %v1727, %v1736
        %v1739 = vmul.f32 %v1729, %v1737
        %1740 = vrot.lane.b32.xlu0 %v1261, 40
        %v1741 = vpop.permute.xlu0 %1740
        %1742 = vrot.lane.b32.xlu0 %v1264, 40
        %v1743 = vpop.permute.xlu0 %1742
        %v1746 = vsel %vm1316, %v1738, 0
        %v1749 = vsel %vm1316, %v1739, 0
        %v1751 = vsel %vm1351, %v1743, 0
        %1753 = vmatpush.msra.mxu0 0.0
        %1754 = vmatpush.msra.mxu0 0.0
        %1755 = vmatpush.msra.mxu0 0.0
        %1756 = vmatpush.msra.mxu0 0.0
        %1757 = vmatpush.msra.mxu0 0.0
        %1758 = vmatpush.msra.mxu0 0.0
        %1759 = vmatpush.msra.mxu0 0.0
        %1760 = vmatpush.msra.mxu0 0.0
        %1761 = vmatpush.msra.mxu0 0.0
        %1762 = vmatpush.msra.mxu0 0.0
        %1763 = vmatpush.msra.mxu0 0.0
        %1764 = vmatpush.msra.mxu0 0.0
        %1765 = vmatpush.msra.mxu0 0.0
        %1766 = vmatpush.msra.mxu0 0.0
        %1767 = vmatpush.msra.mxu0 %v1751
        %1768 = vmatpush.msra.mxu0 %v1741
        %1769 = vmatmul.f32.gmra.mxu0 %v1746
        %v1770 = vpop.f32.mrf.mxu0
        %v1771 = vadd.f32 0.0, %v1770
        %1772 = vmatmul.f32.gmra.mxu0 %v1749
        %v1773 = vpop.f32.mrf.mxu0
        %v1774 = vadd.f32 0.0, %v1773
        %1775 = vdwg.mxu0
        %v1777 = vsel %vm1277, %v1771, 0
        %v1780 = vsel %vm1277, %v1774, 0
        %1782 = vmatpush.msra.mxu0 0.0
        %1783 = vmatpush.msra.mxu0 0.0
        %1784 = vmatpush.msra.mxu0 0.0
        %1785 = vmatpush.msra.mxu0 0.0
        %1786 = vmatpush.msra.mxu0 0.0
        %1787 = vmatpush.msra.mxu0 0.0
        %1788 = vmatpush.msra.mxu0 0.0
        %1789 = vmatpush.msra.mxu0 0.0
        %1790 = vmatpush.msra.mxu0 0.0
        %1791 = vmatpush.msra.mxu0 0.0
        %1792 = vmatpush.msra.mxu0 0.0
        %1793 = vmatpush.msra.mxu0 0.0
        %1794 = vmatpush.msra.mxu0 0.0
        %1795 = vmatpush.msra.mxu0 0.0
        %1796 = vmatpush.msra.mxu0 0.0
        %1797 = vmatpush.msra.mxu0 %v1269
        %1798 = vmatmul.f32.gmra.mxu0 %v1777
        %v1799 = vpop.f32.mrf.mxu0
        %v1800 = vadd.f32 0.0, %v1799
        %1801 = vmatmul.f32.gmra.mxu0 %v1780
        %v1802 = vpop.f32.mrf.mxu0
        %v1803 = vadd.f32 0.0, %v1802
        %1804 = vdwg.mxu0
        %v1805 = vadd.f32 %v1673, %v1800
        %v1806 = vadd.f32 %v1674, %v1803
        %v1807 = vadd.f32 %v1226, %v1805
        %v1808 = vadd.f32 %v1227, %v1806
        %v1809 = vld [vmem:[%s17] sm:$0x3]
        %v1810 = vsel %vm1169, %v1807, 0.0
        %1811 = vadd.xlane.f32.xlu0 %v1810
        %v1812 = vpop.xlane.xlu0 %1811
        %v1813 = vsel %vm1173, %v1808, 0.0
        %1814 = vadd.xlane.f32.xlu0 %v1813
        %v1815 = vpop.xlane.xlu0 %1814
        %v1816 = vmul.f32 %v1812, %v1183
        %v1817 = vmul.f32 %v1815, %v1183
        %v1818 = vsub.f32 %v1807, %v1816
        %v1819 = vsub.f32 %v1808, %v1817
        %v1820 = vmul.f32 %v1818, %v1818
        %v1821 = vmul.f32 %v1819, %v1819
        %v1822 = vsel %vm1169, %v1820, 0.0
        %1823 = vadd.xlane.f32.xlu0 %v1822
        %v1824 = vpop.xlane.xlu0 %1823
        %v1825 = vsel %vm1173, %v1821, 0.0
        %1826 = vadd.xlane.f32.xlu0 %v1825
        %v1827 = vpop.xlane.xlu0 %1826
        %v1828 = vmul.f32 %v1824, %v1183
        %v1829 = vmul.f32 %v1827, %v1183
        %v1830 = vadd.f32 %v1828, 1e-05
        %v1831 = vadd.f32 %v1829, 1e-05
        %v1832 = vrsqrt.pop %v1830
        %v1833 = vmul.f32 %v1832, %v1830
        %v1834 = vmul.f32 %v1833, %v1832
        %v1835 = vmul.f32 0.5, %v1834
        %v1836 = vsub.f32 1.5, %v1835
        %v1837 = vmul.f32 %v1832, %v1836
        %vm1838 = vweird.f32 %v1830
        %vm1839 = vweird.f32 %v1832
        %vm1840 = vmor %vm1838, %vm1839
        %v1841 = vsel %vm1840, %v1832, %v1837
        %v1842 = vrsqrt.pop %v1831
        %v1843 = vmul.f32 %v1842, %v1831
        %v1844 = vmul.f32 %v1843, %v1842
        %v1845 = vmul.f32 0.5, %v1844
        %v1846 = vsub.f32 1.5, %v1845
        %v1847 = vmul.f32 %v1842, %v1846
        %vm1848 = vweird.f32 %v1831
        %vm1849 = vweird.f32 %v1842
        %vm1850 = vmor %vm1848, %vm1849
        %v1851 = vsel %vm1850, %v1842, %v1847
        %v1852 = vmul.f32 %v1818, %v1841
        %v1853 = vmul.f32 %v1819, %v1851
        %v1854 = vperm.slane %v1809, 0
        %v1855 = vmul.f32 %v1852, %v1854
        %v1856 = vmul.f32 %v1853, %v1854
        %v1857 = vperm.slane %v1809, 1
        %v1858 = vadd.f32 %v1855, %v1857
        %v1859 = vadd.f32 %v1856, %v1857
        %v1860 = vld [vmem:[%s19] sm:$0xff]
        %v1861 = vld [vmem:[%s19 + $0x8] sm:$0xff]
        %v1862 = vld [vmem:[%s19 + $0x10] sm:$0xff]
        %v1863 = vld [vmem:[%s19 + $0x18] sm:$0xff]
        %v1864 = vld [vmem:[%s21] sm:$0x1]
        %v1866 = vperm.slane %v1864, 0
        %v1869 = vsel %vm1169, %v1858, 0
        %v1872 = vsel %vm1169, %v1859, 0
        %1874 = vmatpush.msra.mxu0 0.0
        %1875 = vmatpush.msra.mxu0 0.0
        %1876 = vmatpush.msra.mxu0 0.0
        %1877 = vmatpush.msra.mxu0 0.0
        %1878 = vmatpush.msra.mxu0 0.0
        %1879 = vmatpush.msra.mxu0 0.0
        %1880 = vmatpush.msra.mxu0 0.0
        %1881 = vmatpush.msra.mxu0 0.0
        %1882 = vmatpush.msra.mxu0 0.0
        %1883 = vmatpush.msra.mxu0 0.0
        %1884 = vmatpush.msra.mxu0 0.0
        %1885 = vmatpush.msra.mxu0 0.0
        %1886 = vmatpush.msra.mxu0 %v1863
        %1887 = vmatpush.msra.mxu0 %v1862
        %1888 = vmatpush.msra.mxu0 %v1861
        %1889 = vmatpush.msra.mxu0 %v1860
        %1890 = vmatmul.f32.gmra.mxu0 %v1869
        %v1891 = vpop.f32.mrf.mxu0
        %v1892 = vadd.f32 %v1866, %v1891
        %1893 = vmatmul.f32.gmra.mxu0 %v1872
        %v1894 = vpop.f32.mrf.mxu0
        %v1895 = vadd.f32 %v1866, %v1894
        %1896 = vdwg.mxu0
        %v1897 = vmul.f32 %v1892, 0.5
        %v1898 = vmul.f32 %v1895, 0.5
        %v1899 = vmul.f32 %v1892, 0.044715
        %v1900 = vmul.f32 %v1895, 0.044715
        %v1901 = vmul.f32 %v1899, %v1892
        %v1902 = vmul.f32 %v1900, %v1895
        %v1903 = vmul.f32 %v1901, %v1892
        %v1904 = vmul.f32 %v1902, %v1895
        %v1905 = vadd.f32 %v1892, %v1903
        %v1906 = vadd.f32 %v1895, %v1904
        %v1907 = vmul.f32 %v1905, 0.7978846
        %v1908 = vmul.f32 %v1906, 0.7978846
        %v1909 = vtanh.pop %v1907
        %v1910 = vtanh.pop %v1908
        %v1911 = vadd.f32 %v1909, 1.0
        %v1912 = vadd.f32 %v1910, 1.0
        %v1913 = vmul.f32 %v1897, %v1911
        %v1914 = vmul.f32 %v1898, %v1912
        %v1915 = vld [vmem:[%s23] sm:$0xff]
        %v1916 = vld [vmem:[%s23 + $0x8] sm:$0xff]
        %v1917 = vld [vmem:[%s23 + $0x10] sm:$0xff]
        %v1918 = vld [vmem:[%s23 + $0x18] sm:$0xff]
        %v1919 = vld [vmem:[%s23 + $0x20] sm:$0xff]
        %v1920 = vld [vmem:[%s23 + $0x28] sm:$0xff]
        %v1921 = vld [vmem:[%s23 + $0x30] sm:$0xff]
        %v1922 = vld [vmem:[%s23 + $0x38] sm:$0xff]
        %v1923 = vld [vmem:[%s25] sm:$0x1]
        %v1925 = vperm.slane %v1923, 0
        %vm1927 = vcmask 523264
        %v1929 = vsel %vm1927, %v1913, 0
        %v1932 = vsel %vm1927, %v1914, 0
        %1934 = vmatpush.msra.mxu0 0.0
        %1935 = vmatpush.msra.mxu0 0.0
        %1936 = vmatpush.msra.mxu0 0.0
        %1937 = vmatpush.msra.mxu0 0.0
        %1938 = vmatpush.msra.mxu0 0.0
        %1939 = vmatpush.msra.mxu0 0.0
        %1940 = vmatpush.msra.mxu0 0.0
        %1941 = vmatpush.msra.mxu0 0.0
        %1942 = vmatpush.msra.mxu0 %v1922
        %1943 = vmatpush.msra.mxu0 %v1921
        %1944 = vmatpush.msra.mxu0 %v1920
        %1945 = vmatpush.msra.mxu0 %v1919
        %1946 = vmatpush.msra.mxu0 %v1918
        %1947 = vmatpush.msra.mxu0 %v1917
        %1948 = vmatpush.msra.mxu0 %v1916
        %1949 = vmatpush.msra.mxu0 %v1915
        %1950 = vmatmul.f32.gmra.mxu0 %v1929
        %v1951 = vpop.f32.mrf.mxu0
        %v1952 = vadd.f32 %v1925, %v1951
        %1953 = vmatmul.f32.gmra.mxu0 %v1932
        %v1954 = vpop.f32.mrf.mxu0
        %v1955 = vadd.f32 %v1925, %v1954
        %1956 = vdwg.mxu0
        %v1957 = vadd.f32 %v1858, %v1952
        %v1958 = vadd.f32 %v1859, %v1955
        %v1959 = vld [vmem:[%s27] sm:$0x3]
        %v1960 = vsel %vm1169, %v1957, 0.0
        %1961 = vadd.xlane.f32.xlu0 %v1960
        %v1962 = vpop.xlane.xlu0 %1961
        %v1963 = vsel %vm1173, %v1958, 0.0
        %1964 = vadd.xlane.f32.xlu0 %v1963
        %v1965 = vpop.xlane.xlu0 %1964
        %v1966 = vmul.f32 %v1962, %v1183
        %v1967 = vmul.f32 %v1965, %v1183
        %v1968 = vsub.f32 %v1957, %v1966
        %v1969 = vsub.f32 %v1958, %v1967
        %v1970 = vmul.f32 %v1968, %v1968
        %v1971 = vmul.f32 %v1969, %v1969
        %v1972 = vsel %vm1169, %v1970, 0.0
        %1973 = vadd.xlane.f32.xlu0 %v1972
        %v1974 = vpop.xlane.xlu0 %1973
        %v1975 = vsel %vm1173, %v1971, 0.0
        %1976 = vadd.xlane.f32.xlu0 %v1975
        %v1977 = vpop.xlane.xlu0 %1976
        %v1978 = vmul.f32 %v1974, %v1183
        %v1979 = vmul.f32 %v1977, %v1183
        %v1980 = vadd.f32 %v1978, 1e-05
        %v1981 = vadd.f32 %v1979, 1e-05
        %v1982 = vrsqrt.pop %v1980
        %v1983 = vmul.f32 %v1982, %v1980
        %v1984 = vmul.f32 %v1983, %v1982
        %v1985 = vmul.f32 0.5, %v1984
        %v1986 = vsub.f32 1.5, %v1985
        %v1987 = vmul.f32 %v1982, %v1986
        %vm1988 = vweird.f32 %v1980
        %vm1989 = vweird.f32 %v1982
        %vm1990 = vmor %vm1988, %vm1989
        %v1991 = vsel %vm1990, %v1982, %v1987
        %v1992 = vrsqrt.pop %v1981
        %v1993 = vmul.f32 %v1992, %v1981
        %v1994 = vmul.f32 %v1993, %v1992
        %v1995 = vmul.f32 0.5, %v1994
        %v1996 = vsub.f32 1.5, %v1995
        %v1997 = vmul.f32 %v1992, %v1996
        %vm1998 = vweird.f32 %v1981
        %vm1999 = vweird.f32 %v1992
        %vm2000 = vmor %vm1998, %vm1999
        %v2001 = vsel %vm2000, %v1992, %v1997
        %v2002 = vmul.f32 %v1968, %v1991
        %v2003 = vmul.f32 %v1969, %v2001
        %v2004 = vperm.slane %v1959, 0
        %v2005 = vmul.f32 %v2002, %v2004
        %v2006 = vmul.f32 %v2003, %v2004
        %v2007 = vperm.slane %v1959, 1
        %v2008 = vadd.f32 %v2005, %v2007
        %v2009 = vadd.f32 %v2006, %v2007
        %s2010 = scalar_lea.vmem %s9, 32
        %v2011 = vld [vmem:[%s2010] sm:$0xff]
        %v2012 = vld [vmem:[%s2010 + $0x8] sm:$0xff]
        %v2013 = vld [vmem:[%s2010 + $0x10] sm:$0xff]
        %v2014 = vld [vmem:[%s2010 + $0x18] sm:$0xff]
        %s2015 = scalar_lea.vmem %s11, 1
        %v2016 = vld [vmem:[%s2015] sm:$0x1]
        %v2018 = vperm.slane %v2016, 0
        %v2021 = vsel %vm1169, %v2008, 0
        %v2024 = vsel %vm1169, %v2009, 0
        %2026 = vmatpush.msra.mxu0 0.0
        %2027 = vmatpush.msra.mxu0 0.0
        %2028 = vmatpush.msra.mxu0 0.0
        %2029 = vmatpush.msra.mxu0 0.0
        %2030 = vmatpush.msra.mxu0 0.0
        %2031 = vmatpush.msra.mxu0 0.0
        %2032 = vmatpush.msra.mxu0 0.0
        %2033 = vmatpush.msra.mxu0 0.0
        %2034 = vmatpush.msra.mxu0 0.0
        %2035 = vmatpush.msra.mxu0 0.0
        %2036 = vmatpush.msra.mxu0 0.0
        %2037 = vmatpush.msra.mxu0 0.0
        %2038 = vmatpush.msra.mxu0 %v2014
        %2039 = vmatpush.msra.mxu0 %v2013
        %2040 = vmatpush.msra.mxu0 %v2012
        %2041 = vmatpush.msra.mxu0 %v2011
        %2042 = vmatmul.f32.gmra.mxu0 %v2021
        %v2043 = vpop.f32.mrf.mxu0
        %v2044 = vadd.f32 %v2018, %v2043
        %2045 = vmatmul.f32.gmra.mxu0 %v2024
        %v2046 = vpop.f32.mrf.mxu0
        %v2047 = vadd.f32 %v2018, %v2046
        %2048 = vdwg.mxu0
        %s2049 = scalar_lea.vmem %s13, 32
        %v2050 = vld [vmem:[%s2049] sm:$0xff]
        %v2051 = vld [vmem:[%s2049 + $0x8] sm:$0xff]
        %v2052 = vld [vmem:[%s2049 + $0x10] sm:$0xff]
        %v2053 = vld [vmem:[%s2049 + $0x18] sm:$0xff]
        %s2054 = scalar_lea.vmem %s15, 1
        %v2055 = vld [vmem:[%s2054] sm:$0x1]
        %2058 = vrot.lane.b32.xlu0 %v2044, 96
        %v2059 = vpop.permute.xlu0 %2058
        %2060 = vrot.lane.b32.xlu0 %v2047, 96
        %v2061 = vpop.permute.xlu0 %2060
        %v2062 = vsel %vm1277, %v2044, 0
        %v2064 = vsel %vm1277, %v2047, 0
        %v2066 = vsel %vm1277, %v2059, 0
        %v2068 = vsel %vm1277, %v2061, 0
        %2070 = vmatpush.xpose.msra.mxu0 0.0
        %2071 = vmatpush.xpose.msra.mxu0 0.0
        %2072 = vmatpush.xpose.msra.mxu0 0.0
        %2073 = vmatpush.xpose.msra.mxu0 0.0
        %2074 = vmatpush.xpose.msra.mxu0 0.0
        %2075 = vmatpush.xpose.msra.mxu0 0.0
        %2076 = vmatpush.xpose.msra.mxu0 0.0
        %2077 = vmatpush.xpose.msra.mxu0 0.0
        %2078 = vmatpush.xpose.msra.mxu0 0.0
        %2079 = vmatpush.xpose.msra.mxu0 0.0
        %2080 = vmatpush.xpose.msra.mxu0 0.0
        %2081 = vmatpush.xpose.msra.mxu0 0.0
        %2082 = vmatpush.xpose.msra.mxu0 0.0
        %2083 = vmatpush.xpose.msra.mxu0 0.0
        %2084 = vmatpush.xpose.msra.mxu0 %v2068
        %2085 = vmatpush.xpose.msra.mxu0 %v2066
        %2086 = vmatmul.f32.gmra.mxu0 %v2062
        %v2087 = vpop.f32.mrf.mxu0
        %v2088 = vadd.f32 0.0, %v2087
        %2089 = vmatmul.f32.gmra.mxu0 %v2064
        %v2090 = vpop.f32.mrf.mxu0
        %v2091 = vadd.f32 0.0, %v2090
        %2092 = vdwg.mxu0
        %v2093 = vmul.f32 %v2088, 0.35355338
        %v2094 = vmul.f32 %v2091, 0.35355338
        %v2095 = vadd.f32 %v2093, %v1312
        %v2096 = vadd.f32 %v2094, %v1312
        %v2097 = vsel %vm1316, %v2095, -inf
        %2098 = vmax.xlane.f32.xlu0 %v2097
        %v2099 = vpop.xlane.xlu0 %2098
        %v2100 = vsel %vm1320, %v2096, -inf
        %2101 = vmax.xlane.f32.xlu0 %v2100
        %v2102 = vpop.xlane.xlu0 %2101
        %v2103 = vsub.f32 %v2095, %v2099
        %v2104 = vsub.f32 %v2096, %v2102
        %v2105 = vmul.f32 %v2103, 1.442695
        %v2106 = vpow.pop %v2105
        %v2107 = vmul.f32 %v2104, 1.442695
        %v2108 = vpow.pop %v2107
        %v2109 = vsel %vm1316, %v2106, 0.0
        %2110 = vadd.xlane.f32.xlu0 %v2109
        %v2111 = vpop.xlane.xlu0 %2110
        %v2112 = vsel %vm1320, %v2108, 0.0
        %2113 = vadd.xlane.f32.xlu0 %v2112
        %v2114 = vpop.xlane.xlu0 %2113
        %v2115 = vrcp.pop %v2111
        %v2116 = vrcp.pop %v2114
        %v2117 = vmul.f32 %v2106, %v2115
        %v2118 = vmul.f32 %v2108, %v2116
        %2119 = vrot.lane.b32.xlu0 %v2044, 64
        %v2120 = vpop.permute.xlu0 %2119
        %2121 = vrot.lane.b32.xlu0 %v2047, 64
        %v2122 = vpop.permute.xlu0 %2121
        %v2125 = vsel %vm1316, %v2117, 0
        %v2128 = vsel %vm1316, %v2118, 0
        %v2130 = vsel %vm1351, %v2122, 0
        %2132 = vmatpush.msra.mxu0 0.0
        %2133 = vmatpush.msra.mxu0 0.0
        %2134 = vmatpush.msra.mxu0 0.0
        %2135 = vmatpush.msra.mxu0 0.0
        %2136 = vmatpush.msra.mxu0 0.0
        %2137 = vmatpush.msra.mxu0 0.0
        %2138 = vmatpush.msra.mxu0 0.0
        %2139 = vmatpush.msra.mxu0 0.0
        %2140 = vmatpush.msra.mxu0 0.0
        %2141 = vmatpush.msra.mxu0 0.0
        %2142 = vmatpush.msra.mxu0 0.0
        %2143 = vmatpush.msra.mxu0 0.0
        %2144 = vmatpush.msra.mxu0 0.0
        %2145 = vmatpush.msra.mxu0 0.0
        %2146 = vmatpush.msra.mxu0 %v2130
        %2147 = vmatpush.msra.mxu0 %v2120
        %2148 = vmatmul.f32.gmra.mxu0 %v2125
        %v2149 = vpop.f32.mrf.mxu0
        %v2150 = vadd.f32 0.0, %v2149
        %2151 = vmatmul.f32.gmra.mxu0 %v2128
        %v2152 = vpop.f32.mrf.mxu0
        %v2153 = vadd.f32 0.0, %v2152
        %2154 = vdwg.mxu0
        %v2156 = vsel %vm1277, %v2150, 0
        %v2159 = vsel %vm1277, %v2153, 0
        %2161 = vmatpush.msra.mxu0 0.0
        %2162 = vmatpush.msra.mxu0 0.0
        %2163 = vmatpush.msra.mxu0 0.0
        %2164 = vmatpush.msra.mxu0 0.0
        %2165 = vmatpush.msra.mxu0 0.0
        %2166 = vmatpush.msra.mxu0 0.0
        %2167 = vmatpush.msra.mxu0 0.0
        %2168 = vmatpush.msra.mxu0 0.0
        %2169 = vmatpush.msra.mxu0 0.0
        %2170 = vmatpush.msra.mxu0 0.0
        %2171 = vmatpush.msra.mxu0 0.0
        %2172 = vmatpush.msra.mxu0 0.0
        %2173 = vmatpush.msra.mxu0 0.0
        %2174 = vmatpush.msra.mxu0 0.0
        %2175 = vmatpush.msra.mxu0 0.0
        %2176 = vmatpush.msra.mxu0 %v2050
        %2177 = vmatmul.f32.gmra.mxu0 %v2156
        %v2178 = vpop.f32.mrf.mxu0
        %v2179 = vadd.f32 0.0, %v2178
        %2180 = vmatmul.f32.gmra.mxu0 %v2159
        %v2181 = vpop.f32.mrf.mxu0
        %v2182 = vadd.f32 0.0, %v2181
        %2183 = vdwg.mxu0
        %v2185 = vperm.slane %v2055, 0
        %v2187 = vadd.f32 %v2185, %v2179
        %v2188 = vadd.f32 %v2185, %v2182
        %2189 = vrot.lane.b32.xlu0 %v2044, 120
        %v2190 = vpop.permute.xlu0 %2189
        %2191 = vrot.lane.b32.xlu0 %v2047, 120
        %v2192 = vpop.permute.xlu0 %2191
        %2193 = vrot.lane.b32.xlu0 %v2044, 88
        %v2194 = vpop.permute.xlu0 %2193
        %2195 = vrot.lane.b32.xlu0 %v2047, 88
        %v2196 = vpop.permute.xlu0 %2195
        %v2197 = vsel %vm1277, %v2190, 0
        %v2199 = vsel %vm1277, %v2192, 0
        %v2201 = vsel %vm1277, %v2194, 0
        %v2203 = vsel %vm1277, %v2196, 0
        %2205 = vmatpush.xpose.msra.mxu0 0.0
        %2206 = vmatpush.xpose.msra.mxu0 0.0
        %2207 = vmatpush.xpose.msra.mxu0 0.0
        %2208 = vmatpush.xpose.msra.mxu0 0.0
        %2209 = vmatpush.xpose.msra.mxu0 0.0
        %2210 = vmatpush.xpose.msra.mxu0 0.0
        %2211 = vmatpush.xpose.msra.mxu0 0.0
        %2212 = vmatpush.xpose.msra.mxu0 0.0
        %2213 = vmatpush.xpose.msra.mxu0 0.0
        %2214 = vmatpush.xpose.msra.mxu0 0.0
        %2215 = vmatpush.xpose.msra.mxu0 0.0
        %2216 = vmatpush.xpose.msra.mxu0 0.0
        %2217 = vmatpush.xpose.msra.mxu0 0.0
        %2218 = vmatpush.xpose.msra.mxu0 0.0
        %2219 = vmatpush.xpose.msra.mxu0 %v2203
        %2220 = vmatpush.xpose.msra.mxu0 %v2201
        %2221 = vmatmul.f32.gmra.mxu0 %v2197
        %v2222 = vpop.f32.mrf.mxu0
        %v2223 = vadd.f32 0.0, %v2222
        %2224 = vmatmul.f32.gmra.mxu0 %v2199
        %v2225 = vpop.f32.mrf.mxu0
        %v2226 = vadd.f32 0.0, %v2225
        %2227 = vdwg.mxu0
        %v2228 = vmul.f32 %v2223, 0.35355338
        %v2229 = vmul.f32 %v2226, 0.35355338
        %v2230 = vadd.f32 %v2228, %v1312
        %v2231 = vadd.f32 %v2229, %v1312
        %v2232 = vsel %vm1316, %v2230, -inf
        %2233 = vmax.xlane.f32.xlu0 %v2232
        %v2234 = vpop.xlane.xlu0 %2233
        %v2235 = vsel %vm1320, %v2231, -inf
        %2236 = vmax.xlane.f32.xlu0 %v2235
        %v2237 = vpop.xlane.xlu0 %2236
        %v2238 = vsub.f32 %v2230, %v2234
        %v2239 = vsub.f32 %v2231, %v2237
        %v2240 = vmul.f32 %v2238, 1.442695
        %v2241 = vpow.pop %v2240
        %v2242 = vmul.f32 %v2239, 1.442695
        %v2243 = vpow.pop %v2242
        %v2244 = vsel %vm1316, %v2241, 0.0
        %2245 = vadd.xlane.f32.xlu0 %v2244
        %v2246 = vpop.xlane.xlu0 %2245
        %v2247 = vsel %vm1320, %v2243, 0.0
        %2248 = vadd.xlane.f32.xlu0 %v2247
        %v2249 = vpop.xlane.xlu0 %2248
        %v2250 = vrcp.pop %v2246
        %v2251 = vrcp.pop %v2249
        %v2252 = vmul.f32 %v2241, %v2250
        %v2253 = vmul.f32 %v2243, %v2251
        %2254 = vrot.lane.b32.xlu0 %v2044, 56
        %v2255 = vpop.permute.xlu0 %2254
        %2256 = vrot.lane.b32.xlu0 %v2047, 56
        %v2257 = vpop.permute.xlu0 %2256
        %v2260 = vsel %vm1316, %v2252, 0
        %v2263 = vsel %vm1316, %v2253, 0
        %v2265 = vsel %vm1351, %v2257, 0
        %2267 = vmatpush.msra.mxu0 0.0
        %2268 = vmatpush.msra.mxu0 0.0
        %2269 = vmatpush.msra.mxu0 0.0
        %2270 = vmatpush.msra.mxu0 0.0
        %2271 = vmatpush.msra.mxu0 0.0
        %2272 = vmatpush.msra.mxu0 0.0
        %2273 = vmatpush.msra.mxu0 0.0
        %2274 = vmatpush.msra.mxu0 0.0
        %2275 = vmatpush.msra.mxu0 0.0
        %2276 = vmatpush.msra.mxu0 0.0
        %2277 = vmatpush.msra.mxu0 0.0
        %2278 = vmatpush.msra.mxu0 0.0
        %2279 = vmatpush.msra.mxu0 0.0
        %2280 = vmatpush.msra.mxu0 0.0
        %2281 = vmatpush.msra.mxu0 %v2265
        %2282 = vmatpush.msra.mxu0 %v2255
        %2283 = vmatmul.f32.gmra.mxu0 %v2260
        %v2284 = vpop.f32.mrf.mxu0
        %v2285 = vadd.f32 0.0, %v2284
        %2286 = vmatmul.f32.gmra.mxu0 %v2263
        %v2287 = vpop.f32.mrf.mxu0
        %v2288 = vadd.f32 0.0, %v2287
        %2289 = vdwg.mxu0
        %v2291 = vsel %vm1277, %v2285, 0
        %v2294 = vsel %vm1277, %v2288, 0
        %2296 = vmatpush.msra.mxu0 0.0
        %2297 = vmatpush.msra.mxu0 0.0
        %2298 = vmatpush.msra.mxu0 0.0
        %2299 = vmatpush.msra.mxu0 0.0
        %2300 = vmatpush.msra.mxu0 0.0
        %2301 = vmatpush.msra.mxu0 0.0
        %2302 = vmatpush.msra.mxu0 0.0
        %2303 = vmatpush.msra.mxu0 0.0
        %2304 = vmatpush.msra.mxu0 0.0
        %2305 = vmatpush.msra.mxu0 0.0
        %2306 = vmatpush.msra.mxu0 0.0
        %2307 = vmatpush.msra.mxu0 0.0
        %2308 = vmatpush.msra.mxu0 0.0
        %2309 = vmatpush.msra.mxu0 0.0
        %2310 = vmatpush.msra.mxu0 0.0
        %2311 = vmatpush.msra.mxu0 %v2051
        %2312 = vmatmul.f32.gmra.mxu0 %v2291
        %v2313 = vpop.f32.mrf.mxu0
        %v2314 = vadd.f32 0.0, %v2313
        %2315 = vmatmul.f32.gmra.mxu0 %v2294
        %v2316 = vpop.f32.mrf.mxu0
        %v2317 = vadd.f32 0.0, %v2316
        %2318 = vdwg.mxu0
        %v2319 = vadd.f32 %v2187, %v2314
        %v2320 = vadd.f32 %v2188, %v2317
        %2321 = vrot.lane.b32.xlu0 %v2044, 112
        %v2322 = vpop.permute.xlu0 %2321
        %2323 = vrot.lane.b32.xlu0 %v2047, 112
        %v2324 = vpop.permute.xlu0 %2323
        %2325 = vrot.lane.b32.xlu0 %v2044, 80
        %v2326 = vpop.permute.xlu0 %2325
        %2327 = vrot.lane.b32.xlu0 %v2047, 80
        %v2328 = vpop.permute.xlu0 %2327
        %v2329 = vsel %vm1277, %v2322, 0
        %v2331 = vsel %vm1277, %v2324, 0
        %v2333 = vsel %vm1277, %v2326, 0
        %v2335 = vsel %vm1277, %v2328, 0
        %2337 = vmatpush.xpose.msra.mxu0 0.0
        %2338 = vmatpush.xpose.msra.mxu0 0.0
        %2339 = vmatpush.xpose.msra.mxu0 0.0
        %2340 = vmatpush.xpose.msra.mxu0 0.0
        %2341 = vmatpush.xpose.msra.mxu0 0.0
        %2342 = vmatpush.xpose.msra.mxu0 0.0
        %2343 = vmatpush.xpose.msra.mxu0 0.0
        %2344 = vmatpush.xpose.msra.mxu0 0.0
        %2345 = vmatpush.xpose.msra.mxu0 0.0
        %2346 = vmatpush.xpose.msra.mxu0 0.0
        %2347 = vmatpush.xpose.msra.mxu0 0.0
        %2348 = vmatpush.xpose.msra.mxu0 0.0
        %2349 = vmatpush.xpose.msra.mxu0 0.0
        %2350 = vmatpush.xpose.msra.mxu0 0.0
        %2351 = vmatpush.xpose.msra.mxu0 %v2335
        %2352 = vmatpush.xpose.msra.mxu0 %v2333
        %2353 = vmatmul.f32.gmra.mxu0 %v2329
        %v2354 = vpop.f32.mrf.mxu0
        %v2355 = vadd.f32 0.0, %v2354
        %2356 = vmatmul.f32.gmra.mxu0 %v2331
        %v2357 = vpop.f32.mrf.mxu0
        %v2358 = vadd.f32 0.0, %v2357
        %2359 = vdwg.mxu0
        %v2360 = vmul.f32 %v2355, 0.35355338
        %v2361 = vmul.f32 %v2358, 0.35355338
        %v2362 = vadd.f32 %v2360, %v1312
        %v2363 = vadd.f32 %v2361, %v1312
        %v2364 = vsel %vm1316, %v2362, -inf
        %2365 = vmax.xlane.f32.xlu0 %v2364
        %v2366 = vpop.xlane.xlu0 %2365
        %v2367 = vsel %vm1320, %v2363, -inf
        %2368 = vmax.xlane.f32.xlu0 %v2367
        %v2369 = vpop.xlane.xlu0 %2368
        %v2370 = vsub.f32 %v2362, %v2366
        %v2371 = vsub.f32 %v2363, %v2369
        %v2372 = vmul.f32 %v2370, 1.442695
        %v2373 = vpow.pop %v2372
        %v2374 = vmul.f32 %v2371, 1.442695
        %v2375 = vpow.pop %v2374
        %v2376 = vsel %vm1316, %v2373, 0.0
        %2377 = vadd.xlane.f32.xlu0 %v2376
        %v2378 = vpop.xlane.xlu0 %2377
        %v2379 = vsel %vm1320, %v2375, 0.0
        %2380 = vadd.xlane.f32.xlu0 %v2379
        %v2381 = vpop.xlane.xlu0 %2380
        %v2382 = vrcp.pop %v2378
        %v2383 = vrcp.pop %v2381
        %v2384 = vmul.f32 %v2373, %v2382
        %v2385 = vmul.f32 %v2375, %v2383
        %2386 = vrot.lane.b32.xlu0 %v2044, 48
        %v2387 = vpop.permute.xlu0 %2386
        %2388 = vrot.lane.b32.xlu0 %v2047, 48
        %v2389 = vpop.permute.xlu0 %2388
        %v2392 = vsel %vm1316, %v2384, 0
        %v2395 = vsel %vm1316, %v2385, 0
        %v2397 = vsel %vm1351, %v2389, 0
        %2399 = vmatpush.msra.mxu0 0.0
        %2400 = vmatpush.msra.mxu0 0.0
        %2401 = vmatpush.msra.mxu0 0.0
        %2402 = vmatpush.msra.mxu0 0.0
        %2403 = vmatpush.msra.mxu0 0.0
        %2404 = vmatpush.msra.mxu0 0.0
        %2405 = vmatpush.msra.mxu0 0.0
        %2406 = vmatpush.msra.mxu0 0.0
        %2407 = vmatpush.msra.mxu0 0.0
        %2408 = vmatpush.msra.mxu0 0.0
        %2409 = vmatpush.msra.mxu0 0.0
        %2410 = vmatpush.msra.mxu0 0.0
        %2411 = vmatpush.msra.mxu0 0.0
        %2412 = vmatpush.msra.mxu0 0.0
        %2413 = vmatpush.msra.mxu0 %v2397
        %2414 = vmatpush.msra.mxu0 %v2387
        %2415 = vmatmul.f32.gmra.mxu0 %v2392
        %v2416 = vpop.f32.mrf.mxu0
        %v2417 = vadd.f32 0.0, %v2416
        %2418 = vmatmul.f32.gmra.mxu0 %v2395
        %v2419 = vpop.f32.mrf.mxu0
        %v2420 = vadd.f32 0.0, %v2419
        %2421 = vdwg.mxu0
        %v2423 = vsel %vm1277, %v2417, 0
        %v2426 = vsel %vm1277, %v2420, 0
        %2428 = vmatpush.msra.mxu0 0.0
        %2429 = vmatpush.msra.mxu0 0.0
        %2430 = vmatpush.msra.mxu0 0.0
        %2431 = vmatpush.msra.mxu0 0.0
        %2432 = vmatpush.msra.mxu0 0.0
        %2433 = vmatpush.msra.mxu0 0.0
        %2434 = vmatpush.msra.mxu0 0.0
        %2435 = vmatpush.msra.mxu0 0.0
        %2436 = vmatpush.msra.mxu0 0.0
        %2437 = vmatpush.msra.mxu0 0.0
        %2438 = vmatpush.msra.mxu0 0.0
        %2439 = vmatpush.msra.mxu0 0.0
        %2440 = vmatpush.msra.mxu0 0.0
        %2441 = vmatpush.msra.mxu0 0.0
        %2442 = vmatpush.msra.mxu0 0.0
        %2443 = vmatpush.msra.mxu0 %v2052
        %2444 = vmatmul.f32.gmra.mxu0 %v2423
        %v2445 = vpop.f32.mrf.mxu0
        %v2446 = vadd.f32 0.0, %v2445
        %2447 = vmatmul.f32.gmra.mxu0 %v2426
        %v2448 = vpop.f32.mrf.mxu0
        %v2449 = vadd.f32 0.0, %v2448
        %2450 = vdwg.mxu0
        %v2451 = vadd.f32 %v2319, %v2446
        %v2452 = vadd.f32 %v2320, %v2449
        %2453 = vrot.lane.b32.xlu0 %v2044, 104
        %v2454 = vpop.permute.xlu0 %2453
        %2455 = vrot.lane.b32.xlu0 %v2047, 104
        %v2456 = vpop.permute.xlu0 %2455
        %2457 = vrot.lane.b32.xlu0 %v2044, 72
        %v2458 = vpop.permute.xlu0 %2457
        %2459 = vrot.lane.b32.xlu0 %v2047, 72
        %v2460 = vpop.permute.xlu0 %2459
        %v2461 = vsel %vm1277, %v2454, 0
        %v2463 = vsel %vm1277, %v2456, 0
        %v2465 = vsel %vm1277, %v2458, 0
        %v2467 = vsel %vm1277, %v2460, 0
        %2469 = vmatpush.xpose.msra.mxu0 0.0
        %2470 = vmatpush.xpose.msra.mxu0 0.0
        %2471 = vmatpush.xpose.msra.mxu0 0.0
        %2472 = vmatpush.xpose.msra.mxu0 0.0
        %2473 = vmatpush.xpose.msra.mxu0 0.0
        %2474 = vmatpush.xpose.msra.mxu0 0.0
        %2475 = vmatpush.xpose.msra.mxu0 0.0
        %2476 = vmatpush.xpose.msra.mxu0 0.0
        %2477 = vmatpush.xpose.msra.mxu0 0.0
        %2478 = vmatpush.xpose.msra.mxu0 0.0
        %2479 = vmatpush.xpose.msra.mxu0 0.0
        %2480 = vmatpush.xpose.msra.mxu0 0.0
        %2481 = vmatpush.xpose.msra.mxu0 0.0
        %2482 = vmatpush.xpose.msra.mxu0 0.0
        %2483 = vmatpush.xpose.msra.mxu0 %v2467
        %2484 = vmatpush.xpose.msra.mxu0 %v2465
        %2485 = vmatmul.f32.gmra.mxu0 %v2461
        %v2486 = vpop.f32.mrf.mxu0
        %v2487 = vadd.f32 0.0, %v2486
        %2488 = vmatmul.f32.gmra.mxu0 %v2463
        %v2489 = vpop.f32.mrf.mxu0
        %v2490 = vadd.f32 0.0, %v2489
        %2491 = vdwg.mxu0
        %v2492 = vmul.f32 %v2487, 0.35355338
        %v2493 = vmul.f32 %v2490, 0.35355338
        %v2494 = vadd.f32 %v2492, %v1312
        %v2495 = vadd.f32 %v2493, %v1312
        %v2496 = vsel %vm1316, %v2494, -inf
        %2497 = vmax.xlane.f32.xlu0 %v2496
        %v2498 = vpop.xlane.xlu0 %2497
        %v2499 = vsel %vm1320, %v2495, -inf
        %2500 = vmax.xlane.f32.xlu0 %v2499
        %v2501 = vpop.xlane.xlu0 %2500
        %v2502 = vsub.f32 %v2494, %v2498
        %v2503 = vsub.f32 %v2495, %v2501
        %v2504 = vmul.f32 %v2502, 1.442695
        %v2505 = vpow.pop %v2504
        %v2506 = vmul.f32 %v2503, 1.442695
        %v2507 = vpow.pop %v2506
        %v2508 = vsel %vm1316, %v2505, 0.0
        %2509 = vadd.xlane.f32.xlu0 %v2508
        %v2510 = vpop.xlane.xlu0 %2509
        %v2511 = vsel %vm1320, %v2507, 0.0
        %2512 = vadd.xlane.f32.xlu0 %v2511
        %v2513 = vpop.xlane.xlu0 %2512
        %v2514 = vrcp.pop %v2510
        %v2515 = vrcp.pop %v2513
        %v2516 = vmul.f32 %v2505, %v2514
        %v2517 = vmul.f32 %v2507, %v2515
        %2518 = vrot.lane.b32.xlu0 %v2044, 40
        %v2519 = vpop.permute.xlu0 %2518
        %2520 = vrot.lane.b32.xlu0 %v2047, 40
        %v2521 = vpop.permute.xlu0 %2520
        %v2524 = vsel %vm1316, %v2516, 0
        %v2527 = vsel %vm1316, %v2517, 0
        %v2529 = vsel %vm1351, %v2521, 0
        %2531 = vmatpush.msra.mxu0 0.0
        %2532 = vmatpush.msra.mxu0 0.0
        %2533 = vmatpush.msra.mxu0 0.0
        %2534 = vmatpush.msra.mxu0 0.0
        %2535 = vmatpush.msra.mxu0 0.0
        %2536 = vmatpush.msra.mxu0 0.0
        %2537 = vmatpush.msra.mxu0 0.0
        %2538 = vmatpush.msra.mxu0 0.0
        %2539 = vmatpush.msra.mxu0 0.0
        %2540 = vmatpush.msra.mxu0 0.0
        %2541 = vmatpush.msra.mxu0 0.0
        %2542 = vmatpush.msra.mxu0 0.0
        %2543 = vmatpush.msra.mxu0 0.0
        %2544 = vmatpush.msra.mxu0 0.0
        %2545 = vmatpush.msra.mxu0 %v2529
        %2546 = vmatpush.msra.mxu0 %v2519
        %2547 = vmatmul.f32.gmra.mxu0 %v2524
        %v2548 = vpop.f32.mrf.mxu0
        %v2549 = vadd.f32 0.0, %v2548
        %2550 = vmatmul.f32.gmra.mxu0 %v2527
        %v2551 = vpop.f32.mrf.mxu0
        %v2552 = vadd.f32 0.0, %v2551
        %2553 = vdwg.mxu0
        %v2555 = vsel %vm1277, %v2549, 0
        %v2558 = vsel %vm1277, %v2552, 0
        %2560 = vmatpush.msra.mxu0 0.0
        %2561 = vmatpush.msra.mxu0 0.0
        %2562 = vmatpush.msra.mxu0 0.0
        %2563 = vmatpush.msra.mxu0 0.0
        %2564 = vmatpush.msra.mxu0 0.0
        %2565 = vmatpush.msra.mxu0 0.0
        %2566 = vmatpush.msra.mxu0 0.0
        %2567 = vmatpush.msra.mxu0 0.0
        %2568 = vmatpush.msra.mxu0 0.0
        %2569 = vmatpush.msra.mxu0 0.0
        %2570 = vmatpush.msra.mxu0 0.0
        %2571 = vmatpush.msra.mxu0 0.0
        %2572 = vmatpush.msra.mxu0 0.0
        %2573 = vmatpush.msra.mxu0 0.0
        %2574 = vmatpush.msra.mxu0 0.0
        %2575 = vmatpush.msra.mxu0 %v2053
        %2576 = vmatmul.f32.gmra.mxu0 %v2555
        %v2577 = vpop.f32.mrf.mxu0
        %v2578 = vadd.f32 0.0, %v2577
        %2579 = vmatmul.f32.gmra.mxu0 %v2558
        %v2580 = vpop.f32.mrf.mxu0
        %v2581 = vadd.f32 0.0, %v2580
        %2582 = vdwg.mxu0
        %v2583 = vadd.f32 %v2451, %v2578
        %v2584 = vadd.f32 %v2452, %v2581
        %v2585 = vadd.f32 %v2008, %v2583
        %v2586 = vadd.f32 %v2009, %v2584
        %s2587 = scalar_lea.vmem %s17, 2
        %v2588 = vld [vmem:[%s2587] sm:$0x3]
        %v2589 = vsel %vm1169, %v2585, 0.0
        %2590 = vadd.xlane.f32.xlu0 %v2589
        %v2591 = vpop.xlane.xlu0 %2590
        %v2592 = vsel %vm1173, %v2586, 0.0
        %2593 = vadd.xlane.f32.xlu0 %v2592
        %v2594 = vpop.xlane.xlu0 %2593
        %v2595 = vmul.f32 %v2591, %v1183
        %v2596 = vmul.f32 %v2594, %v1183
        %v2597 = vsub.f32 %v2585, %v2595
        %v2598 = vsub.f32 %v2586, %v2596
        %v2599 = vmul.f32 %v2597, %v2597
        %v2600 = vmul.f32 %v2598, %v2598
        %v2601 = vsel %vm1169, %v2599, 0.0
        %2602 = vadd.xlane.f32.xlu0 %v2601
        %v2603 = vpop.xlane.xlu0 %2602
        %v2604 = vsel %vm1173, %v2600, 0.0
        %2605 = vadd.xlane.f32.xlu0 %v2604
        %v2606 = vpop.xlane.xlu0 %2605
        %v2607 = vmul.f32 %v2603, %v1183
        %v2608 = vmul.f32 %v2606, %v1183
        %v2609 = vadd.f32 %v2607, 1e-05
        %v2610 = vadd.f32 %v2608, 1e-05
        %v2611 = vrsqrt.pop %v2609
        %v2612 = vmul.f32 %v2611, %v2609
        %v2613 = vmul.f32 %v2612, %v2611
        %v2614 = vmul.f32 0.5, %v2613
        %v2615 = vsub.f32 1.5, %v2614
        %v2616 = vmul.f32 %v2611, %v2615
        %vm2617 = vweird.f32 %v2609
        %vm2618 = vweird.f32 %v2611
        %vm2619 = vmor %vm2617, %vm2618
        %v2620 = vsel %vm2619, %v2611, %v2616
        %v2621 = vrsqrt.pop %v2610
        %v2622 = vmul.f32 %v2621, %v2610
        %v2623 = vmul.f32 %v2622, %v2621
        %v2624 = vmul.f32 0.5, %v2623
        %v2625 = vsub.f32 1.5, %v2624
        %v2626 = vmul.f32 %v2621, %v2625
        %vm2627 = vweird.f32 %v2610
        %vm2628 = vweird.f32 %v2621
        %vm2629 = vmor %vm2627, %vm2628
        %v2630 = vsel %vm2629, %v2621, %v2626
        %v2631 = vmul.f32 %v2597, %v2620
        %v2632 = vmul.f32 %v2598, %v2630
        %v2633 = vperm.slane %v2588, 0
        %v2634 = vmul.f32 %v2631, %v2633
        %v2635 = vmul.f32 %v2632, %v2633
        %v2636 = vperm.slane %v2588, 1
        %v2637 = vadd.f32 %v2634, %v2636
        %v2638 = vadd.f32 %v2635, %v2636
        %s2639 = scalar_lea.vmem %s19, 32
        %v2640 = vld [vmem:[%s2639] sm:$0xff]
        %v2641 = vld [vmem:[%s2639 + $0x8] sm:$0xff]
        %v2642 = vld [vmem:[%s2639 + $0x10] sm:$0xff]
        %v2643 = vld [vmem:[%s2639 + $0x18] sm:$0xff]
        %s2644 = scalar_lea.vmem %s21, 1
        %v2645 = vld [vmem:[%s2644] sm:$0x1]
        %v2647 = vperm.slane %v2645, 0
        %v2650 = vsel %vm1169, %v2637, 0
        %v2653 = vsel %vm1169, %v2638, 0
        %2655 = vmatpush.msra.mxu0 0.0
        %2656 = vmatpush.msra.mxu0 0.0
        %2657 = vmatpush.msra.mxu0 0.0
        %2658 = vmatpush.msra.mxu0 0.0
        %2659 = vmatpush.msra.mxu0 0.0
        %2660 = vmatpush.msra.mxu0 0.0
        %2661 = vmatpush.msra.mxu0 0.0
        %2662 = vmatpush.msra.mxu0 0.0
        %2663 = vmatpush.msra.mxu0 0.0
        %2664 = vmatpush.msra.mxu0 0.0
        %2665 = vmatpush.msra.mxu0 0.0
        %2666 = vmatpush.msra.mxu0 0.0
        %2667 = vmatpush.msra.mxu0 %v2643
        %2668 = vmatpush.msra.mxu0 %v2642
        %2669 = vmatpush.msra.mxu0 %v2641
        %2670 = vmatpush.msra.mxu0 %v2640
        %2671 = vmatmul.f32.gmra.mxu0 %v2650
        %v2672 = vpop.f32.mrf.mxu0
        %v2673 = vadd.f32 %v2647, %v2672
        %2674 = vmatmul.f32.gmra.mxu0 %v2653
        %v2675 = vpop.f32.mrf.mxu0
        %v2676 = vadd.f32 %v2647, %v2675
        %2677 = vdwg.mxu0
        %v2678 = vmul.f32 %v2673, 0.5
        %v2679 = vmul.f32 %v2676, 0.5
        %v2680 = vmul.f32 %v2673, 0.044715
        %v2681 = vmul.f32 %v2676, 0.044715
        %v2682 = vmul.f32 %v2680, %v2673
        %v2683 = vmul.f32 %v2681, %v2676
        %v2684 = vmul.f32 %v2682, %v2673
        %v2685 = vmul.f32 %v2683, %v2676
        %v2686 = vadd.f32 %v2673, %v2684
        %v2687 = vadd.f32 %v2676, %v2685
        %v2688 = vmul.f32 %v2686, 0.7978846
        %v2689 = vmul.f32 %v2687, 0.7978846
        %v2690 = vtanh.pop %v2688
        %v2691 = vtanh.pop %v2689
        %v2692 = vadd.f32 %v2690, 1.0
        %v2693 = vadd.f32 %v2691, 1.0
        %v2694 = vmul.f32 %v2678, %v2692
        %v2695 = vmul.f32 %v2679, %v2693
        %s2696 = scalar_lea.vmem %s23, 64
        %v2697 = vld [vmem:[%s2696] sm:$0xff]
        %v2698 = vld [vmem:[%s2696 + $0x8] sm:$0xff]
        %v2699 = vld [vmem:[%s2696 + $0x10] sm:$0xff]
        %v2700 = vld [vmem:[%s2696 + $0x18] sm:$0xff]
        %v2701 = vld [vmem:[%s2696 + $0x20] sm:$0xff]
        %v2702 = vld [vmem:[%s2696 + $0x28] sm:$0xff]
        %v2703 = vld [vmem:[%s2696 + $0x30] sm:$0xff]
        %v2704 = vld [vmem:[%s2696 + $0x38] sm:$0xff]
        %s2705 = scalar_lea.vmem %s25, 1
        %v2706 = vld [vmem:[%s2705] sm:$0x1]
        %v2708 = vperm.slane %v2706, 0
        %v2711 = vsel %vm1927, %v2694, 0
        %v2714 = vsel %vm1927, %v2695, 0
        %2716 = vmatpush.msra.mxu0 0.0
        %2717 = vmatpush.msra.mxu0 0.0
        %2718 = vmatpush.msra.mxu0 0.0
        %2719 = vmatpush.msra.mxu0 0.0
        %2720 = vmatpush.msra.mxu0 0.0
        %2721 = vmatpush.msra.mxu0 0.0
        %2722 = vmatpush.msra.mxu0 0.0
        %2723 = vmatpush.msra.mxu0 0.0
        %2724 = vmatpush.msra.mxu0 %v2704
        %2725 = vmatpush.msra.mxu0 %v2703
        %2726 = vmatpush.msra.mxu0 %v2702
        %2727 = vmatpush.msra.mxu0 %v2701
        %2728 = vmatpush.msra.mxu0 %v2700
        %2729 = vmatpush.msra.mxu0 %v2699
        %2730 = vmatpush.msra.mxu0 %v2698
        %2731 = vmatpush.msra.mxu0 %v2697
        %2732 = vmatmul.f32.gmra.mxu0 %v2711
        %v2733 = vpop.f32.mrf.mxu0
        %v2734 = vadd.f32 %v2708, %v2733
        %2735 = vmatmul.f32.gmra.mxu0 %v2714
        %v2736 = vpop.f32.mrf.mxu0
        %v2737 = vadd.f32 %v2708, %v2736
        %2738 = vdwg.mxu0
        %v2739 = vadd.f32 %v2637, %v2734
        %v2740 = vadd.f32 %v2638, %v2737
        %s2741 = scalar_lea.vmem %s27, 2
        %v2742 = vld [vmem:[%s2741] sm:$0x3]
        %v2743 = vsel %vm1169, %v2739, 0.0
        %2744 = vadd.xlane.f32.xlu0 %v2743
        %v2745 = vpop.xlane.xlu0 %2744
        %v2746 = vsel %vm1173, %v2740, 0.0
        %2747 = vadd.xlane.f32.xlu0 %v2746
        %v2748 = vpop.xlane.xlu0 %2747
        %v2749 = vmul.f32 %v2745, %v1183
        %v2750 = vmul.f32 %v2748, %v1183
        %v2751 = vsub.f32 %v2739, %v2749
        %v2752 = vsub.f32 %v2740, %v2750
        %v2753 = vmul.f32 %v2751, %v2751
        %v2754 = vmul.f32 %v2752, %v2752
        %v2755 = vsel %vm1169, %v2753, 0.0
        %2756 = vadd.xlane.f32.xlu0 %v2755
        %v2757 = vpop.xlane.xlu0 %2756
        %v2758 = vsel %vm1173, %v2754, 0.0
        %2759 = vadd.xlane.f32.xlu0 %v2758
        %v2760 = vpop.xlane.xlu0 %2759
        %v2761 = vmul.f32 %v2757, %v1183
        %v2762 = vmul.f32 %v2760, %v1183
        %v2763 = vadd.f32 %v2761, 1e-05
        %v2764 = vadd.f32 %v2762, 1e-05
        %v2765 = vrsqrt.pop %v2763
        %v2766 = vmul.f32 %v2765, %v2763
        %v2767 = vmul.f32 %v2766, %v2765
        %v2768 = vmul.f32 0.5, %v2767
        %v2769 = vsub.f32 1.5, %v2768
        %v2770 = vmul.f32 %v2765, %v2769
        %vm2771 = vweird.f32 %v2763
        %vm2772 = vweird.f32 %v2765
        %vm2773 = vmor %vm2771, %vm2772
        %v2774 = vsel %vm2773, %v2765, %v2770
        %v2775 = vrsqrt.pop %v2764
        %v2776 = vmul.f32 %v2775, %v2764
        %v2777 = vmul.f32 %v2776, %v2775
        %v2778 = vmul.f32 0.5, %v2777
        %v2779 = vsub.f32 1.5, %v2778
        %v2780 = vmul.f32 %v2775, %v2779
        %vm2781 = vweird.f32 %v2764
        %vm2782 = vweird.f32 %v2775
        %vm2783 = vmor %vm2781, %vm2782
        %v2784 = vsel %vm2783, %v2775, %v2780
        %v2785 = vmul.f32 %v2751, %v2774
        %v2786 = vmul.f32 %v2752, %v2784
        %v2787 = vperm.slane %v2742, 0
        %v2788 = vmul.f32 %v2785, %v2787
        %v2789 = vmul.f32 %v2786, %v2787
        %v2790 = vperm.slane %v2742, 1
        %v2791 = vadd.f32 %v2788, %v2790
        %v2792 = vadd.f32 %v2789, %v2790
        %v2793 = vld [vmem:[%s65] sm:$0xff]
        %v2794 = vld [vmem:[%s65 + $0x8] sm:$0xff]
        %v2795 = vld [vmem:[%s65 + $0x10] sm:$0xff]
        %v2796 = vld [vmem:[%s65 + $0x18] sm:$0xff]
        %v2797 = vld [vmem:[%s65 + $0x20] sm:$0xff]
        %v2798 = vld [vmem:[%s65 + $0x28] sm:$0xff]
        %v2799 = vld [vmem:[%s65 + $0x30] sm:$0xff]
        %v2800 = vld [vmem:[%s65 + $0x38] sm:$0xff]
        %v2801 = vld [vmem:[%s67] sm:$0x1]
        %v2803 = vsel %vm1169, %v2791, 0
        %2805 = vmatpush.msra.mxu0 0.0
        %2806 = vmatpush.msra.mxu0 0.0
        %2807 = vmatpush.msra.mxu0 0.0
        %2808 = vmatpush.msra.mxu0 0.0
        %2809 = vmatpush.msra.mxu0 0.0
        %2810 = vmatpush.msra.mxu0 0.0
        %2811 = vmatpush.msra.mxu0 0.0
        %2812 = vmatpush.msra.mxu0 0.0
        %2813 = vmatpush.msra.mxu0 0.0
        %2814 = vmatpush.msra.mxu0 0.0
        %2815 = vmatpush.msra.mxu0 0.0
        %2816 = vmatpush.msra.mxu0 0.0
        %2817 = vmatpush.msra.mxu0 %v2796
        %2818 = vmatpush.msra.mxu0 %v2795
        %2819 = vmatpush.msra.mxu0 %v2794
        %2820 = vmatpush.msra.mxu0 %v2793
        %2821 = vmatmul.f32.gmra.mxu0 %v2803
        %v2822 = vpop.f32.mrf.mxu0
        %v2823 = vadd.f32 0.0, %v2822
        %2824 = vdwg.mxu0
        %v2825 = vadd.f32 %v2801, %v2823
        %v2826 = vrot.slane %v2791, 1
        %v2827 = vsel %vm1169, %v2826, 0
        %2829 = vmatpush.msra.mxu0 0.0
        %2830 = vmatpush.msra.mxu0 0.0
        %2831 = vmatpush.msra.mxu0 0.0
        %2832 = vmatpush.msra.mxu0 0.0
        %2833 = vmatpush.msra.mxu0 0.0
        %2834 = vmatpush.msra.mxu0 0.0
        %2835 = vmatpush.msra.mxu0 0.0
        %2836 = vmatpush.msra.mxu0 0.0
        %2837 = vmatpush.msra.mxu0 0.0
        %2838 = vmatpush.msra.mxu0 0.0
        %2839 = vmatpush.msra.mxu0 0.0
        %2840 = vmatpush.msra.mxu0 0.0
        %2841 = vmatpush.msra.mxu0 %v2800
        %2842 = vmatpush.msra.mxu0 %v2799
        %2843 = vmatpush.msra.mxu0 %v2798
        %2844 = vmatpush.msra.mxu0 %v2797
        %2845 = vmatmul.f32.gmra.mxu0 %v2827
        %v2846 = vpop.f32.mrf.mxu0
        %v2847 = vadd.f32 0.0, %v2846
        %2848 = vdwg.mxu0
        %v2849 = vadd.f32 %v2825, %v2847
        %vm2850 = vcmask 8192
        %v2851 = vsel %vm2850, %v2849, -inf
        %2852 = vmax.xlane.f32.xlu0 %v2851
        %v2853 = vpop.xlane.xlu0 %2852
        %v2854 = vsub.f32 %v2849, %v2853
        %v2855 = vmul.f32 %v2854, 1.442695
        %v2856 = vpow.pop %v2855
        %v2857 = vsel %vm2850, %v2856, 0.0
        %2858 = vadd.xlane.f32.xlu0 %v2857
        %v2859 = vpop.xlane.xlu0 %2858
        %v2860 = vlog2.pop %v2859
        %v2861 = vmul.f32 %v2860, 0.6931472
        %v2862 = vadd.f32 %v2861, %v2853
        %v2863 = vsub.f32 %v2849, %v2862
        %2864 = vst.msk [vmem:[%s1146] sm:$0x1] %vm2850, %v2863
        %v2865 = vld [vmem:[%s1162] sm:$0xff]
        %v2866 = vld [vmem:[%s29] sm:$0x3]
        %v2867 = vsel %vm1169, %v2865, 0.0
        %2868 = vadd.xlane.f32.xlu0 %v2867
        %v2869 = vpop.xlane.xlu0 %2868
        %v2870 = vmul.f32 %v2869, %v1183
        %v2871 = vsub.f32 %v2865, %v2870
        %v2872 = vmul.f32 %v2871, %v2871
        %v2873 = vsel %vm1169, %v2872, 0.0
        %2874 = vadd.xlane.f32.xlu0 %v2873
        %v2875 = vpop.xlane.xlu0 %2874
        %v2876 = vmul.f32 %v2875, %v1183
        %v2877 = vadd.f32 %v2876, 1e-05
        %v2878 = vrsqrt.pop %v2877
        %v2879 = vmul.f32 %v2878, %v2877
        %v2880 = vmul.f32 %v2879, %v2878
        %v2881 = vmul.f32 0.5, %v2880
        %v2882 = vsub.f32 1.5, %v2881
        %v2883 = vmul.f32 %v2878, %v2882
        %vm2884 = vweird.f32 %v2877
        %vm2885 = vweird.f32 %v2878
        %vm2886 = vmor %vm2884, %vm2885
        %v2887 = vsel %vm2886, %v2878, %v2883
        %v2888 = vmul.f32 %v2871, %v2887
        %v2889 = vperm.slane %v2866, 0
        %v2890 = vmul.f32 %v2888, %v2889
        %v2891 = vperm.slane %v2866, 1
        %v2892 = vadd.f32 %v2890, %v2891
        %v2893 = vlaneseq
        %v2894 = vshrl.u32 %v2893, 7
        %v2895 = vlaneseq
        %v2896 = vand.u32 %v2895, 127
        %vm2897 = vcmp.le.s32.totalorder %v2896, %v2894
        %v2898 = vsel %vm2897, 0.0, -1e+09
        %v2899 = vld [vmem:[%s31] sm:$0xff]
        %v2900 = vld [vmem:[%s31 + $0x8] sm:$0xff]
        %v2901 = vld [vmem:[%s31 + $0x10] sm:$0xff]
        %v2902 = vld [vmem:[%s31 + $0x18] sm:$0xff]
        %v2903 = vld [vmem:[%s33] sm:$0x1]
        %v2905 = vperm.slane %v2903, 0
        %v2908 = vsel %vm1169, %v2892, 0
        %2910 = vmatpush.msra.mxu0 0.0
        %2911 = vmatpush.msra.mxu0 0.0
        %2912 = vmatpush.msra.mxu0 0.0
        %2913 = vmatpush.msra.mxu0 0.0
        %2914 = vmatpush.msra.mxu0 0.0
        %2915 = vmatpush.msra.mxu0 0.0
        %2916 = vmatpush.msra.mxu0 0.0
        %2917 = vmatpush.msra.mxu0 0.0
        %2918 = vmatpush.msra.mxu0 0.0
        %2919 = vmatpush.msra.mxu0 0.0
        %2920 = vmatpush.msra.mxu0 0.0
        %2921 = vmatpush.msra.mxu0 0.0
        %2922 = vmatpush.msra.mxu0 %v2902
        %2923 = vmatpush.msra.mxu0 %v2901
        %2924 = vmatpush.msra.mxu0 %v2900
        %2925 = vmatpush.msra.mxu0 %v2899
        %2926 = vmatmul.f32.gmra.mxu0 %v2908
        %v2927 = vpop.f32.mrf.mxu0
        %v2928 = vadd.f32 %v2905, %v2927
        %2929 = vdwg.mxu0
        %v2930 = vld [vmem:[%s35] sm:$0xff]
        %v2931 = vld [vmem:[%s35 + $0x8] sm:$0xff]
        %v2932 = vld [vmem:[%s35 + $0x10] sm:$0xff]
        %v2933 = vld [vmem:[%s35 + $0x18] sm:$0xff]
        %v2934 = vld [vmem:[%s37] sm:$0x1]
        %2936 = vrot.lane.b32.xlu0 %v2928, 96
        %v2937 = vpop.permute.xlu0 %2936
        %v2938 = vsel %vm1277, %v2928, 0
        %v2940 = vsel %vm1277, %v2937, 0
        %2942 = vmatpush.xpose.msra.mxu0 0.0
        %2943 = vmatpush.xpose.msra.mxu0 0.0
        %2944 = vmatpush.xpose.msra.mxu0 0.0
        %2945 = vmatpush.xpose.msra.mxu0 0.0
        %2946 = vmatpush.xpose.msra.mxu0 0.0
        %2947 = vmatpush.xpose.msra.mxu0 0.0
        %2948 = vmatpush.xpose.msra.mxu0 0.0
        %2949 = vmatpush.xpose.msra.mxu0 0.0
        %2950 = vmatpush.xpose.msra.mxu0 0.0
        %2951 = vmatpush.xpose.msra.mxu0 0.0
        %2952 = vmatpush.xpose.msra.mxu0 0.0
        %2953 = vmatpush.xpose.msra.mxu0 0.0
        %2954 = vmatpush.xpose.msra.mxu0 0.0
        %2955 = vmatpush.xpose.msra.mxu0 0.0
        %2956 = vmatpush.xpose.msra.mxu0 0.0
        %2957 = vmatpush.xpose.msra.mxu0 %v2940
        %2958 = vmatmul.f32.gmra.mxu0 %v2938
        %v2959 = vpop.f32.mrf.mxu0
        %v2960 = vadd.f32 0.0, %v2959
        %2961 = vdwg.mxu0
        %v2962 = vmul.f32 %v2960, 0.35355338
        %v2963 = vadd.f32 %v2962, %v2898
        %v2964 = vsel %vm1277, %v2963, -inf
        %2965 = vmax.xlane.f32.xlu0 %v2964
        %v2966 = vpop.xlane.xlu0 %2965
        %v2967 = vsub.f32 %v2963, %v2966
        %v2968 = vmul.f32 %v2967, 1.442695
        %v2969 = vpow.pop %v2968
        %v2970 = vsel %vm1277, %v2969, 0.0
        %2971 = vadd.xlane.f32.xlu0 %v2970
        %v2972 = vpop.xlane.xlu0 %2971
        %v2973 = vrcp.pop %v2972
        %v2974 = vmul.f32 %v2969, %v2973
        %2975 = vrot.lane.b32.xlu0 %v2928, 64
        %v2976 = vpop.permute.xlu0 %2975
        %v2979 = vsel %vm1277, %v2974, 0
        %2981 = vmatpush.msra.mxu0 0.0
        %2982 = vmatpush.msra.mxu0 0.0
        %2983 = vmatpush.msra.mxu0 0.0
        %2984 = vmatpush.msra.mxu0 0.0
        %2985 = vmatpush.msra.mxu0 0.0
        %2986 = vmatpush.msra.mxu0 0.0
        %2987 = vmatpush.msra.mxu0 0.0
        %2988 = vmatpush.msra.mxu0 0.0
        %2989 = vmatpush.msra.mxu0 0.0
        %2990 = vmatpush.msra.mxu0 0.0
        %2991 = vmatpush.msra.mxu0 0.0
        %2992 = vmatpush.msra.mxu0 0.0
        %2993 = vmatpush.msra.mxu0 0.0
        %2994 = vmatpush.msra.mxu0 0.0
        %2995 = vmatpush.msra.mxu0 0.0
        %2996 = vmatpush.msra.mxu0 %v2976
        %2997 = vmatmul.f32.gmra.mxu0 %v2979
        %v2998 = vpop.f32.mrf.mxu0
        %v2999 = vadd.f32 0.0, %v2998
        %3000 = vdwg.mxu0
        %v3002 = vsel %vm1277, %v2999, 0
        %3004 = vmatpush.msra.mxu0 0.0
        %3005 = vmatpush.msra.mxu0 0.0
        %3006 = vmatpush.msra.mxu0 0.0
        %3007 = vmatpush.msra.mxu0 0.0
        %3008 = vmatpush.msra.mxu0 0.0
        %3009 = vmatpush.msra.mxu0 0.0
        %3010 = vmatpush.msra.mxu0 0.0
        %3011 = vmatpush.msra.mxu0 0.0
        %3012 = vmatpush.msra.mxu0 0.0
        %3013 = vmatpush.msra.mxu0 0.0
        %3014 = vmatpush.msra.mxu0 0.0
        %3015 = vmatpush.msra.mxu0 0.0
        %3016 = vmatpush.msra.mxu0 0.0
        %3017 = vmatpush.msra.mxu0 0.0
        %3018 = vmatpush.msra.mxu0 0.0
        %3019 = vmatpush.msra.mxu0 %v2930
        %3020 = vmatmul.f32.gmra.mxu0 %v3002
        %v3021 = vpop.f32.mrf.mxu0
        %v3022 = vadd.f32 0.0, %v3021
        %3023 = vdwg.mxu0
        %v3025 = vperm.slane %v2934, 0
        %v3027 = vadd.f32 %v3025, %v3022
        %3028 = vrot.lane.b32.xlu0 %v2928, 120
        %v3029 = vpop.permute.xlu0 %3028
        %3030 = vrot.lane.b32.xlu0 %v2928, 88
        %v3031 = vpop.permute.xlu0 %3030
        %v3032 = vsel %vm1277, %v3029, 0
        %v3034 = vsel %vm1277, %v3031, 0
        %3036 = vmatpush.xpose.msra.mxu0 0.0
        %3037 = vmatpush.xpose.msra.mxu0 0.0
        %3038 = vmatpush.xpose.msra.mxu0 0.0
        %3039 = vmatpush.xpose.msra.mxu0 0.0
        %3040 = vmatpush.xpose.msra.mxu0 0.0
        %3041 = vmatpush.xpose.msra.mxu0 0.0
        %3042 = vmatpush.xpose.msra.mxu0 0.0
        %3043 = vmatpush.xpose.msra.mxu0 0.0
        %3044 = vmatpush.xpose.msra.mxu0 0.0
        %3045 = vmatpush.xpose.msra.mxu0 0.0
        %3046 = vmatpush.xpose.msra.mxu0 0.0
        %3047 = vmatpush.xpose.msra.mxu0 0.0
        %3048 = vmatpush.xpose.msra.mxu0 0.0
        %3049 = vmatpush.xpose.msra.mxu0 0.0
        %3050 = vmatpush.xpose.msra.mxu0 0.0
        %3051 = vmatpush.xpose.msra.mxu0 %v3034
        %3052 = vmatmul.f32.gmra.mxu0 %v3032
        %v3053 = vpop.f32.mrf.mxu0
        %v3054 = vadd.f32 0.0, %v3053
        %3055 = vdwg.mxu0
        %v3056 = vmul.f32 %v3054, 0.35355338
        %v3057 = vadd.f32 %v3056, %v2898
        %v3058 = vsel %vm1277, %v3057, -inf
        %3059 = vmax.xlane.f32.xlu0 %v3058
        %v3060 = vpop.xlane.xlu0 %3059
        %v3061 = vsub.f32 %v3057, %v3060
        %v3062 = vmul.f32 %v3061, 1.442695
        %v3063 = vpow.pop %v3062
        %v3064 = vsel %vm1277, %v3063, 0.0
        %3065 = vadd.xlane.f32.xlu0 %v3064
        %v3066 = vpop.xlane.xlu0 %3065
        %v3067 = vrcp.pop %v3066
        %v3068 = vmul.f32 %v3063, %v3067
        %3069 = vrot.lane.b32.xlu0 %v2928, 56
        %v3070 = vpop.permute.xlu0 %3069
        %v3073 = vsel %vm1277, %v3068, 0
        %3075 = vmatpush.msra.mxu0 0.0
        %3076 = vmatpush.msra.mxu0 0.0
        %3077 = vmatpush.msra.mxu0 0.0
        %3078 = vmatpush.msra.mxu0 0.0
        %3079 = vmatpush.msra.mxu0 0.0
        %3080 = vmatpush.msra.mxu0 0.0
        %3081 = vmatpush.msra.mxu0 0.0
        %3082 = vmatpush.msra.mxu0 0.0
        %3083 = vmatpush.msra.mxu0 0.0
        %3084 = vmatpush.msra.mxu0 0.0
        %3085 = vmatpush.msra.mxu0 0.0
        %3086 = vmatpush.msra.mxu0 0.0
        %3087 = vmatpush.msra.mxu0 0.0
        %3088 = vmatpush.msra.mxu0 0.0
        %3089 = vmatpush.msra.mxu0 0.0
        %3090 = vmatpush.msra.mxu0 %v3070
        %3091 = vmatmul.f32.gmra.mxu0 %v3073
        %v3092 = vpop.f32.mrf.mxu0
        %v3093 = vadd.f32 0.0, %v3092
        %3094 = vdwg.mxu0
        %v3096 = vsel %vm1277, %v3093, 0
        %3098 = vmatpush.msra.mxu0 0.0
        %3099 = vmatpush.msra.mxu0 0.0
        %3100 = vmatpush.msra.mxu0 0.0
        %3101 = vmatpush.msra.mxu0 0.0
        %3102 = vmatpush.msra.mxu0 0.0
        %3103 = vmatpush.msra.mxu0 0.0
        %3104 = vmatpush.msra.mxu0 0.0
        %3105 = vmatpush.msra.mxu0 0.0
        %3106 = vmatpush.msra.mxu0 0.0
        %3107 = vmatpush.msra.mxu0 0.0
        %3108 = vmatpush.msra.mxu0 0.0
        %3109 = vmatpush.msra.mxu0 0.0
        %3110 = vmatpush.msra.mxu0 0.0
        %3111 = vmatpush.msra.mxu0 0.0
        %3112 = vmatpush.msra.mxu0 0.0
        %3113 = vmatpush.msra.mxu0 %v2931
        %3114 = vmatmul.f32.gmra.mxu0 %v3096
        %v3115 = vpop.f32.mrf.mxu0
        %v3116 = vadd.f32 0.0, %v3115
        %3117 = vdwg.mxu0
        %v3118 = vadd.f32 %v3027, %v3116
        %3119 = vrot.lane.b32.xlu0 %v2928, 112
        %v3120 = vpop.permute.xlu0 %3119
        %3121 = vrot.lane.b32.xlu0 %v2928, 80
        %v3122 = vpop.permute.xlu0 %3121
        %v3123 = vsel %vm1277, %v3120, 0
        %v3125 = vsel %vm1277, %v3122, 0
        %3127 = vmatpush.xpose.msra.mxu0 0.0
        %3128 = vmatpush.xpose.msra.mxu0 0.0
        %3129 = vmatpush.xpose.msra.mxu0 0.0
        %3130 = vmatpush.xpose.msra.mxu0 0.0
        %3131 = vmatpush.xpose.msra.mxu0 0.0
        %3132 = vmatpush.xpose.msra.mxu0 0.0
        %3133 = vmatpush.xpose.msra.mxu0 0.0
        %3134 = vmatpush.xpose.msra.mxu0 0.0
        %3135 = vmatpush.xpose.msra.mxu0 0.0
        %3136 = vmatpush.xpose.msra.mxu0 0.0
        %3137 = vmatpush.xpose.msra.mxu0 0.0
        %3138 = vmatpush.xpose.msra.mxu0 0.0
        %3139 = vmatpush.xpose.msra.mxu0 0.0
        %3140 = vmatpush.xpose.msra.mxu0 0.0
        %3141 = vmatpush.xpose.msra.mxu0 0.0
        %3142 = vmatpush.xpose.msra.mxu0 %v3125
        %3143 = vmatmul.f32.gmra.mxu0 %v3123
        %v3144 = vpop.f32.mrf.mxu0
        %v3145 = vadd.f32 0.0, %v3144
        %3146 = vdwg.mxu0
        %v3147 = vmul.f32 %v3145, 0.35355338
        %v3148 = vadd.f32 %v3147, %v2898
        %v3149 = vsel %vm1277, %v3148, -inf
        %3150 = vmax.xlane.f32.xlu0 %v3149
        %v3151 = vpop.xlane.xlu0 %3150
        %v3152 = vsub.f32 %v3148, %v3151
        %v3153 = vmul.f32 %v3152, 1.442695
        %v3154 = vpow.pop %v3153
        %v3155 = vsel %vm1277, %v3154, 0.0
        %3156 = vadd.xlane.f32.xlu0 %v3155
        %v3157 = vpop.xlane.xlu0 %3156
        %v3158 = vrcp.pop %v3157
        %v3159 = vmul.f32 %v3154, %v3158
        %3160 = vrot.lane.b32.xlu0 %v2928, 48
        %v3161 = vpop.permute.xlu0 %3160
        %v3164 = vsel %vm1277, %v3159, 0
        %3166 = vmatpush.msra.mxu0 0.0
        %3167 = vmatpush.msra.mxu0 0.0
        %3168 = vmatpush.msra.mxu0 0.0
        %3169 = vmatpush.msra.mxu0 0.0
        %3170 = vmatpush.msra.mxu0 0.0
        %3171 = vmatpush.msra.mxu0 0.0
        %3172 = vmatpush.msra.mxu0 0.0
        %3173 = vmatpush.msra.mxu0 0.0
        %3174 = vmatpush.msra.mxu0 0.0
        %3175 = vmatpush.msra.mxu0 0.0
        %3176 = vmatpush.msra.mxu0 0.0
        %3177 = vmatpush.msra.mxu0 0.0
        %3178 = vmatpush.msra.mxu0 0.0
        %3179 = vmatpush.msra.mxu0 0.0
        %3180 = vmatpush.msra.mxu0 0.0
        %3181 = vmatpush.msra.mxu0 %v3161
        %3182 = vmatmul.f32.gmra.mxu0 %v3164
        %v3183 = vpop.f32.mrf.mxu0
        %v3184 = vadd.f32 0.0, %v3183
        %3185 = vdwg.mxu0
        %v3187 = vsel %vm1277, %v3184, 0
        %3189 = vmatpush.msra.mxu0 0.0
        %3190 = vmatpush.msra.mxu0 0.0
        %3191 = vmatpush.msra.mxu0 0.0
        %3192 = vmatpush.msra.mxu0 0.0
        %3193 = vmatpush.msra.mxu0 0.0
        %3194 = vmatpush.msra.mxu0 0.0
        %3195 = vmatpush.msra.mxu0 0.0
        %3196 = vmatpush.msra.mxu0 0.0
        %3197 = vmatpush.msra.mxu0 0.0
        %3198 = vmatpush.msra.mxu0 0.0
        %3199 = vmatpush.msra.mxu0 0.0
        %3200 = vmatpush.msra.mxu0 0.0
        %3201 = vmatpush.msra.mxu0 0.0
        %3202 = vmatpush.msra.mxu0 0.0
        %3203 = vmatpush.msra.mxu0 0.0
        %3204 = vmatpush.msra.mxu0 %v2932
        %3205 = vmatmul.f32.gmra.mxu0 %v3187
        %v3206 = vpop.f32.mrf.mxu0
        %v3207 = vadd.f32 0.0, %v3206
        %3208 = vdwg.mxu0
        %v3209 = vadd.f32 %v3118, %v3207
        %3210 = vrot.lane.b32.xlu0 %v2928, 104
        %v3211 = vpop.permute.xlu0 %3210
        %3212 = vrot.lane.b32.xlu0 %v2928, 72
        %v3213 = vpop.permute.xlu0 %3212
        %v3214 = vsel %vm1277, %v3211, 0
        %v3216 = vsel %vm1277, %v3213, 0
        %3218 = vmatpush.xpose.msra.mxu0 0.0
        %3219 = vmatpush.xpose.msra.mxu0 0.0
        %3220 = vmatpush.xpose.msra.mxu0 0.0
        %3221 = vmatpush.xpose.msra.mxu0 0.0
        %3222 = vmatpush.xpose.msra.mxu0 0.0
        %3223 = vmatpush.xpose.msra.mxu0 0.0
        %3224 = vmatpush.xpose.msra.mxu0 0.0
        %3225 = vmatpush.xpose.msra.mxu0 0.0
        %3226 = vmatpush.xpose.msra.mxu0 0.0
        %3227 = vmatpush.xpose.msra.mxu0 0.0
        %3228 = vmatpush.xpose.msra.mxu0 0.0
        %3229 = vmatpush.xpose.msra.mxu0 0.0
        %3230 = vmatpush.xpose.msra.mxu0 0.0
        %3231 = vmatpush.xpose.msra.mxu0 0.0
        %3232 = vmatpush.xpose.msra.mxu0 0.0
        %3233 = vmatpush.xpose.msra.mxu0 %v3216
        %3234 = vmatmul.f32.gmra.mxu0 %v3214
        %v3235 = vpop.f32.mrf.mxu0
        %v3236 = vadd.f32 0.0, %v3235
        %3237 = vdwg.mxu0
        %v3238 = vmul.f32 %v3236, 0.35355338
        %v3239 = vadd.f32 %v3238, %v2898
        %v3240 = vsel %vm1277, %v3239, -inf
        %3241 = vmax.xlane.f32.xlu0 %v3240
        %v3242 = vpop.xlane.xlu0 %3241
        %v3243 = vsub.f32 %v3239, %v3242
        %v3244 = vmul.f32 %v3243, 1.442695
        %v3245 = vpow.pop %v3244
        %v3246 = vsel %vm1277, %v3245, 0.0
        %3247 = vadd.xlane.f32.xlu0 %v3246
        %v3248 = vpop.xlane.xlu0 %3247
        %v3249 = vrcp.pop %v3248
        %v3250 = vmul.f32 %v3245, %v3249
        %3251 = vrot.lane.b32.xlu0 %v2928, 40
        %v3252 = vpop.permute.xlu0 %3251
        %v3255 = vsel %vm1277, %v3250, 0
        %3257 = vmatpush.msra.mxu0 0.0
        %3258 = vmatpush.msra.mxu0 0.0
        %3259 = vmatpush.msra.mxu0 0.0
        %3260 = vmatpush.msra.mxu0 0.0
        %3261 = vmatpush.msra.mxu0 0.0
        %3262 = vmatpush.msra.mxu0 0.0
        %3263 = vmatpush.msra.mxu0 0.0
        %3264 = vmatpush.msra.mxu0 0.0
        %3265 = vmatpush.msra.mxu0 0.0
        %3266 = vmatpush.msra.mxu0 0.0
        %3267 = vmatpush.msra.mxu0 0.0
        %3268 = vmatpush.msra.mxu0 0.0
        %3269 = vmatpush.msra.mxu0 0.0
        %3270 = vmatpush.msra.mxu0 0.0
        %3271 = vmatpush.msra.mxu0 0.0
        %3272 = vmatpush.msra.mxu0 %v3252
        %3273 = vmatmul.f32.gmra.mxu0 %v3255
        %v3274 = vpop.f32.mrf.mxu0
        %v3275 = vadd.f32 0.0, %v3274
        %3276 = vdwg.mxu0
        %v3278 = vsel %vm1277, %v3275, 0
        %3280 = vmatpush.msra.mxu0 0.0
        %3281 = vmatpush.msra.mxu0 0.0
        %3282 = vmatpush.msra.mxu0 0.0
        %3283 = vmatpush.msra.mxu0 0.0
        %3284 = vmatpush.msra.mxu0 0.0
        %3285 = vmatpush.msra.mxu0 0.0
        %3286 = vmatpush.msra.mxu0 0.0
        %3287 = vmatpush.msra.mxu0 0.0
        %3288 = vmatpush.msra.mxu0 0.0
        %3289 = vmatpush.msra.mxu0 0.0
        %3290 = vmatpush.msra.mxu0 0.0
        %3291 = vmatpush.msra.mxu0 0.0
        %3292 = vmatpush.msra.mxu0 0.0
        %3293 = vmatpush.msra.mxu0 0.0
        %3294 = vmatpush.msra.mxu0 0.0
        %3295 = vmatpush.msra.mxu0 %v2933
        %3296 = vmatmul.f32.gmra.mxu0 %v3278
        %v3297 = vpop.f32.mrf.mxu0
        %v3298 = vadd.f32 0.0, %v3297
        %3299 = vdwg.mxu0
        %v3300 = vadd.f32 %v3209, %v3298
        %v3301 = vadd.f32 %v2892, %v3300
        %v3302 = vld [vmem:[%s39] sm:$0x3]
        %v3303 = vsel %vm1169, %v3301, 0.0
        %3304 = vadd.xlane.f32.xlu0 %v3303
        %v3305 = vpop.xlane.xlu0 %3304
        %v3306 = vmul.f32 %v3305, %v1183
        %v3307 = vsub.f32 %v3301, %v3306
        %v3308 = vmul.f32 %v3307, %v3307
        %v3309 = vsel %vm1169, %v3308, 0.0
        %3310 = vadd.xlane.f32.xlu0 %v3309
        %v3311 = vpop.xlane.xlu0 %3310
        %v3312 = vmul.f32 %v3311, %v1183
        %v3313 = vadd.f32 %v3312, 1e-05
        %v3314 = vrsqrt.pop %v3313
        %v3315 = vmul.f32 %v3314, %v3313
        %v3316 = vmul.f32 %v3315, %v3314
        %v3317 = vmul.f32 0.5, %v3316
        %v3318 = vsub.f32 1.5, %v3317
        %v3319 = vmul.f32 %v3314, %v3318
        %vm3320 = vweird.f32 %v3313
        %vm3321 = vweird.f32 %v3314
        %vm3322 = vmor %vm3320, %vm3321
        %v3323 = vsel %vm3322, %v3314, %v3319
        %v3324 = vmul.f32 %v3307, %v3323
        %v3325 = vperm.slane %v3302, 0
        %v3326 = vmul.f32 %v3324, %v3325
        %v3327 = vperm.slane %v3302, 1
        %v3328 = vadd.f32 %v3326, %v3327
        %v3329 = vld [vmem:[%s41] sm:$0xff]
        %v3330 = vld [vmem:[%s41 + $0x8] sm:$0xff]
        %v3331 = vld [vmem:[%s41 + $0x10] sm:$0xff]
        %v3332 = vld [vmem:[%s41 + $0x18] sm:$0xff]
        %v3333 = vld [vmem:[%s43] sm:$0x1]
        %v3335 = vperm.slane %v3333, 0
        %v3338 = vsel %vm1169, %v3328, 0
        %3340 = vmatpush.msra.mxu0 0.0
        %3341 = vmatpush.msra.mxu0 0.0
        %3342 = vmatpush.msra.mxu0 0.0
        %3343 = vmatpush.msra.mxu0 0.0
        %3344 = vmatpush.msra.mxu0 0.0
        %3345 = vmatpush.msra.mxu0 0.0
        %3346 = vmatpush.msra.mxu0 0.0
        %3347 = vmatpush.msra.mxu0 0.0
        %3348 = vmatpush.msra.mxu0 0.0
        %3349 = vmatpush.msra.mxu0 0.0
        %3350 = vmatpush.msra.mxu0 0.0
        %3351 = vmatpush.msra.mxu0 0.0
        %3352 = vmatpush.msra.mxu0 %v3332
        %3353 = vmatpush.msra.mxu0 %v3331
        %3354 = vmatpush.msra.mxu0 %v3330
        %3355 = vmatpush.msra.mxu0 %v3329
        %3356 = vmatmul.f32.gmra.mxu0 %v3338
        %v3357 = vpop.f32.mrf.mxu0
        %v3358 = vadd.f32 %v3335, %v3357
        %3359 = vdwg.mxu0
        %v3360 = vld [vmem:[%s45] sm:$0xff]
        %v3361 = vld [vmem:[%s45 + $0x8] sm:$0xff]
        %v3362 = vld [vmem:[%s45 + $0x10] sm:$0xff]
        %v3363 = vld [vmem:[%s45 + $0x18] sm:$0xff]
        %v3364 = vld [vmem:[%s47] sm:$0x1]
        %v3366 = vperm.slane %v3364, 0
        %v3369 = vsel %vm1169, %v2792, 0
        %3371 = vmatpush.msra.mxu0 0.0
        %3372 = vmatpush.msra.mxu0 0.0
        %3373 = vmatpush.msra.mxu0 0.0
        %3374 = vmatpush.msra.mxu0 0.0
        %3375 = vmatpush.msra.mxu0 0.0
        %3376 = vmatpush.msra.mxu0 0.0
        %3377 = vmatpush.msra.mxu0 0.0
        %3378 = vmatpush.msra.mxu0 0.0
        %3379 = vmatpush.msra.mxu0 0.0
        %3380 = vmatpush.msra.mxu0 0.0
        %3381 = vmatpush.msra.mxu0 0.0
        %3382 = vmatpush.msra.mxu0 0.0
        %3383 = vmatpush.msra.mxu0 %v3363
        %3384 = vmatpush.msra.mxu0 %v3362
        %3385 = vmatpush.msra.mxu0 %v3361
        %3386 = vmatpush.msra.mxu0 %v3360
        %3387 = vmatmul.f32.gmra.mxu0 %v2803
        %v3388 = vpop.f32.mrf.mxu0
        %v3389 = vadd.f32 %v3366, %v3388
        %3390 = vmatmul.f32.gmra.mxu0 %v3369
        %v3391 = vpop.f32.mrf.mxu0
        %v3392 = vadd.f32 %v3366, %v3391
        %3393 = vdwg.mxu0
        %v3394 = vld [vmem:[%s49] sm:$0xff]
        %v3395 = vld [vmem:[%s49 + $0x8] sm:$0xff]
        %v3396 = vld [vmem:[%s49 + $0x10] sm:$0xff]
        %v3397 = vld [vmem:[%s49 + $0x18] sm:$0xff]
        %v3398 = vld [vmem:[%s51] sm:$0x1]
        %v3400 = vsel %vm1277, %v3358, 0
        %v3403 = vsel %vm1277, %v3389, 0
        %v3406 = vsel %vm1277, %v3392, 0
        %3408 = vmatpush.xpose.msra.mxu0 0.0
        %3409 = vmatpush.xpose.msra.mxu0 0.0
        %3410 = vmatpush.xpose.msra.mxu0 0.0
        %3411 = vmatpush.xpose.msra.mxu0 0.0
        %3412 = vmatpush.xpose.msra.mxu0 0.0
        %3413 = vmatpush.xpose.msra.mxu0 0.0
        %3414 = vmatpush.xpose.msra.mxu0 0.0
        %3415 = vmatpush.xpose.msra.mxu0 0.0
        %3416 = vmatpush.xpose.msra.mxu0 0.0
        %3417 = vmatpush.xpose.msra.mxu0 0.0
        %3418 = vmatpush.xpose.msra.mxu0 0.0
        %3419 = vmatpush.xpose.msra.mxu0 0.0
        %3420 = vmatpush.xpose.msra.mxu0 0.0
        %3421 = vmatpush.xpose.msra.mxu0 0.0
        %3422 = vmatpush.xpose.msra.mxu0 %v3406
        %3423 = vmatpush.xpose.msra.mxu0 %v3403
        %3424 = vmatmul.f32.gmra.mxu0 %v3400
        %v3425 = vpop.f32.mrf.mxu0
        %v3426 = vadd.f32 0.0, %v3425
        %3427 = vdwg.mxu0
        %v3428 = vmul.f32 %v3426, 0.35355338
        %v3429 = vsel %vm1316, %v3428, -inf
        %3430 = vmax.xlane.f32.xlu0 %v3429
        %v3431 = vpop.xlane.xlu0 %3430
        %v3432 = vsub.f32 %v3428, %v3431
        %v3433 = vmul.f32 %v3432, 1.442695
        %v3434 = vpow.pop %v3433
        %v3435 = vsel %vm1316, %v3434, 0.0
        %3436 = vadd.xlane.f32.xlu0 %v3435
        %v3437 = vpop.xlane.xlu0 %3436
        %v3438 = vrcp.pop %v3437
        %v3439 = vmul.f32 %v3434, %v3438
        %3440 = vrot.lane.b32.xlu0 %v3389, 96
        %v3441 = vpop.permute.xlu0 %3440
        %3442 = vrot.lane.b32.xlu0 %v3392, 96
        %v3443 = vpop.permute.xlu0 %3442
        %v3446 = vsel %vm1316, %v3439, 0
        %v3448 = vsel %vm1351, %v3443, 0
        %3450 = vmatpush.msra.mxu0 0.0
        %3451 = vmatpush.msra.mxu0 0.0
        %3452 = vmatpush.msra.mxu0 0.0
        %3453 = vmatpush.msra.mxu0 0.0
        %3454 = vmatpush.msra.mxu0 0.0
        %3455 = vmatpush.msra.mxu0 0.0
        %3456 = vmatpush.msra.mxu0 0.0
        %3457 = vmatpush.msra.mxu0 0.0
        %3458 = vmatpush.msra.mxu0 0.0
        %3459 = vmatpush.msra.mxu0 0.0
        %3460 = vmatpush.msra.mxu0 0.0
        %3461 = vmatpush.msra.mxu0 0.0
        %3462 = vmatpush.msra.mxu0 0.0
        %3463 = vmatpush.msra.mxu0 0.0
        %3464 = vmatpush.msra.mxu0 %v3448
        %3465 = vmatpush.msra.mxu0 %v3441
        %3466 = vmatmul.f32.gmra.mxu0 %v3446
        %v3467 = vpop.f32.mrf.mxu0
        %v3468 = vadd.f32 0.0, %v3467
        %3469 = vdwg.mxu0
        %v3471 = vsel %vm1277, %v3468, 0
        %3473 = vmatpush.msra.mxu0 0.0
        %3474 = vmatpush.msra.mxu0 0.0
        %3475 = vmatpush.msra.mxu0 0.0
        %3476 = vmatpush.msra.mxu0 0.0
        %3477 = vmatpush.msra.mxu0 0.0
        %3478 = vmatpush.msra.mxu0 0.0
        %3479 = vmatpush.msra.mxu0 0.0
        %3480 = vmatpush.msra.mxu0 0.0
        %3481 = vmatpush.msra.mxu0 0.0
        %3482 = vmatpush.msra.mxu0 0.0
        %3483 = vmatpush.msra.mxu0 0.0
        %3484 = vmatpush.msra.mxu0 0.0
        %3485 = vmatpush.msra.mxu0 0.0
        %3486 = vmatpush.msra.mxu0 0.0
        %3487 = vmatpush.msra.mxu0 0.0
        %3488 = vmatpush.msra.mxu0 %v3394
        %3489 = vmatmul.f32.gmra.mxu0 %v3471
        %v3490 = vpop.f32.mrf.mxu0
        %v3491 = vadd.f32 0.0, %v3490
        %3492 = vdwg.mxu0
        %v3494 = vperm.slane %v3398, 0
        %v3496 = vadd.f32 %v3494, %v3491
        %3497 = vrot.lane.b32.xlu0 %v3358, 120
        %v3498 = vpop.permute.xlu0 %3497
        %3499 = vrot.lane.b32.xlu0 %v3389, 120
        %v3500 = vpop.permute.xlu0 %3499
        %3501 = vrot.lane.b32.xlu0 %v3392, 120
        %v3502 = vpop.permute.xlu0 %3501
        %v3503 = vsel %vm1277, %v3498, 0
        %v3505 = vsel %vm1277, %v3500, 0
        %v3507 = vsel %vm1277, %v3502, 0
        %3509 = vmatpush.xpose.msra.mxu0 0.0
        %3510 = vmatpush.xpose.msra.mxu0 0.0
        %3511 = vmatpush.xpose.msra.mxu0 0.0
        %3512 = vmatpush.xpose.msra.mxu0 0.0
        %3513 = vmatpush.xpose.msra.mxu0 0.0
        %3514 = vmatpush.xpose.msra.mxu0 0.0
        %3515 = vmatpush.xpose.msra.mxu0 0.0
        %3516 = vmatpush.xpose.msra.mxu0 0.0
        %3517 = vmatpush.xpose.msra.mxu0 0.0
        %3518 = vmatpush.xpose.msra.mxu0 0.0
        %3519 = vmatpush.xpose.msra.mxu0 0.0
        %3520 = vmatpush.xpose.msra.mxu0 0.0
        %3521 = vmatpush.xpose.msra.mxu0 0.0
        %3522 = vmatpush.xpose.msra.mxu0 0.0
        %3523 = vmatpush.xpose.msra.mxu0 %v3507
        %3524 = vmatpush.xpose.msra.mxu0 %v3505
        %3525 = vmatmul.f32.gmra.mxu0 %v3503
        %v3526 = vpop.f32.mrf.mxu0
        %v3527 = vadd.f32 0.0, %v3526
        %3528 = vdwg.mxu0
        %v3529 = vmul.f32 %v3527, 0.35355338
        %v3530 = vsel %vm1316, %v3529, -inf
        %3531 = vmax.xlane.f32.xlu0 %v3530
        %v3532 = vpop.xlane.xlu0 %3531
        %v3533 = vsub.f32 %v3529, %v3532
        %v3534 = vmul.f32 %v3533, 1.442695
        %v3535 = vpow.pop %v3534
        %v3536 = vsel %vm1316, %v3535, 0.0
        %3537 = vadd.xlane.f32.xlu0 %v3536
        %v3538 = vpop.xlane.xlu0 %3537
        %v3539 = vrcp.pop %v3538
        %v3540 = vmul.f32 %v3535, %v3539
        %3541 = vrot.lane.b32.xlu0 %v3389, 88
        %v3542 = vpop.permute.xlu0 %3541
        %3543 = vrot.lane.b32.xlu0 %v3392, 88
        %v3544 = vpop.permute.xlu0 %3543
        %v3547 = vsel %vm1316, %v3540, 0
        %v3549 = vsel %vm1351, %v3544, 0
        %3551 = vmatpush.msra.mxu0 0.0
        %3552 = vmatpush.msra.mxu0 0.0
        %3553 = vmatpush.msra.mxu0 0.0
        %3554 = vmatpush.msra.mxu0 0.0
        %3555 = vmatpush.msra.mxu0 0.0
        %3556 = vmatpush.msra.mxu0 0.0
        %3557 = vmatpush.msra.mxu0 0.0
        %3558 = vmatpush.msra.mxu0 0.0
        %3559 = vmatpush.msra.mxu0 0.0
        %3560 = vmatpush.msra.mxu0 0.0
        %3561 = vmatpush.msra.mxu0 0.0
        %3562 = vmatpush.msra.mxu0 0.0
        %3563 = vmatpush.msra.mxu0 0.0
        %3564 = vmatpush.msra.mxu0 0.0
        %3565 = vmatpush.msra.mxu0 %v3549
        %3566 = vmatpush.msra.mxu0 %v3542
        %3567 = vmatmul.f32.gmra.mxu0 %v3547
        %v3568 = vpop.f32.mrf.mxu0
        %v3569 = vadd.f32 0.0, %v3568
        %3570 = vdwg.mxu0
        %v3572 = vsel %vm1277, %v3569, 0
        %3574 = vmatpush.msra.mxu0 0.0
        %3575 = vmatpush.msra.mxu0 0.0
        %3576 = vmatpush.msra.mxu0 0.0
        %3577 = vmatpush.msra.mxu0 0.0
        %3578 = vmatpush.msra.mxu0 0.0
        %3579 = vmatpush.msra.mxu0 0.0
        %3580 = vmatpush.msra.mxu0 0.0
        %3581 = vmatpush.msra.mxu0 0.0
        %3582 = vmatpush.msra.mxu0 0.0
        %3583 = vmatpush.msra.mxu0 0.0
        %3584 = vmatpush.msra.mxu0 0.0
        %3585 = vmatpush.msra.mxu0 0.0
        %3586 = vmatpush.msra.mxu0 0.0
        %3587 = vmatpush.msra.mxu0 0.0
        %3588 = vmatpush.msra.mxu0 0.0
        %3589 = vmatpush.msra.mxu0 %v3395
        %3590 = vmatmul.f32.gmra.mxu0 %v3572
        %v3591 = vpop.f32.mrf.mxu0
        %v3592 = vadd.f32 0.0, %v3591
        %3593 = vdwg.mxu0
        %v3594 = vadd.f32 %v3496, %v3592
        %3595 = vrot.lane.b32.xlu0 %v3358, 112
        %v3596 = vpop.permute.xlu0 %3595
        %3597 = vrot.lane.b32.xlu0 %v3389, 112
        %v3598 = vpop.permute.xlu0 %3597
        %3599 = vrot.lane.b32.xlu0 %v3392, 112
        %v3600 = vpop.permute.xlu0 %3599
        %v3601 = vsel %vm1277, %v3596, 0
        %v3603 = vsel %vm1277, %v3598, 0
        %v3605 = vsel %vm1277, %v3600, 0
        %3607 = vmatpush.xpose.msra.mxu0 0.0
        %3608 = vmatpush.xpose.msra.mxu0 0.0
        %3609 = vmatpush.xpose.msra.mxu0 0.0
        %3610 = vmatpush.xpose.msra.mxu0 0.0
        %3611 = vmatpush.xpose.msra.mxu0 0.0
        %3612 = vmatpush.xpose.msra.mxu0 0.0
        %3613 = vmatpush.xpose.msra.mxu0 0.0
        %3614 = vmatpush.xpose.msra.mxu0 0.0
        %3615 = vmatpush.xpose.msra.mxu0 0.0
        %3616 = vmatpush.xpose.msra.mxu0 0.0
        %3617 = vmatpush.xpose.msra.mxu0 0.0
        %3618 = vmatpush.xpose.msra.mxu0 0.0
        %3619 = vmatpush.xpose.msra.mxu0 0.0
        %3620 = vmatpush.xpose.msra.mxu0 0.0
        %3621 = vmatpush.xpose.msra.mxu0 %v3605
        %3622 = vmatpush.xpose.msra.mxu0 %v3603
        %3623 = vmatmul.f32.gmra.mxu0 %v3601
        %v3624 = vpop.f32.mrf.mxu0
        %v3625 = vadd.f32 0.0, %v3624
        %3626 = vdwg.mxu0
        %v3627 = vmul.f32 %v3625, 0.35355338
        %v3628 = vsel %vm1316, %v3627, -inf
        %3629 = vmax.xlane.f32.xlu0 %v3628
        %v3630 = vpop.xlane.xlu0 %3629
        %v3631 = vsub.f32 %v3627, %v3630
        %v3632 = vmul.f32 %v3631, 1.442695
        %v3633 = vpow.pop %v3632
        %v3634 = vsel %vm1316, %v3633, 0.0
        %3635 = vadd.xlane.f32.xlu0 %v3634
        %v3636 = vpop.xlane.xlu0 %3635
        %v3637 = vrcp.pop %v3636
        %v3638 = vmul.f32 %v3633, %v3637
        %3639 = vrot.lane.b32.xlu0 %v3389, 80
        %v3640 = vpop.permute.xlu0 %3639
        %3641 = vrot.lane.b32.xlu0 %v3392, 80
        %v3642 = vpop.permute.xlu0 %3641
        %v3645 = vsel %vm1316, %v3638, 0
        %v3647 = vsel %vm1351, %v3642, 0
        %3649 = vmatpush.msra.mxu0 0.0
        %3650 = vmatpush.msra.mxu0 0.0
        %3651 = vmatpush.msra.mxu0 0.0
        %3652 = vmatpush.msra.mxu0 0.0
        %3653 = vmatpush.msra.mxu0 0.0
        %3654 = vmatpush.msra.mxu0 0.0
        %3655 = vmatpush.msra.mxu0 0.0
        %3656 = vmatpush.msra.mxu0 0.0
        %3657 = vmatpush.msra.mxu0 0.0
        %3658 = vmatpush.msra.mxu0 0.0
        %3659 = vmatpush.msra.mxu0 0.0
        %3660 = vmatpush.msra.mxu0 0.0
        %3661 = vmatpush.msra.mxu0 0.0
        %3662 = vmatpush.msra.mxu0 0.0
        %3663 = vmatpush.msra.mxu0 %v3647
        %3664 = vmatpush.msra.mxu0 %v3640
        %3665 = vmatmul.f32.gmra.mxu0 %v3645
        %v3666 = vpop.f32.mrf.mxu0
        %v3667 = vadd.f32 0.0, %v3666
        %3668 = vdwg.mxu0
        %v3670 = vsel %vm1277, %v3667, 0
        %3672 = vmatpush.msra.mxu0 0.0
        %3673 = vmatpush.msra.mxu0 0.0
        %3674 = vmatpush.msra.mxu0 0.0
        %3675 = vmatpush.msra.mxu0 0.0
        %3676 = vmatpush.msra.mxu0 0.0
        %3677 = vmatpush.msra.mxu0 0.0
        %3678 = vmatpush.msra.mxu0 0.0
        %3679 = vmatpush.msra.mxu0 0.0
        %3680 = vmatpush.msra.mxu0 0.0
        %3681 = vmatpush.msra.mxu0 0.0
        %3682 = vmatpush.msra.mxu0 0.0
        %3683 = vmatpush.msra.mxu0 0.0
        %3684 = vmatpush.msra.mxu0 0.0
        %3685 = vmatpush.msra.mxu0 0.0
        %3686 = vmatpush.msra.mxu0 0.0
        %3687 = vmatpush.msra.mxu0 %v3396
        %3688 = vmatmul.f32.gmra.mxu0 %v3670
        %v3689 = vpop.f32.mrf.mxu0
        %v3690 = vadd.f32 0.0, %v3689
        %3691 = vdwg.mxu0
        %v3692 = vadd.f32 %v3594, %v3690
        %3693 = vrot.lane.b32.xlu0 %v3358, 104
        %v3694 = vpop.permute.xlu0 %3693
        %3695 = vrot.lane.b32.xlu0 %v3389, 104
        %v3696 = vpop.permute.xlu0 %3695
        %3697 = vrot.lane.b32.xlu0 %v3392, 104
        %v3698 = vpop.permute.xlu0 %3697
        %v3699 = vsel %vm1277, %v3694, 0
        %v3701 = vsel %vm1277, %v3696, 0
        %v3703 = vsel %vm1277, %v3698, 0
        %3705 = vmatpush.xpose.msra.mxu0 0.0
        %3706 = vmatpush.xpose.msra.mxu0 0.0
        %3707 = vmatpush.xpose.msra.mxu0 0.0
        %3708 = vmatpush.xpose.msra.mxu0 0.0
        %3709 = vmatpush.xpose.msra.mxu0 0.0
        %3710 = vmatpush.xpose.msra.mxu0 0.0
        %3711 = vmatpush.xpose.msra.mxu0 0.0
        %3712 = vmatpush.xpose.msra.mxu0 0.0
        %3713 = vmatpush.xpose.msra.mxu0 0.0
        %3714 = vmatpush.xpose.msra.mxu0 0.0
        %3715 = vmatpush.xpose.msra.mxu0 0.0
        %3716 = vmatpush.xpose.msra.mxu0 0.0
        %3717 = vmatpush.xpose.msra.mxu0 0.0
        %3718 = vmatpush.xpose.msra.mxu0 0.0
        %3719 = vmatpush.xpose.msra.mxu0 %v3703
        %3720 = vmatpush.xpose.msra.mxu0 %v3701
        %3721 = vmatmul.f32.gmra.mxu0 %v3699
        %v3722 = vpop.f32.mrf.mxu0
        %v3723 = vadd.f32 0.0, %v3722
        %3724 = vdwg.mxu0
        %v3725 = vmul.f32 %v3723, 0.35355338
        %v3726 = vsel %vm1316, %v3725, -inf
        %3727 = vmax.xlane.f32.xlu0 %v3726
        %v3728 = vpop.xlane.xlu0 %3727
        %v3729 = vsub.f32 %v3725, %v3728
        %v3730 = vmul.f32 %v3729, 1.442695
        %v3731 = vpow.pop %v3730
        %v3732 = vsel %vm1316, %v3731, 0.0
        %3733 = vadd.xlane.f32.xlu0 %v3732
        %v3734 = vpop.xlane.xlu0 %3733
        %v3735 = vrcp.pop %v3734
        %v3736 = vmul.f32 %v3731, %v3735
        %3737 = vrot.lane.b32.xlu0 %v3389, 72
        %v3738 = vpop.permute.xlu0 %3737
        %3739 = vrot.lane.b32.xlu0 %v3392, 72
        %v3740 = vpop.permute.xlu0 %3739
        %v3743 = vsel %vm1316, %v3736, 0
        %v3745 = vsel %vm1351, %v3740, 0
        %3747 = vmatpush.msra.mxu0 0.0
        %3748 = vmatpush.msra.mxu0 0.0
        %3749 = vmatpush.msra.mxu0 0.0
        %3750 = vmatpush.msra.mxu0 0.0
        %3751 = vmatpush.msra.mxu0 0.0
        %3752 = vmatpush.msra.mxu0 0.0
        %3753 = vmatpush.msra.mxu0 0.0
        %3754 = vmatpush.msra.mxu0 0.0
        %3755 = vmatpush.msra.mxu0 0.0
        %3756 = vmatpush.msra.mxu0 0.0
        %3757 = vmatpush.msra.mxu0 0.0
        %3758 = vmatpush.msra.mxu0 0.0
        %3759 = vmatpush.msra.mxu0 0.0
        %3760 = vmatpush.msra.mxu0 0.0
        %3761 = vmatpush.msra.mxu0 %v3745
        %3762 = vmatpush.msra.mxu0 %v3738
        %3763 = vmatmul.f32.gmra.mxu0 %v3743
        %v3764 = vpop.f32.mrf.mxu0
        %v3765 = vadd.f32 0.0, %v3764
        %3766 = vdwg.mxu0
        %v3768 = vsel %vm1277, %v3765, 0
        %3770 = vmatpush.msra.mxu0 0.0
        %3771 = vmatpush.msra.mxu0 0.0
        %3772 = vmatpush.msra.mxu0 0.0
        %3773 = vmatpush.msra.mxu0 0.0
        %3774 = vmatpush.msra.mxu0 0.0
        %3775 = vmatpush.msra.mxu0 0.0
        %3776 = vmatpush.msra.mxu0 0.0
        %3777 = vmatpush.msra.mxu0 0.0
        %3778 = vmatpush.msra.mxu0 0.0
        %3779 = vmatpush.msra.mxu0 0.0
        %3780 = vmatpush.msra.mxu0 0.0
        %3781 = vmatpush.msra.mxu0 0.0
        %3782 = vmatpush.msra.mxu0 0.0
        %3783 = vmatpush.msra.mxu0 0.0
        %3784 = vmatpush.msra.mxu0 0.0
        %3785 = vmatpush.msra.mxu0 %v3397
        %3786 = vmatmul.f32.gmra.mxu0 %v3768
        %v3787 = vpop.f32.mrf.mxu0
        %v3788 = vadd.f32 0.0, %v3787
        %3789 = vdwg.mxu0
        %v3790 = vadd.f32 %v3692, %v3788
        %v3791 = vadd.f32 %v3328, %v3790
        %v3792 = vld [vmem:[%s53] sm:$0x3]
        %v3793 = vsel %vm1169, %v3791, 0.0
        %3794 = vadd.xlane.f32.xlu0 %v3793
        %v3795 = vpop.xlane.xlu0 %3794
        %v3796 = vmul.f32 %v3795, %v1183
        %v3797 = vsub.f32 %v3791, %v3796
        %v3798 = vmul.f32 %v3797, %v3797
        %v3799 = vsel %vm1169, %v3798, 0.0
        %3800 = vadd.xlane.f32.xlu0 %v3799
        %v3801 = vpop.xlane.xlu0 %3800
        %v3802 = vmul.f32 %v3801, %v1183
        %v3803 = vadd.f32 %v3802, 1e-05
        %v3804 = vrsqrt.pop %v3803
        %v3805 = vmul.f32 %v3804, %v3803
        %v3806 = vmul.f32 %v3805, %v3804
        %v3807 = vmul.f32 0.5, %v3806
        %v3808 = vsub.f32 1.5, %v3807
        %v3809 = vmul.f32 %v3804, %v3808
        %vm3810 = vweird.f32 %v3803
        %vm3811 = vweird.f32 %v3804
        %vm3812 = vmor %vm3810, %vm3811
        %v3813 = vsel %vm3812, %v3804, %v3809
        %v3814 = vmul.f32 %v3797, %v3813
        %v3815 = vperm.slane %v3792, 0
        %v3816 = vmul.f32 %v3814, %v3815
        %v3817 = vperm.slane %v3792, 1
        %v3818 = vadd.f32 %v3816, %v3817
        %v3819 = vld [vmem:[%s55] sm:$0xff]
        %v3820 = vld [vmem:[%s55 + $0x8] sm:$0xff]
        %v3821 = vld [vmem:[%s55 + $0x10] sm:$0xff]
        %v3822 = vld [vmem:[%s55 + $0x18] sm:$0xff]
        %v3823 = vld [vmem:[%s57] sm:$0x1]
        %v3825 = vperm.slane %v3823, 0
        %v3828 = vsel %vm1169, %v3818, 0
        %3830 = vmatpush.msra.mxu0 0.0
        %3831 = vmatpush.msra.mxu0 0.0
        %3832 = vmatpush.msra.mxu0 0.0
        %3833 = vmatpush.msra.mxu0 0.0
        %3834 = vmatpush.msra.mxu0 0.0
        %3835 = vmatpush.msra.mxu0 0.0
        %3836 = vmatpush.msra.mxu0 0.0
        %3837 = vmatpush.msra.mxu0 0.0
        %3838 = vmatpush.msra.mxu0 0.0
        %3839 = vmatpush.msra.mxu0 0.0
        %3840 = vmatpush.msra.mxu0 0.0
        %3841 = vmatpush.msra.mxu0 0.0
        %3842 = vmatpush.msra.mxu0 %v3822
        %3843 = vmatpush.msra.mxu0 %v3821
        %3844 = vmatpush.msra.mxu0 %v3820
        %3845 = vmatpush.msra.mxu0 %v3819
        %3846 = vmatmul.f32.gmra.mxu0 %v3828
        %v3847 = vpop.f32.mrf.mxu0
        %v3848 = vadd.f32 %v3825, %v3847
        %3849 = vdwg.mxu0
        %v3850 = vmul.f32 %v3848, 0.5
        %v3851 = vmul.f32 %v3848, 0.044715
        %v3852 = vmul.f32 %v3851, %v3848
        %v3853 = vmul.f32 %v3852, %v3848
        %v3854 = vadd.f32 %v3848, %v3853
        %v3855 = vmul.f32 %v3854, 0.7978846
        %v3856 = vtanh.pop %v3855
        %v3857 = vadd.f32 %v3856, 1.0
        %v3858 = vmul.f32 %v3850, %v3857
        %v3859 = vld [vmem:[%s59] sm:$0xff]
        %v3860 = vld [vmem:[%s59 + $0x8] sm:$0xff]
        %v3861 = vld [vmem:[%s59 + $0x10] sm:$0xff]
        %v3862 = vld [vmem:[%s59 + $0x18] sm:$0xff]
        %v3863 = vld [vmem:[%s59 + $0x20] sm:$0xff]
        %v3864 = vld [vmem:[%s59 + $0x28] sm:$0xff]
        %v3865 = vld [vmem:[%s59 + $0x30] sm:$0xff]
        %v3866 = vld [vmem:[%s59 + $0x38] sm:$0xff]
        %v3867 = vld [vmem:[%s61] sm:$0x1]
        %v3869 = vperm.slane %v3867, 0
        %v3872 = vsel %vm1927, %v3858, 0
        %3874 = vmatpush.msra.mxu0 0.0
        %3875 = vmatpush.msra.mxu0 0.0
        %3876 = vmatpush.msra.mxu0 0.0
        %3877 = vmatpush.msra.mxu0 0.0
        %3878 = vmatpush.msra.mxu0 0.0
        %3879 = vmatpush.msra.mxu0 0.0
        %3880 = vmatpush.msra.mxu0 0.0
        %3881 = vmatpush.msra.mxu0 0.0
        %3882 = vmatpush.msra.mxu0 %v3866
        %3883 = vmatpush.msra.mxu0 %v3865
        %3884 = vmatpush.msra.mxu0 %v3864
        %3885 = vmatpush.msra.mxu0 %v3863
        %3886 = vmatpush.msra.mxu0 %v3862
        %3887 = vmatpush.msra.mxu0 %v3861
        %3888 = vmatpush.msra.mxu0 %v3860
        %3889 = vmatpush.msra.mxu0 %v3859
        %3890 = vmatmul.f32.gmra.mxu0 %v3872
        %v3891 = vpop.f32.mrf.mxu0
        %v3892 = vadd.f32 %v3869, %v3891
        %3893 = vdwg.mxu0
        %v3894 = vadd.f32 %v3818, %v3892
        %v3895 = vld [vmem:[%s63] sm:$0x3]
        %v3896 = vsel %vm1169, %v3894, 0.0
        %3897 = vadd.xlane.f32.xlu0 %v3896
        %v3898 = vpop.xlane.xlu0 %3897
        %v3899 = vmul.f32 %v3898, %v1183
        %v3900 = vsub.f32 %v3894, %v3899
        %v3901 = vmul.f32 %v3900, %v3900
        %v3902 = vsel %vm1169, %v3901, 0.0
        %3903 = vadd.xlane.f32.xlu0 %v3902
        %v3904 = vpop.xlane.xlu0 %3903
        %v3905 = vmul.f32 %v3904, %v1183
        %v3906 = vadd.f32 %v3905, 1e-05
        %v3907 = vrsqrt.pop %v3906
        %v3908 = vmul.f32 %v3907, %v3906
        %v3909 = vmul.f32 %v3908, %v3907
        %v3910 = vmul.f32 0.5, %v3909
        %v3911 = vsub.f32 1.5, %v3910
        %v3912 = vmul.f32 %v3907, %v3911
        %vm3913 = vweird.f32 %v3906
        %vm3914 = vweird.f32 %v3907
        %vm3915 = vmor %vm3913, %vm3914
        %v3916 = vsel %vm3915, %v3907, %v3912
        %v3917 = vmul.f32 %v3900, %v3916
        %v3918 = vperm.slane %v3895, 0
        %v3919 = vmul.f32 %v3917, %v3918
        %v3920 = vperm.slane %v3895, 1
        %v3921 = vadd.f32 %v3919, %v3920
        %s3922 = scalar_lea.vmem %s31, 32
        %v3923 = vld [vmem:[%s3922] sm:$0xff]
        %v3924 = vld [vmem:[%s3922 + $0x8] sm:$0xff]
        %v3925 = vld [vmem:[%s3922 + $0x10] sm:$0xff]
        %v3926 = vld [vmem:[%s3922 + $0x18] sm:$0xff]
        %s3927 = scalar_lea.vmem %s33, 1
        %v3928 = vld [vmem:[%s3927] sm:$0x1]
        %v3930 = vperm.slane %v3928, 0
        %v3933 = vsel %vm1169, %v3921, 0
        %3935 = vmatpush.msra.mxu0 0.0
        %3936 = vmatpush.msra.mxu0 0.0
        %3937 = vmatpush.msra.mxu0 0.0
        %3938 = vmatpush.msra.mxu0 0.0
        %3939 = vmatpush.msra.mxu0 0.0
        %3940 = vmatpush.msra.mxu0 0.0
        %3941 = vmatpush.msra.mxu0 0.0
        %3942 = vmatpush.msra.mxu0 0.0
        %3943 = vmatpush.msra.mxu0 0.0
        %3944 = vmatpush.msra.mxu0 0.0
        %3945 = vmatpush.msra.mxu0 0.0
        %3946 = vmatpush.msra.mxu0 0.0
        %3947 = vmatpush.msra.mxu0 %v3926
        %3948 = vmatpush.msra.mxu0 %v3925
        %3949 = vmatpush.msra.mxu0 %v3924
        %3950 = vmatpush.msra.mxu0 %v3923
        %3951 = vmatmul.f32.gmra.mxu0 %v3933
        %v3952 = vpop.f32.mrf.mxu0
        %v3953 = vadd.f32 %v3930, %v3952
        %3954 = vdwg.mxu0
        %s3955 = scalar_lea.vmem %s35, 32
        %v3956 = vld [vmem:[%s3955] sm:$0xff]
        %v3957 = vld [vmem:[%s3955 + $0x8] sm:$0xff]
        %v3958 = vld [vmem:[%s3955 + $0x10] sm:$0xff]
        %v3959 = vld [vmem:[%s3955 + $0x18] sm:$0xff]
        %s3960 = scalar_lea.vmem %s37, 1
        %v3961 = vld [vmem:[%s3960] sm:$0x1]
        %3963 = vrot.lane.b32.xlu0 %v3953, 96
        %v3964 = vpop.permute.xlu0 %3963
        %v3965 = vsel %vm1277, %v3953, 0
        %v3967 = vsel %vm1277, %v3964, 0
        %3969 = vmatpush.xpose.msra.mxu0 0.0
        %3970 = vmatpush.xpose.msra.mxu0 0.0
        %3971 = vmatpush.xpose.msra.mxu0 0.0
        %3972 = vmatpush.xpose.msra.mxu0 0.0
        %3973 = vmatpush.xpose.msra.mxu0 0.0
        %3974 = vmatpush.xpose.msra.mxu0 0.0
        %3975 = vmatpush.xpose.msra.mxu0 0.0
        %3976 = vmatpush.xpose.msra.mxu0 0.0
        %3977 = vmatpush.xpose.msra.mxu0 0.0
        %3978 = vmatpush.xpose.msra.mxu0 0.0
        %3979 = vmatpush.xpose.msra.mxu0 0.0
        %3980 = vmatpush.xpose.msra.mxu0 0.0
        %3981 = vmatpush.xpose.msra.mxu0 0.0
        %3982 = vmatpush.xpose.msra.mxu0 0.0
        %3983 = vmatpush.xpose.msra.mxu0 0.0
        %3984 = vmatpush.xpose.msra.mxu0 %v3967
        %3985 = vmatmul.f32.gmra.mxu0 %v3965
        %v3986 = vpop.f32.mrf.mxu0
        %v3987 = vadd.f32 0.0, %v3986
        %3988 = vdwg.mxu0
        %v3989 = vmul.f32 %v3987, 0.35355338
        %v3990 = vadd.f32 %v3989, %v2898
        %v3991 = vsel %vm1277, %v3990, -inf
        %3992 = vmax.xlane.f32.xlu0 %v3991
        %v3993 = vpop.xlane.xlu0 %3992
        %v3994 = vsub.f32 %v3990, %v3993
        %v3995 = vmul.f32 %v3994, 1.442695
        %v3996 = vpow.pop %v3995
        %v3997 = vsel %vm1277, %v3996, 0.0
        %3998 = vadd.xlane.f32.xlu0 %v3997
        %v3999 = vpop.xlane.xlu0 %3998
        %v4000 = vrcp.pop %v3999
        %v4001 = vmul.f32 %v3996, %v4000
        %4002 = vrot.lane.b32.xlu0 %v3953, 64
        %v4003 = vpop.permute.xlu0 %4002
        %v4006 = vsel %vm1277, %v4001, 0
        %4008 = vmatpush.msra.mxu0 0.0
        %4009 = vmatpush.msra.mxu0 0.0
        %4010 = vmatpush.msra.mxu0 0.0
        %4011 = vmatpush.msra.mxu0 0.0
        %4012 = vmatpush.msra.mxu0 0.0
        %4013 = vmatpush.msra.mxu0 0.0
        %4014 = vmatpush.msra.mxu0 0.0
        %4015 = vmatpush.msra.mxu0 0.0
        %4016 = vmatpush.msra.mxu0 0.0
        %4017 = vmatpush.msra.mxu0 0.0
        %4018 = vmatpush.msra.mxu0 0.0
        %4019 = vmatpush.msra.mxu0 0.0
        %4020 = vmatpush.msra.mxu0 0.0
        %4021 = vmatpush.msra.mxu0 0.0
        %4022 = vmatpush.msra.mxu0 0.0
        %4023 = vmatpush.msra.mxu0 %v4003
        %4024 = vmatmul.f32.gmra.mxu0 %v4006
        %v4025 = vpop.f32.mrf.mxu0
        %v4026 = vadd.f32 0.0, %v4025
        %4027 = vdwg.mxu0
        %v4029 = vsel %vm1277, %v4026, 0
        %4031 = vmatpush.msra.mxu0 0.0
        %4032 = vmatpush.msra.mxu0 0.0
        %4033 = vmatpush.msra.mxu0 0.0
        %4034 = vmatpush.msra.mxu0 0.0
        %4035 = vmatpush.msra.mxu0 0.0
        %4036 = vmatpush.msra.mxu0 0.0
        %4037 = vmatpush.msra.mxu0 0.0
        %4038 = vmatpush.msra.mxu0 0.0
        %4039 = vmatpush.msra.mxu0 0.0
        %4040 = vmatpush.msra.mxu0 0.0
        %4041 = vmatpush.msra.mxu0 0.0
        %4042 = vmatpush.msra.mxu0 0.0
        %4043 = vmatpush.msra.mxu0 0.0
        %4044 = vmatpush.msra.mxu0 0.0
        %4045 = vmatpush.msra.mxu0 0.0
        %4046 = vmatpush.msra.mxu0 %v3956
        %4047 = vmatmul.f32.gmra.mxu0 %v4029
        %v4048 = vpop.f32.mrf.mxu0
        %v4049 = vadd.f32 0.0, %v4048
        %4050 = vdwg.mxu0
        %v4052 = vperm.slane %v3961, 0
        %v4054 = vadd.f32 %v4052, %v4049
        %4055 = vrot.lane.b32.xlu0 %v3953, 120
        %v4056 = vpop.permute.xlu0 %4055
        %4057 = vrot.lane.b32.xlu0 %v3953, 88
        %v4058 = vpop.permute.xlu0 %4057
        %v4059 = vsel %vm1277, %v4056, 0
        %v4061 = vsel %vm1277, %v4058, 0
        %4063 = vmatpush.xpose.msra.mxu0 0.0
        %4064 = vmatpush.xpose.msra.mxu0 0.0
        %4065 = vmatpush.xpose.msra.mxu0 0.0
        %4066 = vmatpush.xpose.msra.mxu0 0.0
        %4067 = vmatpush.xpose.msra.mxu0 0.0
        %4068 = vmatpush.xpose.msra.mxu0 0.0
        %4069 = vmatpush.xpose.msra.mxu0 0.0
        %4070 = vmatpush.xpose.msra.mxu0 0.0
        %4071 = vmatpush.xpose.msra.mxu0 0.0
        %4072 = vmatpush.xpose.msra.mxu0 0.0
        %4073 = vmatpush.xpose.msra.mxu0 0.0
        %4074 = vmatpush.xpose.msra.mxu0 0.0
        %4075 = vmatpush.xpose.msra.mxu0 0.0
        %4076 = vmatpush.xpose.msra.mxu0 0.0
        %4077 = vmatpush.xpose.msra.mxu0 0.0
        %4078 = vmatpush.xpose.msra.mxu0 %v4061
        %4079 = vmatmul.f32.gmra.mxu0 %v4059
        %v4080 = vpop.f32.mrf.mxu0
        %v4081 = vadd.f32 0.0, %v4080
        %4082 = vdwg.mxu0
        %v4083 = vmul.f32 %v4081, 0.35355338
        %v4084 = vadd.f32 %v4083, %v2898
        %v4085 = vsel %vm1277, %v4084, -inf
        %4086 = vmax.xlane.f32.xlu0 %v4085
        %v4087 = vpop.xlane.xlu0 %4086
        %v4088 = vsub.f32 %v4084, %v4087
        %v4089 = vmul.f32 %v4088, 1.442695
        %v4090 = vpow.pop %v4089
        %v4091 = vsel %vm1277, %v4090, 0.0
        %4092 = vadd.xlane.f32.xlu0 %v4091
        %v4093 = vpop.xlane.xlu0 %4092
        %v4094 = vrcp.pop %v4093
        %v4095 = vmul.f32 %v4090, %v4094
        %4096 = vrot.lane.b32.xlu0 %v3953, 56
        %v4097 = vpop.permute.xlu0 %4096
        %v4100 = vsel %vm1277, %v4095, 0
        %4102 = vmatpush.msra.mxu0 0.0
        %4103 = vmatpush.msra.mxu0 0.0
        %4104 = vmatpush.msra.mxu0 0.0
        %4105 = vmatpush.msra.mxu0 0.0
        %4106 = vmatpush.msra.mxu0 0.0
        %4107 = vmatpush.msra.mxu0 0.0
        %4108 = vmatpush.msra.mxu0 0.0
        %4109 = vmatpush.msra.mxu0 0.0
        %4110 = vmatpush.msra.mxu0 0.0
        %4111 = vmatpush.msra.mxu0 0.0
        %4112 = vmatpush.msra.mxu0 0.0
        %4113 = vmatpush.msra.mxu0 0.0
        %4114 = vmatpush.msra.mxu0 0.0
        %4115 = vmatpush.msra.mxu0 0.0
        %4116 = vmatpush.msra.mxu0 0.0
        %4117 = vmatpush.msra.mxu0 %v4097
        %4118 = vmatmul.f32.gmra.mxu0 %v4100
        %v4119 = vpop.f32.mrf.mxu0
        %v4120 = vadd.f32 0.0, %v4119
        %4121 = vdwg.mxu0
        %v4123 = vsel %vm1277, %v4120, 0
        %4125 = vmatpush.msra.mxu0 0.0
        %4126 = vmatpush.msra.mxu0 0.0
        %4127 = vmatpush.msra.mxu0 0.0
        %4128 = vmatpush.msra.mxu0 0.0
        %4129 = vmatpush.msra.mxu0 0.0
        %4130 = vmatpush.msra.mxu0 0.0
        %4131 = vmatpush.msra.mxu0 0.0
        %4132 = vmatpush.msra.mxu0 0.0
        %4133 = vmatpush.msra.mxu0 0.0
        %4134 = vmatpush.msra.mxu0 0.0
        %4135 = vmatpush.msra.mxu0 0.0
        %4136 = vmatpush.msra.mxu0 0.0
        %4137 = vmatpush.msra.mxu0 0.0
        %4138 = vmatpush.msra.mxu0 0.0
        %4139 = vmatpush.msra.mxu0 0.0
        %4140 = vmatpush.msra.mxu0 %v3957
        %4141 = vmatmul.f32.gmra.mxu0 %v4123
        %v4142 = vpop.f32.mrf.mxu0
        %v4143 = vadd.f32 0.0, %v4142
        %4144 = vdwg.mxu0
        %v4145 = vadd.f32 %v4054, %v4143
        %4146 = vrot.lane.b32.xlu0 %v3953, 112
        %v4147 = vpop.permute.xlu0 %4146
        %4148 = vrot.lane.b32.xlu0 %v3953, 80
        %v4149 = vpop.permute.xlu0 %4148
        %v4150 = vsel %vm1277, %v4147, 0
        %v4152 = vsel %vm1277, %v4149, 0
        %4154 = vmatpush.xpose.msra.mxu0 0.0
        %4155 = vmatpush.xpose.msra.mxu0 0.0
        %4156 = vmatpush.xpose.msra.mxu0 0.0
        %4157 = vmatpush.xpose.msra.mxu0 0.0
        %4158 = vmatpush.xpose.msra.mxu0 0.0
        %4159 = vmatpush.xpose.msra.mxu0 0.0
        %4160 = vmatpush.xpose.msra.mxu0 0.0
        %4161 = vmatpush.xpose.msra.mxu0 0.0
        %4162 = vmatpush.xpose.msra.mxu0 0.0
        %4163 = vmatpush.xpose.msra.mxu0 0.0
        %4164 = vmatpush.xpose.msra.mxu0 0.0
        %4165 = vmatpush.xpose.msra.mxu0 0.0
        %4166 = vmatpush.xpose.msra.mxu0 0.0
        %4167 = vmatpush.xpose.msra.mxu0 0.0
        %4168 = vmatpush.xpose.msra.mxu0 0.0
        %4169 = vmatpush.xpose.msra.mxu0 %v4152
        %4170 = vmatmul.f32.gmra.mxu0 %v4150
        %v4171 = vpop.f32.mrf.mxu0
        %v4172 = vadd.f32 0.0, %v4171
        %4173 = vdwg.mxu0
        %v4174 = vmul.f32 %v4172, 0.35355338
        %v4175 = vadd.f32 %v4174, %v2898
        %v4176 = vsel %vm1277, %v4175, -inf
        %4177 = vmax.xlane.f32.xlu0 %v4176
        %v4178 = vpop.xlane.xlu0 %4177
        %v4179 = vsub.f32 %v4175, %v4178
        %v4180 = vmul.f32 %v4179, 1.442695
        %v4181 = vpow.pop %v4180
        %v4182 = vsel %vm1277, %v4181, 0.0
        %4183 = vadd.xlane.f32.xlu0 %v4182
        %v4184 = vpop.xlane.xlu0 %4183
        %v4185 = vrcp.pop %v4184
        %v4186 = vmul.f32 %v4181, %v4185
        %4187 = vrot.lane.b32.xlu0 %v3953, 48
        %v4188 = vpop.permute.xlu0 %4187
        %v4191 = vsel %vm1277, %v4186, 0
        %4193 = vmatpush.msra.mxu0 0.0
        %4194 = vmatpush.msra.mxu0 0.0
        %4195 = vmatpush.msra.mxu0 0.0
        %4196 = vmatpush.msra.mxu0 0.0
        %4197 = vmatpush.msra.mxu0 0.0
        %4198 = vmatpush.msra.mxu0 0.0
        %4199 = vmatpush.msra.mxu0 0.0
        %4200 = vmatpush.msra.mxu0 0.0
        %4201 = vmatpush.msra.mxu0 0.0
        %4202 = vmatpush.msra.mxu0 0.0
        %4203 = vmatpush.msra.mxu0 0.0
        %4204 = vmatpush.msra.mxu0 0.0
        %4205 = vmatpush.msra.mxu0 0.0
        %4206 = vmatpush.msra.mxu0 0.0
        %4207 = vmatpush.msra.mxu0 0.0
        %4208 = vmatpush.msra.mxu0 %v4188
        %4209 = vmatmul.f32.gmra.mxu0 %v4191
        %v4210 = vpop.f32.mrf.mxu0
        %v4211 = vadd.f32 0.0, %v4210
        %4212 = vdwg.mxu0
        %v4214 = vsel %vm1277, %v4211, 0
        %4216 = vmatpush.msra.mxu0 0.0
        %4217 = vmatpush.msra.mxu0 0.0
        %4218 = vmatpush.msra.mxu0 0.0
        %4219 = vmatpush.msra.mxu0 0.0
        %4220 = vmatpush.msra.mxu0 0.0
        %4221 = vmatpush.msra.mxu0 0.0
        %4222 = vmatpush.msra.mxu0 0.0
        %4223 = vmatpush.msra.mxu0 0.0
        %4224 = vmatpush.msra.mxu0 0.0
        %4225 = vmatpush.msra.mxu0 0.0
        %4226 = vmatpush.msra.mxu0 0.0
        %4227 = vmatpush.msra.mxu0 0.0
        %4228 = vmatpush.msra.mxu0 0.0
        %4229 = vmatpush.msra.mxu0 0.0
        %4230 = vmatpush.msra.mxu0 0.0
        %4231 = vmatpush.msra.mxu0 %v3958
        %4232 = vmatmul.f32.gmra.mxu0 %v4214
        %v4233 = vpop.f32.mrf.mxu0
        %v4234 = vadd.f32 0.0, %v4233
        %4235 = vdwg.mxu0
        %v4236 = vadd.f32 %v4145, %v4234
        %4237 = vrot.lane.b32.xlu0 %v3953, 104
        %v4238 = vpop.permute.xlu0 %4237
        %4239 = vrot.lane.b32.xlu0 %v3953, 72
        %v4240 = vpop.permute.xlu0 %4239
        %v4241 = vsel %vm1277, %v4238, 0
        %v4243 = vsel %vm1277, %v4240, 0
        %4245 = vmatpush.xpose.msra.mxu0 0.0
        %4246 = vmatpush.xpose.msra.mxu0 0.0
        %4247 = vmatpush.xpose.msra.mxu0 0.0
        %4248 = vmatpush.xpose.msra.mxu0 0.0
        %4249 = vmatpush.xpose.msra.mxu0 0.0
        %4250 = vmatpush.xpose.msra.mxu0 0.0
        %4251 = vmatpush.xpose.msra.mxu0 0.0
        %4252 = vmatpush.xpose.msra.mxu0 0.0
        %4253 = vmatpush.xpose.msra.mxu0 0.0
        %4254 = vmatpush.xpose.msra.mxu0 0.0
        %4255 = vmatpush.xpose.msra.mxu0 0.0
        %4256 = vmatpush.xpose.msra.mxu0 0.0
        %4257 = vmatpush.xpose.msra.mxu0 0.0
        %4258 = vmatpush.xpose.msra.mxu0 0.0
        %4259 = vmatpush.xpose.msra.mxu0 0.0
        %4260 = vmatpush.xpose.msra.mxu0 %v4243
        %4261 = vmatmul.f32.gmra.mxu0 %v4241
        %v4262 = vpop.f32.mrf.mxu0
        %v4263 = vadd.f32 0.0, %v4262
        %4264 = vdwg.mxu0
        %v4265 = vmul.f32 %v4263, 0.35355338
        %v4266 = vadd.f32 %v4265, %v2898
        %v4267 = vsel %vm1277, %v4266, -inf
        %4268 = vmax.xlane.f32.xlu0 %v4267
        %v4269 = vpop.xlane.xlu0 %4268
        %v4270 = vsub.f32 %v4266, %v4269
        %v4271 = vmul.f32 %v4270, 1.442695
        %v4272 = vpow.pop %v4271
        %v4273 = vsel %vm1277, %v4272, 0.0
        %4274 = vadd.xlane.f32.xlu0 %v4273
        %v4275 = vpop.xlane.xlu0 %4274
        %v4276 = vrcp.pop %v4275
        %v4277 = vmul.f32 %v4272, %v4276
        %4278 = vrot.lane.b32.xlu0 %v3953, 40
        %v4279 = vpop.permute.xlu0 %4278
        %v4282 = vsel %vm1277, %v4277, 0
        %4284 = vmatpush.msra.mxu0 0.0
        %4285 = vmatpush.msra.mxu0 0.0
        %4286 = vmatpush.msra.mxu0 0.0
        %4287 = vmatpush.msra.mxu0 0.0
        %4288 = vmatpush.msra.mxu0 0.0
        %4289 = vmatpush.msra.mxu0 0.0
        %4290 = vmatpush.msra.mxu0 0.0
        %4291 = vmatpush.msra.mxu0 0.0
        %4292 = vmatpush.msra.mxu0 0.0
        %4293 = vmatpush.msra.mxu0 0.0
        %4294 = vmatpush.msra.mxu0 0.0
        %4295 = vmatpush.msra.mxu0 0.0
        %4296 = vmatpush.msra.mxu0 0.0
        %4297 = vmatpush.msra.mxu0 0.0
        %4298 = vmatpush.msra.mxu0 0.0
        %4299 = vmatpush.msra.mxu0 %v4279
        %4300 = vmatmul.f32.gmra.mxu0 %v4282
        %v4301 = vpop.f32.mrf.mxu0
        %v4302 = vadd.f32 0.0, %v4301
        %4303 = vdwg.mxu0
        %v4305 = vsel %vm1277, %v4302, 0
        %4307 = vmatpush.msra.mxu0 0.0
        %4308 = vmatpush.msra.mxu0 0.0
        %4309 = vmatpush.msra.mxu0 0.0
        %4310 = vmatpush.msra.mxu0 0.0
        %4311 = vmatpush.msra.mxu0 0.0
        %4312 = vmatpush.msra.mxu0 0.0
        %4313 = vmatpush.msra.mxu0 0.0
        %4314 = vmatpush.msra.mxu0 0.0
        %4315 = vmatpush.msra.mxu0 0.0
        %4316 = vmatpush.msra.mxu0 0.0
        %4317 = vmatpush.msra.mxu0 0.0
        %4318 = vmatpush.msra.mxu0 0.0
        %4319 = vmatpush.msra.mxu0 0.0
        %4320 = vmatpush.msra.mxu0 0.0
        %4321 = vmatpush.msra.mxu0 0.0
        %4322 = vmatpush.msra.mxu0 %v3959
        %4323 = vmatmul.f32.gmra.mxu0 %v4305
        %v4324 = vpop.f32.mrf.mxu0
        %v4325 = vadd.f32 0.0, %v4324
        %4326 = vdwg.mxu0
        %v4327 = vadd.f32 %v4236, %v4325
        %v4328 = vadd.f32 %v3921, %v4327
        %s4329 = scalar_lea.vmem %s39, 2
        %v4330 = vld [vmem:[%s4329] sm:$0x3]
        %v4331 = vsel %vm1169, %v4328, 0.0
        %4332 = vadd.xlane.f32.xlu0 %v4331
        %v4333 = vpop.xlane.xlu0 %4332
        %v4334 = vmul.f32 %v4333, %v1183
        %v4335 = vsub.f32 %v4328, %v4334
        %v4336 = vmul.f32 %v4335, %v4335
        %v4337 = vsel %vm1169, %v4336, 0.0
        %4338 = vadd.xlane.f32.xlu0 %v4337
        %v4339 = vpop.xlane.xlu0 %4338
        %v4340 = vmul.f32 %v4339, %v1183
        %v4341 = vadd.f32 %v4340, 1e-05
        %v4342 = vrsqrt.pop %v4341
        %v4343 = vmul.f32 %v4342, %v4341
        %v4344 = vmul.f32 %v4343, %v4342
        %v4345 = vmul.f32 0.5, %v4344
        %v4346 = vsub.f32 1.5, %v4345
        %v4347 = vmul.f32 %v4342, %v4346
        %vm4348 = vweird.f32 %v4341
        %vm4349 = vweird.f32 %v4342
        %vm4350 = vmor %vm4348, %vm4349
        %v4351 = vsel %vm4350, %v4342, %v4347
        %v4352 = vmul.f32 %v4335, %v4351
        %v4353 = vperm.slane %v4330, 0
        %v4354 = vmul.f32 %v4352, %v4353
        %v4355 = vperm.slane %v4330, 1
        %v4356 = vadd.f32 %v4354, %v4355
        %s4357 = scalar_lea.vmem %s41, 32
        %v4358 = vld [vmem:[%s4357] sm:$0xff]
        %v4359 = vld [vmem:[%s4357 + $0x8] sm:$0xff]
        %v4360 = vld [vmem:[%s4357 + $0x10] sm:$0xff]
        %v4361 = vld [vmem:[%s4357 + $0x18] sm:$0xff]
        %s4362 = scalar_lea.vmem %s43, 1
        %v4363 = vld [vmem:[%s4362] sm:$0x1]
        %v4365 = vperm.slane %v4363, 0
        %v4368 = vsel %vm1169, %v4356, 0
        %4370 = vmatpush.msra.mxu0 0.0
        %4371 = vmatpush.msra.mxu0 0.0
        %4372 = vmatpush.msra.mxu0 0.0
        %4373 = vmatpush.msra.mxu0 0.0
        %4374 = vmatpush.msra.mxu0 0.0
        %4375 = vmatpush.msra.mxu0 0.0
        %4376 = vmatpush.msra.mxu0 0.0
        %4377 = vmatpush.msra.mxu0 0.0
        %4378 = vmatpush.msra.mxu0 0.0
        %4379 = vmatpush.msra.mxu0 0.0
        %4380 = vmatpush.msra.mxu0 0.0
        %4381 = vmatpush.msra.mxu0 0.0
        %4382 = vmatpush.msra.mxu0 %v4361
        %4383 = vmatpush.msra.mxu0 %v4360
        %4384 = vmatpush.msra.mxu0 %v4359
        %4385 = vmatpush.msra.mxu0 %v4358
        %4386 = vmatmul.f32.gmra.mxu0 %v4368
        %v4387 = vpop.f32.mrf.mxu0
        %v4388 = vadd.f32 %v4365, %v4387
        %4389 = vdwg.mxu0
        %s4390 = scalar_lea.vmem %s45, 32
        %v4391 = vld [vmem:[%s4390] sm:$0xff]
        %v4392 = vld [vmem:[%s4390 + $0x8] sm:$0xff]
        %v4393 = vld [vmem:[%s4390 + $0x10] sm:$0xff]
        %v4394 = vld [vmem:[%s4390 + $0x18] sm:$0xff]
        %s4395 = scalar_lea.vmem %s47, 1
        %v4396 = vld [vmem:[%s4395] sm:$0x1]
        %v4398 = vperm.slane %v4396, 0
        %4400 = vmatpush.msra.mxu0 0.0
        %4401 = vmatpush.msra.mxu0 0.0
        %4402 = vmatpush.msra.mxu0 0.0
        %4403 = vmatpush.msra.mxu0 0.0
        %4404 = vmatpush.msra.mxu0 0.0
        %4405 = vmatpush.msra.mxu0 0.0
        %4406 = vmatpush.msra.mxu0 0.0
        %4407 = vmatpush.msra.mxu0 0.0
        %4408 = vmatpush.msra.mxu0 0.0
        %4409 = vmatpush.msra.mxu0 0.0
        %4410 = vmatpush.msra.mxu0 0.0
        %4411 = vmatpush.msra.mxu0 0.0
        %4412 = vmatpush.msra.mxu0 %v4394
        %4413 = vmatpush.msra.mxu0 %v4393
        %4414 = vmatpush.msra.mxu0 %v4392
        %4415 = vmatpush.msra.mxu0 %v4391
        %4416 = vmatmul.f32.gmra.mxu0 %v2803
        %v4417 = vpop.f32.mrf.mxu0
        %v4418 = vadd.f32 %v4398, %v4417
        %4419 = vmatmul.f32.gmra.mxu0 %v3369
        %v4420 = vpop.f32.mrf.mxu0
        %v4421 = vadd.f32 %v4398, %v4420
        %4422 = vdwg.mxu0
        %s4423 = scalar_lea.vmem %s49, 32
        %v4424 = vld [vmem:[%s4423] sm:$0xff]
        %v4425 = vld [vmem:[%s4423 + $0x8] sm:$0xff]
        %v4426 = vld [vmem:[%s4423 + $0x10] sm:$0xff]
        %v4427 = vld [vmem:[%s4423 + $0x18] sm:$0xff]
        %s4428 = scalar_lea.vmem %s51, 1
        %v4429 = vld [vmem:[%s4428] sm:$0x1]
        %v4431 = vsel %vm1277, %v4388, 0
        %v4434 = vsel %vm1277, %v4418, 0
        %v4437 = vsel %vm1277, %v4421, 0
        %4439 = vmatpush.xpose.msra.mxu0 0.0
        %4440 = vmatpush.xpose.msra.mxu0 0.0
        %4441 = vmatpush.xpose.msra.mxu0 0.0
        %4442 = vmatpush.xpose.msra.mxu0 0.0
        %4443 = vmatpush.xpose.msra.mxu0 0.0
        %4444 = vmatpush.xpose.msra.mxu0 0.0
        %4445 = vmatpush.xpose.msra.mxu0 0.0
        %4446 = vmatpush.xpose.msra.mxu0 0.0
        %4447 = vmatpush.xpose.msra.mxu0 0.0
        %4448 = vmatpush.xpose.msra.mxu0 0.0
        %4449 = vmatpush.xpose.msra.mxu0 0.0
        %4450 = vmatpush.xpose.msra.mxu0 0.0
        %4451 = vmatpush.xpose.msra.mxu0 0.0
        %4452 = vmatpush.xpose.msra.mxu0 0.0
        %4453 = vmatpush.xpose.msra.mxu0 %v4437
        %4454 = vmatpush.xpose.msra.mxu0 %v4434
        %4455 = vmatmul.f32.gmra.mxu0 %v4431
        %v4456 = vpop.f32.mrf.mxu0
        %v4457 = vadd.f32 0.0, %v4456
        %4458 = vdwg.mxu0
        %v4459 = vmul.f32 %v4457, 0.35355338
        %v4460 = vsel %vm1316, %v4459, -inf
        %4461 = vmax.xlane.f32.xlu0 %v4460
        %v4462 = vpop.xlane.xlu0 %4461
        %v4463 = vsub.f32 %v4459, %v4462
        %v4464 = vmul.f32 %v4463, 1.442695
        %v4465 = vpow.pop %v4464
        %v4466 = vsel %vm1316, %v4465, 0.0
        %4467 = vadd.xlane.f32.xlu0 %v4466
        %v4468 = vpop.xlane.xlu0 %4467
        %v4469 = vrcp.pop %v4468
        %v4470 = vmul.f32 %v4465, %v4469
        %4471 = vrot.lane.b32.xlu0 %v4418, 96
        %v4472 = vpop.permute.xlu0 %4471
        %4473 = vrot.lane.b32.xlu0 %v4421, 96
        %v4474 = vpop.permute.xlu0 %4473
        %v4477 = vsel %vm1316, %v4470, 0
        %v4479 = vsel %vm1351, %v4474, 0
        %4481 = vmatpush.msra.mxu0 0.0
        %4482 = vmatpush.msra.mxu0 0.0
        %4483 = vmatpush.msra.mxu0 0.0
        %4484 = vmatpush.msra.mxu0 0.0
        %4485 = vmatpush.msra.mxu0 0.0
        %4486 = vmatpush.msra.mxu0 0.0
        %4487 = vmatpush.msra.mxu0 0.0
        %4488 = vmatpush.msra.mxu0 0.0
        %4489 = vmatpush.msra.mxu0 0.0
        %4490 = vmatpush.msra.mxu0 0.0
        %4491 = vmatpush.msra.mxu0 0.0
        %4492 = vmatpush.msra.mxu0 0.0
        %4493 = vmatpush.msra.mxu0 0.0
        %4494 = vmatpush.msra.mxu0 0.0
        %4495 = vmatpush.msra.mxu0 %v4479
        %4496 = vmatpush.msra.mxu0 %v4472
        %4497 = vmatmul.f32.gmra.mxu0 %v4477
        %v4498 = vpop.f32.mrf.mxu0
        %v4499 = vadd.f32 0.0, %v4498
        %4500 = vdwg.mxu0
        %v4502 = vsel %vm1277, %v4499, 0
        %4504 = vmatpush.msra.mxu0 0.0
        %4505 = vmatpush.msra.mxu0 0.0
        %4506 = vmatpush.msra.mxu0 0.0
        %4507 = vmatpush.msra.mxu0 0.0
        %4508 = vmatpush.msra.mxu0 0.0
        %4509 = vmatpush.msra.mxu0 0.0
        %4510 = vmatpush.msra.mxu0 0.0
        %4511 = vmatpush.msra.mxu0 0.0
        %4512 = vmatpush.msra.mxu0 0.0
        %4513 = vmatpush.msra.mxu0 0.0
        %4514 = vmatpush.msra.mxu0 0.0
        %4515 = vmatpush.msra.mxu0 0.0
        %4516 = vmatpush.msra.mxu0 0.0
        %4517 = vmatpush.msra.mxu0 0.0
        %4518 = vmatpush.msra.mxu0 0.0
        %4519 = vmatpush.msra.mxu0 %v4424
        %4520 = vmatmul.f32.gmra.mxu0 %v4502
        %v4521 = vpop.f32.mrf.mxu0
        %v4522 = vadd.f32 0.0, %v4521
        %4523 = vdwg.mxu0
        %v4525 = vperm.slane %v4429, 0
        %v4527 = vadd.f32 %v4525, %v4522
        %4528 = vrot.lane.b32.xlu0 %v4388, 120
        %v4529 = vpop.permute.xlu0 %4528
        %4530 = vrot.lane.b32.xlu0 %v4418, 120
        %v4531 = vpop.permute.xlu0 %4530
        %4532 = vrot.lane.b32.xlu0 %v4421, 120
        %v4533 = vpop.permute.xlu0 %4532
        %v4534 = vsel %vm1277, %v4529, 0
        %v4536 = vsel %vm1277, %v4531, 0
        %v4538 = vsel %vm1277, %v4533, 0
        %4540 = vmatpush.xpose.msra.mxu0 0.0
        %4541 = vmatpush.xpose.msra.mxu0 0.0
        %4542 = vmatpush.xpose.msra.mxu0 0.0
        %4543 = vmatpush.xpose.msra.mxu0 0.0
        %4544 = vmatpush.xpose.msra.mxu0 0.0
        %4545 = vmatpush.xpose.msra.mxu0 0.0
        %4546 = vmatpush.xpose.msra.mxu0 0.0
        %4547 = vmatpush.xpose.msra.mxu0 0.0
        %4548 = vmatpush.xpose.msra.mxu0 0.0
        %4549 = vmatpush.xpose.msra.mxu0 0.0
        %4550 = vmatpush.xpose.msra.mxu0 0.0
        %4551 = vmatpush.xpose.msra.mxu0 0.0
        %4552 = vmatpush.xpose.msra.mxu0 0.0
        %4553 = vmatpush.xpose.msra.mxu0 0.0
        %4554 = vmatpush.xpose.msra.mxu0 %v4538
        %4555 = vmatpush.xpose.msra.mxu0 %v4536
        %4556 = vmatmul.f32.gmra.mxu0 %v4534
        %v4557 = vpop.f32.mrf.mxu0
        %v4558 = vadd.f32 0.0, %v4557
        %4559 = vdwg.mxu0
        %v4560 = vmul.f32 %v4558, 0.35355338
        %v4561 = vsel %vm1316, %v4560, -inf
        %4562 = vmax.xlane.f32.xlu0 %v4561
        %v4563 = vpop.xlane.xlu0 %4562
        %v4564 = vsub.f32 %v4560, %v4563
        %v4565 = vmul.f32 %v4564, 1.442695
        %v4566 = vpow.pop %v4565
        %v4567 = vsel %vm1316, %v4566, 0.0
        %4568 = vadd.xlane.f32.xlu0 %v4567
        %v4569 = vpop.xlane.xlu0 %4568
        %v4570 = vrcp.pop %v4569
        %v4571 = vmul.f32 %v4566, %v4570
        %4572 = vrot.lane.b32.xlu0 %v4418, 88
        %v4573 = vpop.permute.xlu0 %4572
        %4574 = vrot.lane.b32.xlu0 %v4421, 88
        %v4575 = vpop.permute.xlu0 %4574
        %v4578 = vsel %vm1316, %v4571, 0
        %v4580 = vsel %vm1351, %v4575, 0
        %4582 = vmatpush.msra.mxu0 0.0
        %4583 = vmatpush.msra.mxu0 0.0
        %4584 = vmatpush.msra.mxu0 0.0
        %4585 = vmatpush.msra.mxu0 0.0
        %4586 = vmatpush.msra.mxu0 0.0
        %4587 = vmatpush.msra.mxu0 0.0
        %4588 = vmatpush.msra.mxu0 0.0
        %4589 = vmatpush.msra.mxu0 0.0
        %4590 = vmatpush.msra.mxu0 0.0
        %4591 = vmatpush.msra.mxu0 0.0
        %4592 = vmatpush.msra.mxu0 0.0
        %4593 = vmatpush.msra.mxu0 0.0
        %4594 = vmatpush.msra.mxu0 0.0
        %4595 = vmatpush.msra.mxu0 0.0
        %4596 = vmatpush.msra.mxu0 %v4580
        %4597 = vmatpush.msra.mxu0 %v4573
        %4598 = vmatmul.f32.gmra.mxu0 %v4578
        %v4599 = vpop.f32.mrf.mxu0
        %v4600 = vadd.f32 0.0, %v4599
        %4601 = vdwg.mxu0
        %v4603 = vsel %vm1277, %v4600, 0
        %4605 = vmatpush.msra.mxu0 0.0
        %4606 = vmatpush.msra.mxu0 0.0
        %4607 = vmatpush.msra.mxu0 0.0
        %4608 = vmatpush.msra.mxu0 0.0
        %4609 = vmatpush.msra.mxu0 0.0
        %4610 = vmatpush.msra.mxu0 0.0
        %4611 = vmatpush.msra.mxu0 0.0
        %4612 = vmatpush.msra.mxu0 0.0
        %4613 = vmatpush.msra.mxu0 0.0
        %4614 = vmatpush.msra.mxu0 0.0
        %4615 = vmatpush.msra.mxu0 0.0
        %4616 = vmatpush.msra.mxu0 0.0
        %4617 = vmatpush.msra.mxu0 0.0
        %4618 = vmatpush.msra.mxu0 0.0
        %4619 = vmatpush.msra.mxu0 0.0
        %4620 = vmatpush.msra.mxu0 %v4425
        %4621 = vmatmul.f32.gmra.mxu0 %v4603
        %v4622 = vpop.f32.mrf.mxu0
        %v4623 = vadd.f32 0.0, %v4622
        %4624 = vdwg.mxu0
        %v4625 = vadd.f32 %v4527, %v4623
        %4626 = vrot.lane.b32.xlu0 %v4388, 112
        %v4627 = vpop.permute.xlu0 %4626
        %4628 = vrot.lane.b32.xlu0 %v4418, 112
        %v4629 = vpop.permute.xlu0 %4628
        %4630 = vrot.lane.b32.xlu0 %v4421, 112
        %v4631 = vpop.permute.xlu0 %4630
        %v4632 = vsel %vm1277, %v4627, 0
        %v4634 = vsel %vm1277, %v4629, 0
        %v4636 = vsel %vm1277, %v4631, 0
        %4638 = vmatpush.xpose.msra.mxu0 0.0
        %4639 = vmatpush.xpose.msra.mxu0 0.0
        %4640 = vmatpush.xpose.msra.mxu0 0.0
        %4641 = vmatpush.xpose.msra.mxu0 0.0
        %4642 = vmatpush.xpose.msra.mxu0 0.0
        %4643 = vmatpush.xpose.msra.mxu0 0.0
        %4644 = vmatpush.xpose.msra.mxu0 0.0
        %4645 = vmatpush.xpose.msra.mxu0 0.0
        %4646 = vmatpush.xpose.msra.mxu0 0.0
        %4647 = vmatpush.xpose.msra.mxu0 0.0
        %4648 = vmatpush.xpose.msra.mxu0 0.0
        %4649 = vmatpush.xpose.msra.mxu0 0.0
        %4650 = vmatpush.xpose.msra.mxu0 0.0
        %4651 = vmatpush.xpose.msra.mxu0 0.0
        %4652 = vmatpush.xpose.msra.mxu0 %v4636
        %4653 = vmatpush.xpose.msra.mxu0 %v4634
        %4654 = vmatmul.f32.gmra.mxu0 %v4632
        %v4655 = vpop.f32.mrf.mxu0
        %v4656 = vadd.f32 0.0, %v4655
        %4657 = vdwg.mxu0
        %v4658 = vmul.f32 %v4656, 0.35355338
        %v4659 = vsel %vm1316, %v4658, -inf
        %4660 = vmax.xlane.f32.xlu0 %v4659
        %v4661 = vpop.xlane.xlu0 %4660
        %v4662 = vsub.f32 %v4658, %v4661
        %v4663 = vmul.f32 %v4662, 1.442695
        %v4664 = vpow.pop %v4663
        %v4665 = vsel %vm1316, %v4664, 0.0
        %4666 = vadd.xlane.f32.xlu0 %v4665
        %v4667 = vpop.xlane.xlu0 %4666
        %v4668 = vrcp.pop %v4667
        %v4669 = vmul.f32 %v4664, %v4668
        %4670 = vrot.lane.b32.xlu0 %v4418, 80
        %v4671 = vpop.permute.xlu0 %4670
        %4672 = vrot.lane.b32.xlu0 %v4421, 80
        %v4673 = vpop.permute.xlu0 %4672
        %v4676 = vsel %vm1316, %v4669, 0
        %v4678 = vsel %vm1351, %v4673, 0
        %4680 = vmatpush.msra.mxu0 0.0
        %4681 = vmatpush.msra.mxu0 0.0
        %4682 = vmatpush.msra.mxu0 0.0
        %4683 = vmatpush.msra.mxu0 0.0
        %4684 = vmatpush.msra.mxu0 0.0
        %4685 = vmatpush.msra.mxu0 0.0
        %4686 = vmatpush.msra.mxu0 0.0
        %4687 = vmatpush.msra.mxu0 0.0
        %4688 = vmatpush.msra.mxu0 0.0
        %4689 = vmatpush.msra.mxu0 0.0
        %4690 = vmatpush.msra.mxu0 0.0
        %4691 = vmatpush.msra.mxu0 0.0
        %4692 = vmatpush.msra.mxu0 0.0
        %4693 = vmatpush.msra.mxu0 0.0
        %4694 = vmatpush.msra.mxu0 %v4678
        %4695 = vmatpush.msra.mxu0 %v4671
        %4696 = vmatmul.f32.gmra.mxu0 %v4676
        %v4697 = vpop.f32.mrf.mxu0
        %v4698 = vadd.f32 0.0, %v4697
        %4699 = vdwg.mxu0
        %v4701 = vsel %vm1277, %v4698, 0
        %4703 = vmatpush.msra.mxu0 0.0
        %4704 = vmatpush.msra.mxu0 0.0
        %4705 = vmatpush.msra.mxu0 0.0
        %4706 = vmatpush.msra.mxu0 0.0
        %4707 = vmatpush.msra.mxu0 0.0
        %4708 = vmatpush.msra.mxu0 0.0
        %4709 = vmatpush.msra.mxu0 0.0
        %4710 = vmatpush.msra.mxu0 0.0
        %4711 = vmatpush.msra.mxu0 0.0
        %4712 = vmatpush.msra.mxu0 0.0
        %4713 = vmatpush.msra.mxu0 0.0
        %4714 = vmatpush.msra.mxu0 0.0
        %4715 = vmatpush.msra.mxu0 0.0
        %4716 = vmatpush.msra.mxu0 0.0
        %4717 = vmatpush.msra.mxu0 0.0
        %4718 = vmatpush.msra.mxu0 %v4426
        %4719 = vmatmul.f32.gmra.mxu0 %v4701
        %v4720 = vpop.f32.mrf.mxu0
        %v4721 = vadd.f32 0.0, %v4720
        %4722 = vdwg.mxu0
        %v4723 = vadd.f32 %v4625, %v4721
        %4724 = vrot.lane.b32.xlu0 %v4388, 104
        %v4725 = vpop.permute.xlu0 %4724
        %4726 = vrot.lane.b32.xlu0 %v4418, 104
        %v4727 = vpop.permute.xlu0 %4726
        %4728 = vrot.lane.b32.xlu0 %v4421, 104
        %v4729 = vpop.permute.xlu0 %4728
        %v4730 = vsel %vm1277, %v4725, 0
        %v4732 = vsel %vm1277, %v4727, 0
        %v4734 = vsel %vm1277, %v4729, 0
        %4736 = vmatpush.xpose.msra.mxu0 0.0
        %4737 = vmatpush.xpose.msra.mxu0 0.0
        %4738 = vmatpush.xpose.msra.mxu0 0.0
        %4739 = vmatpush.xpose.msra.mxu0 0.0
        %4740 = vmatpush.xpose.msra.mxu0 0.0
        %4741 = vmatpush.xpose.msra.mxu0 0.0
        %4742 = vmatpush.xpose.msra.mxu0 0.0
        %4743 = vmatpush.xpose.msra.mxu0 0.0
        %4744 = vmatpush.xpose.msra.mxu0 0.0
        %4745 = vmatpush.xpose.msra.mxu0 0.0
        %4746 = vmatpush.xpose.msra.mxu0 0.0
        %4747 = vmatpush.xpose.msra.mxu0 0.0
        %4748 = vmatpush.xpose.msra.mxu0 0.0
        %4749 = vmatpush.xpose.msra.mxu0 0.0
        %4750 = vmatpush.xpose.msra.mxu0 %v4734
        %4751 = vmatpush.xpose.msra.mxu0 %v4732
        %4752 = vmatmul.f32.gmra.mxu0 %v4730
        %v4753 = vpop.f32.mrf.mxu0
        %v4754 = vadd.f32 0.0, %v4753
        %4755 = vdwg.mxu0
        %v4756 = vmul.f32 %v4754, 0.35355338
        %v4757 = vsel %vm1316, %v4756, -inf
        %4758 = vmax.xlane.f32.xlu0 %v4757
        %v4759 = vpop.xlane.xlu0 %4758
        %v4760 = vsub.f32 %v4756, %v4759
        %v4761 = vmul.f32 %v4760, 1.442695
        %v4762 = vpow.pop %v4761
        %v4763 = vsel %vm1316, %v4762, 0.0
        %4764 = vadd.xlane.f32.xlu0 %v4763
        %v4765 = vpop.xlane.xlu0 %4764
        %v4766 = vrcp.pop %v4765
        %v4767 = vmul.f32 %v4762, %v4766
        %4768 = vrot.lane.b32.xlu0 %v4418, 72
        %v4769 = vpop.permute.xlu0 %4768
        %4770 = vrot.lane.b32.xlu0 %v4421, 72
        %v4771 = vpop.permute.xlu0 %4770
        %v4774 = vsel %vm1316, %v4767, 0
        %v4776 = vsel %vm1351, %v4771, 0
        %4778 = vmatpush.msra.mxu0 0.0
        %4779 = vmatpush.msra.mxu0 0.0
        %4780 = vmatpush.msra.mxu0 0.0
        %4781 = vmatpush.msra.mxu0 0.0
        %4782 = vmatpush.msra.mxu0 0.0
        %4783 = vmatpush.msra.mxu0 0.0
        %4784 = vmatpush.msra.mxu0 0.0
        %4785 = vmatpush.msra.mxu0 0.0
        %4786 = vmatpush.msra.mxu0 0.0
        %4787 = vmatpush.msra.mxu0 0.0
        %4788 = vmatpush.msra.mxu0 0.0
        %4789 = vmatpush.msra.mxu0 0.0
        %4790 = vmatpush.msra.mxu0 0.0
        %4791 = vmatpush.msra.mxu0 0.0
        %4792 = vmatpush.msra.mxu0 %v4776
        %4793 = vmatpush.msra.mxu0 %v4769
        %4794 = vmatmul.f32.gmra.mxu0 %v4774
        %v4795 = vpop.f32.mrf.mxu0
        %v4796 = vadd.f32 0.0, %v4795
        %4797 = vdwg.mxu0
        %v4799 = vsel %vm1277, %v4796, 0
        %4801 = vmatpush.msra.mxu0 0.0
        %4802 = vmatpush.msra.mxu0 0.0
        %4803 = vmatpush.msra.mxu0 0.0
        %4804 = vmatpush.msra.mxu0 0.0
        %4805 = vmatpush.msra.mxu0 0.0
        %4806 = vmatpush.msra.mxu0 0.0
        %4807 = vmatpush.msra.mxu0 0.0
        %4808 = vmatpush.msra.mxu0 0.0
        %4809 = vmatpush.msra.mxu0 0.0
        %4810 = vmatpush.msra.mxu0 0.0
        %4811 = vmatpush.msra.mxu0 0.0
        %4812 = vmatpush.msra.mxu0 0.0
        %4813 = vmatpush.msra.mxu0 0.0
        %4814 = vmatpush.msra.mxu0 0.0
        %4815 = vmatpush.msra.mxu0 0.0
        %4816 = vmatpush.msra.mxu0 %v4427
        %4817 = vmatmul.f32.gmra.mxu0 %v4799
        %v4818 = vpop.f32.mrf.mxu0
        %v4819 = vadd.f32 0.0, %v4818
        %4820 = vdwg.mxu0
        %v4821 = vadd.f32 %v4723, %v4819
        %v4822 = vadd.f32 %v4356, %v4821
        %s4823 = scalar_lea.vmem %s53, 2
        %v4824 = vld [vmem:[%s4823] sm:$0x3]
        %v4825 = vsel %vm1169, %v4822, 0.0
        %4826 = vadd.xlane.f32.xlu0 %v4825
        %v4827 = vpop.xlane.xlu0 %4826
        %v4828 = vmul.f32 %v4827, %v1183
        %v4829 = vsub.f32 %v4822, %v4828
        %v4830 = vmul.f32 %v4829, %v4829
        %v4831 = vsel %vm1169, %v4830, 0.0
        %4832 = vadd.xlane.f32.xlu0 %v4831
        %v4833 = vpop.xlane.xlu0 %4832
        %v4834 = vmul.f32 %v4833, %v1183
        %v4835 = vadd.f32 %v4834, 1e-05
        %v4836 = vrsqrt.pop %v4835
        %v4837 = vmul.f32 %v4836, %v4835
        %v4838 = vmul.f32 %v4837, %v4836
        %v4839 = vmul.f32 0.5, %v4838
        %v4840 = vsub.f32 1.5, %v4839
        %v4841 = vmul.f32 %v4836, %v4840
        %vm4842 = vweird.f32 %v4835
        %vm4843 = vweird.f32 %v4836
        %vm4844 = vmor %vm4842, %vm4843
        %v4845 = vsel %vm4844, %v4836, %v4841
        %v4846 = vmul.f32 %v4829, %v4845
        %v4847 = vperm.slane %v4824, 0
        %v4848 = vmul.f32 %v4846, %v4847
        %v4849 = vperm.slane %v4824, 1
        %v4850 = vadd.f32 %v4848, %v4849
        %s4851 = scalar_lea.vmem %s55, 32
        %v4852 = vld [vmem:[%s4851] sm:$0xff]
        %v4853 = vld [vmem:[%s4851 + $0x8] sm:$0xff]
        %v4854 = vld [vmem:[%s4851 + $0x10] sm:$0xff]
        %v4855 = vld [vmem:[%s4851 + $0x18] sm:$0xff]
        %s4856 = scalar_lea.vmem %s57, 1
        %v4857 = vld [vmem:[%s4856] sm:$0x1]
        %v4859 = vperm.slane %v4857, 0
        %v4862 = vsel %vm1169, %v4850, 0
        %4864 = vmatpush.msra.mxu0 0.0
        %4865 = vmatpush.msra.mxu0 0.0
        %4866 = vmatpush.msra.mxu0 0.0
        %4867 = vmatpush.msra.mxu0 0.0
        %4868 = vmatpush.msra.mxu0 0.0
        %4869 = vmatpush.msra.mxu0 0.0
        %4870 = vmatpush.msra.mxu0 0.0
        %4871 = vmatpush.msra.mxu0 0.0
        %4872 = vmatpush.msra.mxu0 0.0
        %4873 = vmatpush.msra.mxu0 0.0
        %4874 = vmatpush.msra.mxu0 0.0
        %4875 = vmatpush.msra.mxu0 0.0
        %4876 = vmatpush.msra.mxu0 %v4855
        %4877 = vmatpush.msra.mxu0 %v4854
        %4878 = vmatpush.msra.mxu0 %v4853
        %4879 = vmatpush.msra.mxu0 %v4852
        %4880 = vmatmul.f32.gmra.mxu0 %v4862
        %v4881 = vpop.f32.mrf.mxu0
        %v4882 = vadd.f32 %v4859, %v4881
        %4883 = vdwg.mxu0
        %v4884 = vmul.f32 %v4882, 0.5
        %v4885 = vmul.f32 %v4882, 0.044715
        %v4886 = vmul.f32 %v4885, %v4882
        %v4887 = vmul.f32 %v4886, %v4882
        %v4888 = vadd.f32 %v4882, %v4887
        %v4889 = vmul.f32 %v4888, 0.7978846
        %v4890 = vtanh.pop %v4889
        %v4891 = vadd.f32 %v4890, 1.0
        %v4892 = vmul.f32 %v4884, %v4891
        %s4893 = scalar_lea.vmem %s59, 64
        %v4894 = vld [vmem:[%s4893] sm:$0xff]
        %v4895 = vld [vmem:[%s4893 + $0x8] sm:$0xff]
        %v4896 = vld [vmem:[%s4893 + $0x10] sm:$0xff]
        %v4897 = vld [vmem:[%s4893 + $0x18] sm:$0xff]
        %v4898 = vld [vmem:[%s4893 + $0x20] sm:$0xff]
        %v4899 = vld [vmem:[%s4893 + $0x28] sm:$0xff]
        %v4900 = vld [vmem:[%s4893 + $0x30] sm:$0xff]
        %v4901 = vld [vmem:[%s4893 + $0x38] sm:$0xff]
        %s4902 = scalar_lea.vmem %s61, 1
        %v4903 = vld [vmem:[%s4902] sm:$0x1]
        %v4905 = vperm.slane %v4903, 0
        %v4908 = vsel %vm1927, %v4892, 0
        %4910 = vmatpush.msra.mxu0 0.0
        %4911 = vmatpush.msra.mxu0 0.0
        %4912 = vmatpush.msra.mxu0 0.0
        %4913 = vmatpush.msra.mxu0 0.0
        %4914 = vmatpush.msra.mxu0 0.0
        %4915 = vmatpush.msra.mxu0 0.0
        %4916 = vmatpush.msra.mxu0 0.0
        %4917 = vmatpush.msra.mxu0 0.0
        %4918 = vmatpush.msra.mxu0 %v4901
        %4919 = vmatpush.msra.mxu0 %v4900
        %4920 = vmatpush.msra.mxu0 %v4899
        %4921 = vmatpush.msra.mxu0 %v4898
        %4922 = vmatpush.msra.mxu0 %v4897
        %4923 = vmatpush.msra.mxu0 %v4896
        %4924 = vmatpush.msra.mxu0 %v4895
        %4925 = vmatpush.msra.mxu0 %v4894
        %4926 = vmatmul.f32.gmra.mxu0 %v4908
        %v4927 = vpop.f32.mrf.mxu0
        %v4928 = vadd.f32 %v4905, %v4927
        %4929 = vdwg.mxu0
        %v4930 = vadd.f32 %v4850, %v4928
        %s4931 = scalar_lea.vmem %s63, 2
        %v4932 = vld [vmem:[%s4931] sm:$0x3]
        %v4933 = vsel %vm1169, %v4930, 0.0
        %4934 = vadd.xlane.f32.xlu0 %v4933
        %v4935 = vpop.xlane.xlu0 %4934
        %v4936 = vmul.f32 %v4935, %v1183
        %v4937 = vsub.f32 %v4930, %v4936
        %v4938 = vmul.f32 %v4937, %v4937
        %v4939 = vsel %vm1169, %v4938, 0.0
        %4940 = vadd.xlane.f32.xlu0 %v4939
        %v4941 = vpop.xlane.xlu0 %4940
        %v4942 = vmul.f32 %v4941, %v1183
        %v4943 = vadd.f32 %v4942, 1e-05
        %v4944 = vrsqrt.pop %v4943
        %v4945 = vmul.f32 %v4944, %v4943
        %v4946 = vmul.f32 %v4945, %v4944
        %v4947 = vmul.f32 0.5, %v4946
        %v4948 = vsub.f32 1.5, %v4947
        %v4949 = vmul.f32 %v4944, %v4948
        %vm4950 = vweird.f32 %v4943
        %vm4951 = vweird.f32 %v4944
        %vm4952 = vmor %vm4950, %vm4951
        %v4953 = vsel %vm4952, %v4944, %v4949
        %v4954 = vmul.f32 %v4937, %v4953
        %v4955 = vperm.slane %v4932, 0
        %v4956 = vmul.f32 %v4954, %v4955
        %v4957 = vperm.slane %v4932, 1
        %v4958 = vadd.f32 %v4956, %v4957
        %v4959 = vld [vmem:[%s69] sm:$0xff]
        %v4960 = vld [vmem:[%s69 + $0x8] sm:$0xff]
        %v4961 = vld [vmem:[%s69 + $0x10] sm:$0xff]
        %v4962 = vld [vmem:[%s69 + $0x18] sm:$0xff]
        %v4963 = vld [vmem:[%s71] sm:$0x1]
        %v4965 = vperm.slane %v4963, 0
        %v4968 = vsel %vm1169, %v4958, 0
        %4970 = vmatpush.msra.mxu0 0.0
        %4971 = vmatpush.msra.mxu0 0.0
        %4972 = vmatpush.msra.mxu0 0.0
        %4973 = vmatpush.msra.mxu0 0.0
        %4974 = vmatpush.msra.mxu0 0.0
        %4975 = vmatpush.msra.mxu0 0.0
        %4976 = vmatpush.msra.mxu0 0.0
        %4977 = vmatpush.msra.mxu0 0.0
        %4978 = vmatpush.msra.mxu0 0.0
        %4979 = vmatpush.msra.mxu0 0.0
        %4980 = vmatpush.msra.mxu0 0.0
        %4981 = vmatpush.msra.mxu0 0.0
        %4982 = vmatpush.msra.mxu0 %v4962
        %4983 = vmatpush.msra.mxu0 %v4961
        %4984 = vmatpush.msra.mxu0 %v4960
        %4985 = vmatpush.msra.mxu0 %v4959
        %4986 = vmatmul.f32.gmra.mxu0 %v4968
        %v4987 = vpop.f32.mrf.mxu0
        %v4988 = vadd.f32 %v4965, %v4987
        %4989 = vdwg.mxu0
        %4990 = vmax.xlane.f32.xlu0 %v4988
        %v4991 = vpop.xlane.xlu0 %4990
        %v4992 = vsub.f32 %v4988, %v4991
        %v4993 = vmul.f32 %v4992, 1.442695
        %v4994 = vpow.pop %v4993
        %4995 = vadd.xlane.f32.xlu0 %v4994
        %v4996 = vpop.xlane.xlu0 %4995
        %v4997 = vlog2.pop %v4996
        %v4998 = vmul.f32 %v4997, 0.6931472
        %v4999 = vadd.f32 %v4998, %v4991
        %v5000 = vsub.f32 %v4988, %v4999
        %5001 = vst [vmem:[%s1153] sm:$0xff] %v5000
        %s5002 = sand.u32 %s872, 1
        %s5003 = scalar_lea.sflag [#allocation3], %s5002
        %s5004 = sand.u32 %s872, 1
        %s5005 = scalar_lea.vmem [#allocation2], %s5004
        %s5006 = sand.u32 %s898, 1
        %s5007 = scalar_lea.sflag [#allocation5], %s5006
        %s5008 = sand.u32 %s898, 1
        %s5009 = smul.addr %s5008, 8
        %s5010 = scalar_lea.vmem [#allocation4], %s5009
        // Predicated region
        $region165: #{prefix_bart_forward.1} parent=163 // pred_check
          %p5011 = pneg %p882
        $region166: #{prefix_bart_forward.1} parent=163 // pred_check_branch
          %5013 = sbr.rel (%p5011) target = $region168
        $region167: #{prefix_bart_forward.1} parent=163 // pred_region
          %5015 = vsyncadd %s5003, 0
          %s5016 = scalar_lea.hbm %s73, %s93
          %s5018 = sshll.u32 %s5005, 4
          %s5019 = int_to_ptr.vmem [resolvable:$true] %s5018
          %s5020 = sshll.u32 %s5016, 4
          %s5021 = int_to_ptr.hbm [resolvable:$true] %s5020
          %5023 = dma.vmem_to_hbm [thread:$0]  %s5019, 16, %s5021, %s5003
        $region168: #{prefix_bart_forward.1} parent=163 // pred_fallthru
          _
        // Predicated region
        $region169: #{prefix_bart_forward.1} parent=163 // pred_check
          %p5024 = pneg %p908
        $region170: #{prefix_bart_forward.1} parent=163 // pred_check_branch
          %5026 = sbr.rel (%p5024) target = $region172
        $region171: #{prefix_bart_forward.1} parent=163 // pred_region
          %5028 = vsyncadd %s5007, 0
          %s5029 = smul.addr %s93, 8
          %s5030 = scalar_lea.hbm %s75, %s5029
          %s5032 = sshll.u32 %s5010, 4
          %s5033 = int_to_ptr.vmem [resolvable:$true] %s5032
          %s5034 = sshll.u32 %s5030, 4
          %s5035 = int_to_ptr.hbm [resolvable:$true] %s5034
          %5037 = dma.vmem_to_hbm [thread:$0]  %s5033, 128, %s5035, %s5007
        $region172: #{prefix_bart_forward.1} parent=163 // pred_fallthru
          _
      $region164: #{prefix_bart_forward.1} parent=5 // pred_fallthru
        _
      %p5038 = scmp.le.s32.totalorder 2, %s88
      // Predicated region
      $region173: #{prefix_bart_forward.1} parent=5 // pred_check
        %p5039 = pneg %p5038
      $region174: #{prefix_bart_forward.1} parent=5 // pred_check_branch
        %5041 = sbr.rel (%p5039) target = $region176
      $region175: #{prefix_bart_forward.1} parent=5 // pred_region
        %s5042 = ssub.s32 %s88, 2
        // Predicated region
        $region177: #{prefix_bart_forward.1} parent=175 // pred_check
          %p5043 = pneg %p888
        $region178: #{prefix_bart_forward.1} parent=175 // pred_check_branch
          %5045 = sbr.rel (%p5043) target = $region180
        $region179: #{prefix_bart_forward.1} parent=175 // pred_region
          %s5046 = sand.u32 %s873, 1
          %s5047 = scalar_lea.sflag [#allocation3], %s5046
          %s5048 = sand.u32 %s873, 1
          %s5049 = scalar_lea.vmem [#allocation2], %s5048
          %5051 = dma.done %s5047, 16
        $region180: #{prefix_bart_forward.1} parent=175 // pred_fallthru
          _
        // Predicated region
        $region181: #{prefix_bart_forward.1} parent=175 // pred_check
          %p5052 = pneg %p914
        $region182: #{prefix_bart_forward.1} parent=175 // pred_check_branch
          %5054 = sbr.rel (%p5052) target = $region184
        $region183: #{prefix_bart_forward.1} parent=175 // pred_region
          %s5055 = sand.u32 %s899, 1
          %s5056 = scalar_lea.sflag [#allocation5], %s5055
          %s5057 = sand.u32 %s899, 1
          %s5058 = smul.addr %s5057, 8
          %s5059 = scalar_lea.vmem [#allocation4], %s5058
          %5061 = dma.done %s5056, 128
        $region184: #{prefix_bart_forward.1} parent=175 // pred_fallthru
          _
      $region176: #{prefix_bart_forward.1} parent=5 // pred_fallthru
        _
    $region6: #{prefix_bart_forward.1} parent=1 // loop_footer
      %s92 = sadd.s32 1, %s88
    $region7: #{prefix_bart_forward.1} parent=1 // loop_footer_branch
      %87 = sbr.rel target = $region3
    $region8: #{prefix_bart_forward.1} parent=1 // loop_exit
      _
    %5062 = vsyncpa [#allocation3], 1
    %s5063 = scalar_lea.sflag [#allocation3], 1
    %5064 = vsyncpa %s5063, 1
    %5065 = vsyncpa [#allocation5], 1
    %s5066 = scalar_lea.sflag [#allocation5], 1
    %5067 = vsyncpa %s5066, 1

</llo_original>
